<compile_context>
chip_gen: v7x
topology: tpu7x:2x2x1
jax: 0.10.0
libtpu: 0.0.40
codegen_flags: <defaults>
</compile_context>

<pallas_src>
import functools

import numpy as np

import jax
import jax.numpy as jnp
from jax.experimental import pallas as pl
from jax.experimental.pallas import tpu as pltpu


# ----------------------------- Pallas kernel --------------------------------


def _fused_layer_kernel(x_ref, w_ref, b_ref, lw_ref, mask_ref, dist_ref, *rest,
                        tap_groups, L, rb, Ho, Wh, inv_hw, pool):
    """Fused 3x3 conv + bias + ReLU + LPIPS distance (+ fused 2x2 maxpool).

    One grid step = one (target, pred) image pair.

    Inputs:
      x_ref   : (2, P2pad, Cin) bf16  zero-padded striped inputs (row pitch is
                a multiple of 8/16; a few junk columns / overrun rows).
      w_ref   : (G, Kg, Cout)  bf16   conv taps packed into K-groups.
      b_ref   : (1, Cout)      f32    bias.
      lw_ref  : (Cout, 1)      f32    LPIPS 'lin' weights (column vector).
      mask_ref: (L, 1)         f32    1.0 for real striped rows, 0.0 for junk.
    Outputs:
      dist_ref: (1, 8, 128)    f32    per-pair LPIPS layer distance (broadcast
                                      into a full vreg for lane-dense stores).
      pool_ref: (2, Ho, Wh, Cout) bf16 pooled features (pool layers only).
    Scratch (pool layers only):
      mt_ref, mp_ref: (L, Cout) f32   striped pre-pool ReLU features.
    """
    if pool:
        pool_ref, mt_ref, mp_ref = rest
        m_scratch = (mt_ref, mp_ref)

    lw = lw_ref[...].astype(jnp.bfloat16)
    eps = 1e-10
    total = jnp.zeros((), jnp.float32)

    # Row-blocked conv + fused LPIPS: per block, both images' features stay in
    # vregs; they are also written to VMEM scratch for the pooling epilogue.
    for r0 in range(0, L, rb):
        feats = []
        for img in range(2):
            acc = None
            for g, offs in enumerate(tap_groups):
                # In-kernel im2col: contiguous row slices of the striped slab,
                # (optionally) lane-concatenated to fill K=256 on v6e/v7x.
                slabs = [x_ref[img, pl.ds(off + r0, rb), :].astype(jnp.bfloat16)
                         for off in offs]
                xt = slabs[0] if len(slabs) == 1 else jnp.concatenate(
                    slabs, axis=-1)
                part = jnp.dot(xt, w_ref[g],
                               preferred_element_type=jnp.float32)
                acc = part if acc is None else acc + part
            m = jnp.maximum(acc + b_ref[...], 0.0)        # (rb, Cout) f32
            if pool:
                m_scratch[img][pl.ds(r0, rb), :] = m
            feats.append(m)

        # Fused LPIPS on this row block (junk striped rows masked out).
        ft, fp = feats
        ftn = ft * jax.lax.rsqrt(jnp.sum(ft * ft, axis=-1, keepdims=True) + eps)
        fpn = fp * jax.lax.rsqrt(jnp.sum(fp * fp, axis=-1, keepdims=True) + eps)
        diff = ftn - fpn
        # Channel-weighted sum as a tiny bf16 MXU matmul (XLU relief).
        per_pix = jnp.dot((diff * diff).astype(jnp.bfloat16), lw,
                          preferred_element_type=jnp.float32)      # (rb, 1)
        total = total + jnp.sum(per_pix * mask_ref[pl.ds(r0, rb), :])

    dist_ref[...] = (total * inv_hw) * jnp.ones(dist_ref.shape, dist_ref.dtype)

    if pool:
        # Fused 2x2 max-pool from the VMEM scratch:
        #   w-direction: stride-2 sublane reads (even / odd columns),
        #   h-direction: layout-preserving reshape + tile-aligned half slices.
        for img in range(2):
            m_ref = m_scratch[img]
            a = m_ref[pl.ds(0, L // 2, stride=2), :]
            c = m_ref[pl.ds(1, L // 2, stride=2), :]
            mw = jnp.maximum(a, c)                        # (H*Wh, Cout)
            mw3 = mw.reshape(Ho, 2 * Wh, mw.shape[-1])
            pooled = jnp.maximum(mw3[:, :Wh, :], mw3[:, Wh:, :])
            pool_ref[img] = pooled.astype(pool_ref.dtype)


# ----------------------------- wrappers --------------------------------------


def _round_up(x, m):
    return ((x + m - 1) // m) * m


def _should_pair_taps():
    """K=256 tap pairing fills the 256-wide MXU on v6e/v7x; keep K=128 on v5e."""
    try:
        kind = jax.devices()[0].device_kind.lower()
        return "v5" not in kind
    except Exception:
        return True


def _row_mask(H, W, pitch):
    """(L, 1) 0/1 mask over striped rows: 1 for real columns (w < W)."""
    m = np.zeros((H * pitch, 1), np.float32)
    r = np.arange(H * pitch)
    m[(r % pitch) < W, 0] = 1.0
    return jnp.asarray(m)


def _tap_offset_groups(pitch, pair):
    """Static striped-row offsets of the 9 conv taps, optionally paired."""
    offs = [(t // 3) * pitch + (t % 3) for t in range(9)]
    if not pair:
        return tuple((o,) for o in offs)
    groups = []
    for i in range(0, 10, 2):
        if i + 1 < 9:
            groups.append((offs[i], offs[i + 1]))
        else:
            groups.append((offs[8], 0))   # dummy 10th tap -> zero weights
    return tuple(groups)


def _pack_tap_weights(w9, pair):
    """(9, Cin, Cout) f32 -> (G, Kg, Cout) bf16, pairwise-concatenated if pair."""
    if not pair:
        return jnp.asarray(w9, jnp.bfloat16)
    pieces = []
    for i in range(0, 10, 2):
        if i + 1 < 9:
            pieces.append(jnp.concatenate([w9[i], w9[i + 1]], axis=0))
        else:
            pieces.append(jnp.concatenate([w9[8], jnp.zeros_like(w9[8])], axis=0))
    return jnp.stack(pieces).astype(jnp.bfloat16)


def _im2col_layer1(x_nhwc, pitch):
    """Wrapper-side im2col for the Cin=3 first layer -> striped (N, H*pitch, K1) bf16."""
    N, H, W, C = x_nhwc.shape
    k1 = _round_up(9 * C, 8)
    xp = jnp.pad(x_nhwc, ((0, 0), (1, 1), (1, 1), (0, 0)))
    cols = [xp[:, dy:dy + H, dx:dx + W, :] for dy in range(3) for dx in range(3)]
    patches = jnp.concatenate(cols, axis=-1)                      # (N, H, W, 9C)
    patches = jnp.pad(patches, ((0, 0), (0, 0), (0, pitch - W), (0, 0)))
    patches = jnp.pad(patches, ((0, 0), (0, 0), (0, 0), (0, k1 - 9 * C)))
    return patches.reshape(N, H * pitch, k1).astype(jnp.bfloat16)


def _stripe_pad(x_nhwc, pitch):
    """Zero-pad ring + stripe to pitch (multiple of 8/16) + tap overrun rows."""
    N, H, W, C = x_nhwc.shape
    xp = jnp.pad(x_nhwc, ((0, 0), (1, 1), (1, pitch - W - 1), (0, 0)))
    xs = xp.reshape(N, (H + 2) * pitch, C)
    return jnp.pad(xs, ((0, 0), (0, 8), (0, 0)))


def fused_conv_lpips_layer(x_striped, w_packed, b, lw_col, mask, tap_groups,
                           H, W, pitch, pool):
    """One fused layer over all (target, pred) pairs.

    Returns (per-pair LPIPS layer distance [B], pooled bf16 map or None).
    """
    N2, P2pad, Cin = x_striped.shape
    B = N2 // 2
    G, Kg, Cout = w_packed.shape
    L = H * pitch
    rb = L
    for cand in (128, 64, 32, 16, 8):        # row block for conv/LPIPS streaming
        if L % cand == 0:
            rb = cand
            break
    Ho, Wh = (H // 2, pitch // 2) if pool else (0, 0)
    inv_hw = 1.0 / float(H * W)

    in_specs = [
        pl.BlockSpec((2, P2pad, Cin), lambda n: (n, 0, 0)),   # (t_n, p_n) pair
        pl.BlockSpec((G, Kg, Cout), lambda n: (0, 0, 0)),
        pl.BlockSpec((1, Cout), lambda n: (0, 0)),
        pl.BlockSpec((Cout, 1), lambda n: (0, 0)),
        pl.BlockSpec((L, 1), lambda n: (0, 0)),
    ]
    out_shapes = [jax.ShapeDtypeStruct((B, 8, 128), jnp.float32)]
    out_specs = [pl.BlockSpec((1, 8, 128), lambda n: (n, 0, 0))]
    scratch = []
    if pool:
        out_shapes.append(jax.ShapeDtypeStruct((N2, Ho, Wh, Cout), jnp.bfloat16))
        out_specs.append(pl.BlockSpec((2, Ho, Wh, Cout), lambda n: (n, 0, 0, 0)))
        scratch = [pltpu.VMEM((L, Cout), jnp.float32),
                   pltpu.VMEM((L, Cout), jnp.float32)]

    kernel = functools.partial(
        _fused_layer_kernel, tap_groups=tap_groups, L=L, rb=rb,
        Ho=Ho, Wh=Wh, inv_hw=inv_hw, pool=pool)

    # VMEM use per step is < 1 MiB at these shapes, well under the default
    # scoped limit on v5e/v6e/v7x; no explicit vmem_limit_bytes needed here.
    outs = pl.pallas_call(
        kernel,
        grid=(B,),
        in_specs=in_specs,
        out_specs=tuple(out_specs),
        out_shape=tuple(out_shapes),
        scratch_shapes=scratch,
        compiler_params=pltpu.CompilerParams(
            dimension_semantics=("parallel",)),   # v7x: one pair per TensorCore
    )(x_striped, w_packed, b, lw_col, mask)

    dist_blk = outs[0]
    pooled = outs[1] if pool else None
    return dist_blk[:, 0, 0], pooled


# ----------------------------- model setup -----------------------------------


def init_params(key, in_ch=3, chans=(128, 128, 128), pair=True):
    """Deterministic surrogate for VGG convs + LPIPS 'lin' heads.

    Channel widths are multiples of 128 so every store is lane-dense.  Layer-1
    weights are pre-flattened for the K=32 im2col matmul; deeper layers are
    packed tap-pairwise to K=256 (v6e/v7x) or kept at K=128 (v5e).
    """
    layers, lins = [], []
    cin = in_ch
    for i, cout in enumerate(chans):
        key, kw_, kl_ = jax.random.split(key, 3)
        w = jax.random.normal(kw_, (3, 3, cin, cout), jnp.float32) / np.sqrt(9.0 * cin)
        w9 = w.reshape(9, cin, cout)
        if i == 0:
            k1 = _round_up(9 * cin, 8)
            w_flat = w9.reshape(9 * cin, cout)
            w_packed = jnp.pad(w_flat, ((0, k1 - 9 * cin), (0, 0)))[None]
            w_packed = w_packed.astype(jnp.bfloat16)          # (1, k1, Cout)
        else:
            w_packed = _pack_tap_weights(w9, pair)
        b = jnp.zeros((1, cout), jnp.float32)
        lw = jax.random.uniform(kl_, (cout, 1), jnp.float32)   # non-negative lins
        layers.append({"w": w_packed, "b": b})
        lins.append(lw)
        cin = cout
    return {"conv": layers, "lin": lins}


def perceptual_loss_forward(pred_nchw, target_nchw, params, normalize=False,
                            pair=True):
    """Matches PerceptualLoss.forward(pred, target, normalize): returns [B,1,1,1]."""
    # LPIPS ScalingLayer constants (hard-coded in LPIPS, not checkpoint data).
    shift = jnp.array([-0.030, -0.088, -0.188], jnp.float32)
    scale = jnp.array([0.458, 0.448, 0.450], jnp.float32)
    if normalize:                        # [0,1] -> [-1,1] then (x - shift)/scale
        a = 2.0 / scale
        d = (-1.0 - shift) / scale
    else:
        a = 1.0 / scale
        d = -shift / scale

    B = pred_nchw.shape[0]
    # Interleave (target_n, pred_n) so each grid step owns one pair.
    x = jnp.stack([target_nchw, pred_nchw], axis=1)
    x = x.reshape((2 * B,) + pred_nchw.shape[1:])
    x = jnp.transpose(x, (0, 2, 3, 1)).astype(jnp.float32)       # (2B, H, W, 3)
    x = x * a + d                          # ScalingLayer folded, fuses with pad

    n_layers = len(params["conv"])
    dist = jnp.zeros((B,), jnp.float32)
    h = x
    for i, (layer, lw) in enumerate(zip(params["conv"], params["lin"])):
        pool = i < n_layers - 1
        H, W = h.shape[1], h.shape[2]
        if pool:
            assert H % 2 == 0 and W % 2 == 0
        if i == 0:
            pitch = _round_up(max(W, 2), 16 if pool else 8)
            x_striped = _im2col_layer1(h, pitch)
            groups = ((0,),)
        else:
            pitch = _round_up(W + 2, 16 if pool else 8)
            x_striped = _stripe_pad(h, pitch)
            groups = _tap_offset_groups(pitch, pair)
        mask = _row_mask(H, W, pitch)
        d_l, pooled = fused_conv_lpips_layer(
            x_striped, layer["w"], layer["b"], lw, mask, groups, H, W, pitch, pool)
        dist = dist + d_l
        if pool:
            h = pooled[:, :, :W // 2, :]   # drop junk striped columns (cheap XLA)
    return dist.reshape(B, 1, 1, 1)


# ----------------------------- main -------------------------------------------


if __name__ == "__main__":
    key = jax.random.PRNGKey(0)
    kp, kt, kw = jax.random.split(key, 3)
    B, C, H, W = 2, 3, 16, 16              # NCHW, RGB images in [0, 1]
    pred = jax.random.uniform(kp, (B, C, H, W), jnp.float32)
    target = jax.random.uniform(kt, (B, C, H, W), jnp.float32)

    pair = _should_pair_taps()
    params = init_params(kw, in_ch=C, pair=pair)

    loss_fn = jax.jit(perceptual_loss_forward,
                      static_argnames=("normalize", "pair"))
    dist = loss_fn(pred, target, params, normalize=True, pair=pair)
    dist = jax.block_until_ready(dist)

    assert dist.shape == (B, 1, 1, 1)
    assert bool(jnp.all(jnp.isfinite(dist)))
    print("KERNEL_OK")
</pallas_src>

<mosaic_0001>
module attributes {stable_mosaic.version = 11 : i64} {
  func.func @_fused_layer_kernel(%arg0: i32, %arg1: memref<2x256x32xbf16, #tpu.memory_space<vmem>>, %arg2: memref<1x32x128xbf16, #tpu.memory_space<vmem>>, %arg3: memref<1x128xf32, #tpu.memory_space<vmem>>, %arg4: memref<128x1xf32, #tpu.memory_space<vmem>>, %arg5: memref<256x1xf32, #tpu.memory_space<vmem>>, %arg6: memref<1x8x128xf32, #tpu.memory_space<vmem>>, %arg7: memref<2x8x8x128xbf16, #tpu.memory_space<vmem>>, %arg8: memref<256x128xf32, #tpu.memory_space<vmem>>, %arg9: memref<256x128xf32, #tpu.memory_space<vmem>>) attributes {dimension_semantics = [#tpu.dimension_semantics<parallel>], iteration_bounds = array<i64: 2>, scalar_prefetch = 0 : i64, scratch_operands = 2 : i64, tpu.core_type = #tpu.core_type<tc>, window_params = [{transform_indices = @transform_0, window_bounds = array<i64: 2, 256, 32>}, {pipeline_mode = #tpu.pipeline_mode<synchronous>, transform_indices = @transform_1, window_bounds = array<i64: 1, 32, 128>}, {pipeline_mode = #tpu.pipeline_mode<synchronous>, transform_indices = @transform_2, window_bounds = array<i64: 1, 128>}, {pipeline_mode = #tpu.pipeline_mode<synchronous>, transform_indices = @transform_3, window_bounds = array<i64: 128, 1>}, {pipeline_mode = #tpu.pipeline_mode<synchronous>, transform_indices = @transform_4, window_bounds = array<i64: 256, 1>}, {transform_indices = @transform_5, window_bounds = array<i64: 1, 8, 128>}, {transform_indices = @transform_6, window_bounds = array<i64: 2, 8, 8, 128>}]} {
    %c0 = arith.constant 0 : index
    %c0_0 = arith.constant 0 : index
    %0 = vector.load %arg4[%c0, %c0_0] : memref<128x1xf32, #tpu.memory_space<vmem>>, vector<128x1xf32>
    %1 = arith.truncf %0 : vector<128x1xf32> to vector<128x1xbf16>
    %c0_1 = arith.constant 0 : index
    %c0_2 = arith.constant 0 : index
    %c0_3 = arith.constant 0 : index
    %2 = vector.load %arg1[%c0_1, %c0_2, %c0_3] : memref<2x256x32xbf16, #tpu.memory_space<vmem>>, vector<1x128x32xbf16>
    %3 = vector.shape_cast %2 : vector<1x128x32xbf16> to vector<128x32xbf16>
    %c0_4 = arith.constant 0 : index
    %c0_5 = arith.constant 0 : index
    %c0_6 = arith.constant 0 : index
    %4 = vector.load %arg2[%c0_4, %c0_5, %c0_6] : memref<1x32x128xbf16, #tpu.memory_space<vmem>>, vector<1x32x128xbf16>
    %5 = vector.shape_cast %4 : vector<1x32x128xbf16> to vector<32x128xbf16>
    %cst = arith.constant dense<0.000000e+00> : vector<128x128xf32>
    %6 = tpu.matmul %3, %5, %cst {dimension_numbers = #tpu.dot_dimension_numbers<[1], [0], [0], [1], [0, 0, 1, 1], [], []>} : vector<128x32xbf16>, vector<32x128xbf16>, vector<128x128xf32> -> vector<128x128xf32>
    %c0_7 = arith.constant 0 : index
    %c0_8 = arith.constant 0 : index
    %7 = vector.load %arg3[%c0_7, %c0_8] : memref<1x128xf32, #tpu.memory_space<vmem>>, vector<1x128xf32>
    %8 = vector.broadcast %7 : vector<1x128xf32> to vector<128x128xf32>
    %9 = arith.addf %6, %8 : vector<128x128xf32>
    %cst_9 = arith.constant 0.000000e+00 : f32
    %10 = vector.broadcast %cst_9 : f32 to vector<128x128xf32>
    %11 = arith.maximumf %9, %10 : vector<128x128xf32>
    %c0_10 = arith.constant 0 : index
    %c0_11 = arith.constant 0 : index
    %12 = vector.load %arg8[%c0_10, %c0_11] : memref<256x128xf32, #tpu.memory_space<vmem>>, vector<128x128xf32>
    tpu.vector_store %arg8[%c0_10, %c0_11], %11 {strides = array<i32>} : memref<256x128xf32, #tpu.memory_space<vmem>>, vector<128x128xf32>,
    %c1 = arith.constant 1 : index
    %c0_12 = arith.constant 0 : index
    %c0_13 = arith.constant 0 : index
    %13 = vector.load %arg1[%c1, %c0_12, %c0_13] : memref<2x256x32xbf16, #tpu.memory_space<vmem>>, vector<1x128x32xbf16>
    %14 = vector.shape_cast %13 : vector<1x128x32xbf16> to vector<128x32xbf16>
    %c0_14 = arith.constant 0 : index
    %c0_15 = arith.constant 0 : index
    %c0_16 = arith.constant 0 : index
    %15 = vector.load %arg2[%c0_14, %c0_15, %c0_16] : memref<1x32x128xbf16, #tpu.memory_space<vmem>>, vector<1x32x128xbf16>
    %16 = vector.shape_cast %15 : vector<1x32x128xbf16> to vector<32x128xbf16>
    %cst_17 = arith.constant dense<0.000000e+00> : vector<128x128xf32>
    %17 = tpu.matmul %14, %16, %cst_17 {dimension_numbers = #tpu.dot_dimension_numbers<[1], [0], [0], [1], [0, 0, 1, 1], [], []>} : vector<128x32xbf16>, vector<32x128xbf16>, vector<128x128xf32> -> vector<128x128xf32>
    %c0_18 = arith.constant 0 : index
    %c0_19 = arith.constant 0 : index
    %18 = vector.load %arg3[%c0_18, %c0_19] : memref<1x128xf32, #tpu.memory_space<vmem>>, vector<1x128xf32>
    %19 = vector.broadcast %18 : vector<1x128xf32> to vector<128x128xf32>
    %20 = arith.addf %17, %19 : vector<128x128xf32>
    %cst_20 = arith.constant 0.000000e+00 : f32
    %21 = vector.broadcast %cst_20 : f32 to vector<128x128xf32>
    %22 = arith.maximumf %20, %21 : vector<128x128xf32>
    %c0_21 = arith.constant 0 : index
    %c0_22 = arith.constant 0 : index
    %23 = vector.load %arg9[%c0_21, %c0_22] : memref<256x128xf32, #tpu.memory_space<vmem>>, vector<128x128xf32>
    tpu.vector_store %arg9[%c0_21, %c0_22], %22 {strides = array<i32>} : memref<256x128xf32, #tpu.memory_space<vmem>>, vector<128x128xf32>,
    %24 = arith.mulf %11, %11 : vector<128x128xf32>
    %cst_23 = arith.constant dense<0.000000e+00> : vector<128xf32>
    %25 = vector.multi_reduction <add>, %24, %cst_23 [1] : vector<128x128xf32> to vector<128xf32>
    %26 = vector.shape_cast %25 : vector<128xf32> to vector<128x1xf32>
    %cst_24 = arith.constant 1.000000e-10 : f32
    %27 = vector.broadcast %cst_24 : f32 to vector<128x1xf32>
    %28 = arith.addf %26, %27 : vector<128x1xf32>
    %29 = math.rsqrt %28 : vector<128x1xf32>
    %30 = vector.broadcast %29 : vector<128x1xf32> to vector<128x128xf32>
    %31 = arith.mulf %11, %30 : vector<128x128xf32>
    %32 = arith.mulf %22, %22 : vector<128x128xf32>
    %cst_25 = arith.constant dense<0.000000e+00> : vector<128xf32>
    %33 = vector.multi_reduction <add>, %32, %cst_25 [1] : vector<128x128xf32> to vector<128xf32>
    %34 = vector.shape_cast %33 : vector<128xf32> to vector<128x1xf32>
    %cst_26 = arith.constant 1.000000e-10 : f32
    %35 = vector.broadcast %cst_26 : f32 to vector<128x1xf32>
    %36 = arith.addf %34, %35 : vector<128x1xf32>
    %37 = math.rsqrt %36 : vector<128x1xf32>
    %38 = vector.broadcast %37 : vector<128x1xf32> to vector<128x128xf32>
    %39 = arith.mulf %22, %38 : vector<128x128xf32>
    %40 = arith.subf %31, %39 : vector<128x128xf32>
    %41 = arith.mulf %40, %40 : vector<128x128xf32>
    %42 = arith.truncf %41 : vector<128x128xf32> to vector<128x128xbf16>
    %cst_27 = arith.constant dense<0.000000e+00> : vector<128x1xf32>
    %43 = tpu.matmul %42, %1, %cst_27 {dimension_numbers = #tpu.dot_dimension_numbers<[1], [0], [0], [1], [0, 0, 1, 1], [], []>} : vector<128x128xbf16>, vector<128x1xbf16>, vector<128x1xf32> -> vector<128x1xf32>
    %c0_28 = arith.constant 0 : index
    %c0_29 = arith.constant 0 : index
    %44 = vector.load %arg5[%c0_28, %c0_29] : memref<256x1xf32, #tpu.memory_space<vmem>>, vector<128x1xf32>
    %45 = arith.mulf %43, %44 : vector<128x1xf32>
    %46 = vector.shape_cast %45 : vector<128x1xf32> to vector<1x128x1xf32>
    %cst_30 = arith.constant dense<0.000000e+00> : vector<1xf32>
    %47 = vector.multi_reduction <add>, %46, %cst_30 [1, 2] : vector<1x128x1xf32> to vector<1xf32>
    %48 = vector.shape_cast %47 : vector<1xf32> to vector<1x1x1xf32>
    %49 = vector.extract %48[0, 0, 0] : f32 from vector<1x1x1xf32>
    %cst_31 = arith.constant 0.000000e+00 : f32
    %50 = arith.addf %cst_31, %49 : f32
    %c0_32 = arith.constant 0 : index
    %c128 = arith.constant 128 : index
    %c0_33 = arith.constant 0 : index
    %51 = vector.load %arg1[%c0_32, %c128, %c0_33] : memref<2x256x32xbf16, #tpu.memory_space<vmem>>, vector<1x128x32xbf16>
    %52 = vector.shape_cast %51 : vector<1x128x32xbf16> to vector<128x32xbf16>
    %c0_34 = arith.constant 0 : index
    %c0_35 = arith.constant 0 : index
    %c0_36 = arith.constant 0 : index
    %53 = vector.load %arg2[%c0_34, %c0_35, %c0_36] : memref<1x32x128xbf16, #tpu.memory_space<vmem>>, vector<1x32x128xbf16>
    %54 = vector.shape_cast %53 : vector<1x32x128xbf16> to vector<32x128xbf16>
    %cst_37 = arith.constant dense<0.000000e+00> : vector<128x128xf32>
    %55 = tpu.matmul %52, %54, %cst_37 {dimension_numbers = #tpu.dot_dimension_numbers<[1], [0], [0], [1], [0, 0, 1, 1], [], []>} : vector<128x32xbf16>, vector<32x128xbf16>, vector<128x128xf32> -> vector<128x128xf32>
    %c0_38 = arith.constant 0 : index
    %c0_39 = arith.constant 0 : index
    %56 = vector.load %arg3[%c0_38, %c0_39] : memref<1x128xf32, #tpu.memory_space<vmem>>, vector<1x128xf32>
    %57 = vector.broadcast %56 : vector<1x128xf32> to vector<128x128xf32>
    %58 = arith.addf %55, %57 : vector<128x128xf32>
    %cst_40 = arith.constant 0.000000e+00 : f32
    %59 = vector.broadcast %cst_40 : f32 to vector<128x128xf32>
    %60 = arith.maximumf %58, %59 : vector<128x128xf32>
    %c128_41 = arith.constant 128 : index
    %c0_42 = arith.constant 0 : index
    %61 = vector.load %arg8[%c128_41, %c0_42] : memref<256x128xf32, #tpu.memory_space<vmem>>, vector<128x128xf32>
    tpu.vector_store %arg8[%c128_41, %c0_42], %60 {strides = array<i32>} : memref<256x128xf32, #tpu.memory_space<vmem>>, vector<128x128xf32>,
    %c1_43 = arith.constant 1 : index
    %c128_44 = arith.constant 128 : index
    %c0_45 = arith.constant 0 : index
    %62 = vector.load %arg1[%c1_43, %c128_44, %c0_45] : memref<2x256x32xbf16, #tpu.memory_space<vmem>>, vector<1x128x32xbf16>
    %63 = vector.shape_cast %62 : vector<1x128x32xbf16> to vector<128x32xbf16>
    %c0_46 = arith.constant 0 : index
    %c0_47 = arith.constant 0 : index
    %c0_48 = arith.constant 0 : index
    %64 = vector.load %arg2[%c0_46, %c0_47, %c0_48] : memref<1x32x128xbf16, #tpu.memory_space<vmem>>, vector<1x32x128xbf16>
    %65 = vector.shape_cast %64 : vector<1x32x128xbf16> to vector<32x128xbf16>
    %cst_49 = arith.constant dense<0.000000e+00> : vector<128x128xf32>
    %66 = tpu.matmul %63, %65, %cst_49 {dimension_numbers = #tpu.dot_dimension_numbers<[1], [0], [0], [1], [0, 0, 1, 1], [], []>} : vector<128x32xbf16>, vector<32x128xbf16>, vector<128x128xf32> -> vector<128x128xf32>
    %c0_50 = arith.constant 0 : index
    %c0_51 = arith.constant 0 : index
    %67 = vector.load %arg3[%c0_50, %c0_51] : memref<1x128xf32, #tpu.memory_space<vmem>>, vector<1x128xf32>
    %68 = vector.broadcast %67 : vector<1x128xf32> to vector<128x128xf32>
    %69 = arith.addf %66, %68 : vector<128x128xf32>
    %cst_52 = arith.constant 0.000000e+00 : f32
    %70 = vector.broadcast %cst_52 : f32 to vector<128x128xf32>
    %71 = arith.maximumf %69, %70 : vector<128x128xf32>
    %c128_53 = arith.constant 128 : index
    %c0_54 = arith.constant 0 : index
    %72 = vector.load %arg9[%c128_53, %c0_54] : memref<256x128xf32, #tpu.memory_space<vmem>>, vector<128x128xf32>
    tpu.vector_store %arg9[%c128_53, %c0_54], %71 {strides = array<i32>} : memref<256x128xf32, #tpu.memory_space<vmem>>, vector<128x128xf32>,
    %73 = arith.mulf %60, %60 : vector<128x128xf32>
    %cst_55 = arith.constant dense<0.000000e+00> : vector<128xf32>
    %74 = vector.multi_reduction <add>, %73, %cst_55 [1] : vector<128x128xf32> to vector<128xf32>
    %75 = vector.shape_cast %74 : vector<128xf32> to vector<128x1xf32>
    %cst_56 = arith.constant 1.000000e-10 : f32
    %76 = vector.broadcast %cst_56 : f32 to vector<128x1xf32>
    %77 = arith.addf %75, %76 : vector<128x1xf32>
    %78 = math.rsqrt %77 : vector<128x1xf32>
    %79 = vector.broadcast %78 : vector<128x1xf32> to vector<128x128xf32>
    %80 = arith.mulf %60, %79 : vector<128x128xf32>
    %81 = arith.mulf %71, %71 : vector<128x128xf32>
    %cst_57 = arith.constant dense<0.000000e+00> : vector<128xf32>
    %82 = vector.multi_reduction <add>, %81, %cst_57 [1] : vector<128x128xf32> to vector<128xf32>
    %83 = vector.shape_cast %82 : vector<128xf32> to vector<128x1xf32>
    %cst_58 = arith.constant 1.000000e-10 : f32
    %84 = vector.broadcast %cst_58 : f32 to vector<128x1xf32>
    %85 = arith.addf %83, %84 : vector<128x1xf32>
    %86 = math.rsqrt %85 : vector<128x1xf32>
    %87 = vector.broadcast %86 : vector<128x1xf32> to vector<128x128xf32>
    %88 = arith.mulf %71, %87 : vector<128x128xf32>
    %89 = arith.subf %80, %88 : vector<128x128xf32>
    %90 = arith.mulf %89, %89 : vector<128x128xf32>
    %91 = arith.truncf %90 : vector<128x128xf32> to vector<128x128xbf16>
    %cst_59 = arith.constant dense<0.000000e+00> : vector<128x1xf32>
    %92 = tpu.matmul %91, %1, %cst_59 {dimension_numbers = #tpu.dot_dimension_numbers<[1], [0], [0], [1], [0, 0, 1, 1], [], []>} : vector<128x128xbf16>, vector<128x1xbf16>, vector<128x1xf32> -> vector<128x1xf32>
    %c128_60 = arith.constant 128 : index
    %c0_61 = arith.constant 0 : index
    %93 = vector.load %arg5[%c128_60, %c0_61] : memref<256x1xf32, #tpu.memory_space<vmem>>, vector<128x1xf32>
    %94 = arith.mulf %92, %93 : vector<128x1xf32>
    %95 = vector.shape_cast %94 : vector<128x1xf32> to vector<1x128x1xf32>
    %cst_62 = arith.constant dense<0.000000e+00> : vector<1xf32>
    %96 = vector.multi_reduction <add>, %95, %cst_62 [1, 2] : vector<1x128x1xf32> to vector<1xf32>
    %97 = vector.shape_cast %96 : vector<1xf32> to vector<1x1x1xf32>
    %98 = vector.extract %97[0, 0, 0] : f32 from vector<1x1x1xf32>
    %99 = arith.addf %50, %98 : f32
    %cst_63 = arith.constant 3.906250e-03 : f32
    %100 = arith.mulf %99, %cst_63 : f32
    %cst_64 = arith.constant 1.000000e+00 : f32
    %101 = vector.broadcast %cst_64 : f32 to vector<1x8x128xf32>
    %102 = vector.broadcast %100 : f32 to vector<1x8x128xf32>
    %103 = arith.mulf %102, %101 : vector<1x8x128xf32>
    %c0_65 = arith.constant 0 : index
    %c0_66 = arith.constant 0 : index
    %c0_67 = arith.constant 0 : index
    %104 = vector.load %arg6[%c0_65, %c0_66, %c0_67] : memref<1x8x128xf32, #tpu.memory_space<vmem>>, vector<1x8x128xf32>
    tpu.vector_store %arg6[%c0_65, %c0_66, %c0_67], %103 {strides = array<i32>} : memref<1x8x128xf32, #tpu.memory_space<vmem>>, vector<1x8x128xf32>,
    %c0_68 = arith.constant 0 : index
    %c0_69 = arith.constant 0 : index
    %105 = tpu.strided_load %arg8[%c0_68, %c0_69] {strides = array<i32: 2, 1>} : memref<256x128xf32, #tpu.memory_space<vmem>>, vector<128x128xf32>
    %c1_70 = arith.constant 1 : index
    %c0_71 = arith.constant 0 : index
    %106 = tpu.strided_load %arg8[%c1_70, %c0_71] {strides = array<i32: 2, 1>} : memref<256x128xf32, #tpu.memory_space<vmem>>, vector<128x128xf32>
    %107 = arith.maximumf %105, %106 : vector<128x128xf32>
    %108 = vector.shape_cast %107 : vector<128x128xf32> to vector<8x16x128xf32>
    %109 = vector.extract_strided_slice %108 {offsets = [0, 0, 0], sizes = [8, 8, 128], strides = [1, 1, 1]} : vector<8x16x128xf32> to vector<8x8x128xf32>
    %110 = vector.extract_strided_slice %108 {offsets = [0, 8, 0], sizes = [8, 8, 128], strides = [1, 1, 1]} : vector<8x16x128xf32> to vector<8x8x128xf32>
    %111 = arith.maximumf %109, %110 : vector<8x8x128xf32>
    %112 = arith.truncf %111 : vector<8x8x128xf32> to vector<8x8x128xbf16>
    %c0_72 = arith.constant 0 : index
    %c0_73 = arith.constant 0 : index
    %c0_74 = arith.constant 0 : index
    %c0_75 = arith.constant 0 : index
    %113 = vector.load %arg7[%c0_72, %c0_73, %c0_74, %c0_75] : memref<2x8x8x128xbf16, #tpu.memory_space<vmem>>, vector<1x8x8x128xbf16>
    %114 = vector.shape_cast %113 : vector<1x8x8x128xbf16> to vector<8x8x128xbf16>
    %115 = vector.shape_cast %112 : vector<8x8x128xbf16> to vector<1x8x8x128xbf16>
    tpu.vector_store %arg7[%c0_72, %c0_73, %c0_74, %c0_75], %115 {strides = array<i32>} : memref<2x8x8x128xbf16, #tpu.memory_space<vmem>>, vector<1x8x8x128xbf16>,
    %c0_76 = arith.constant 0 : index
    %c0_77 = arith.constant 0 : index
    %116 = tpu.strided_load %arg9[%c0_76, %c0_77] {strides = array<i32: 2, 1>} : memref<256x128xf32, #tpu.memory_space<vmem>>, vector<128x128xf32>
    %c1_78 = arith.constant 1 : index
    %c0_79 = arith.constant 0 : index
    %117 = tpu.strided_load %arg9[%c1_78, %c0_79] {strides = array<i32: 2, 1>} : memref<256x128xf32, #tpu.memory_space<vmem>>, vector<128x128xf32>
    %118 = arith.maximumf %116, %117 : vector<128x128xf32>
    %119 = vector.shape_cast %118 : vector<128x128xf32> to vector<8x16x128xf32>
    %120 = vector.extract_strided_slice %119 {offsets = [0, 0, 0], sizes = [8, 8, 128], strides = [1, 1, 1]} : vector<8x16x128xf32> to vector<8x8x128xf32>
    %121 = vector.extract_strided_slice %119 {offsets = [0, 8, 0], sizes = [8, 8, 128], strides = [1, 1, 1]} : vector<8x16x128xf32> to vector<8x8x128xf32>
    %122 = arith.maximumf %120, %121 : vector<8x8x128xf32>
    %123 = arith.truncf %122 : vector<8x8x128xf32> to vector<8x8x128xbf16>
    %c1_80 = arith.constant 1 : index
    %c0_81 = arith.constant 0 : index
    %c0_82 = arith.constant 0 : index
    %c0_83 = arith.constant 0 : index
    %124 = vector.load %arg7[%c1_80, %c0_81, %c0_82, %c0_83] : memref<2x8x8x128xbf16, #tpu.memory_space<vmem>>, vector<1x8x8x128xbf16>
    %125 = vector.shape_cast %124 : vector<1x8x8x128xbf16> to vector<8x8x128xbf16>
    %126 = vector.shape_cast %123 : vector<8x8x128xbf16> to vector<1x8x8x128xbf16>
    tpu.vector_store %arg7[%c1_80, %c0_81, %c0_82, %c0_83], %126 {strides = array<i32>} : memref<2x8x8x128xbf16, #tpu.memory_space<vmem>>, vector<1x8x8x128xbf16>,
    return
  }
  func.func @transform_0(%arg0: i32) -> (i32, i32, i32) {
    %c0_i32 = arith.constant 0 : i32
    %c0_i32_0 = arith.constant 0 : i32
    %c0_i32_1 = arith.constant 0 : i32
    return %arg0, %c0_i32, %c0_i32_0 : i32, i32, i32
  }
  func.func @transform_1(%arg0: i32) -> (i32, i32, i32) {
    %c0_i32 = arith.constant 0 : i32
    %c0_i32_0 = arith.constant 0 : i32
    %c0_i32_1 = arith.constant 0 : i32
    %c0_i32_2 = arith.constant 0 : i32
    return %c0_i32, %c0_i32_0, %c0_i32_1 : i32, i32, i32
  }
  func.func @transform_2(%arg0: i32) -> (i32, i32) {
    %c0_i32 = arith.constant 0 : i32
    %c0_i32_0 = arith.constant 0 : i32
    %c0_i32_1 = arith.constant 0 : i32
    return %c0_i32, %c0_i32_0 : i32, i32
  }
  func.func @transform_3(%arg0: i32) -> (i32, i32) {
    %c0_i32 = arith.constant 0 : i32
    %c0_i32_0 = arith.constant 0 : i32
    %c0_i32_1 = arith.constant 0 : i32
    return %c0_i32, %c0_i32_0 : i32, i32
  }
  func.func @transform_4(%arg0: i32) -> (i32, i32) {
    %c0_i32 = arith.constant 0 : i32
    %c0_i32_0 = arith.constant 0 : i32
    %c0_i32_1 = arith.constant 0 : i32
    return %c0_i32, %c0_i32_0 : i32, i32
  }
  func.func @transform_5(%arg0: i32) -> (i32, i32, i32) {
    %c0_i32 = arith.constant 0 : i32
    %c0_i32_0 = arith.constant 0 : i32
    %c0_i32_1 = arith.constant 0 : i32
    return %arg0, %c0_i32, %c0_i32_0 : i32, i32, i32
  }
  func.func @transform_6(%arg0: i32) -> (i32, i32, i32, i32) {
    %c0_i32 = arith.constant 0 : i32
    %c0_i32_0 = arith.constant 0 : i32
    %c0_i32_1 = arith.constant 0 : i32
    %c0_i32_2 = arith.constant 0 : i32
    return %arg0, %c0_i32, %c0_i32_0, %c0_i32_1 : i32, i32, i32, i32
  }
}

module attributes {stable_mosaic.version = 11 : i64} {
  func.func @_fused_layer_kernel(%arg0: i32, %arg1: memref<2x168x128xbf16, #tpu.memory_space<vmem>>, %arg2: memref<5x256x128xbf16, #tpu.memory_space<vmem>>, %arg3: memref<1x128xf32, #tpu.memory_space<vmem>>, %arg4: memref<128x1xf32, #tpu.memory_space<vmem>>, %arg5: memref<128x1xf32, #tpu.memory_space<vmem>>, %arg6: memref<1x8x128xf32, #tpu.memory_space<vmem>>, %arg7: memref<2x4x8x128xbf16, #tpu.memory_space<vmem>>, %arg8: memref<128x128xf32, #tpu.memory_space<vmem>>, %arg9: memref<128x128xf32, #tpu.memory_space<vmem>>) attributes {dimension_semantics = [#tpu.dimension_semantics<parallel>], iteration_bounds = array<i64: 2>, scalar_prefetch = 0 : i64, scratch_operands = 2 : i64, tpu.core_type = #tpu.core_type<tc>, window_params = [{transform_indices = @transform_0, window_bounds = array<i64: 2, 168, 128>}, {pipeline_mode = #tpu.pipeline_mode<synchronous>, transform_indices = @transform_1, window_bounds = array<i64: 5, 256, 128>}, {pipeline_mode = #tpu.pipeline_mode<synchronous>, transform_indices = @transform_2, window_bounds = array<i64: 1, 128>}, {pipeline_mode = #tpu.pipeline_mode<synchronous>, transform_indices = @transform_3, window_bounds = array<i64: 128, 1>}, {pipeline_mode = #tpu.pipeline_mode<synchronous>, transform_indices = @transform_4, window_bounds = array<i64: 128, 1>}, {transform_indices = @transform_5, window_bounds = array<i64: 1, 8, 128>}, {transform_indices = @transform_6, window_bounds = array<i64: 2, 4, 8, 128>}]} {
    %c0 = arith.constant 0 : index
    %c0_0 = arith.constant 0 : index
    %0 = vector.load %arg4[%c0, %c0_0] : memref<128x1xf32, #tpu.memory_space<vmem>>, vector<128x1xf32>
    %1 = arith.truncf %0 : vector<128x1xf32> to vector<128x1xbf16>
    %c0_1 = arith.constant 0 : index
    %c0_2 = arith.constant 0 : index
    %c0_3 = arith.constant 0 : index
    %2 = vector.load %arg1[%c0_1, %c0_2, %c0_3] : memref<2x168x128xbf16, #tpu.memory_space<vmem>>, vector<1x128x128xbf16>
    %3 = vector.shape_cast %2 : vector<1x128x128xbf16> to vector<128x128xbf16>
    %c0_4 = arith.constant 0 : index
    %c1 = arith.constant 1 : index
    %c0_5 = arith.constant 0 : index
    %4 = vector.load %arg1[%c0_4, %c1, %c0_5] : memref<2x168x128xbf16, #tpu.memory_space<vmem>>, vector<1x128x128xbf16>
    %5 = vector.shape_cast %4 : vector<1x128x128xbf16> to vector<128x128xbf16>
    %6 = tpu.concatenate %3, %5 in 1 : vector<128x128xbf16>, vector<128x128xbf16> -> vector<128x256xbf16>
    %c0_6 = arith.constant 0 : index
    %c0_7 = arith.constant 0 : index
    %c0_8 = arith.constant 0 : index
    %7 = vector.load %arg2[%c0_6, %c0_7, %c0_8] : memref<5x256x128xbf16, #tpu.memory_space<vmem>>, vector<1x256x128xbf16>
    %8 = vector.shape_cast %7 : vector<1x256x128xbf16> to vector<256x128xbf16>
    %cst = arith.constant dense<0.000000e+00> : vector<128x128xf32>
    %9 = tpu.matmul %6, %8, %cst {dimension_numbers = #tpu.dot_dimension_numbers<[1], [0], [0], [1], [0, 0, 1, 1], [], []>} : vector<128x256xbf16>, vector<256x128xbf16>, vector<128x128xf32> -> vector<128x128xf32>
    %c0_9 = arith.constant 0 : index
    %c2 = arith.constant 2 : index
    %c0_10 = arith.constant 0 : index
    %10 = vector.load %arg1[%c0_9, %c2, %c0_10] : memref<2x168x128xbf16, #tpu.memory_space<vmem>>, vector<1x128x128xbf16>
    %11 = vector.shape_cast %10 : vector<1x128x128xbf16> to vector<128x128xbf16>
    %c0_11 = arith.constant 0 : index
    %c16 = arith.constant 16 : index
    %c0_12 = arith.constant 0 : index
    %12 = vector.load %arg1[%c0_11, %c16, %c0_12] : memref<2x168x128xbf16, #tpu.memory_space<vmem>>, vector<1x128x128xbf16>
    %13 = vector.shape_cast %12 : vector<1x128x128xbf16> to vector<128x128xbf16>
    %14 = tpu.concatenate %11, %13 in 1 : vector<128x128xbf16>, vector<128x128xbf16> -> vector<128x256xbf16>
    %c1_13 = arith.constant 1 : index
    %c0_14 = arith.constant 0 : index
    %c0_15 = arith.constant 0 : index
    %15 = vector.load %arg2[%c1_13, %c0_14, %c0_15] : memref<5x256x128xbf16, #tpu.memory_space<vmem>>, vector<1x256x128xbf16>
    %16 = vector.shape_cast %15 : vector<1x256x128xbf16> to vector<256x128xbf16>
    %cst_16 = arith.constant dense<0.000000e+00> : vector<128x128xf32>
    %17 = tpu.matmul %14, %16, %cst_16 {dimension_numbers = #tpu.dot_dimension_numbers<[1], [0], [0], [1], [0, 0, 1, 1], [], []>} : vector<128x256xbf16>, vector<256x128xbf16>, vector<128x128xf32> -> vector<128x128xf32>
    %18 = arith.addf %9, %17 : vector<128x128xf32>
    %c0_17 = arith.constant 0 : index
    %c17 = arith.constant 17 : index
    %c0_18 = arith.constant 0 : index
    %19 = vector.load %arg1[%c0_17, %c17, %c0_18] : memref<2x168x128xbf16, #tpu.memory_space<vmem>>, vector<1x128x128xbf16>
    %20 = vector.shape_cast %19 : vector<1x128x128xbf16> to vector<128x128xbf16>
    %c0_19 = arith.constant 0 : index
    %c18 = arith.constant 18 : index
    %c0_20 = arith.constant 0 : index
    %21 = vector.load %arg1[%c0_19, %c18, %c0_20] : memref<2x168x128xbf16, #tpu.memory_space<vmem>>, vector<1x128x128xbf16>
    %22 = vector.shape_cast %21 : vector<1x128x128xbf16> to vector<128x128xbf16>
    %23 = tpu.concatenate %20, %22 in 1 : vector<128x128xbf16>, vector<128x128xbf16> -> vector<128x256xbf16>
    %c2_21 = arith.constant 2 : index
    %c0_22 = arith.constant 0 : index
    %c0_23 = arith.constant 0 : index
    %24 = vector.load %arg2[%c2_21, %c0_22, %c0_23] : memref<5x256x128xbf16, #tpu.memory_space<vmem>>, vector<1x256x128xbf16>
    %25 = vector.shape_cast %24 : vector<1x256x128xbf16> to vector<256x128xbf16>
    %cst_24 = arith.constant dense<0.000000e+00> : vector<128x128xf32>
    %26 = tpu.matmul %23, %25, %cst_24 {dimension_numbers = #tpu.dot_dimension_numbers<[1], [0], [0], [1], [0, 0, 1, 1], [], []>} : vector<128x256xbf16>, vector<256x128xbf16>, vector<128x128xf32> -> vector<128x128xf32>
    %27 = arith.addf %18, %26 : vector<128x128xf32>
    %c0_25 = arith.constant 0 : index
    %c32 = arith.constant 32 : index
    %c0_26 = arith.constant 0 : index
    %28 = vector.load %arg1[%c0_25, %c32, %c0_26] : memref<2x168x128xbf16, #tpu.memory_space<vmem>>, vector<1x128x128xbf16>
    %29 = vector.shape_cast %28 : vector<1x128x128xbf16> to vector<128x128xbf16>
    %c0_27 = arith.constant 0 : index
    %c33 = arith.constant 33 : index
    %c0_28 = arith.constant 0 : index
    %30 = vector.load %arg1[%c0_27, %c33, %c0_28] : memref<2x168x128xbf16, #tpu.memory_space<vmem>>, vector<1x128x128xbf16>
    %31 = vector.shape_cast %30 : vector<1x128x128xbf16> to vector<128x128xbf16>
    %32 = tpu.concatenate %29, %31 in 1 : vector<128x128xbf16>, vector<128x128xbf16> -> vector<128x256xbf16>
    %c3 = arith.constant 3 : index
    %c0_29 = arith.constant 0 : index
    %c0_30 = arith.constant 0 : index
    %33 = vector.load %arg2[%c3, %c0_29, %c0_30] : memref<5x256x128xbf16, #tpu.memory_space<vmem>>, vector<1x256x128xbf16>
    %34 = vector.shape_cast %33 : vector<1x256x128xbf16> to vector<256x128xbf16>
    %cst_31 = arith.constant dense<0.000000e+00> : vector<128x128xf32>
    %35 = tpu.matmul %32, %34, %cst_31 {dimension_numbers = #tpu.dot_dimension_numbers<[1], [0], [0], [1], [0, 0, 1, 1], [], []>} : vector<128x256xbf16>, vector<256x128xbf16>, vector<128x128xf32> -> vector<128x128xf32>
    %36 = arith.addf %27, %35 : vector<128x128xf32>
    %c0_32 = arith.constant 0 : index
    %c34 = arith.constant 34 : index
    %c0_33 = arith.constant 0 : index
    %37 = vector.load %arg1[%c0_32, %c34, %c0_33] : memref<2x168x128xbf16, #tpu.memory_space<vmem>>, vector<1x128x128xbf16>
    %38 = vector.shape_cast %37 : vector<1x128x128xbf16> to vector<128x128xbf16>
    %c0_34 = arith.constant 0 : index
    %c0_35 = arith.constant 0 : index
    %c0_36 = arith.constant 0 : index
    %39 = vector.load %arg1[%c0_34, %c0_35, %c0_36] : memref<2x168x128xbf16, #tpu.memory_space<vmem>>, vector<1x128x128xbf16>
    %40 = vector.shape_cast %39 : vector<1x128x128xbf16> to vector<128x128xbf16>
    %41 = tpu.concatenate %38, %40 in 1 : vector<128x128xbf16>, vector<128x128xbf16> -> vector<128x256xbf16>
    %c4 = arith.constant 4 : index
    %c0_37 = arith.constant 0 : index
    %c0_38 = arith.constant 0 : index
    %42 = vector.load %arg2[%c4, %c0_37, %c0_38] : memref<5x256x128xbf16, #tpu.memory_space<vmem>>, vector<1x256x128xbf16>
    %43 = vector.shape_cast %42 : vector<1x256x128xbf16> to vector<256x128xbf16>
    %cst_39 = arith.constant dense<0.000000e+00> : vector<128x128xf32>
    %44 = tpu.matmul %41, %43, %cst_39 {dimension_numbers = #tpu.dot_dimension_numbers<[1], [0], [0], [1], [0, 0, 1, 1], [], []>} : vector<128x256xbf16>, vector<256x128xbf16>, vector<128x128xf32> -> vector<128x128xf32>
    %45 = arith.addf %36, %44 : vector<128x128xf32>
    %c0_40 = arith.constant 0 : index
    %c0_41 = arith.constant 0 : index
    %46 = vector.load %arg3[%c0_40, %c0_41] : memref<1x128xf32, #tpu.memory_space<vmem>>, vector<1x128xf32>
    %47 = vector.broadcast %46 : vector<1x128xf32> to vector<128x128xf32>
    %48 = arith.addf %45, %47 : vector<128x128xf32>
    %cst_42 = arith.constant 0.000000e+00 : f32
    %49 = vector.broadcast %cst_42 : f32 to vector<128x128xf32>
    %50 = arith.maximumf %48, %49 : vector<128x128xf32>
    %c0_43 = arith.constant 0 : index
    %c0_44 = arith.constant 0 : index
    %51 = vector.load %arg8[%c0_43, %c0_44] : memref<128x128xf32, #tpu.memory_space<vmem>>, vector<128x128xf32>
    tpu.vector_store %arg8[%c0_43, %c0_44], %50 {strides = array<i32>} : memref<128x128xf32, #tpu.memory_space<vmem>>, vector<128x128xf32>,
    %c1_45 = arith.constant 1 : index
    %c0_46 = arith.constant 0 : index
    %c0_47 = arith.constant 0 : index
    %52 = vector.load %arg1[%c1_45, %c0_46, %c0_47] : memref<2x168x128xbf16, #tpu.memory_space<vmem>>, vector<1x128x128xbf16>
    %53 = vector.shape_cast %52 : vector<1x128x128xbf16> to vector<128x128xbf16>
    %c1_48 = arith.constant 1 : index
    %c1_49 = arith.constant 1 : index
    %c0_50 = arith.constant 0 : index
    %54 = vector.load %arg1[%c1_48, %c1_49, %c0_50] : memref<2x168x128xbf16, #tpu.memory_space<vmem>>, vector<1x128x128xbf16>
    %55 = vector.shape_cast %54 : vector<1x128x128xbf16> to vector<128x128xbf16>
    %56 = tpu.concatenate %53, %55 in 1 : vector<128x128xbf16>, vector<128x128xbf16> -> vector<128x256xbf16>
    %c0_51 = arith.constant 0 : index
    %c0_52 = arith.constant 0 : index
    %c0_53 = arith.constant 0 : index
    %57 = vector.load %arg2[%c0_51, %c0_52, %c0_53] : memref<5x256x128xbf16, #tpu.memory_space<vmem>>, vector<1x256x128xbf16>
    %58 = vector.shape_cast %57 : vector<1x256x128xbf16> to vector<256x128xbf16>
    %cst_54 = arith.constant dense<0.000000e+00> : vector<128x128xf32>
    %59 = tpu.matmul %56, %58, %cst_54 {dimension_numbers = #tpu.dot_dimension_numbers<[1], [0], [0], [1], [0, 0, 1, 1], [], []>} : vector<128x256xbf16>, vector<256x128xbf16>, vector<128x128xf32> -> vector<128x128xf32>
    %c1_55 = arith.constant 1 : index
    %c2_56 = arith.constant 2 : index
    %c0_57 = arith.constant 0 : index
    %60 = vector.load %arg1[%c1_55, %c2_56, %c0_57] : memref<2x168x128xbf16, #tpu.memory_space<vmem>>, vector<1x128x128xbf16>
    %61 = vector.shape_cast %60 : vector<1x128x128xbf16> to vector<128x128xbf16>
    %c1_58 = arith.constant 1 : index
    %c16_59 = arith.constant 16 : index
    %c0_60 = arith.constant 0 : index
    %62 = vector.load %arg1[%c1_58, %c16_59, %c0_60] : memref<2x168x128xbf16, #tpu.memory_space<vmem>>, vector<1x128x128xbf16>
    %63 = vector.shape_cast %62 : vector<1x128x128xbf16> to vector<128x128xbf16>
    %64 = tpu.concatenate %61, %63 in 1 : vector<128x128xbf16>, vector<128x128xbf16> -> vector<128x256xbf16>
    %c1_61 = arith.constant 1 : index
    %c0_62 = arith.constant 0 : index
    %c0_63 = arith.constant 0 : index
    %65 = vector.load %arg2[%c1_61, %c0_62, %c0_63] : memref<5x256x128xbf16, #tpu.memory_space<vmem>>, vector<1x256x128xbf16>
    %66 = vector.shape_cast %65 : vector<1x256x128xbf16> to vector<256x128xbf16>
    %cst_64 = arith.constant dense<0.000000e+00> : vector<128x128xf32>
    %67 = tpu.matmul %64, %66, %cst_64 {dimension_numbers = #tpu.dot_dimension_numbers<[1], [0], [0], [1], [0, 0, 1, 1], [], []>} : vector<128x256xbf16>, vector<256x128xbf16>, vector<128x128xf32> -> vector<128x128xf32>
    %68 = arith.addf %59, %67 : vector<128x128xf32>
    %c1_65 = arith.constant 1 : index
    %c17_66 = arith.constant 17 : index
    %c0_67 = arith.constant 0 : index
    %69 = vector.load %arg1[%c1_65, %c17_66, %c0_67] : memref<2x168x128xbf16, #tpu.memory_space<vmem>>, vector<1x128x128xbf16>
    %70 = vector.shape_cast %69 : vector<1x128x128xbf16> to vector<128x128xbf16>
    %c1_68 = arith.constant 1 : index
    %c18_69 = arith.constant 18 : index
    %c0_70 = arith.constant 0 : index
    %71 = vector.load %arg1[%c1_68, %c18_69, %c0_70] : memref<2x168x128xbf16, #tpu.memory_space<vmem>>, vector<1x128x128xbf16>
    %72 = vector.shape_cast %71 : vector<1x128x128xbf16> to vector<128x128xbf16>
    %73 = tpu.concatenate %70, %72 in 1 : vector<128x128xbf16>, vector<128x128xbf16> -> vector<128x256xbf16>
    %c2_71 = arith.constant 2 : index
    %c0_72 = arith.constant 0 : index
    %c0_73 = arith.constant 0 : index
    %74 = vector.load %arg2[%c2_71, %c0_72, %c0_73] : memref<5x256x128xbf16, #tpu.memory_space<vmem>>, vector<1x256x128xbf16>
    %75 = vector.shape_cast %74 : vector<1x256x128xbf16> to vector<256x128xbf16>
    %cst_74 = arith.constant dense<0.000000e+00> : vector<128x128xf32>
    %76 = tpu.matmul %73, %75, %cst_74 {dimension_numbers = #tpu.dot_dimension_numbers<[1], [0], [0], [1], [0, 0, 1, 1], [], []>} : vector<128x256xbf16>, vector<256x128xbf16>, vector<128x128xf32> -> vector<128x128xf32>
    %77 = arith.addf %68, %76 : vector<128x128xf32>
    %c1_75 = arith.constant 1 : index
    %c32_76 = arith.constant 32 : index
    %c0_77 = arith.constant 0 : index
    %78 = vector.load %arg1[%c1_75, %c32_76, %c0_77] : memref<2x168x128xbf16, #tpu.memory_space<vmem>>, vector<1x128x128xbf16>
    %79 = vector.shape_cast %78 : vector<1x128x128xbf16> to vector<128x128xbf16>
    %c1_78 = arith.constant 1 : index
    %c33_79 = arith.constant 33 : index
    %c0_80 = arith.constant 0 : index
    %80 = vector.load %arg1[%c1_78, %c33_79, %c0_80] : memref<2x168x128xbf16, #tpu.memory_space<vmem>>, vector<1x128x128xbf16>
    %81 = vector.shape_cast %80 : vector<1x128x128xbf16> to vector<128x128xbf16>
    %82 = tpu.concatenate %79, %81 in 1 : vector<128x128xbf16>, vector<128x128xbf16> -> vector<128x256xbf16>
    %c3_81 = arith.constant 3 : index
    %c0_82 = arith.constant 0 : index
    %c0_83 = arith.constant 0 : index
    %83 = vector.load %arg2[%c3_81, %c0_82, %c0_83] : memref<5x256x128xbf16, #tpu.memory_space<vmem>>, vector<1x256x128xbf16>
    %84 = vector.shape_cast %83 : vector<1x256x128xbf16> to vector<256x128xbf16>
    %cst_84 = arith.constant dense<0.000000e+00> : vector<128x128xf32>
    %85 = tpu.matmul %82, %84, %cst_84 {dimension_numbers = #tpu.dot_dimension_numbers<[1], [0], [0], [1], [0, 0, 1, 1], [], []>} : vector<128x256xbf16>, vector<256x128xbf16>, vector<128x128xf32> -> vector<128x128xf32>
    %86 = arith.addf %77, %85 : vector<128x128xf32>
    %c1_85 = arith.constant 1 : index
    %c34_86 = arith.constant 34 : index
    %c0_87 = arith.constant 0 : index
    %87 = vector.load %arg1[%c1_85, %c34_86, %c0_87] : memref<2x168x128xbf16, #tpu.memory_space<vmem>>, vector<1x128x128xbf16>
    %88 = vector.shape_cast %87 : vector<1x128x128xbf16> to vector<128x128xbf16>
    %c1_88 = arith.constant 1 : index
    %c0_89 = arith.constant 0 : index
    %c0_90 = arith.constant 0 : index
    %89 = vector.load %arg1[%c1_88, %c0_89, %c0_90] : memref<2x168x128xbf16, #tpu.memory_space<vmem>>, vector<1x128x128xbf16>
    %90 = vector.shape_cast %89 : vector<1x128x128xbf16> to vector<128x128xbf16>
    %91 = tpu.concatenate %88, %90 in 1 : vector<128x128xbf16>, vector<128x128xbf16> -> vector<128x256xbf16>
    %c4_91 = arith.constant 4 : index
    %c0_92 = arith.constant 0 : index
    %c0_93 = arith.constant 0 : index
    %92 = vector.load %arg2[%c4_91, %c0_92, %c0_93] : memref<5x256x128xbf16, #tpu.memory_space<vmem>>, vector<1x256x128xbf16>
    %93 = vector.shape_cast %92 : vector<1x256x128xbf16> to vector<256x128xbf16>
    %cst_94 = arith.constant dense<0.000000e+00> : vector<128x128xf32>
    %94 = tpu.matmul %91, %93, %cst_94 {dimension_numbers = #tpu.dot_dimension_numbers<[1], [0], [0], [1], [0, 0, 1, 1], [], []>} : vector<128x256xbf16>, vector<256x128xbf16>, vector<128x128xf32> -> vector<128x128xf32>
    %95 = arith.addf %86, %94 : vector<128x128xf32>
    %c0_95 = arith.constant 0 : index
    %c0_96 = arith.constant 0 : index
    %96 = vector.load %arg3[%c0_95, %c0_96] : memref<1x128xf32, #tpu.memory_space<vmem>>, vector<1x128xf32>
    %97 = vector.broadcast %96 : vector<1x128xf32> to vector<128x128xf32>
    %98 = arith.addf %95, %97 : vector<128x128xf32>
    %cst_97 = arith.constant 0.000000e+00 : f32
    %99 = vector.broadcast %cst_97 : f32 to vector<128x128xf32>
    %100 = arith.maximumf %98, %99 : vector<128x128xf32>
    %c0_98 = arith.constant 0 : index
    %c0_99 = arith.constant 0 : index
    %101 = vector.load %arg9[%c0_98, %c0_99] : memref<128x128xf32, #tpu.memory_space<vmem>>, vector<128x128xf32>
    tpu.vector_store %arg9[%c0_98, %c0_99], %100 {strides = array<i32>} : memref<128x128xf32, #tpu.memory_space<vmem>>, vector<128x128xf32>,
    %102 = arith.mulf %50, %50 : vector<128x128xf32>
    %cst_100 = arith.constant dense<0.000000e+00> : vector<128xf32>
    %103 = vector.multi_reduction <add>, %102, %cst_100 [1] : vector<128x128xf32> to vector<128xf32>
    %104 = vector.shape_cast %103 : vector<128xf32> to vector<128x1xf32>
    %cst_101 = arith.constant 1.000000e-10 : f32
    %105 = vector.broadcast %cst_101 : f32 to vector<128x1xf32>
    %106 = arith.addf %104, %105 : vector<128x1xf32>
    %107 = math.rsqrt %106 : vector<128x1xf32>
    %108 = vector.broadcast %107 : vector<128x1xf32> to vector<128x128xf32>
    %109 = arith.mulf %50, %108 : vector<128x128xf32>
    %110 = arith.mulf %100, %100 : vector<128x128xf32>
    %cst_102 = arith.constant dense<0.000000e+00> : vector<128xf32>
    %111 = vector.multi_reduction <add>, %110, %cst_102 [1] : vector<128x128xf32> to vector<128xf32>
    %112 = vector.shape_cast %111 : vector<128xf32> to vector<128x1xf32>
    %cst_103 = arith.constant 1.000000e-10 : f32
    %113 = vector.broadcast %cst_103 : f32 to vector<128x1xf32>
    %114 = arith.addf %112, %113 : vector<128x1xf32>
    %115 = math.rsqrt %114 : vector<128x1xf32>
    %116 = vector.broadcast %115 : vector<128x1xf32> to vector<128x128xf32>
    %117 = arith.mulf %100, %116 : vector<128x128xf32>
    %118 = arith.subf %109, %117 : vector<128x128xf32>
    %119 = arith.mulf %118, %118 : vector<128x128xf32>
    %120 = arith.truncf %119 : vector<128x128xf32> to vector<128x128xbf16>
    %cst_104 = arith.constant dense<0.000000e+00> : vector<128x1xf32>
    %121 = tpu.matmul %120, %1, %cst_104 {dimension_numbers = #tpu.dot_dimension_numbers<[1], [0], [0], [1], [0, 0, 1, 1], [], []>} : vector<128x128xbf16>, vector<128x1xbf16>, vector<128x1xf32> -> vector<128x1xf32>
    %c0_105 = arith.constant 0 : index
    %c0_106 = arith.constant 0 : index
    %122 = vector.load %arg5[%c0_105, %c0_106] : memref<128x1xf32, #tpu.memory_space<vmem>>, vector<128x1xf32>
    %123 = arith.mulf %121, %122 : vector<128x1xf32>
    %124 = vector.shape_cast %123 : vector<128x1xf32> to vector<1x128x1xf32>
    %cst_107 = arith.constant dense<0.000000e+00> : vector<1xf32>
    %125 = vector.multi_reduction <add>, %124, %cst_107 [1, 2] : vector<1x128x1xf32> to vector<1xf32>
    %126 = vector.shape_cast %125 : vector<1xf32> to vector<1x1x1xf32>
    %127 = vector.extract %126[0, 0, 0] : f32 from vector<1x1x1xf32>
    %cst_108 = arith.constant 0.000000e+00 : f32
    %128 = arith.addf %cst_108, %127 : f32
    %cst_109 = arith.constant 1.562500e-02 : f32
    %129 = arith.mulf %128, %cst_109 : f32
    %cst_110 = arith.constant 1.000000e+00 : f32
    %130 = vector.broadcast %cst_110 : f32 to vector<1x8x128xf32>
    %131 = vector.broadcast %129 : f32 to vector<1x8x128xf32>
    %132 = arith.mulf %131, %130 : vector<1x8x128xf32>
    %c0_111 = arith.constant 0 : index
    %c0_112 = arith.constant 0 : index
    %c0_113 = arith.constant 0 : index
    %133 = vector.load %arg6[%c0_111, %c0_112, %c0_113] : memref<1x8x128xf32, #tpu.memory_space<vmem>>, vector<1x8x128xf32>
    tpu.vector_store %arg6[%c0_111, %c0_112, %c0_113], %132 {strides = array<i32>} : memref<1x8x128xf32, #tpu.memory_space<vmem>>, vector<1x8x128xf32>,
    %c0_114 = arith.constant 0 : index
    %c0_115 = arith.constant 0 : index
    %134 = tpu.strided_load %arg8[%c0_114, %c0_115] {strides = array<i32: 2, 1>} : memref<128x128xf32, #tpu.memory_space<vmem>>, vector<64x128xf32>
    %c1_116 = arith.constant 1 : index
    %c0_117 = arith.constant 0 : index
    %135 = tpu.strided_load %arg8[%c1_116, %c0_117] {strides = array<i32: 2, 1>} : memref<128x128xf32, #tpu.memory_space<vmem>>, vector<64x128xf32>
    %136 = arith.maximumf %134, %135 : vector<64x128xf32>
    %137 = vector.shape_cast %136 : vector<64x128xf32> to vector<4x16x128xf32>
    %138 = vector.extract_strided_slice %137 {offsets = [0, 0, 0], sizes = [4, 8, 128], strides = [1, 1, 1]} : vector<4x16x128xf32> to vector<4x8x128xf32>
    %139 = vector.extract_strided_slice %137 {offsets = [0, 8, 0], sizes = [4, 8, 128], strides = [1, 1, 1]} : vector<4x16x128xf32> to vector<4x8x128xf32>
    %140 = arith.maximumf %138, %139 : vector<4x8x128xf32>
    %141 = arith.truncf %140 : vector<4x8x128xf32> to vector<4x8x128xbf16>
    %c0_118 = arith.constant 0 : index
    %c0_119 = arith.constant 0 : index
    %c0_120 = arith.constant 0 : index
    %c0_121 = arith.constant 0 : index
    %142 = vector.load %arg7[%c0_118, %c0_119, %c0_120, %c0_121] : memref<2x4x8x128xbf16, #tpu.memory_space<vmem>>, vector<1x4x8x128xbf16>
    %143 = vector.shape_cast %142 : vector<1x4x8x128xbf16> to vector<4x8x128xbf16>
    %144 = vector.shape_cast %141 : vector<4x8x128xbf16> to vector<1x4x8x128xbf16>
    tpu.vector_store %arg7[%c0_118, %c0_119, %c0_120, %c0_121], %144 {strides = array<i32>} : memref<2x4x8x128xbf16, #tpu.memory_space<vmem>>, vector<1x4x8x128xbf16>,
    %c0_122 = arith.constant 0 : index
    %c0_123 = arith.constant 0 : index
    %145 = tpu.strided_load %arg9[%c0_122, %c0_123] {strides = array<i32: 2, 1>} : memref<128x128xf32, #tpu.memory_space<vmem>>, vector<64x128xf32>
    %c1_124 = arith.constant 1 : index
    %c0_125 = arith.constant 0 : index
    %146 = tpu.strided_load %arg9[%c1_124, %c0_125] {strides = array<i32: 2, 1>} : memref<128x128xf32, #tpu.memory_space<vmem>>, vector<64x128xf32>
    %147 = arith.maximumf %145, %146 : vector<64x128xf32>
    %148 = vector.shape_cast %147 : vector<64x128xf32> to vector<4x16x128xf32>
    %149 = vector.extract_strided_slice %148 {offsets = [0, 0, 0], sizes = [4, 8, 128], strides = [1, 1, 1]} : vector<4x16x128xf32> to vector<4x8x128xf32>
    %150 = vector.extract_strided_slice %148 {offsets = [0, 8, 0], sizes = [4, 8, 128], strides = [1, 1, 1]} : vector<4x16x128xf32> to vector<4x8x128xf32>
    %151 = arith.maximumf %149, %150 : vector<4x8x128xf32>
    %152 = arith.truncf %151 : vector<4x8x128xf32> to vector<4x8x128xbf16>
    %c1_126 = arith.constant 1 : index
    %c0_127 = arith.constant 0 : index
    %c0_128 = arith.constant 0 : index
    %c0_129 = arith.constant 0 : index
    %153 = vector.load %arg7[%c1_126, %c0_127, %c0_128, %c0_129] : memref<2x4x8x128xbf16, #tpu.memory_space<vmem>>, vector<1x4x8x128xbf16>
    %154 = vector.shape_cast %153 : vector<1x4x8x128xbf16> to vector<4x8x128xbf16>
    %155 = vector.shape_cast %152 : vector<4x8x128xbf16> to vector<1x4x8x128xbf16>
    tpu.vector_store %arg7[%c1_126, %c0_127, %c0_128, %c0_129], %155 {strides = array<i32>} : memref<2x4x8x128xbf16, #tpu.memory_space<vmem>>, vector<1x4x8x128xbf16>,
    return
  }
  func.func @transform_0(%arg0: i32) -> (i32, i32, i32) {
    %c0_i32 = arith.constant 0 : i32
    %c0_i32_0 = arith.constant 0 : i32
    %c0_i32_1 = arith.constant 0 : i32
    return %arg0, %c0_i32, %c0_i32_0 : i32, i32, i32
  }
  func.func @transform_1(%arg0: i32) -> (i32, i32, i32) {
    %c0_i32 = arith.constant 0 : i32
    %c0_i32_0 = arith.constant 0 : i32
    %c0_i32_1 = arith.constant 0 : i32
    %c0_i32_2 = arith.constant 0 : i32
    return %c0_i32, %c0_i32_0, %c0_i32_1 : i32, i32, i32
  }
  func.func @transform_2(%arg0: i32) -> (i32, i32) {
    %c0_i32 = arith.constant 0 : i32
    %c0_i32_0 = arith.constant 0 : i32
    %c0_i32_1 = arith.constant 0 : i32
    return %c0_i32, %c0_i32_0 : i32, i32
  }
  func.func @transform_3(%arg0: i32) -> (i32, i32) {
    %c0_i32 = arith.constant 0 : i32
    %c0_i32_0 = arith.constant 0 : i32
    %c0_i32_1 = arith.constant 0 : i32
    return %c0_i32, %c0_i32_0 : i32, i32
  }
  func.func @transform_4(%arg0: i32) -> (i32, i32) {
    %c0_i32 = arith.constant 0 : i32
    %c0_i32_0 = arith.constant 0 : i32
    %c0_i32_1 = arith.constant 0 : i32
    return %c0_i32, %c0_i32_0 : i32, i32
  }
  func.func @transform_5(%arg0: i32) -> (i32, i32, i32) {
    %c0_i32 = arith.constant 0 : i32
    %c0_i32_0 = arith.constant 0 : i32
    %c0_i32_1 = arith.constant 0 : i32
    return %arg0, %c0_i32, %c0_i32_0 : i32, i32, i32
  }
  func.func @transform_6(%arg0: i32) -> (i32, i32, i32, i32) {
    %c0_i32 = arith.constant 0 : i32
    %c0_i32_0 = arith.constant 0 : i32
    %c0_i32_1 = arith.constant 0 : i32
    %c0_i32_2 = arith.constant 0 : i32
    return %arg0, %c0_i32, %c0_i32_0, %c0_i32_1 : i32, i32, i32, i32
  }
}

module attributes {stable_mosaic.version = 11 : i64} {
  func.func @_fused_layer_kernel(%arg0: i32, %arg1: memref<2x56x128xbf16, #tpu.memory_space<vmem>>, %arg2: memref<5x256x128xbf16, #tpu.memory_space<vmem>>, %arg3: memref<1x128xf32, #tpu.memory_space<vmem>>, %arg4: memref<128x1xf32, #tpu.memory_space<vmem>>, %arg5: memref<32x1xf32, #tpu.memory_space<vmem>>, %arg6: memref<1x8x128xf32, #tpu.memory_space<vmem>>) attributes {dimension_semantics = [#tpu.dimension_semantics<parallel>], iteration_bounds = array<i64: 2>, scalar_prefetch = 0 : i64, scratch_operands = 0 : i64, tpu.core_type = #tpu.core_type<tc>, window_params = [{transform_indices = @transform_0, window_bounds = array<i64: 2, 56, 128>}, {pipeline_mode = #tpu.pipeline_mode<synchronous>, transform_indices = @transform_1, window_bounds = array<i64: 5, 256, 128>}, {pipeline_mode = #tpu.pipeline_mode<synchronous>, transform_indices = @transform_2, window_bounds = array<i64: 1, 128>}, {pipeline_mode = #tpu.pipeline_mode<synchronous>, transform_indices = @transform_3, window_bounds = array<i64: 128, 1>}, {pipeline_mode = #tpu.pipeline_mode<synchronous>, transform_indices = @transform_4, window_bounds = array<i64: 32, 1>}, {transform_indices = @transform_5, window_bounds = array<i64: 1, 8, 128>}]} {
    %c0 = arith.constant 0 : index
    %c0_0 = arith.constant 0 : index
    %0 = vector.load %arg4[%c0, %c0_0] : memref<128x1xf32, #tpu.memory_space<vmem>>, vector<128x1xf32>
    %1 = arith.truncf %0 : vector<128x1xf32> to vector<128x1xbf16>
    %c0_1 = arith.constant 0 : index
    %c0_2 = arith.constant 0 : index
    %c0_3 = arith.constant 0 : index
    %2 = vector.load %arg1[%c0_1, %c0_2, %c0_3] : memref<2x56x128xbf16, #tpu.memory_space<vmem>>, vector<1x32x128xbf16>
    %3 = vector.shape_cast %2 : vector<1x32x128xbf16> to vector<32x128xbf16>
    %c0_4 = arith.constant 0 : index
    %c1 = arith.constant 1 : index
    %c0_5 = arith.constant 0 : index
    %4 = vector.load %arg1[%c0_4, %c1, %c0_5] : memref<2x56x128xbf16, #tpu.memory_space<vmem>>, vector<1x32x128xbf16>
    %5 = vector.shape_cast %4 : vector<1x32x128xbf16> to vector<32x128xbf16>
    %6 = tpu.concatenate %3, %5 in 1 : vector<32x128xbf16>, vector<32x128xbf16> -> vector<32x256xbf16>
    %c0_6 = arith.constant 0 : index
    %c0_7 = arith.constant 0 : index
    %c0_8 = arith.constant 0 : index
    %7 = vector.load %arg2[%c0_6, %c0_7, %c0_8] : memref<5x256x128xbf16, #tpu.memory_space<vmem>>, vector<1x256x128xbf16>
    %8 = vector.shape_cast %7 : vector<1x256x128xbf16> to vector<256x128xbf16>
    %cst = arith.constant dense<0.000000e+00> : vector<32x128xf32>
    %9 = tpu.matmul %6, %8, %cst {dimension_numbers = #tpu.dot_dimension_numbers<[1], [0], [0], [1], [0, 0, 1, 1], [], []>} : vector<32x256xbf16>, vector<256x128xbf16>, vector<32x128xf32> -> vector<32x128xf32>
    %c0_9 = arith.constant 0 : index
    %c2 = arith.constant 2 : index
    %c0_10 = arith.constant 0 : index
    %10 = vector.load %arg1[%c0_9, %c2, %c0_10] : memref<2x56x128xbf16, #tpu.memory_space<vmem>>, vector<1x32x128xbf16>
    %11 = vector.shape_cast %10 : vector<1x32x128xbf16> to vector<32x128xbf16>
    %c0_11 = arith.constant 0 : index
    %c8 = arith.constant 8 : index
    %c0_12 = arith.constant 0 : index
    %12 = vector.load %arg1[%c0_11, %c8, %c0_12] : memref<2x56x128xbf16, #tpu.memory_space<vmem>>, vector<1x32x128xbf16>
    %13 = vector.shape_cast %12 : vector<1x32x128xbf16> to vector<32x128xbf16>
    %14 = tpu.concatenate %11, %13 in 1 : vector<32x128xbf16>, vector<32x128xbf16> -> vector<32x256xbf16>
    %c1_13 = arith.constant 1 : index
    %c0_14 = arith.constant 0 : index
    %c0_15 = arith.constant 0 : index
    %15 = vector.load %arg2[%c1_13, %c0_14, %c0_15] : memref<5x256x128xbf16, #tpu.memory_space<vmem>>, vector<1x256x128xbf16>
    %16 = vector.shape_cast %15 : vector<1x256x128xbf16> to vector<256x128xbf16>
    %cst_16 = arith.constant dense<0.000000e+00> : vector<32x128xf32>
    %17 = tpu.matmul %14, %16, %cst_16 {dimension_numbers = #tpu.dot_dimension_numbers<[1], [0], [0], [1], [0, 0, 1, 1], [], []>} : vector<32x256xbf16>, vector<256x128xbf16>, vector<32x128xf32> -> vector<32x128xf32>
    %18 = arith.addf %9, %17 : vector<32x128xf32>
    %c0_17 = arith.constant 0 : index
    %c9 = arith.constant 9 : index
    %c0_18 = arith.constant 0 : index
    %19 = vector.load %arg1[%c0_17, %c9, %c0_18] : memref<2x56x128xbf16, #tpu.memory_space<vmem>>, vector<1x32x128xbf16>
    %20 = vector.shape_cast %19 : vector<1x32x128xbf16> to vector<32x128xbf16>
    %c0_19 = arith.constant 0 : index
    %c10 = arith.constant 10 : index
    %c0_20 = arith.constant 0 : index
    %21 = vector.load %arg1[%c0_19, %c10, %c0_20] : memref<2x56x128xbf16, #tpu.memory_space<vmem>>, vector<1x32x128xbf16>
    %22 = vector.shape_cast %21 : vector<1x32x128xbf16> to vector<32x128xbf16>
    %23 = tpu.concatenate %20, %22 in 1 : vector<32x128xbf16>, vector<32x128xbf16> -> vector<32x256xbf16>
    %c2_21 = arith.constant 2 : index
    %c0_22 = arith.constant 0 : index
    %c0_23 = arith.constant 0 : index
    %24 = vector.load %arg2[%c2_21, %c0_22, %c0_23] : memref<5x256x128xbf16, #tpu.memory_space<vmem>>, vector<1x256x128xbf16>
    %25 = vector.shape_cast %24 : vector<1x256x128xbf16> to vector<256x128xbf16>
    %cst_24 = arith.constant dense<0.000000e+00> : vector<32x128xf32>
    %26 = tpu.matmul %23, %25, %cst_24 {dimension_numbers = #tpu.dot_dimension_numbers<[1], [0], [0], [1], [0, 0, 1, 1], [], []>} : vector<32x256xbf16>, vector<256x128xbf16>, vector<32x128xf32> -> vector<32x128xf32>
    %27 = arith.addf %18, %26 : vector<32x128xf32>
    %c0_25 = arith.constant 0 : index
    %c16 = arith.constant 16 : index
    %c0_26 = arith.constant 0 : index
    %28 = vector.load %arg1[%c0_25, %c16, %c0_26] : memref<2x56x128xbf16, #tpu.memory_space<vmem>>, vector<1x32x128xbf16>
    %29 = vector.shape_cast %28 : vector<1x32x128xbf16> to vector<32x128xbf16>
    %c0_27 = arith.constant 0 : index
    %c17 = arith.constant 17 : index
    %c0_28 = arith.constant 0 : index
    %30 = vector.load %arg1[%c0_27, %c17, %c0_28] : memref<2x56x128xbf16, #tpu.memory_space<vmem>>, vector<1x32x128xbf16>
    %31 = vector.shape_cast %30 : vector<1x32x128xbf16> to vector<32x128xbf16>
    %32 = tpu.concatenate %29, %31 in 1 : vector<32x128xbf16>, vector<32x128xbf16> -> vector<32x256xbf16>
    %c3 = arith.constant 3 : index
    %c0_29 = arith.constant 0 : index
    %c0_30 = arith.constant 0 : index
    %33 = vector.load %arg2[%c3, %c0_29, %c0_30] : memref<5x256x128xbf16, #tpu.memory_space<vmem>>, vector<1x256x128xbf16>
    %34 = vector.shape_cast %33 : vector<1x256x128xbf16> to vector<256x128xbf16>
    %cst_31 = arith.constant dense<0.000000e+00> : vector<32x128xf32>
    %35 = tpu.matmul %32, %34, %cst_31 {dimension_numbers = #tpu.dot_dimension_numbers<[1], [0], [0], [1], [0, 0, 1, 1], [], []>} : vector<32x256xbf16>, vector<256x128xbf16>, vector<32x128xf32> -> vector<32x128xf32>
    %36 = arith.addf %27, %35 : vector<32x128xf32>
    %c0_32 = arith.constant 0 : index
    %c18 = arith.constant 18 : index
    %c0_33 = arith.constant 0 : index
    %37 = vector.load %arg1[%c0_32, %c18, %c0_33] : memref<2x56x128xbf16, #tpu.memory_space<vmem>>, vector<1x32x128xbf16>
    %38 = vector.shape_cast %37 : vector<1x32x128xbf16> to vector<32x128xbf16>
    %c0_34 = arith.constant 0 : index
    %c0_35 = arith.constant 0 : index
    %c0_36 = arith.constant 0 : index
    %39 = vector.load %arg1[%c0_34, %c0_35, %c0_36] : memref<2x56x128xbf16, #tpu.memory_space<vmem>>, vector<1x32x128xbf16>
    %40 = vector.shape_cast %39 : vector<1x32x128xbf16> to vector<32x128xbf16>
    %41 = tpu.concatenate %38, %40 in 1 : vector<32x128xbf16>, vector<32x128xbf16> -> vector<32x256xbf16>
    %c4 = arith.constant 4 : index
    %c0_37 = arith.constant 0 : index
    %c0_38 = arith.constant 0 : index
    %42 = vector.load %arg2[%c4, %c0_37, %c0_38] : memref<5x256x128xbf16, #tpu.memory_space<vmem>>, vector<1x256x128xbf16>
    %43 = vector.shape_cast %42 : vector<1x256x128xbf16> to vector<256x128xbf16>
    %cst_39 = arith.constant dense<0.000000e+00> : vector<32x128xf32>
    %44 = tpu.matmul %41, %43, %cst_39 {dimension_numbers = #tpu.dot_dimension_numbers<[1], [0], [0], [1], [0, 0, 1, 1], [], []>} : vector<32x256xbf16>, vector<256x128xbf16>, vector<32x128xf32> -> vector<32x128xf32>
    %45 = arith.addf %36, %44 : vector<32x128xf32>
    %c0_40 = arith.constant 0 : index
    %c0_41 = arith.constant 0 : index
    %46 = vector.load %arg3[%c0_40, %c0_41] : memref<1x128xf32, #tpu.memory_space<vmem>>, vector<1x128xf32>
    %47 = vector.broadcast %46 : vector<1x128xf32> to vector<32x128xf32>
    %48 = arith.addf %45, %47 : vector<32x128xf32>
    %cst_42 = arith.constant 0.000000e+00 : f32
    %49 = vector.broadcast %cst_42 : f32 to vector<32x128xf32>
    %50 = arith.maximumf %48, %49 : vector<32x128xf32>
    %c1_43 = arith.constant 1 : index
    %c0_44 = arith.constant 0 : index
    %c0_45 = arith.constant 0 : index
    %51 = vector.load %arg1[%c1_43, %c0_44, %c0_45] : memref<2x56x128xbf16, #tpu.memory_space<vmem>>, vector<1x32x128xbf16>
    %52 = vector.shape_cast %51 : vector<1x32x128xbf16> to vector<32x128xbf16>
    %c1_46 = arith.constant 1 : index
    %c1_47 = arith.constant 1 : index
    %c0_48 = arith.constant 0 : index
    %53 = vector.load %arg1[%c1_46, %c1_47, %c0_48] : memref<2x56x128xbf16, #tpu.memory_space<vmem>>, vector<1x32x128xbf16>
    %54 = vector.shape_cast %53 : vector<1x32x128xbf16> to vector<32x128xbf16>
    %55 = tpu.concatenate %52, %54 in 1 : vector<32x128xbf16>, vector<32x128xbf16> -> vector<32x256xbf16>
    %c0_49 = arith.constant 0 : index
    %c0_50 = arith.constant 0 : index
    %c0_51 = arith.constant 0 : index
    %56 = vector.load %arg2[%c0_49, %c0_50, %c0_51] : memref<5x256x128xbf16, #tpu.memory_space<vmem>>, vector<1x256x128xbf16>
    %57 = vector.shape_cast %56 : vector<1x256x128xbf16> to vector<256x128xbf16>
    %cst_52 = arith.constant dense<0.000000e+00> : vector<32x128xf32>
    %58 = tpu.matmul %55, %57, %cst_52 {dimension_numbers = #tpu.dot_dimension_numbers<[1], [0], [0], [1], [0, 0, 1, 1], [], []>} : vector<32x256xbf16>, vector<256x128xbf16>, vector<32x128xf32> -> vector<32x128xf32>
    %c1_53 = arith.constant 1 : index
    %c2_54 = arith.constant 2 : index
    %c0_55 = arith.constant 0 : index
    %59 = vector.load %arg1[%c1_53, %c2_54, %c0_55] : memref<2x56x128xbf16, #tpu.memory_space<vmem>>, vector<1x32x128xbf16>
    %60 = vector.shape_cast %59 : vector<1x32x128xbf16> to vector<32x128xbf16>
    %c1_56 = arith.constant 1 : index
    %c8_57 = arith.constant 8 : index
    %c0_58 = arith.constant 0 : index
    %61 = vector.load %arg1[%c1_56, %c8_57, %c0_58] : memref<2x56x128xbf16, #tpu.memory_space<vmem>>, vector<1x32x128xbf16>
    %62 = vector.shape_cast %61 : vector<1x32x128xbf16> to vector<32x128xbf16>
    %63 = tpu.concatenate %60, %62 in 1 : vector<32x128xbf16>, vector<32x128xbf16> -> vector<32x256xbf16>
    %c1_59 = arith.constant 1 : index
    %c0_60 = arith.constant 0 : index
    %c0_61 = arith.constant 0 : index
    %64 = vector.load %arg2[%c1_59, %c0_60, %c0_61] : memref<5x256x128xbf16, #tpu.memory_space<vmem>>, vector<1x256x128xbf16>
    %65 = vector.shape_cast %64 : vector<1x256x128xbf16> to vector<256x128xbf16>
    %cst_62 = arith.constant dense<0.000000e+00> : vector<32x128xf32>
    %66 = tpu.matmul %63, %65, %cst_62 {dimension_numbers = #tpu.dot_dimension_numbers<[1], [0], [0], [1], [0, 0, 1, 1], [], []>} : vector<32x256xbf16>, vector<256x128xbf16>, vector<32x128xf32> -> vector<32x128xf32>
    %67 = arith.addf %58, %66 : vector<32x128xf32>
    %c1_63 = arith.constant 1 : index
    %c9_64 = arith.constant 9 : index
    %c0_65 = arith.constant 0 : index
    %68 = vector.load %arg1[%c1_63, %c9_64, %c0_65] : memref<2x56x128xbf16, #tpu.memory_space<vmem>>, vector<1x32x128xbf16>
    %69 = vector.shape_cast %68 : vector<1x32x128xbf16> to vector<32x128xbf16>
    %c1_66 = arith.constant 1 : index
    %c10_67 = arith.constant 10 : index
    %c0_68 = arith.constant 0 : index
    %70 = vector.load %arg1[%c1_66, %c10_67, %c0_68] : memref<2x56x128xbf16, #tpu.memory_space<vmem>>, vector<1x32x128xbf16>
    %71 = vector.shape_cast %70 : vector<1x32x128xbf16> to vector<32x128xbf16>
    %72 = tpu.concatenate %69, %71 in 1 : vector<32x128xbf16>, vector<32x128xbf16> -> vector<32x256xbf16>
    %c2_69 = arith.constant 2 : index
    %c0_70 = arith.constant 0 : index
    %c0_71 = arith.constant 0 : index
    %73 = vector.load %arg2[%c2_69, %c0_70, %c0_71] : memref<5x256x128xbf16, #tpu.memory_space<vmem>>, vector<1x256x128xbf16>
    %74 = vector.shape_cast %73 : vector<1x256x128xbf16> to vector<256x128xbf16>
    %cst_72 = arith.constant dense<0.000000e+00> : vector<32x128xf32>
    %75 = tpu.matmul %72, %74, %cst_72 {dimension_numbers = #tpu.dot_dimension_numbers<[1], [0], [0], [1], [0, 0, 1, 1], [], []>} : vector<32x256xbf16>, vector<256x128xbf16>, vector<32x128xf32> -> vector<32x128xf32>
    %76 = arith.addf %67, %75 : vector<32x128xf32>
    %c1_73 = arith.constant 1 : index
    %c16_74 = arith.constant 16 : index
    %c0_75 = arith.constant 0 : index
    %77 = vector.load %arg1[%c1_73, %c16_74, %c0_75] : memref<2x56x128xbf16, #tpu.memory_space<vmem>>, vector<1x32x128xbf16>
    %78 = vector.shape_cast %77 : vector<1x32x128xbf16> to vector<32x128xbf16>
    %c1_76 = arith.constant 1 : index
    %c17_77 = arith.constant 17 : index
    %c0_78 = arith.constant 0 : index
    %79 = vector.load %arg1[%c1_76, %c17_77, %c0_78] : memref<2x56x128xbf16, #tpu.memory_space<vmem>>, vector<1x32x128xbf16>
    %80 = vector.shape_cast %79 : vector<1x32x128xbf16> to vector<32x128xbf16>
    %81 = tpu.concatenate %78, %80 in 1 : vector<32x128xbf16>, vector<32x128xbf16> -> vector<32x256xbf16>
    %c3_79 = arith.constant 3 : index
    %c0_80 = arith.constant 0 : index
    %c0_81 = arith.constant 0 : index
    %82 = vector.load %arg2[%c3_79, %c0_80, %c0_81] : memref<5x256x128xbf16, #tpu.memory_space<vmem>>, vector<1x256x128xbf16>
    %83 = vector.shape_cast %82 : vector<1x256x128xbf16> to vector<256x128xbf16>
    %cst_82 = arith.constant dense<0.000000e+00> : vector<32x128xf32>
    %84 = tpu.matmul %81, %83, %cst_82 {dimension_numbers = #tpu.dot_dimension_numbers<[1], [0], [0], [1], [0, 0, 1, 1], [], []>} : vector<32x256xbf16>, vector<256x128xbf16>, vector<32x128xf32> -> vector<32x128xf32>
    %85 = arith.addf %76, %84 : vector<32x128xf32>
    %c1_83 = arith.constant 1 : index
    %c18_84 = arith.constant 18 : index
    %c0_85 = arith.constant 0 : index
    %86 = vector.load %arg1[%c1_83, %c18_84, %c0_85] : memref<2x56x128xbf16, #tpu.memory_space<vmem>>, vector<1x32x128xbf16>
    %87 = vector.shape_cast %86 : vector<1x32x128xbf16> to vector<32x128xbf16>
    %c1_86 = arith.constant 1 : index
    %c0_87 = arith.constant 0 : index
    %c0_88 = arith.constant 0 : index
    %88 = vector.load %arg1[%c1_86, %c0_87, %c0_88] : memref<2x56x128xbf16, #tpu.memory_space<vmem>>, vector<1x32x128xbf16>
    %89 = vector.shape_cast %88 : vector<1x32x128xbf16> to vector<32x128xbf16>
    %90 = tpu.concatenate %87, %89 in 1 : vector<32x128xbf16>, vector<32x128xbf16> -> vector<32x256xbf16>
    %c4_89 = arith.constant 4 : index
    %c0_90 = arith.constant 0 : index
    %c0_91 = arith.constant 0 : index
    %91 = vector.load %arg2[%c4_89, %c0_90, %c0_91] : memref<5x256x128xbf16, #tpu.memory_space<vmem>>, vector<1x256x128xbf16>
    %92 = vector.shape_cast %91 : vector<1x256x128xbf16> to vector<256x128xbf16>
    %cst_92 = arith.constant dense<0.000000e+00> : vector<32x128xf32>
    %93 = tpu.matmul %90, %92, %cst_92 {dimension_numbers = #tpu.dot_dimension_numbers<[1], [0], [0], [1], [0, 0, 1, 1], [], []>} : vector<32x256xbf16>, vector<256x128xbf16>, vector<32x128xf32> -> vector<32x128xf32>
    %94 = arith.addf %85, %93 : vector<32x128xf32>
    %c0_93 = arith.constant 0 : index
    %c0_94 = arith.constant 0 : index
    %95 = vector.load %arg3[%c0_93, %c0_94] : memref<1x128xf32, #tpu.memory_space<vmem>>, vector<1x128xf32>
    %96 = vector.broadcast %95 : vector<1x128xf32> to vector<32x128xf32>
    %97 = arith.addf %94, %96 : vector<32x128xf32>
    %cst_95 = arith.constant 0.000000e+00 : f32
    %98 = vector.broadcast %cst_95 : f32 to vector<32x128xf32>
    %99 = arith.maximumf %97, %98 : vector<32x128xf32>
    %100 = arith.mulf %50, %50 : vector<32x128xf32>
    %cst_96 = arith.constant dense<0.000000e+00> : vector<32xf32>
    %101 = vector.multi_reduction <add>, %100, %cst_96 [1] : vector<32x128xf32> to vector<32xf32>
    %102 = vector.shape_cast %101 : vector<32xf32> to vector<32x1xf32>
    %cst_97 = arith.constant 1.000000e-10 : f32
    %103 = vector.broadcast %cst_97 : f32 to vector<32x1xf32>
    %104 = arith.addf %102, %103 : vector<32x1xf32>
    %105 = math.rsqrt %104 : vector<32x1xf32>
    %106 = vector.broadcast %105 : vector<32x1xf32> to vector<32x128xf32>
    %107 = arith.mulf %50, %106 : vector<32x128xf32>
    %108 = arith.mulf %99, %99 : vector<32x128xf32>
    %cst_98 = arith.constant dense<0.000000e+00> : vector<32xf32>
    %109 = vector.multi_reduction <add>, %108, %cst_98 [1] : vector<32x128xf32> to vector<32xf32>
    %110 = vector.shape_cast %109 : vector<32xf32> to vector<32x1xf32>
    %cst_99 = arith.constant 1.000000e-10 : f32
    %111 = vector.broadcast %cst_99 : f32 to vector<32x1xf32>
    %112 = arith.addf %110, %111 : vector<32x1xf32>
    %113 = math.rsqrt %112 : vector<32x1xf32>
    %114 = vector.broadcast %113 : vector<32x1xf32> to vector<32x128xf32>
    %115 = arith.mulf %99, %114 : vector<32x128xf32>
    %116 = arith.subf %107, %115 : vector<32x128xf32>
    %117 = arith.mulf %116, %116 : vector<32x128xf32>
    %118 = arith.truncf %117 : vector<32x128xf32> to vector<32x128xbf16>
    %cst_100 = arith.constant dense<0.000000e+00> : vector<32x1xf32>
    %119 = tpu.matmul %118, %1, %cst_100 {dimension_numbers = #tpu.dot_dimension_numbers<[1], [0], [0], [1], [0, 0, 1, 1], [], []>} : vector<32x128xbf16>, vector<128x1xbf16>, vector<32x1xf32> -> vector<32x1xf32>
    %c0_101 = arith.constant 0 : index
    %c0_102 = arith.constant 0 : index
    %120 = vector.load %arg5[%c0_101, %c0_102] : memref<32x1xf32, #tpu.memory_space<vmem>>, vector<32x1xf32>
    %121 = arith.mulf %119, %120 : vector<32x1xf32>
    %122 = vector.shape_cast %121 : vector<32x1xf32> to vector<1x32x1xf32>
    %cst_103 = arith.constant dense<0.000000e+00> : vector<1xf32>
    %123 = vector.multi_reduction <add>, %122, %cst_103 [1, 2] : vector<1x32x1xf32> to vector<1xf32>
    %124 = vector.shape_cast %123 : vector<1xf32> to vector<1x1x1xf32>
    %125 = vector.extract %124[0, 0, 0] : f32 from vector<1x1x1xf32>
    %cst_104 = arith.constant 0.000000e+00 : f32
    %126 = arith.addf %cst_104, %125 : f32
    %cst_105 = arith.constant 6.250000e-02 : f32
    %127 = arith.mulf %126, %cst_105 : f32
    %cst_106 = arith.constant 1.000000e+00 : f32
    %128 = vector.broadcast %cst_106 : f32 to vector<1x8x128xf32>
    %129 = vector.broadcast %127 : f32 to vector<1x8x128xf32>
    %130 = arith.mulf %129, %128 : vector<1x8x128xf32>
    %c0_107 = arith.constant 0 : index
    %c0_108 = arith.constant 0 : index
    %c0_109 = arith.constant 0 : index
    %131 = vector.load %arg6[%c0_107, %c0_108, %c0_109] : memref<1x8x128xf32, #tpu.memory_space<vmem>>, vector<1x8x128xf32>
    tpu.vector_store %arg6[%c0_107, %c0_108, %c0_109], %130 {strides = array<i32>} : memref<1x8x128xf32, #tpu.memory_space<vmem>>, vector<1x8x128xf32>,
    return
  }
  func.func @transform_0(%arg0: i32) -> (i32, i32, i32) {
    %c0_i32 = arith.constant 0 : i32
    %c0_i32_0 = arith.constant 0 : i32
    %c0_i32_1 = arith.constant 0 : i32
    return %arg0, %c0_i32, %c0_i32_0 : i32, i32, i32
  }
  func.func @transform_1(%arg0: i32) -> (i32, i32, i32) {
    %c0_i32 = arith.constant 0 : i32
    %c0_i32_0 = arith.constant 0 : i32
    %c0_i32_1 = arith.constant 0 : i32
    %c0_i32_2 = arith.constant 0 : i32
    return %c0_i32, %c0_i32_0, %c0_i32_1 : i32, i32, i32
  }
  func.func @transform_2(%arg0: i32) -> (i32, i32) {
    %c0_i32 = arith.constant 0 : i32
    %c0_i32_0 = arith.constant 0 : i32
    %c0_i32_1 = arith.constant 0 : i32
    return %c0_i32, %c0_i32_0 : i32, i32
  }
  func.func @transform_3(%arg0: i32) -> (i32, i32) {
    %c0_i32 = arith.constant 0 : i32
    %c0_i32_0 = arith.constant 0 : i32
    %c0_i32_1 = arith.constant 0 : i32
    return %c0_i32, %c0_i32_0 : i32, i32
  }
  func.func @transform_4(%arg0: i32) -> (i32, i32) {
    %c0_i32 = arith.constant 0 : i32
    %c0_i32_0 = arith.constant 0 : i32
    %c0_i32_1 = arith.constant 0 : i32
    return %c0_i32, %c0_i32_0 : i32, i32
  }
  func.func @transform_5(%arg0: i32) -> (i32, i32, i32) {
    %c0_i32 = arith.constant 0 : i32
    %c0_i32_0 = arith.constant 0 : i32
    %c0_i32_1 = arith.constant 0 : i32
    return %arg0, %c0_i32, %c0_i32_0 : i32, i32, i32
  }
}

</mosaic_0001>

<llo_original>
// kernel: perceptual_loss_forward.3
$region0: #{perceptual_loss_forward.3}
  #allocation0 [shape = 'u32[]', space=smem, size = 0x4, offset = 0x4, fixed_abs, tag = 'smem constant byte address 0x4 - core index']
  #allocation1 [shape = 'u32[144,128]{1,0:T(1,128)}', space=vmem, size = 0x12000, scoped, tag = 'internal scratch']
  #allocation2 [shape = 'f32[256,128]{1,0:T(8,128)}', space=vmem, size = 0x20000, scoped, tag = 'scratch operand']
  #allocation3 [shape = 'f32[256,128]{1,0:T(8,128)}', space=vmem, size = 0x20000, scoped, tag = 'scratch operand']
  %s0 = inlined_call_operand.vmem [shape: bf16[4,256,32], index: 0, kind: input, shape index: {}]
  %s1 = inlined_call_operand.vmem [shape: bf16[1,32,128], index: 1, kind: input, shape index: {}]
  %s2 = inlined_call_operand.vmem [shape: f32[1,128], index: 2, kind: input, shape index: {}]
  %s3 = inlined_call_operand.vmem [shape: f32[128,1], index: 3, kind: input, shape index: {}]
  %s4 = inlined_call_operand.vmem [shape: f32[256,1], index: 4, kind: input, shape index: {}]
  %s5 = inlined_call_operand.vmem [shape: f32[2,8,128], index: 5, kind: output, shape index: {0}]
  %s6 = inlined_call_operand.vmem [shape: bf16[4,8,8,128], index: 6, kind: output, shape index: {1}]
  %7 = xla_tuple %s5, %s6
  %s8 = sld [smem:[#allocation0]]
  $region61: #{perceptual_loss_forward.3} parent=0
    _
  %s10 = ssub.s32 1, %s8
  %s11 = scalar_select 0, %s10, %s8
  loop: start=0, step=1, limit=4
  $region2: #{perceptual_loss_forward.3} parent=0 // loop_pre_header
    _
  $region3: #{perceptual_loss_forward.3} parent=0 // loop_header
    %s13 = sphi 0, %s17
    %p14 = scmp.ge.s32.totalorder %s13, 4
    %s23 = sphi 0, %s25
    %s26 = sphi 0, %s23
    %s27 = sphi 0, %s26
    %s43 = sphi 0, %s27
    %s47 = sphi 0, %s47
    %s49 = sphi 0, %s47
    %s50 = sphi 0, %s49
    %s64 = sphi 0, %s50
    %s68 = sphi 0, %s68
    %s70 = sphi 0, %s68
    %s71 = sphi 0, %s70
    %s85 = sphi 0, %s71
    %s89 = sphi 0, %s89
    %s91 = sphi 0, %s89
    %s92 = sphi 0, %s91
    %s106 = sphi 0, %s92
    %s110 = sphi 0, %s110
    %s112 = sphi 0, %s110
    %s113 = sphi 0, %s112
    %s127 = sphi 0, %s113
    %s133 = sphi 0, %s135
    %s136 = sphi 0, %s133
    %s137 = sphi 0, %s136
    %s153 = sphi 0, %s137
    %s159 = sphi 0, %s161
    %s162 = sphi 0, %s159
    %s163 = sphi 0, %s162
    %s179 = sphi 0, %s163
  $region4: #{perceptual_loss_forward.3} parent=0 // loop_header_branch
    %16 = sbr.rel (%p14) target = $region8
  $region5: #{perceptual_loss_forward.3} parent=0 // loop_body
    %s18 = ssub.s32 %s13, 1
    %s19 = ssub.s32 %s13, 2
    %s20 = sadd.s32 %s13, 1
    %s21 = ssub.s32 %s13, %s20
    %p22 = scmp.eq.s32.totalorder %s21, 0
    %s24 = sadd.s32 %s23, 1
    %s25 = scalar_select %p22, %s23, %s24
    %p28 = pneg %p22
    %p29 = scmp.eq.s32.totalorder %s13, 1
    %p30 = por %p28, %p29
    %p31 = scmp.ne.s32.totalorder %s23, %s26
    %p32 = scmp.eq.s32.totalorder %s13, 0
    %p33 = por %p31, %p32
    %p34 = scmp.ne.s32.totalorder %s23, %s26
    %p35 = scmp.eq.s32.totalorder %s18, 1
    %p36 = por %p34, %p35
    %p37 = scmp.ne.s32.totalorder %s26, %s27
    %p38 = scmp.eq.s32.totalorder %s18, 0
    %p39 = por %p37, %p38
    %p40 = scmp.ne.s32.totalorder %s26, %s27
    %p41 = scmp.eq.s32.totalorder %s19, 1
    %p42 = por %p40, %p41
    %p44 = scmp.ne.s32.totalorder %s27, %s43
    %p45 = scmp.eq.s32.totalorder %s19, 0
    %p46 = por %p44, %p45
    %s48 = sadd.s32 %s47, 1
    %p51 = scmp.eq.s32.totalorder %s13, 1
    %p52 = scmp.ne.s32.totalorder %s47, %s49
    %p53 = scmp.eq.s32.totalorder %s13, 0
    %p54 = por %p52, %p53
    %p55 = scmp.ne.s32.totalorder %s47, %s49
    %p56 = scmp.eq.s32.totalorder %s18, 1
    %p57 = por %p55, %p56
    %p58 = scmp.ne.s32.totalorder %s49, %s50
    %p59 = scmp.eq.s32.totalorder %s18, 0
    %p60 = por %p58, %p59
    %p61 = scmp.ne.s32.totalorder %s49, %s50
    %p62 = scmp.eq.s32.totalorder %s19, 1
    %p63 = por %p61, %p62
    %p65 = scmp.ne.s32.totalorder %s50, %s64
    %p66 = scmp.eq.s32.totalorder %s19, 0
    %p67 = por %p65, %p66
    %s69 = sadd.s32 %s68, 1
    %p72 = scmp.eq.s32.totalorder %s13, 1
    %p73 = scmp.ne.s32.totalorder %s68, %s70
    %p74 = scmp.eq.s32.totalorder %s13, 0
    %p75 = por %p73, %p74
    %p76 = scmp.ne.s32.totalorder %s68, %s70
    %p77 = scmp.eq.s32.totalorder %s18, 1
    %p78 = por %p76, %p77
    %p79 = scmp.ne.s32.totalorder %s70, %s71
    %p80 = scmp.eq.s32.totalorder %s18, 0
    %p81 = por %p79, %p80
    %p82 = scmp.ne.s32.totalorder %s70, %s71
    %p83 = scmp.eq.s32.totalorder %s19, 1
    %p84 = por %p82, %p83
    %p86 = scmp.ne.s32.totalorder %s71, %s85
    %p87 = scmp.eq.s32.totalorder %s19, 0
    %p88 = por %p86, %p87
    %s90 = sadd.s32 %s89, 1
    %p93 = scmp.eq.s32.totalorder %s13, 1
    %p94 = scmp.ne.s32.totalorder %s89, %s91
    %p95 = scmp.eq.s32.totalorder %s13, 0
    %p96 = por %p94, %p95
    %p97 = scmp.ne.s32.totalorder %s89, %s91
    %p98 = scmp.eq.s32.totalorder %s18, 1
    %p99 = por %p97, %p98
    %p100 = scmp.ne.s32.totalorder %s91, %s92
    %p101 = scmp.eq.s32.totalorder %s18, 0
    %p102 = por %p100, %p101
    %p103 = scmp.ne.s32.totalorder %s91, %s92
    %p104 = scmp.eq.s32.totalorder %s19, 1
    %p105 = por %p103, %p104
    %p107 = scmp.ne.s32.totalorder %s92, %s106
    %p108 = scmp.eq.s32.totalorder %s19, 0
    %p109 = por %p107, %p108
    %s111 = sadd.s32 %s110, 1
    %p114 = scmp.eq.s32.totalorder %s13, 1
    %p115 = scmp.ne.s32.totalorder %s110, %s112
    %p116 = scmp.eq.s32.totalorder %s13, 0
    %p117 = por %p115, %p116
    %p118 = scmp.ne.s32.totalorder %s110, %s112
    %p119 = scmp.eq.s32.totalorder %s18, 1
    %p120 = por %p118, %p119
    %p121 = scmp.ne.s32.totalorder %s112, %s113
    %p122 = scmp.eq.s32.totalorder %s18, 0
    %p123 = por %p121, %p122
    %p124 = scmp.ne.s32.totalorder %s112, %s113
    %p125 = scmp.eq.s32.totalorder %s19, 1
    %p126 = por %p124, %p125
    %p128 = scmp.ne.s32.totalorder %s113, %s127
    %p129 = scmp.eq.s32.totalorder %s19, 0
    %p130 = por %p128, %p129
    %s131 = ssub.s32 %s13, %s20
    %p132 = scmp.eq.s32.totalorder %s131, 0
    %s134 = sadd.s32 %s133, 1
    %s135 = scalar_select %p132, %s133, %s134
    %p138 = pneg %p132
    %p139 = scmp.eq.s32.totalorder %s13, 1
    %p140 = por %p138, %p139
    %p141 = scmp.ne.s32.totalorder %s133, %s136
    %p142 = scmp.eq.s32.totalorder %s13, 0
    %p143 = por %p141, %p142
    %p144 = scmp.ne.s32.totalorder %s133, %s136
    %p145 = scmp.eq.s32.totalorder %s18, 1
    %p146 = por %p144, %p145
    %p147 = scmp.ne.s32.totalorder %s136, %s137
    %p148 = scmp.eq.s32.totalorder %s18, 0
    %p149 = por %p147, %p148
    %p150 = scmp.ne.s32.totalorder %s136, %s137
    %p151 = scmp.eq.s32.totalorder %s19, 1
    %p152 = por %p150, %p151
    %p154 = scmp.ne.s32.totalorder %s137, %s153
    %p155 = scmp.eq.s32.totalorder %s19, 0
    %p156 = por %p154, %p155
    %s157 = ssub.s32 %s13, %s20
    %p158 = scmp.eq.s32.totalorder %s157, 0
    %s160 = sadd.s32 %s159, 1
    %s161 = scalar_select %p158, %s159, %s160
    %p164 = pneg %p158
    %p165 = scmp.eq.s32.totalorder %s13, 1
    %p166 = por %p164, %p165
    %p167 = scmp.ne.s32.totalorder %s159, %s162
    %p168 = scmp.eq.s32.totalorder %s13, 0
    %p169 = por %p167, %p168
    %p170 = scmp.ne.s32.totalorder %s159, %s162
    %p171 = scmp.eq.s32.totalorder %s18, 1
    %p172 = por %p170, %p171
    %p173 = scmp.ne.s32.totalorder %s162, %s163
    %p174 = scmp.eq.s32.totalorder %s18, 0
    %p175 = por %p173, %p174
    %p176 = scmp.ne.s32.totalorder %s162, %s163
    %p177 = scmp.eq.s32.totalorder %s19, 1
    %p178 = por %p176, %p177
    %p180 = scmp.ne.s32.totalorder %s163, %s179
    %p181 = scmp.eq.s32.totalorder %s19, 0
    %p182 = por %p180, %p181
    %p183 = scmp.le.s32.totalorder 1, %s13
    %p184 = scmp.lt.s32.totalorder %s13, 3
    %p185 = pnand %p183, %p184
    %p186 = pneg %p185
    // Predicated region
    $region9: #{perceptual_loss_forward.3} parent=5 // pred_check
      _
    $region10: #{perceptual_loss_forward.3} parent=5 // pred_check_branch
      %188 = sbr.rel (%p185) target = $region12
    $region11: #{perceptual_loss_forward.3} parent=5 // pred_region
      %s189 = ssub.s32 %s13, 1
      // Predicated region
      $region13: #{perceptual_loss_forward.3} parent=11 // pred_check
        %p190 = pneg %p60
      $region14: #{perceptual_loss_forward.3} parent=11 // pred_check_branch
        %192 = sbr.rel (%p190) target = $region16
      $region15: #{perceptual_loss_forward.3} parent=11 // pred_region
        _
      $region16: #{perceptual_loss_forward.3} parent=11 // pred_fallthru
        _
      // Predicated region
      $region17: #{perceptual_loss_forward.3} parent=11 // pred_check
        %p193 = pneg %p81
      $region18: #{perceptual_loss_forward.3} parent=11 // pred_check_branch
        %195 = sbr.rel (%p193) target = $region20
      $region19: #{perceptual_loss_forward.3} parent=11 // pred_region
        _
      $region20: #{perceptual_loss_forward.3} parent=11 // pred_fallthru
        _
      // Predicated region
      $region21: #{perceptual_loss_forward.3} parent=11 // pred_check
        %p196 = pneg %p102
      $region22: #{perceptual_loss_forward.3} parent=11 // pred_check_branch
        %198 = sbr.rel (%p196) target = $region24
      $region23: #{perceptual_loss_forward.3} parent=11 // pred_region
        _
      $region24: #{perceptual_loss_forward.3} parent=11 // pred_fallthru
        _
      // Predicated region
      $region25: #{perceptual_loss_forward.3} parent=11 // pred_check
        %p199 = pneg %p123
      $region26: #{perceptual_loss_forward.3} parent=11 // pred_check_branch
        %201 = sbr.rel (%p199) target = $region28
      $region27: #{perceptual_loss_forward.3} parent=11 // pred_region
        _
      $region28: #{perceptual_loss_forward.3} parent=11 // pred_fallthru
        _
    $region12: #{perceptual_loss_forward.3} parent=5 // pred_fallthru
      _
    %p202 = scmp.lt.s32.totalorder %s13, 2
    // Predicated region
    $region29: #{perceptual_loss_forward.3} parent=5 // pred_check
      %p203 = pneg %p202
    $region30: #{perceptual_loss_forward.3} parent=5 // pred_check_branch
      %205 = sbr.rel (%p203) target = $region32
    $region31: #{perceptual_loss_forward.3} parent=5 // pred_region
      // Predicated region
      $region33: #{perceptual_loss_forward.3} parent=31 // pred_check
        %p206 = pneg %p33
      $region34: #{perceptual_loss_forward.3} parent=31 // pred_check_branch
        %208 = sbr.rel (%p206) target = $region36
      $region35: #{perceptual_loss_forward.3} parent=31 // pred_region
        %s209 = smul.u32 2, %s13
        %p210 = scmp.lt.s32.totalorder %s209, 3
        %s211 = scalar_select %p210, %s209, 3
        %s212 = smul.addr %s211, 32
        %s213 = smul.addr %s212, 4
        %s214 = scalar_lea.vmem %s0, %s213
        %s215 = smul.u32 2, %s13
      $region36: #{perceptual_loss_forward.3} parent=31 // pred_fallthru
        _
    $region32: #{perceptual_loss_forward.3} parent=5 // pred_fallthru
      _
    %p216 = scmp.le.s32.totalorder 1, %s13
    %p217 = scmp.lt.s32.totalorder %s13, 3
    %p218 = pnand %p216, %p217
    %p219 = pneg %p218
    // Predicated region
    $region37: #{perceptual_loss_forward.3} parent=5 // pred_check
      _
    $region38: #{perceptual_loss_forward.3} parent=5 // pred_check_branch
      %221 = sbr.rel (%p218) target = $region40
    $region39: #{perceptual_loss_forward.3} parent=5 // pred_region
      %s222 = ssub.s32 %s13, 1
      %s223 = smul.u32 2, %s18
      %p224 = scmp.lt.s32.totalorder %s223, 3
      %s225 = scalar_select %p224, %s223, 3
      %s226 = smul.addr %s225, 32
      %s227 = smul.addr %s226, 4
      %s228 = scalar_lea.vmem %s0, %s227
      %p229 = pneg %p39
      %p230 = pneg %p36
      %p231 = pneg %p60
      %p232 = pneg %p57
      %p233 = pneg %p81
      %p234 = pneg %p78
      %p235 = pneg %p102
      %p236 = pneg %p99
      %p237 = pneg %p123
      %p238 = pneg %p120
      %p239 = pneg %p149
      %p240 = pneg %p146
      %p241 = scmp.lt.s32.totalorder %s18, 1
      %s242 = scalar_select %p241, %s18, 1
      %s243 = smul.addr %s242, 8
      %s244 = scalar_lea.vmem %s5, %s243
      %p245 = pneg %p175
      %p246 = pneg %p172
      %s247 = smul.u32 2, %s18
      %p248 = scmp.lt.s32.totalorder %s247, 3
      %s249 = scalar_select %p248, %s247, 3
      %s250 = smul.addr %s249, 8
      %s251 = smul.addr %s250, 4
      %s252 = scalar_lea.vmem %s6, %s251
      %s253 = smul.u32 2, %s18
      %p254 = scmp.lt.s32.totalorder %s253, 3
      %s255 = scalar_select %p254, %s253, 3
      %s256 = smul.addr %s255, 32
      %s257 = smul.addr %s256, 4
      %s258 = scalar_lea.vmem %s0, %s257
      %s259 = smul.u32 2, %s18
      %p260 = scmp.lt.s32.totalorder %s18, 1
      %s261 = scalar_select %p260, %s18, 1
      %s262 = smul.addr %s261, 8
      %s263 = scalar_lea.vmem %s5, %s262
      %s264 = smul.u32 2, %s18
      %p265 = scmp.lt.s32.totalorder %s264, 3
      %s266 = scalar_select %p265, %s264, 3
      %s267 = smul.addr %s266, 8
      %s268 = smul.addr %s267, 4
      %s269 = scalar_lea.vmem %s6, %s268
      %s270 = smul.u32 2, %s18
      %v272 = vld [vmem:[%s3] sm:$0xff]
      %v273 = vld [vmem:[%s3 + $0x8] sm:$0xff]
      %v274 = vld [vmem:[%s3 + $0x10] sm:$0xff]
      %v275 = vld [vmem:[%s3 + $0x18] sm:$0xff]
      %v276 = vld [vmem:[%s3 + $0x20] sm:$0xff]
      %v277 = vld [vmem:[%s3 + $0x28] sm:$0xff]
      %v278 = vld [vmem:[%s3 + $0x30] sm:$0xff]
      %v279 = vld [vmem:[%s3 + $0x38] sm:$0xff]
      %v280 = vld [vmem:[%s3 + $0x40] sm:$0xff]
      %v281 = vld [vmem:[%s3 + $0x48] sm:$0xff]
      %v282 = vld [vmem:[%s3 + $0x50] sm:$0xff]
      %v283 = vld [vmem:[%s3 + $0x58] sm:$0xff]
      %v284 = vld [vmem:[%s3 + $0x60] sm:$0xff]
      %v285 = vld [vmem:[%s3 + $0x68] sm:$0xff]
      %v286 = vld [vmem:[%s3 + $0x70] sm:$0xff]
      %v287 = vld [vmem:[%s3 + $0x78] sm:$0xff]
      %v288 = vpack.c.bf16 %v273, %v272
      %v289 = vpack.c.bf16 %v275, %v274
      %v290 = vpack.c.bf16 %v277, %v276
      %v291 = vpack.c.bf16 %v279, %v278
      %v292 = vpack.c.bf16 %v281, %v280
      %v293 = vpack.c.bf16 %v283, %v282
      %v294 = vpack.c.bf16 %v285, %v284
      %v295 = vpack.c.bf16 %v287, %v286
      %v296 = vld [vmem:[%s258] sm:$0xf]
      %v297 = vld [vmem:[%s258 + $0x4] sm:$0xf]
      %v298 = vld [vmem:[%s258 + $0x8] sm:$0xf]
      %v299 = vld [vmem:[%s258 + $0xc] sm:$0xf]
      %v300 = vld [vmem:[%s258 + $0x10] sm:$0xf]
      %v301 = vld [vmem:[%s258 + $0x14] sm:$0xf]
      %v302 = vld [vmem:[%s258 + $0x18] sm:$0xf]
      %v303 = vld [vmem:[%s258 + $0x1c] sm:$0xf]
      %v304 = vld [vmem:[%s258 + $0x20] sm:$0xf]
      %v305 = vld [vmem:[%s258 + $0x24] sm:$0xf]
      %v306 = vld [vmem:[%s258 + $0x28] sm:$0xf]
      %v307 = vld [vmem:[%s258 + $0x2c] sm:$0xf]
      %v308 = vld [vmem:[%s258 + $0x30] sm:$0xf]
      %v309 = vld [vmem:[%s258 + $0x34] sm:$0xf]
      %v310 = vld [vmem:[%s258 + $0x38] sm:$0xf]
      %v311 = vld [vmem:[%s258 + $0x3c] sm:$0xf]
      %v312 = vld [vmem:[%s1] sm:$0xf]
      %v313 = vld [vmem:[%s1 + $0x4] sm:$0xf]
      %v314 = vld [vmem:[%s1 + $0x8] sm:$0xf]
      %v315 = vld [vmem:[%s1 + $0xc] sm:$0xf]
      %v316 = vld [vmem:[%s2] sm:$0x1]
      %v318 = vlaneseq
      %v319 = vshrl.u32 %v318, 7
      %v320 = vsub.s32 0, %v319
      %v321 = vrot.slane %v316, %v320
      %v339 = vunpack.c.l.b16 %v296
      %v340 = vunpack.c.l.b16 %v297
      %v341 = vunpack.c.l.b16 %v298
      %v342 = vunpack.c.l.b16 %v299
      %v343 = vunpack.c.l.b16 %v300
      %v344 = vunpack.c.l.b16 %v301
      %v345 = vunpack.c.l.b16 %v302
      %v346 = vunpack.c.l.b16 %v303
      %v347 = vunpack.c.l.b16 %v304
      %v348 = vunpack.c.l.b16 %v305
      %v349 = vunpack.c.l.b16 %v306
      %v350 = vunpack.c.l.b16 %v307
      %v351 = vunpack.c.l.b16 %v308
      %v352 = vunpack.c.l.b16 %v309
      %v353 = vunpack.c.l.b16 %v310
      %v354 = vunpack.c.l.b16 %v311
      %v355 = vpack.c.b16 %v340, %v339
      %v356 = vpack.c.b16 %v342, %v341
      %v357 = vpack.c.b16 %v344, %v343
      %v358 = vpack.c.b16 %v346, %v345
      %v359 = vpack.c.b16 %v348, %v347
      %v360 = vpack.c.b16 %v350, %v349
      %v361 = vpack.c.b16 %v352, %v351
      %v362 = vpack.c.b16 %v354, %v353
      %v367 = vunpack.c.l.b16 %v312
      %v368 = vunpack.c.l.b16 %v313
      %v369 = vunpack.c.l.b16 %v314
      %v370 = vunpack.c.l.b16 %v315
      %v371 = vpack.c.b16 %v368, %v367
      %v372 = vpack.c.b16 %v370, %v369
      %vm375 = vcmask 261120
      %v377 = vsel %vm375, %v355, 0
      %v380 = vsel %vm375, %v356, 0
      %v383 = vsel %vm375, %v357, 0
      %v386 = vsel %vm375, %v358, 0
      %v389 = vsel %vm375, %v359, 0
      %v392 = vsel %vm375, %v360, 0
      %v395 = vsel %vm375, %v361, 0
      %v398 = vsel %vm375, %v362, 0
      %400 = vmatprep.subr.bf16.mxu0 0
      %401 = vmatpush1.bf16.msra.mxu0 %v371
      %402 = vmatprep.subr.bf16.mxu0 0
      %403 = vmatpush1.bf16.msra.mxu0 %v372
      %404 = vmatprep.subr.bf16.mxu0 0
      %405 = vmatpush1.bf16.msra.mxu0 0
      %406 = vmatprep.subr.bf16.mxu0 0
      %407 = vmatpush1.bf16.msra.mxu0 0
      %408 = vmatprep.subr.bf16.mxu0 0
      %409 = vmatpush1.bf16.msra.mxu0 0
      %410 = vmatprep.subr.bf16.mxu0 0
      %411 = vmatpush1.bf16.msra.mxu0 0
      %412 = vmatprep.subr.bf16.mxu0 0
      %413 = vmatpush1.bf16.msra.mxu0 0
      %414 = vmatprep.subr.bf16.mxu0 0
      %415 = vmatpush1.bf16.msra.mxu0 0
      %416 = vmatprep.subr.bf16.mxu0 0
      %417 = vmatpush1.bf16.msra.mxu0 0
      %418 = vmatprep.subr.bf16.mxu0 0
      %419 = vmatpush1.bf16.msra.mxu0 0
      %420 = vmatprep.subr.bf16.mxu0 0
      %421 = vmatpush1.bf16.msra.mxu0 0
      %422 = vmatprep.subr.bf16.mxu0 0
      %423 = vmatpush1.bf16.msra.mxu0 0
      %424 = vmatprep.subr.bf16.mxu0 0
      %425 = vmatpush1.bf16.msra.mxu0 0
      %426 = vmatprep.subr.bf16.mxu0 0
      %427 = vmatpush1.bf16.msra.mxu0 0
      %428 = vmatprep.subr.bf16.mxu0 0
      %429 = vmatpush1.bf16.msra.mxu0 0
      %430 = vmatprep.subr.bf16.mxu0 0
      %431 = vmatpush1.bf16.msra.mxu0 0
      %432 = vmatprep.mubr.bf16.mxu0 0
      %433 = vmatmul.mubr.bf16.gmra.mrb[0].mxu0 %v377
      %v434 = vpop.f32.mrb[0].mxu0
      %v435 = vadd.f32 %v321, %v434
      %v436 = vpop.f32.mrb[0].mxu0
      %v437 = vpop.f32.mrb[0].mxu0
      %v438 = vadd.f32 %v321, %v437
      %v439 = vpop.f32.mrb[0].mxu0
      %440 = vmatprep.mubr.bf16.mxu0 0
      %441 = vmatmul.mubr.bf16.gmra.mrb[0].mxu0 %v380
      %v442 = vpop.f32.mrb[0].mxu0
      %v443 = vadd.f32 %v321, %v442
      %v444 = vpop.f32.mrb[0].mxu0
      %v445 = vpop.f32.mrb[0].mxu0
      %v446 = vadd.f32 %v321, %v445
      %v447 = vpop.f32.mrb[0].mxu0
      %448 = vmatprep.mubr.bf16.mxu0 0
      %449 = vmatmul.mubr.bf16.gmra.mrb[0].mxu0 %v383
      %v450 = vpop.f32.mrb[0].mxu0
      %v451 = vadd.f32 %v321, %v450
      %v452 = vpop.f32.mrb[0].mxu0
      %v453 = vpop.f32.mrb[0].mxu0
      %v454 = vadd.f32 %v321, %v453
      %v455 = vpop.f32.mrb[0].mxu0
      %456 = vmatprep.mubr.bf16.mxu0 0
      %457 = vmatmul.mubr.bf16.gmra.mrb[0].mxu0 %v386
      %v458 = vpop.f32.mrb[0].mxu0
      %v459 = vadd.f32 %v321, %v458
      %v460 = vpop.f32.mrb[0].mxu0
      %v461 = vpop.f32.mrb[0].mxu0
      %v462 = vadd.f32 %v321, %v461
      %v463 = vpop.f32.mrb[0].mxu0
      %464 = vmatprep.mubr.bf16.mxu0 0
      %465 = vmatmul.mubr.bf16.gmra.mrb[0].mxu0 %v389
      %v466 = vpop.f32.mrb[0].mxu0
      %v467 = vadd.f32 %v321, %v466
      %v468 = vpop.f32.mrb[0].mxu0
      %v469 = vpop.f32.mrb[0].mxu0
      %v470 = vadd.f32 %v321, %v469
      %v471 = vpop.f32.mrb[0].mxu0
      %472 = vmatprep.mubr.bf16.mxu0 0
      %473 = vmatmul.mubr.bf16.gmra.mrb[0].mxu0 %v392
      %v474 = vpop.f32.mrb[0].mxu0
      %v475 = vadd.f32 %v321, %v474
      %v476 = vpop.f32.mrb[0].mxu0
      %v477 = vpop.f32.mrb[0].mxu0
      %v478 = vadd.f32 %v321, %v477
      %v479 = vpop.f32.mrb[0].mxu0
      %480 = vmatprep.mubr.bf16.mxu0 0
      %481 = vmatmul.mubr.bf16.gmra.mrb[0].mxu0 %v395
      %v482 = vpop.f32.mrb[0].mxu0
      %v483 = vadd.f32 %v321, %v482
      %v484 = vpop.f32.mrb[0].mxu0
      %v485 = vpop.f32.mrb[0].mxu0
      %v486 = vadd.f32 %v321, %v485
      %v487 = vpop.f32.mrb[0].mxu0
      %488 = vmatprep.mubr.bf16.mxu0 0
      %489 = vmatmul.mubr.bf16.gmra.mrb[0].mxu0 %v398
      %v490 = vpop.f32.mrb[0].mxu0
      %v491 = vadd.f32 %v321, %v490
      %v492 = vpop.f32.mrb[0].mxu0
      %v493 = vpop.f32.mrb[0].mxu0
      %v494 = vadd.f32 %v321, %v493
      %v495 = vpop.f32.mrb[0].mxu0
      %496 = vdwg.mxu0
      %v497 = vmax.f32 %v435, 0.0
      %v498 = vmax.f32 %v438, 0.0
      %v499 = vmax.f32 %v443, 0.0
      %v500 = vmax.f32 %v446, 0.0
      %v501 = vmax.f32 %v451, 0.0
      %v502 = vmax.f32 %v454, 0.0
      %v503 = vmax.f32 %v459, 0.0
      %v504 = vmax.f32 %v462, 0.0
      %v505 = vmax.f32 %v467, 0.0
      %v506 = vmax.f32 %v470, 0.0
      %v507 = vmax.f32 %v475, 0.0
      %v508 = vmax.f32 %v478, 0.0
      %v509 = vmax.f32 %v483, 0.0
      %v510 = vmax.f32 %v486, 0.0
      %v511 = vmax.f32 %v491, 0.0
      %v512 = vmax.f32 %v494, 0.0
      %513 = vst [vmem:[#allocation2] sm:$0xff] %v497
      %514 = vst [vmem:[#allocation2 + $0x8] sm:$0xff] %v498
      %515 = vst [vmem:[#allocation2 + $0x10] sm:$0xff] %v499
      %516 = vst [vmem:[#allocation2 + $0x18] sm:$0xff] %v500
      %517 = vst [vmem:[#allocation2 + $0x20] sm:$0xff] %v501
      %518 = vst [vmem:[#allocation2 + $0x28] sm:$0xff] %v502
      %519 = vst [vmem:[#allocation2 + $0x30] sm:$0xff] %v503
      %520 = vst [vmem:[#allocation2 + $0x38] sm:$0xff] %v504
      %521 = vst [vmem:[#allocation2 + $0x40] sm:$0xff] %v505
      %522 = vst [vmem:[#allocation2 + $0x48] sm:$0xff] %v506
      %523 = vst [vmem:[#allocation2 + $0x50] sm:$0xff] %v507
      %524 = vst [vmem:[#allocation2 + $0x58] sm:$0xff] %v508
      %525 = vst [vmem:[#allocation2 + $0x60] sm:$0xff] %v509
      %526 = vst [vmem:[#allocation2 + $0x68] sm:$0xff] %v510
      %527 = vst [vmem:[#allocation2 + $0x70] sm:$0xff] %v511
      %528 = vst [vmem:[#allocation2 + $0x78] sm:$0xff] %v512
      %s529 = scalar_lea.vmem %s258, 128
      %v530 = vld [vmem:[%s529] sm:$0xf]
      %v531 = vld [vmem:[%s529 + $0x4] sm:$0xf]
      %v532 = vld [vmem:[%s529 + $0x8] sm:$0xf]
      %v533 = vld [vmem:[%s529 + $0xc] sm:$0xf]
      %v534 = vld [vmem:[%s529 + $0x10] sm:$0xf]
      %v535 = vld [vmem:[%s529 + $0x14] sm:$0xf]
      %v536 = vld [vmem:[%s529 + $0x18] sm:$0xf]
      %v537 = vld [vmem:[%s529 + $0x1c] sm:$0xf]
      %v538 = vld [vmem:[%s529 + $0x20] sm:$0xf]
      %v539 = vld [vmem:[%s529 + $0x24] sm:$0xf]
      %v540 = vld [vmem:[%s529 + $0x28] sm:$0xf]
      %v541 = vld [vmem:[%s529 + $0x2c] sm:$0xf]
      %v542 = vld [vmem:[%s529 + $0x30] sm:$0xf]
      %v543 = vld [vmem:[%s529 + $0x34] sm:$0xf]
      %v544 = vld [vmem:[%s529 + $0x38] sm:$0xf]
      %v545 = vld [vmem:[%s529 + $0x3c] sm:$0xf]
      %v546 = vld [vmem:[%s1] sm:$0xf]
      %v547 = vld [vmem:[%s1 + $0x4] sm:$0xf]
      %v548 = vld [vmem:[%s1 + $0x8] sm:$0xf]
      %v549 = vld [vmem:[%s1 + $0xc] sm:$0xf]
      %v550 = vld [vmem:[%s2] sm:$0x1]
      %v552 = vlaneseq
      %v553 = vshrl.u32 %v552, 7
      %v554 = vsub.s32 0, %v553
      %v555 = vrot.slane %v550, %v554
      %v573 = vunpack.c.l.b16 %v530
      %v574 = vunpack.c.l.b16 %v531
      %v575 = vunpack.c.l.b16 %v532
      %v576 = vunpack.c.l.b16 %v533
      %v577 = vunpack.c.l.b16 %v534
      %v578 = vunpack.c.l.b16 %v535
      %v579 = vunpack.c.l.b16 %v536
      %v580 = vunpack.c.l.b16 %v537
      %v581 = vunpack.c.l.b16 %v538
      %v582 = vunpack.c.l.b16 %v539
      %v583 = vunpack.c.l.b16 %v540
      %v584 = vunpack.c.l.b16 %v541
      %v585 = vunpack.c.l.b16 %v542
      %v586 = vunpack.c.l.b16 %v543
      %v587 = vunpack.c.l.b16 %v544
      %v588 = vunpack.c.l.b16 %v545
      %v589 = vpack.c.b16 %v574, %v573
      %v590 = vpack.c.b16 %v576, %v575
      %v591 = vpack.c.b16 %v578, %v577
      %v592 = vpack.c.b16 %v580, %v579
      %v593 = vpack.c.b16 %v582, %v581
      %v594 = vpack.c.b16 %v584, %v583
      %v595 = vpack.c.b16 %v586, %v585
      %v596 = vpack.c.b16 %v588, %v587
      %v601 = vunpack.c.l.b16 %v546
      %v602 = vunpack.c.l.b16 %v547
      %v603 = vunpack.c.l.b16 %v548
      %v604 = vunpack.c.l.b16 %v549
      %v605 = vpack.c.b16 %v602, %v601
      %v606 = vpack.c.b16 %v604, %v603
      %v610 = vsel %vm375, %v589, 0
      %v613 = vsel %vm375, %v590, 0
      %v616 = vsel %vm375, %v591, 0
      %v619 = vsel %vm375, %v592, 0
      %v622 = vsel %vm375, %v593, 0
      %v625 = vsel %vm375, %v594, 0
      %v628 = vsel %vm375, %v595, 0
      %v631 = vsel %vm375, %v596, 0
      %633 = vmatprep.subr.bf16.mxu0 0
      %634 = vmatpush1.bf16.msra.mxu0 %v605
      %635 = vmatprep.subr.bf16.mxu0 0
      %636 = vmatpush1.bf16.msra.mxu0 %v606
      %637 = vmatprep.subr.bf16.mxu0 0
      %638 = vmatpush1.bf16.msra.mxu0 0
      %639 = vmatprep.subr.bf16.mxu0 0
      %640 = vmatpush1.bf16.msra.mxu0 0
      %641 = vmatprep.subr.bf16.mxu0 0
      %642 = vmatpush1.bf16.msra.mxu0 0
      %643 = vmatprep.subr.bf16.mxu0 0
      %644 = vmatpush1.bf16.msra.mxu0 0
      %645 = vmatprep.subr.bf16.mxu0 0
      %646 = vmatpush1.bf16.msra.mxu0 0
      %647 = vmatprep.subr.bf16.mxu0 0
      %648 = vmatpush1.bf16.msra.mxu0 0
      %649 = vmatprep.subr.bf16.mxu0 0
      %650 = vmatpush1.bf16.msra.mxu0 0
      %651 = vmatprep.subr.bf16.mxu0 0
      %652 = vmatpush1.bf16.msra.mxu0 0
      %653 = vmatprep.subr.bf16.mxu0 0
      %654 = vmatpush1.bf16.msra.mxu0 0
      %655 = vmatprep.subr.bf16.mxu0 0
      %656 = vmatpush1.bf16.msra.mxu0 0
      %657 = vmatprep.subr.bf16.mxu0 0
      %658 = vmatpush1.bf16.msra.mxu0 0
      %659 = vmatprep.subr.bf16.mxu0 0
      %660 = vmatpush1.bf16.msra.mxu0 0
      %661 = vmatprep.subr.bf16.mxu0 0
      %662 = vmatpush1.bf16.msra.mxu0 0
      %663 = vmatprep.subr.bf16.mxu0 0
      %664 = vmatpush1.bf16.msra.mxu0 0
      %665 = vmatprep.mubr.bf16.mxu0 0
      %666 = vmatmul.mubr.bf16.gmra.mrb[0].mxu0 %v610
      %v667 = vpop.f32.mrb[0].mxu0
      %v668 = vadd.f32 %v555, %v667
      %v669 = vpop.f32.mrb[0].mxu0
      %v670 = vpop.f32.mrb[0].mxu0
      %v671 = vadd.f32 %v555, %v670
      %v672 = vpop.f32.mrb[0].mxu0
      %673 = vmatprep.mubr.bf16.mxu0 0
      %674 = vmatmul.mubr.bf16.gmra.mrb[0].mxu0 %v613
      %v675 = vpop.f32.mrb[0].mxu0
      %v676 = vadd.f32 %v555, %v675
      %v677 = vpop.f32.mrb[0].mxu0
      %v678 = vpop.f32.mrb[0].mxu0
      %v679 = vadd.f32 %v555, %v678
      %v680 = vpop.f32.mrb[0].mxu0
      %681 = vmatprep.mubr.bf16.mxu0 0
      %682 = vmatmul.mubr.bf16.gmra.mrb[0].mxu0 %v616
      %v683 = vpop.f32.mrb[0].mxu0
      %v684 = vadd.f32 %v555, %v683
      %v685 = vpop.f32.mrb[0].mxu0
      %v686 = vpop.f32.mrb[0].mxu0
      %v687 = vadd.f32 %v555, %v686
      %v688 = vpop.f32.mrb[0].mxu0
      %689 = vmatprep.mubr.bf16.mxu0 0
      %690 = vmatmul.mubr.bf16.gmra.mrb[0].mxu0 %v619
      %v691 = vpop.f32.mrb[0].mxu0
      %v692 = vadd.f32 %v555, %v691
      %v693 = vpop.f32.mrb[0].mxu0
      %v694 = vpop.f32.mrb[0].mxu0
      %v695 = vadd.f32 %v555, %v694
      %v696 = vpop.f32.mrb[0].mxu0
      %697 = vmatprep.mubr.bf16.mxu0 0
      %698 = vmatmul.mubr.bf16.gmra.mrb[0].mxu0 %v622
      %v699 = vpop.f32.mrb[0].mxu0
      %v700 = vadd.f32 %v555, %v699
      %v701 = vpop.f32.mrb[0].mxu0
      %v702 = vpop.f32.mrb[0].mxu0
      %v703 = vadd.f32 %v555, %v702
      %v704 = vpop.f32.mrb[0].mxu0
      %705 = vmatprep.mubr.bf16.mxu0 0
      %706 = vmatmul.mubr.bf16.gmra.mrb[0].mxu0 %v625
      %v707 = vpop.f32.mrb[0].mxu0
      %v708 = vadd.f32 %v555, %v707
      %v709 = vpop.f32.mrb[0].mxu0
      %v710 = vpop.f32.mrb[0].mxu0
      %v711 = vadd.f32 %v555, %v710
      %v712 = vpop.f32.mrb[0].mxu0
      %713 = vmatprep.mubr.bf16.mxu0 0
      %714 = vmatmul.mubr.bf16.gmra.mrb[0].mxu0 %v628
      %v715 = vpop.f32.mrb[0].mxu0
      %v716 = vadd.f32 %v555, %v715
      %v717 = vpop.f32.mrb[0].mxu0
      %v718 = vpop.f32.mrb[0].mxu0
      %v719 = vadd.f32 %v555, %v718
      %v720 = vpop.f32.mrb[0].mxu0
      %721 = vmatprep.mubr.bf16.mxu0 0
      %722 = vmatmul.mubr.bf16.gmra.mrb[0].mxu0 %v631
      %v723 = vpop.f32.mrb[0].mxu0
      %v724 = vadd.f32 %v555, %v723
      %v725 = vpop.f32.mrb[0].mxu0
      %v726 = vpop.f32.mrb[0].mxu0
      %v727 = vadd.f32 %v555, %v726
      %v728 = vpop.f32.mrb[0].mxu0
      %729 = vdwg.mxu0
      %v730 = vmax.f32 %v668, 0.0
      %v731 = vmax.f32 %v671, 0.0
      %v732 = vmax.f32 %v676, 0.0
      %v733 = vmax.f32 %v679, 0.0
      %v734 = vmax.f32 %v684, 0.0
      %v735 = vmax.f32 %v687, 0.0
      %v736 = vmax.f32 %v692, 0.0
      %v737 = vmax.f32 %v695, 0.0
      %v738 = vmax.f32 %v700, 0.0
      %v739 = vmax.f32 %v703, 0.0
      %v740 = vmax.f32 %v708, 0.0
      %v741 = vmax.f32 %v711, 0.0
      %v742 = vmax.f32 %v716, 0.0
      %v743 = vmax.f32 %v719, 0.0
      %v744 = vmax.f32 %v724, 0.0
      %v745 = vmax.f32 %v727, 0.0
      %746 = vst [vmem:[#allocation3] sm:$0xff] %v730
      %747 = vst [vmem:[#allocation3 + $0x8] sm:$0xff] %v731
      %748 = vst [vmem:[#allocation3 + $0x10] sm:$0xff] %v732
      %749 = vst [vmem:[#allocation3 + $0x18] sm:$0xff] %v733
      %750 = vst [vmem:[#allocation3 + $0x20] sm:$0xff] %v734
      %751 = vst [vmem:[#allocation3 + $0x28] sm:$0xff] %v735
      %752 = vst [vmem:[#allocation3 + $0x30] sm:$0xff] %v736
      %753 = vst [vmem:[#allocation3 + $0x38] sm:$0xff] %v737
      %754 = vst [vmem:[#allocation3 + $0x40] sm:$0xff] %v738
      %755 = vst [vmem:[#allocation3 + $0x48] sm:$0xff] %v739
      %756 = vst [vmem:[#allocation3 + $0x50] sm:$0xff] %v740
      %757 = vst [vmem:[#allocation3 + $0x58] sm:$0xff] %v741
      %758 = vst [vmem:[#allocation3 + $0x60] sm:$0xff] %v742
      %759 = vst [vmem:[#allocation3 + $0x68] sm:$0xff] %v743
      %760 = vst [vmem:[#allocation3 + $0x70] sm:$0xff] %v744
      %761 = vst [vmem:[#allocation3 + $0x78] sm:$0xff] %v745
      %v762 = vmul.f32 %v497, %v497
      %v763 = vmul.f32 %v498, %v498
      %v764 = vmul.f32 %v499, %v499
      %v765 = vmul.f32 %v500, %v500
      %v766 = vmul.f32 %v501, %v501
      %v767 = vmul.f32 %v502, %v502
      %v768 = vmul.f32 %v503, %v503
      %v769 = vmul.f32 %v504, %v504
      %v770 = vmul.f32 %v505, %v505
      %v771 = vmul.f32 %v506, %v506
      %v772 = vmul.f32 %v507, %v507
      %v773 = vmul.f32 %v508, %v508
      %v774 = vmul.f32 %v509, %v509
      %v775 = vmul.f32 %v510, %v510
      %v776 = vmul.f32 %v511, %v511
      %v777 = vmul.f32 %v512, %v512
      %778 = vadd.xlane.f32.xlu0 %v762
      %v779 = vpop.xlane.xlu0 %778
      %780 = vadd.xlane.f32.xlu0 %v763
      %v781 = vpop.xlane.xlu0 %780
      %782 = vadd.xlane.f32.xlu0 %v764
      %v783 = vpop.xlane.xlu0 %782
      %784 = vadd.xlane.f32.xlu0 %v765
      %v785 = vpop.xlane.xlu0 %784
      %786 = vadd.xlane.f32.xlu0 %v766
      %v787 = vpop.xlane.xlu0 %786
      %788 = vadd.xlane.f32.xlu0 %v767
      %v789 = vpop.xlane.xlu0 %788
      %790 = vadd.xlane.f32.xlu0 %v768
      %v791 = vpop.xlane.xlu0 %790
      %792 = vadd.xlane.f32.xlu0 %v769
      %v793 = vpop.xlane.xlu0 %792
      %794 = vadd.xlane.f32.xlu0 %v770
      %v795 = vpop.xlane.xlu0 %794
      %796 = vadd.xlane.f32.xlu0 %v771
      %v797 = vpop.xlane.xlu0 %796
      %798 = vadd.xlane.f32.xlu0 %v772
      %v799 = vpop.xlane.xlu0 %798
      %800 = vadd.xlane.f32.xlu0 %v773
      %v801 = vpop.xlane.xlu0 %800
      %802 = vadd.xlane.f32.xlu0 %v774
      %v803 = vpop.xlane.xlu0 %802
      %804 = vadd.xlane.f32.xlu0 %v775
      %v805 = vpop.xlane.xlu0 %804
      %806 = vadd.xlane.f32.xlu0 %v776
      %v807 = vpop.xlane.xlu0 %806
      %808 = vadd.xlane.f32.xlu0 %v777
      %v809 = vpop.xlane.xlu0 %808
      %v810 = vadd.f32 %v779, 1e-10
      %v811 = vadd.f32 %v781, 1e-10
      %v812 = vadd.f32 %v783, 1e-10
      %v813 = vadd.f32 %v785, 1e-10
      %v814 = vadd.f32 %v787, 1e-10
      %v815 = vadd.f32 %v789, 1e-10
      %v816 = vadd.f32 %v791, 1e-10
      %v817 = vadd.f32 %v793, 1e-10
      %v818 = vadd.f32 %v795, 1e-10
      %v819 = vadd.f32 %v797, 1e-10
      %v820 = vadd.f32 %v799, 1e-10
      %v821 = vadd.f32 %v801, 1e-10
      %v822 = vadd.f32 %v803, 1e-10
      %v823 = vadd.f32 %v805, 1e-10
      %v824 = vadd.f32 %v807, 1e-10
      %v825 = vadd.f32 %v809, 1e-10
      %v826 = vrsqrt.pop %v810
      %v827 = vrsqrt.pop %v811
      %v828 = vrsqrt.pop %v812
      %v829 = vrsqrt.pop %v813
      %v830 = vrsqrt.pop %v814
      %v831 = vrsqrt.pop %v815
      %v832 = vrsqrt.pop %v816
      %v833 = vrsqrt.pop %v817
      %v834 = vrsqrt.pop %v818
      %v835 = vrsqrt.pop %v819
      %v836 = vrsqrt.pop %v820
      %v837 = vrsqrt.pop %v821
      %v838 = vrsqrt.pop %v822
      %v839 = vrsqrt.pop %v823
      %v840 = vrsqrt.pop %v824
      %v841 = vrsqrt.pop %v825
      %v842 = vmul.f32 %v497, %v826
      %v843 = vmul.f32 %v498, %v827
      %v844 = vmul.f32 %v499, %v828
      %v845 = vmul.f32 %v500, %v829
      %v846 = vmul.f32 %v501, %v830
      %v847 = vmul.f32 %v502, %v831
      %v848 = vmul.f32 %v503, %v832
      %v849 = vmul.f32 %v504, %v833
      %v850 = vmul.f32 %v505, %v834
      %v851 = vmul.f32 %v506, %v835
      %v852 = vmul.f32 %v507, %v836
      %v853 = vmul.f32 %v508, %v837
      %v854 = vmul.f32 %v509, %v838
      %v855 = vmul.f32 %v510, %v839
      %v856 = vmul.f32 %v511, %v840
      %v857 = vmul.f32 %v512, %v841
      %v858 = vmul.f32 %v730, %v730
      %v859 = vmul.f32 %v731, %v731
      %v860 = vmul.f32 %v732, %v732
      %v861 = vmul.f32 %v733, %v733
      %v862 = vmul.f32 %v734, %v734
      %v863 = vmul.f32 %v735, %v735
      %v864 = vmul.f32 %v736, %v736
      %v865 = vmul.f32 %v737, %v737
      %v866 = vmul.f32 %v738, %v738
      %v867 = vmul.f32 %v739, %v739
      %v868 = vmul.f32 %v740, %v740
      %v869 = vmul.f32 %v741, %v741
      %v870 = vmul.f32 %v742, %v742
      %v871 = vmul.f32 %v743, %v743
      %v872 = vmul.f32 %v744, %v744
      %v873 = vmul.f32 %v745, %v745
      %874 = vadd.xlane.f32.xlu0 %v858
      %v875 = vpop.xlane.xlu0 %874
      %876 = vadd.xlane.f32.xlu0 %v859
      %v877 = vpop.xlane.xlu0 %876
      %878 = vadd.xlane.f32.xlu0 %v860
      %v879 = vpop.xlane.xlu0 %878
      %880 = vadd.xlane.f32.xlu0 %v861
      %v881 = vpop.xlane.xlu0 %880
      %882 = vadd.xlane.f32.xlu0 %v862
      %v883 = vpop.xlane.xlu0 %882
      %884 = vadd.xlane.f32.xlu0 %v863
      %v885 = vpop.xlane.xlu0 %884
      %886 = vadd.xlane.f32.xlu0 %v864
      %v887 = vpop.xlane.xlu0 %886
      %888 = vadd.xlane.f32.xlu0 %v865
      %v889 = vpop.xlane.xlu0 %888
      %890 = vadd.xlane.f32.xlu0 %v866
      %v891 = vpop.xlane.xlu0 %890
      %892 = vadd.xlane.f32.xlu0 %v867
      %v893 = vpop.xlane.xlu0 %892
      %894 = vadd.xlane.f32.xlu0 %v868
      %v895 = vpop.xlane.xlu0 %894
      %896 = vadd.xlane.f32.xlu0 %v869
      %v897 = vpop.xlane.xlu0 %896
      %898 = vadd.xlane.f32.xlu0 %v870
      %v899 = vpop.xlane.xlu0 %898
      %900 = vadd.xlane.f32.xlu0 %v871
      %v901 = vpop.xlane.xlu0 %900
      %902 = vadd.xlane.f32.xlu0 %v872
      %v903 = vpop.xlane.xlu0 %902
      %904 = vadd.xlane.f32.xlu0 %v873
      %v905 = vpop.xlane.xlu0 %904
      %v906 = vadd.f32 %v875, 1e-10
      %v907 = vadd.f32 %v877, 1e-10
      %v908 = vadd.f32 %v879, 1e-10
      %v909 = vadd.f32 %v881, 1e-10
      %v910 = vadd.f32 %v883, 1e-10
      %v911 = vadd.f32 %v885, 1e-10
      %v912 = vadd.f32 %v887, 1e-10
      %v913 = vadd.f32 %v889, 1e-10
      %v914 = vadd.f32 %v891, 1e-10
      %v915 = vadd.f32 %v893, 1e-10
      %v916 = vadd.f32 %v895, 1e-10
      %v917 = vadd.f32 %v897, 1e-10
      %v918 = vadd.f32 %v899, 1e-10
      %v919 = vadd.f32 %v901, 1e-10
      %v920 = vadd.f32 %v903, 1e-10
      %v921 = vadd.f32 %v905, 1e-10
      %v922 = vrsqrt.pop %v906
      %v923 = vrsqrt.pop %v907
      %v924 = vrsqrt.pop %v908
      %v925 = vrsqrt.pop %v909
      %v926 = vrsqrt.pop %v910
      %v927 = vrsqrt.pop %v911
      %v928 = vrsqrt.pop %v912
      %v929 = vrsqrt.pop %v913
      %v930 = vrsqrt.pop %v914
      %v931 = vrsqrt.pop %v915
      %v932 = vrsqrt.pop %v916
      %v933 = vrsqrt.pop %v917
      %v934 = vrsqrt.pop %v918
      %v935 = vrsqrt.pop %v919
      %v936 = vrsqrt.pop %v920
      %v937 = vrsqrt.pop %v921
      %v938 = vmul.f32 %v730, %v922
      %v939 = vmul.f32 %v731, %v923
      %v940 = vmul.f32 %v732, %v924
      %v941 = vmul.f32 %v733, %v925
      %v942 = vmul.f32 %v734, %v926
      %v943 = vmul.f32 %v735, %v927
      %v944 = vmul.f32 %v736, %v928
      %v945 = vmul.f32 %v737, %v929
      %v946 = vmul.f32 %v738, %v930
      %v947 = vmul.f32 %v739, %v931
      %v948 = vmul.f32 %v740, %v932
      %v949 = vmul.f32 %v741, %v933
      %v950 = vmul.f32 %v742, %v934
      %v951 = vmul.f32 %v743, %v935
      %v952 = vmul.f32 %v744, %v936
      %v953 = vmul.f32 %v745, %v937
      %v954 = vsub.f32 %v842, %v938
      %v955 = vsub.f32 %v843, %v939
      %v956 = vsub.f32 %v844, %v940
      %v957 = vsub.f32 %v845, %v941
      %v958 = vsub.f32 %v846, %v942
      %v959 = vsub.f32 %v847, %v943
      %v960 = vsub.f32 %v848, %v944
      %v961 = vsub.f32 %v849, %v945
      %v962 = vsub.f32 %v850, %v946
      %v963 = vsub.f32 %v851, %v947
      %v964 = vsub.f32 %v852, %v948
      %v965 = vsub.f32 %v853, %v949
      %v966 = vsub.f32 %v854, %v950
      %v967 = vsub.f32 %v855, %v951
      %v968 = vsub.f32 %v856, %v952
      %v969 = vsub.f32 %v857, %v953
      %v970 = vmul.f32 %v954, %v954
      %v971 = vmul.f32 %v955, %v955
      %v972 = vmul.f32 %v956, %v956
      %v973 = vmul.f32 %v957, %v957
      %v974 = vmul.f32 %v958, %v958
      %v975 = vmul.f32 %v959, %v959
      %v976 = vmul.f32 %v960, %v960
      %v977 = vmul.f32 %v961, %v961
      %v978 = vmul.f32 %v962, %v962
      %v979 = vmul.f32 %v963, %v963
      %v980 = vmul.f32 %v964, %v964
      %v981 = vmul.f32 %v965, %v965
      %v982 = vmul.f32 %v966, %v966
      %v983 = vmul.f32 %v967, %v967
      %v984 = vmul.f32 %v968, %v968
      %v985 = vmul.f32 %v969, %v969
      %v986 = vpack.c.bf16 %v971, %v970
      %v987 = vpack.c.bf16 %v973, %v972
      %v988 = vpack.c.bf16 %v975, %v974
      %v989 = vpack.c.bf16 %v977, %v976
      %v990 = vpack.c.bf16 %v979, %v978
      %v991 = vpack.c.bf16 %v981, %v980
      %v992 = vpack.c.bf16 %v983, %v982
      %v993 = vpack.c.bf16 %v985, %v984
      %994 = vmatprep.subr.bf16.mxu0 0
      %995 = vmatpush1.bf16.msra.mxu0 %v288
      %996 = vmatprep.subr.bf16.mxu0 0
      %997 = vmatpush1.bf16.msra.mxu0 %v289
      %998 = vmatprep.subr.bf16.mxu0 0
      %999 = vmatpush1.bf16.msra.mxu0 %v290
      %1000 = vmatprep.subr.bf16.mxu0 0
      %1001 = vmatpush1.bf16.msra.mxu0 %v291
      %1002 = vmatprep.subr.bf16.mxu0 0
      %1003 = vmatpush1.bf16.msra.mxu0 %v292
      %1004 = vmatprep.subr.bf16.mxu0 0
      %1005 = vmatpush1.bf16.msra.mxu0 %v293
      %1006 = vmatprep.subr.bf16.mxu0 0
      %1007 = vmatpush1.bf16.msra.mxu0 %v294
      %1008 = vmatprep.subr.bf16.mxu0 0
      %1009 = vmatpush1.bf16.msra.mxu0 %v295
      %1010 = vmatprep.subr.bf16.mxu0 0
      %1011 = vmatpush1.bf16.msra.mxu0 0
      %1012 = vmatprep.subr.bf16.mxu0 0
      %1013 = vmatpush1.bf16.msra.mxu0 0
      %1014 = vmatprep.subr.bf16.mxu0 0
      %1015 = vmatpush1.bf16.msra.mxu0 0
      %1016 = vmatprep.subr.bf16.mxu0 0
      %1017 = vmatpush1.bf16.msra.mxu0 0
      %1018 = vmatprep.subr.bf16.mxu0 0
      %1019 = vmatpush1.bf16.msra.mxu0 0
      %1020 = vmatprep.subr.bf16.mxu0 0
      %1021 = vmatpush1.bf16.msra.mxu0 0
      %1022 = vmatprep.subr.bf16.mxu0 0
      %1023 = vmatpush1.bf16.msra.mxu0 0
      %1024 = vmatprep.subr.bf16.mxu0 0
      %1025 = vmatpush1.bf16.msra.mxu0 0
      %1026 = vmatprep.mubr.bf16.mxu0 0
      %1027 = vmatmul.mubr.bf16.gmra.mrb[0].mxu0 %v986
      %v1028 = vpop.f32.mrb[0].mxu0
      %v1029 = vadd.f32 0.0, %v1028
      %v1030 = vpop.f32.mrb[0].mxu0
      %v1031 = vpop.f32.mrb[0].mxu0
      %v1032 = vadd.f32 0.0, %v1031
      %v1033 = vpop.f32.mrb[0].mxu0
      %1034 = vmatprep.mubr.bf16.mxu0 0
      %1035 = vmatmul.mubr.bf16.gmra.mrb[0].mxu0 %v987
      %v1036 = vpop.f32.mrb[0].mxu0
      %v1037 = vadd.f32 0.0, %v1036
      %v1038 = vpop.f32.mrb[0].mxu0
      %v1039 = vpop.f32.mrb[0].mxu0
      %v1040 = vadd.f32 0.0, %v1039
      %v1041 = vpop.f32.mrb[0].mxu0
      %1042 = vmatprep.mubr.bf16.mxu0 0
      %1043 = vmatmul.mubr.bf16.gmra.mrb[0].mxu0 %v988
      %v1044 = vpop.f32.mrb[0].mxu0
      %v1045 = vadd.f32 0.0, %v1044
      %v1046 = vpop.f32.mrb[0].mxu0
      %v1047 = vpop.f32.mrb[0].mxu0
      %v1048 = vadd.f32 0.0, %v1047
      %v1049 = vpop.f32.mrb[0].mxu0
      %1050 = vmatprep.mubr.bf16.mxu0 0
      %1051 = vmatmul.mubr.bf16.gmra.mrb[0].mxu0 %v989
      %v1052 = vpop.f32.mrb[0].mxu0
      %v1053 = vadd.f32 0.0, %v1052
      %v1054 = vpop.f32.mrb[0].mxu0
      %v1055 = vpop.f32.mrb[0].mxu0
      %v1056 = vadd.f32 0.0, %v1055
      %v1057 = vpop.f32.mrb[0].mxu0
      %1058 = vmatprep.mubr.bf16.mxu0 0
      %1059 = vmatmul.mubr.bf16.gmra.mrb[0].mxu0 %v990
      %v1060 = vpop.f32.mrb[0].mxu0
      %v1061 = vadd.f32 0.0, %v1060
      %v1062 = vpop.f32.mrb[0].mxu0
      %v1063 = vpop.f32.mrb[0].mxu0
      %v1064 = vadd.f32 0.0, %v1063
      %v1065 = vpop.f32.mrb[0].mxu0
      %1066 = vmatprep.mubr.bf16.mxu0 0
      %1067 = vmatmul.mubr.bf16.gmra.mrb[0].mxu0 %v991
      %v1068 = vpop.f32.mrb[0].mxu0
      %v1069 = vadd.f32 0.0, %v1068
      %v1070 = vpop.f32.mrb[0].mxu0
      %v1071 = vpop.f32.mrb[0].mxu0
      %v1072 = vadd.f32 0.0, %v1071
      %v1073 = vpop.f32.mrb[0].mxu0
      %1074 = vmatprep.mubr.bf16.mxu0 0
      %1075 = vmatmul.mubr.bf16.gmra.mrb[0].mxu0 %v992
      %v1076 = vpop.f32.mrb[0].mxu0
      %v1077 = vadd.f32 0.0, %v1076
      %v1078 = vpop.f32.mrb[0].mxu0
      %v1079 = vpop.f32.mrb[0].mxu0
      %v1080 = vadd.f32 0.0, %v1079
      %v1081 = vpop.f32.mrb[0].mxu0
      %1082 = vmatprep.mubr.bf16.mxu0 0
      %1083 = vmatmul.mubr.bf16.gmra.mrb[0].mxu0 %v993
      %v1084 = vpop.f32.mrb[0].mxu0
      %v1085 = vadd.f32 0.0, %v1084
      %v1086 = vpop.f32.mrb[0].mxu0
      %v1087 = vpop.f32.mrb[0].mxu0
      %v1088 = vadd.f32 0.0, %v1087
      %v1089 = vpop.f32.mrb[0].mxu0
      %1090 = vdwg.mxu0
      %v1091 = vld [vmem:[%s4] sm:$0xff]
      %v1092 = vld [vmem:[%s4 + $0x8] sm:$0xff]
      %v1093 = vld [vmem:[%s4 + $0x10] sm:$0xff]
      %v1094 = vld [vmem:[%s4 + $0x18] sm:$0xff]
      %v1095 = vld [vmem:[%s4 + $0x20] sm:$0xff]
      %v1096 = vld [vmem:[%s4 + $0x28] sm:$0xff]
      %v1097 = vld [vmem:[%s4 + $0x30] sm:$0xff]
      %v1098 = vld [vmem:[%s4 + $0x38] sm:$0xff]
      %v1099 = vld [vmem:[%s4 + $0x40] sm:$0xff]
      %v1100 = vld [vmem:[%s4 + $0x48] sm:$0xff]
      %v1101 = vld [vmem:[%s4 + $0x50] sm:$0xff]
      %v1102 = vld [vmem:[%s4 + $0x58] sm:$0xff]
      %v1103 = vld [vmem:[%s4 + $0x60] sm:$0xff]
      %v1104 = vld [vmem:[%s4 + $0x68] sm:$0xff]
      %v1105 = vld [vmem:[%s4 + $0x70] sm:$0xff]
      %v1106 = vld [vmem:[%s4 + $0x78] sm:$0xff]
      %v1107 = vmul.f32 %v1029, %v1091
      %v1108 = vmul.f32 %v1032, %v1092
      %v1109 = vmul.f32 %v1037, %v1093
      %v1110 = vmul.f32 %v1040, %v1094
      %v1111 = vmul.f32 %v1045, %v1095
      %v1112 = vmul.f32 %v1048, %v1096
      %v1113 = vmul.f32 %v1053, %v1097
      %v1114 = vmul.f32 %v1056, %v1098
      %v1115 = vmul.f32 %v1061, %v1099
      %v1116 = vmul.f32 %v1064, %v1100
      %v1117 = vmul.f32 %v1069, %v1101
      %v1118 = vmul.f32 %v1072, %v1102
      %v1119 = vmul.f32 %v1077, %v1103
      %v1120 = vmul.f32 %v1080, %v1104
      %v1121 = vmul.f32 %v1085, %v1105
      %v1122 = vmul.f32 %v1088, %v1106
      %vm1123 = vcmask 7168
      %v1124 = vsel %vm1123, %v1107, 0.0
      %v1125 = vsel %vm1123, %v1108, 0.0
      %v1126 = vadd.f32 %v1124, %v1125
      %v1127 = vsel %vm1123, %v1109, 0.0
      %v1128 = vadd.f32 %v1126, %v1127
      %v1129 = vsel %vm1123, %v1110, 0.0
      %v1130 = vadd.f32 %v1128, %v1129
      %v1131 = vsel %vm1123, %v1111, 0.0
      %v1132 = vadd.f32 %v1130, %v1131
      %v1133 = vsel %vm1123, %v1112, 0.0
      %v1134 = vadd.f32 %v1132, %v1133
      %v1135 = vsel %vm1123, %v1113, 0.0
      %v1136 = vadd.f32 %v1134, %v1135
      %v1137 = vsel %vm1123, %v1114, 0.0
      %v1138 = vadd.f32 %v1136, %v1137
      %v1139 = vsel %vm1123, %v1115, 0.0
      %v1140 = vadd.f32 %v1138, %v1139
      %v1141 = vsel %vm1123, %v1116, 0.0
      %v1142 = vadd.f32 %v1140, %v1141
      %v1143 = vsel %vm1123, %v1117, 0.0
      %v1144 = vadd.f32 %v1142, %v1143
      %v1145 = vsel %vm1123, %v1118, 0.0
      %v1146 = vadd.f32 %v1144, %v1145
      %v1147 = vsel %vm1123, %v1119, 0.0
      %v1148 = vadd.f32 %v1146, %v1147
      %v1149 = vsel %vm1123, %v1120, 0.0
      %v1150 = vadd.f32 %v1148, %v1149
      %v1151 = vsel %vm1123, %v1121, 0.0
      %v1152 = vadd.f32 %v1150, %v1151
      %v1153 = vsel %vm1123, %v1122, 0.0
      %v1154 = vadd.f32 %v1152, %v1153
      %1155 = vadd.xlane.f32.xlu0 %v1154
      %v1156 = vpop.xlane.xlu0 %1155
      %v1157 = vrot.slane %v1156, 4
      %v1158 = vadd.f32 %v1156, %v1157
      %v1159 = vrot.slane %v1158, 2
      %v1160 = vadd.f32 %v1158, %v1159
      %v1161 = vrot.slane %v1160, 1
      %v1162 = vadd.f32 %v1160, %v1161
      %s1163 = vtos %v1162
      %s1164 = sadd.f32 %s1163, 0.0
      %v1165 = vld [vmem:[%s258 + $0x40] sm:$0xf]
      %v1166 = vld [vmem:[%s258 + $0x44] sm:$0xf]
      %v1167 = vld [vmem:[%s258 + $0x48] sm:$0xf]
      %v1168 = vld [vmem:[%s258 + $0x4c] sm:$0xf]
      %v1169 = vld [vmem:[%s258 + $0x50] sm:$0xf]
      %v1170 = vld [vmem:[%s258 + $0x54] sm:$0xf]
      %v1171 = vld [vmem:[%s258 + $0x58] sm:$0xf]
      %v1172 = vld [vmem:[%s258 + $0x5c] sm:$0xf]
      %v1173 = vld [vmem:[%s258 + $0x60] sm:$0xf]
      %v1174 = vld [vmem:[%s258 + $0x64] sm:$0xf]
      %v1175 = vld [vmem:[%s258 + $0x68] sm:$0xf]
      %v1176 = vld [vmem:[%s258 + $0x6c] sm:$0xf]
      %v1177 = vld [vmem:[%s258 + $0x70] sm:$0xf]
      %v1178 = vld [vmem:[%s258 + $0x74] sm:$0xf]
      %v1179 = vld [vmem:[%s258 + $0x78] sm:$0xf]
      %v1180 = vld [vmem:[%s258 + $0x7c] sm:$0xf]
      %v1181 = vld [vmem:[%s1] sm:$0xf]
      %v1182 = vld [vmem:[%s1 + $0x4] sm:$0xf]
      %v1183 = vld [vmem:[%s1 + $0x8] sm:$0xf]
      %v1184 = vld [vmem:[%s1 + $0xc] sm:$0xf]
      %v1185 = vld [vmem:[%s2] sm:$0x1]
      %v1187 = vlaneseq
      %v1188 = vshrl.u32 %v1187, 7
      %v1189 = vsub.s32 0, %v1188
      %v1190 = vrot.slane %v1185, %v1189
      %v1208 = vunpack.c.l.b16 %v1165
      %v1209 = vunpack.c.l.b16 %v1166
      %v1210 = vunpack.c.l.b16 %v1167
      %v1211 = vunpack.c.l.b16 %v1168
      %v1212 = vunpack.c.l.b16 %v1169
      %v1213 = vunpack.c.l.b16 %v1170
      %v1214 = vunpack.c.l.b16 %v1171
      %v1215 = vunpack.c.l.b16 %v1172
      %v1216 = vunpack.c.l.b16 %v1173
      %v1217 = vunpack.c.l.b16 %v1174
      %v1218 = vunpack.c.l.b16 %v1175
      %v1219 = vunpack.c.l.b16 %v1176
      %v1220 = vunpack.c.l.b16 %v1177
      %v1221 = vunpack.c.l.b16 %v1178
      %v1222 = vunpack.c.l.b16 %v1179
      %v1223 = vunpack.c.l.b16 %v1180
      %v1224 = vpack.c.b16 %v1209, %v1208
      %v1225 = vpack.c.b16 %v1211, %v1210
      %v1226 = vpack.c.b16 %v1213, %v1212
      %v1227 = vpack.c.b16 %v1215, %v1214
      %v1228 = vpack.c.b16 %v1217, %v1216
      %v1229 = vpack.c.b16 %v1219, %v1218
      %v1230 = vpack.c.b16 %v1221, %v1220
      %v1231 = vpack.c.b16 %v1223, %v1222
      %v1236 = vunpack.c.l.b16 %v1181
      %v1237 = vunpack.c.l.b16 %v1182
      %v1238 = vunpack.c.l.b16 %v1183
      %v1239 = vunpack.c.l.b16 %v1184
      %v1240 = vpack.c.b16 %v1237, %v1236
      %v1241 = vpack.c.b16 %v1239, %v1238
      %v1245 = vsel %vm375, %v1224, 0
      %v1248 = vsel %vm375, %v1225, 0
      %v1251 = vsel %vm375, %v1226, 0
      %v1254 = vsel %vm375, %v1227, 0
      %v1257 = vsel %vm375, %v1228, 0
      %v1260 = vsel %vm375, %v1229, 0
      %v1263 = vsel %vm375, %v1230, 0
      %v1266 = vsel %vm375, %v1231, 0
      %1268 = vmatprep.subr.bf16.mxu0 0
      %1269 = vmatpush1.bf16.msra.mxu0 %v1240
      %1270 = vmatprep.subr.bf16.mxu0 0
      %1271 = vmatpush1.bf16.msra.mxu0 %v1241
      %1272 = vmatprep.subr.bf16.mxu0 0
      %1273 = vmatpush1.bf16.msra.mxu0 0
      %1274 = vmatprep.subr.bf16.mxu0 0
      %1275 = vmatpush1.bf16.msra.mxu0 0
      %1276 = vmatprep.subr.bf16.mxu0 0
      %1277 = vmatpush1.bf16.msra.mxu0 0
      %1278 = vmatprep.subr.bf16.mxu0 0
      %1279 = vmatpush1.bf16.msra.mxu0 0
      %1280 = vmatprep.subr.bf16.mxu0 0
      %1281 = vmatpush1.bf16.msra.mxu0 0
      %1282 = vmatprep.subr.bf16.mxu0 0
      %1283 = vmatpush1.bf16.msra.mxu0 0
      %1284 = vmatprep.subr.bf16.mxu0 0
      %1285 = vmatpush1.bf16.msra.mxu0 0
      %1286 = vmatprep.subr.bf16.mxu0 0
      %1287 = vmatpush1.bf16.msra.mxu0 0
      %1288 = vmatprep.subr.bf16.mxu0 0
      %1289 = vmatpush1.bf16.msra.mxu0 0
      %1290 = vmatprep.subr.bf16.mxu0 0
      %1291 = vmatpush1.bf16.msra.mxu0 0
      %1292 = vmatprep.subr.bf16.mxu0 0
      %1293 = vmatpush1.bf16.msra.mxu0 0
      %1294 = vmatprep.subr.bf16.mxu0 0
      %1295 = vmatpush1.bf16.msra.mxu0 0
      %1296 = vmatprep.subr.bf16.mxu0 0
      %1297 = vmatpush1.bf16.msra.mxu0 0
      %1298 = vmatprep.subr.bf16.mxu0 0
      %1299 = vmatpush1.bf16.msra.mxu0 0
      %1300 = vmatprep.mubr.bf16.mxu0 0
      %1301 = vmatmul.mubr.bf16.gmra.mrb[0].mxu0 %v1245
      %v1302 = vpop.f32.mrb[0].mxu0
      %v1303 = vadd.f32 %v1190, %v1302
      %v1304 = vpop.f32.mrb[0].mxu0
      %v1305 = vpop.f32.mrb[0].mxu0
      %v1306 = vadd.f32 %v1190, %v1305
      %v1307 = vpop.f32.mrb[0].mxu0
      %1308 = vmatprep.mubr.bf16.mxu0 0
      %1309 = vmatmul.mubr.bf16.gmra.mrb[0].mxu0 %v1248
      %v1310 = vpop.f32.mrb[0].mxu0
      %v1311 = vadd.f32 %v1190, %v1310
      %v1312 = vpop.f32.mrb[0].mxu0
      %v1313 = vpop.f32.mrb[0].mxu0
      %v1314 = vadd.f32 %v1190, %v1313
      %v1315 = vpop.f32.mrb[0].mxu0
      %1316 = vmatprep.mubr.bf16.mxu0 0
      %1317 = vmatmul.mubr.bf16.gmra.mrb[0].mxu0 %v1251
      %v1318 = vpop.f32.mrb[0].mxu0
      %v1319 = vadd.f32 %v1190, %v1318
      %v1320 = vpop.f32.mrb[0].mxu0
      %v1321 = vpop.f32.mrb[0].mxu0
      %v1322 = vadd.f32 %v1190, %v1321
      %v1323 = vpop.f32.mrb[0].mxu0
      %1324 = vmatprep.mubr.bf16.mxu0 0
      %1325 = vmatmul.mubr.bf16.gmra.mrb[0].mxu0 %v1254
      %v1326 = vpop.f32.mrb[0].mxu0
      %v1327 = vadd.f32 %v1190, %v1326
      %v1328 = vpop.f32.mrb[0].mxu0
      %v1329 = vpop.f32.mrb[0].mxu0
      %v1330 = vadd.f32 %v1190, %v1329
      %v1331 = vpop.f32.mrb[0].mxu0
      %1332 = vmatprep.mubr.bf16.mxu0 0
      %1333 = vmatmul.mubr.bf16.gmra.mrb[0].mxu0 %v1257
      %v1334 = vpop.f32.mrb[0].mxu0
      %v1335 = vadd.f32 %v1190, %v1334
      %v1336 = vpop.f32.mrb[0].mxu0
      %v1337 = vpop.f32.mrb[0].mxu0
      %v1338 = vadd.f32 %v1190, %v1337
      %v1339 = vpop.f32.mrb[0].mxu0
      %1340 = vmatprep.mubr.bf16.mxu0 0
      %1341 = vmatmul.mubr.bf16.gmra.mrb[0].mxu0 %v1260
      %v1342 = vpop.f32.mrb[0].mxu0
      %v1343 = vadd.f32 %v1190, %v1342
      %v1344 = vpop.f32.mrb[0].mxu0
      %v1345 = vpop.f32.mrb[0].mxu0
      %v1346 = vadd.f32 %v1190, %v1345
      %v1347 = vpop.f32.mrb[0].mxu0
      %1348 = vmatprep.mubr.bf16.mxu0 0
      %1349 = vmatmul.mubr.bf16.gmra.mrb[0].mxu0 %v1263
      %v1350 = vpop.f32.mrb[0].mxu0
      %v1351 = vadd.f32 %v1190, %v1350
      %v1352 = vpop.f32.mrb[0].mxu0
      %v1353 = vpop.f32.mrb[0].mxu0
      %v1354 = vadd.f32 %v1190, %v1353
      %v1355 = vpop.f32.mrb[0].mxu0
      %1356 = vmatprep.mubr.bf16.mxu0 0
      %1357 = vmatmul.mubr.bf16.gmra.mrb[0].mxu0 %v1266
      %v1358 = vpop.f32.mrb[0].mxu0
      %v1359 = vadd.f32 %v1190, %v1358
      %v1360 = vpop.f32.mrb[0].mxu0
      %v1361 = vpop.f32.mrb[0].mxu0
      %v1362 = vadd.f32 %v1190, %v1361
      %v1363 = vpop.f32.mrb[0].mxu0
      %1364 = vdwg.mxu0
      %v1365 = vmax.f32 %v1303, 0.0
      %v1366 = vmax.f32 %v1306, 0.0
      %v1367 = vmax.f32 %v1311, 0.0
      %v1368 = vmax.f32 %v1314, 0.0
      %v1369 = vmax.f32 %v1319, 0.0
      %v1370 = vmax.f32 %v1322, 0.0
      %v1371 = vmax.f32 %v1327, 0.0
      %v1372 = vmax.f32 %v1330, 0.0
      %v1373 = vmax.f32 %v1335, 0.0
      %v1374 = vmax.f32 %v1338, 0.0
      %v1375 = vmax.f32 %v1343, 0.0
      %v1376 = vmax.f32 %v1346, 0.0
      %v1377 = vmax.f32 %v1351, 0.0
      %v1378 = vmax.f32 %v1354, 0.0
      %v1379 = vmax.f32 %v1359, 0.0
      %v1380 = vmax.f32 %v1362, 0.0
      %1381 = vst [vmem:[#allocation2 + $0x80] sm:$0xff] %v1365
      %1382 = vst [vmem:[#allocation2 + $0x88] sm:$0xff] %v1366
      %1383 = vst [vmem:[#allocation2 + $0x90] sm:$0xff] %v1367
      %1384 = vst [vmem:[#allocation2 + $0x98] sm:$0xff] %v1368
      %1385 = vst [vmem:[#allocation2 + $0xa0] sm:$0xff] %v1369
      %1386 = vst [vmem:[#allocation2 + $0xa8] sm:$0xff] %v1370
      %1387 = vst [vmem:[#allocation2 + $0xb0] sm:$0xff] %v1371
      %1388 = vst [vmem:[#allocation2 + $0xb8] sm:$0xff] %v1372
      %1389 = vst [vmem:[#allocation2 + $0xc0] sm:$0xff] %v1373
      %1390 = vst [vmem:[#allocation2 + $0xc8] sm:$0xff] %v1374
      %1391 = vst [vmem:[#allocation2 + $0xd0] sm:$0xff] %v1375
      %1392 = vst [vmem:[#allocation2 + $0xd8] sm:$0xff] %v1376
      %1393 = vst [vmem:[#allocation2 + $0xe0] sm:$0xff] %v1377
      %1394 = vst [vmem:[#allocation2 + $0xe8] sm:$0xff] %v1378
      %1395 = vst [vmem:[#allocation2 + $0xf0] sm:$0xff] %v1379
      %1396 = vst [vmem:[#allocation2 + $0xf8] sm:$0xff] %v1380
      %v1397 = vld [vmem:[%s529 + $0x40] sm:$0xf]
      %v1398 = vld [vmem:[%s529 + $0x44] sm:$0xf]
      %v1399 = vld [vmem:[%s529 + $0x48] sm:$0xf]
      %v1400 = vld [vmem:[%s529 + $0x4c] sm:$0xf]
      %v1401 = vld [vmem:[%s529 + $0x50] sm:$0xf]
      %v1402 = vld [vmem:[%s529 + $0x54] sm:$0xf]
      %v1403 = vld [vmem:[%s529 + $0x58] sm:$0xf]
      %v1404 = vld [vmem:[%s529 + $0x5c] sm:$0xf]
      %v1405 = vld [vmem:[%s529 + $0x60] sm:$0xf]
      %v1406 = vld [vmem:[%s529 + $0x64] sm:$0xf]
      %v1407 = vld [vmem:[%s529 + $0x68] sm:$0xf]
      %v1408 = vld [vmem:[%s529 + $0x6c] sm:$0xf]
      %v1409 = vld [vmem:[%s529 + $0x70] sm:$0xf]
      %v1410 = vld [vmem:[%s529 + $0x74] sm:$0xf]
      %v1411 = vld [vmem:[%s529 + $0x78] sm:$0xf]
      %v1412 = vld [vmem:[%s529 + $0x7c] sm:$0xf]
      %v1413 = vld [vmem:[%s1] sm:$0xf]
      %v1414 = vld [vmem:[%s1 + $0x4] sm:$0xf]
      %v1415 = vld [vmem:[%s1 + $0x8] sm:$0xf]
      %v1416 = vld [vmem:[%s1 + $0xc] sm:$0xf]
      %v1417 = vld [vmem:[%s2] sm:$0x1]
      %v1419 = vlaneseq
      %v1420 = vshrl.u32 %v1419, 7
      %v1421 = vsub.s32 0, %v1420
      %v1422 = vrot.slane %v1417, %v1421
      %v1440 = vunpack.c.l.b16 %v1397
      %v1441 = vunpack.c.l.b16 %v1398
      %v1442 = vunpack.c.l.b16 %v1399
      %v1443 = vunpack.c.l.b16 %v1400
      %v1444 = vunpack.c.l.b16 %v1401
      %v1445 = vunpack.c.l.b16 %v1402
      %v1446 = vunpack.c.l.b16 %v1403
      %v1447 = vunpack.c.l.b16 %v1404
      %v1448 = vunpack.c.l.b16 %v1405
      %v1449 = vunpack.c.l.b16 %v1406
      %v1450 = vunpack.c.l.b16 %v1407
      %v1451 = vunpack.c.l.b16 %v1408
      %v1452 = vunpack.c.l.b16 %v1409
      %v1453 = vunpack.c.l.b16 %v1410
      %v1454 = vunpack.c.l.b16 %v1411
      %v1455 = vunpack.c.l.b16 %v1412
      %v1456 = vpack.c.b16 %v1441, %v1440
      %v1457 = vpack.c.b16 %v1443, %v1442
      %v1458 = vpack.c.b16 %v1445, %v1444
      %v1459 = vpack.c.b16 %v1447, %v1446
      %v1460 = vpack.c.b16 %v1449, %v1448
      %v1461 = vpack.c.b16 %v1451, %v1450
      %v1462 = vpack.c.b16 %v1453, %v1452
      %v1463 = vpack.c.b16 %v1455, %v1454
      %v1468 = vunpack.c.l.b16 %v1413
      %v1469 = vunpack.c.l.b16 %v1414
      %v1470 = vunpack.c.l.b16 %v1415
      %v1471 = vunpack.c.l.b16 %v1416
      %v1472 = vpack.c.b16 %v1469, %v1468
      %v1473 = vpack.c.b16 %v1471, %v1470
      %v1477 = vsel %vm375, %v1456, 0
      %v1480 = vsel %vm375, %v1457, 0
      %v1483 = vsel %vm375, %v1458, 0
      %v1486 = vsel %vm375, %v1459, 0
      %v1489 = vsel %vm375, %v1460, 0
      %v1492 = vsel %vm375, %v1461, 0
      %v1495 = vsel %vm375, %v1462, 0
      %v1498 = vsel %vm375, %v1463, 0
      %1500 = vmatprep.subr.bf16.mxu0 0
      %1501 = vmatpush1.bf16.msra.mxu0 %v1472
      %1502 = vmatprep.subr.bf16.mxu0 0
      %1503 = vmatpush1.bf16.msra.mxu0 %v1473
      %1504 = vmatprep.subr.bf16.mxu0 0
      %1505 = vmatpush1.bf16.msra.mxu0 0
      %1506 = vmatprep.subr.bf16.mxu0 0
      %1507 = vmatpush1.bf16.msra.mxu0 0
      %1508 = vmatprep.subr.bf16.mxu0 0
      %1509 = vmatpush1.bf16.msra.mxu0 0
      %1510 = vmatprep.subr.bf16.mxu0 0
      %1511 = vmatpush1.bf16.msra.mxu0 0
      %1512 = vmatprep.subr.bf16.mxu0 0
      %1513 = vmatpush1.bf16.msra.mxu0 0
      %1514 = vmatprep.subr.bf16.mxu0 0
      %1515 = vmatpush1.bf16.msra.mxu0 0
      %1516 = vmatprep.subr.bf16.mxu0 0
      %1517 = vmatpush1.bf16.msra.mxu0 0
      %1518 = vmatprep.subr.bf16.mxu0 0
      %1519 = vmatpush1.bf16.msra.mxu0 0
      %1520 = vmatprep.subr.bf16.mxu0 0
      %1521 = vmatpush1.bf16.msra.mxu0 0
      %1522 = vmatprep.subr.bf16.mxu0 0
      %1523 = vmatpush1.bf16.msra.mxu0 0
      %1524 = vmatprep.subr.bf16.mxu0 0
      %1525 = vmatpush1.bf16.msra.mxu0 0
      %1526 = vmatprep.subr.bf16.mxu0 0
      %1527 = vmatpush1.bf16.msra.mxu0 0
      %1528 = vmatprep.subr.bf16.mxu0 0
      %1529 = vmatpush1.bf16.msra.mxu0 0
      %1530 = vmatprep.subr.bf16.mxu0 0
      %1531 = vmatpush1.bf16.msra.mxu0 0
      %1532 = vmatprep.mubr.bf16.mxu0 0
      %1533 = vmatmul.mubr.bf16.gmra.mrb[0].mxu0 %v1477
      %v1534 = vpop.f32.mrb[0].mxu0
      %v1535 = vadd.f32 %v1422, %v1534
      %v1536 = vpop.f32.mrb[0].mxu0
      %v1537 = vpop.f32.mrb[0].mxu0
      %v1538 = vadd.f32 %v1422, %v1537
      %v1539 = vpop.f32.mrb[0].mxu0
      %1540 = vmatprep.mubr.bf16.mxu0 0
      %1541 = vmatmul.mubr.bf16.gmra.mrb[0].mxu0 %v1480
      %v1542 = vpop.f32.mrb[0].mxu0
      %v1543 = vadd.f32 %v1422, %v1542
      %v1544 = vpop.f32.mrb[0].mxu0
      %v1545 = vpop.f32.mrb[0].mxu0
      %v1546 = vadd.f32 %v1422, %v1545
      %v1547 = vpop.f32.mrb[0].mxu0
      %1548 = vmatprep.mubr.bf16.mxu0 0
      %1549 = vmatmul.mubr.bf16.gmra.mrb[0].mxu0 %v1483
      %v1550 = vpop.f32.mrb[0].mxu0
      %v1551 = vadd.f32 %v1422, %v1550
      %v1552 = vpop.f32.mrb[0].mxu0
      %v1553 = vpop.f32.mrb[0].mxu0
      %v1554 = vadd.f32 %v1422, %v1553
      %v1555 = vpop.f32.mrb[0].mxu0
      %1556 = vmatprep.mubr.bf16.mxu0 0
      %1557 = vmatmul.mubr.bf16.gmra.mrb[0].mxu0 %v1486
      %v1558 = vpop.f32.mrb[0].mxu0
      %v1559 = vadd.f32 %v1422, %v1558
      %v1560 = vpop.f32.mrb[0].mxu0
      %v1561 = vpop.f32.mrb[0].mxu0
      %v1562 = vadd.f32 %v1422, %v1561
      %v1563 = vpop.f32.mrb[0].mxu0
      %1564 = vmatprep.mubr.bf16.mxu0 0
      %1565 = vmatmul.mubr.bf16.gmra.mrb[0].mxu0 %v1489
      %v1566 = vpop.f32.mrb[0].mxu0
      %v1567 = vadd.f32 %v1422, %v1566
      %v1568 = vpop.f32.mrb[0].mxu0
      %v1569 = vpop.f32.mrb[0].mxu0
      %v1570 = vadd.f32 %v1422, %v1569
      %v1571 = vpop.f32.mrb[0].mxu0
      %1572 = vmatprep.mubr.bf16.mxu0 0
      %1573 = vmatmul.mubr.bf16.gmra.mrb[0].mxu0 %v1492
      %v1574 = vpop.f32.mrb[0].mxu0
      %v1575 = vadd.f32 %v1422, %v1574
      %v1576 = vpop.f32.mrb[0].mxu0
      %v1577 = vpop.f32.mrb[0].mxu0
      %v1578 = vadd.f32 %v1422, %v1577
      %v1579 = vpop.f32.mrb[0].mxu0
      %1580 = vmatprep.mubr.bf16.mxu0 0
      %1581 = vmatmul.mubr.bf16.gmra.mrb[0].mxu0 %v1495
      %v1582 = vpop.f32.mrb[0].mxu0
      %v1583 = vadd.f32 %v1422, %v1582
      %v1584 = vpop.f32.mrb[0].mxu0
      %v1585 = vpop.f32.mrb[0].mxu0
      %v1586 = vadd.f32 %v1422, %v1585
      %v1587 = vpop.f32.mrb[0].mxu0
      %1588 = vmatprep.mubr.bf16.mxu0 0
      %1589 = vmatmul.mubr.bf16.gmra.mrb[0].mxu0 %v1498
      %v1590 = vpop.f32.mrb[0].mxu0
      %v1591 = vadd.f32 %v1422, %v1590
      %v1592 = vpop.f32.mrb[0].mxu0
      %v1593 = vpop.f32.mrb[0].mxu0
      %v1594 = vadd.f32 %v1422, %v1593
      %v1595 = vpop.f32.mrb[0].mxu0
      %1596 = vdwg.mxu0
      %v1597 = vmax.f32 %v1535, 0.0
      %v1598 = vmax.f32 %v1538, 0.0
      %v1599 = vmax.f32 %v1543, 0.0
      %v1600 = vmax.f32 %v1546, 0.0
      %v1601 = vmax.f32 %v1551, 0.0
      %v1602 = vmax.f32 %v1554, 0.0
      %v1603 = vmax.f32 %v1559, 0.0
      %v1604 = vmax.f32 %v1562, 0.0
      %v1605 = vmax.f32 %v1567, 0.0
      %v1606 = vmax.f32 %v1570, 0.0
      %v1607 = vmax.f32 %v1575, 0.0
      %v1608 = vmax.f32 %v1578, 0.0
      %v1609 = vmax.f32 %v1583, 0.0
      %v1610 = vmax.f32 %v1586, 0.0
      %v1611 = vmax.f32 %v1591, 0.0
      %v1612 = vmax.f32 %v1594, 0.0
      %1613 = vst [vmem:[#allocation3 + $0x80] sm:$0xff] %v1597
      %1614 = vst [vmem:[#allocation3 + $0x88] sm:$0xff] %v1598
      %1615 = vst [vmem:[#allocation3 + $0x90] sm:$0xff] %v1599
      %1616 = vst [vmem:[#allocation3 + $0x98] sm:$0xff] %v1600
      %1617 = vst [vmem:[#allocation3 + $0xa0] sm:$0xff] %v1601
      %1618 = vst [vmem:[#allocation3 + $0xa8] sm:$0xff] %v1602
      %1619 = vst [vmem:[#allocation3 + $0xb0] sm:$0xff] %v1603
      %1620 = vst [vmem:[#allocation3 + $0xb8] sm:$0xff] %v1604
      %1621 = vst [vmem:[#allocation3 + $0xc0] sm:$0xff] %v1605
      %1622 = vst [vmem:[#allocation3 + $0xc8] sm:$0xff] %v1606
      %1623 = vst [vmem:[#allocation3 + $0xd0] sm:$0xff] %v1607
      %1624 = vst [vmem:[#allocation3 + $0xd8] sm:$0xff] %v1608
      %1625 = vst [vmem:[#allocation3 + $0xe0] sm:$0xff] %v1609
      %1626 = vst [vmem:[#allocation3 + $0xe8] sm:$0xff] %v1610
      %1627 = vst [vmem:[#allocation3 + $0xf0] sm:$0xff] %v1611
      %1628 = vst [vmem:[#allocation3 + $0xf8] sm:$0xff] %v1612
      %v1629 = vmul.f32 %v1365, %v1365
      %v1630 = vmul.f32 %v1366, %v1366
      %v1631 = vmul.f32 %v1367, %v1367
      %v1632 = vmul.f32 %v1368, %v1368
      %v1633 = vmul.f32 %v1369, %v1369
      %v1634 = vmul.f32 %v1370, %v1370
      %v1635 = vmul.f32 %v1371, %v1371
      %v1636 = vmul.f32 %v1372, %v1372
      %v1637 = vmul.f32 %v1373, %v1373
      %v1638 = vmul.f32 %v1374, %v1374
      %v1639 = vmul.f32 %v1375, %v1375
      %v1640 = vmul.f32 %v1376, %v1376
      %v1641 = vmul.f32 %v1377, %v1377
      %v1642 = vmul.f32 %v1378, %v1378
      %v1643 = vmul.f32 %v1379, %v1379
      %v1644 = vmul.f32 %v1380, %v1380
      %1645 = vadd.xlane.f32.xlu0 %v1629
      %v1646 = vpop.xlane.xlu0 %1645
      %1647 = vadd.xlane.f32.xlu0 %v1630
      %v1648 = vpop.xlane.xlu0 %1647
      %1649 = vadd.xlane.f32.xlu0 %v1631
      %v1650 = vpop.xlane.xlu0 %1649
      %1651 = vadd.xlane.f32.xlu0 %v1632
      %v1652 = vpop.xlane.xlu0 %1651
      %1653 = vadd.xlane.f32.xlu0 %v1633
      %v1654 = vpop.xlane.xlu0 %1653
      %1655 = vadd.xlane.f32.xlu0 %v1634
      %v1656 = vpop.xlane.xlu0 %1655
      %1657 = vadd.xlane.f32.xlu0 %v1635
      %v1658 = vpop.xlane.xlu0 %1657
      %1659 = vadd.xlane.f32.xlu0 %v1636
      %v1660 = vpop.xlane.xlu0 %1659
      %1661 = vadd.xlane.f32.xlu0 %v1637
      %v1662 = vpop.xlane.xlu0 %1661
      %1663 = vadd.xlane.f32.xlu0 %v1638
      %v1664 = vpop.xlane.xlu0 %1663
      %1665 = vadd.xlane.f32.xlu0 %v1639
      %v1666 = vpop.xlane.xlu0 %1665
      %1667 = vadd.xlane.f32.xlu0 %v1640
      %v1668 = vpop.xlane.xlu0 %1667
      %1669 = vadd.xlane.f32.xlu0 %v1641
      %v1670 = vpop.xlane.xlu0 %1669
      %1671 = vadd.xlane.f32.xlu0 %v1642
      %v1672 = vpop.xlane.xlu0 %1671
      %1673 = vadd.xlane.f32.xlu0 %v1643
      %v1674 = vpop.xlane.xlu0 %1673
      %1675 = vadd.xlane.f32.xlu0 %v1644
      %v1676 = vpop.xlane.xlu0 %1675
      %v1677 = vadd.f32 %v1646, 1e-10
      %v1678 = vadd.f32 %v1648, 1e-10
      %v1679 = vadd.f32 %v1650, 1e-10
      %v1680 = vadd.f32 %v1652, 1e-10
      %v1681 = vadd.f32 %v1654, 1e-10
      %v1682 = vadd.f32 %v1656, 1e-10
      %v1683 = vadd.f32 %v1658, 1e-10
      %v1684 = vadd.f32 %v1660, 1e-10
      %v1685 = vadd.f32 %v1662, 1e-10
      %v1686 = vadd.f32 %v1664, 1e-10
      %v1687 = vadd.f32 %v1666, 1e-10
      %v1688 = vadd.f32 %v1668, 1e-10
      %v1689 = vadd.f32 %v1670, 1e-10
      %v1690 = vadd.f32 %v1672, 1e-10
      %v1691 = vadd.f32 %v1674, 1e-10
      %v1692 = vadd.f32 %v1676, 1e-10
      %v1693 = vrsqrt.pop %v1677
      %v1694 = vrsqrt.pop %v1678
      %v1695 = vrsqrt.pop %v1679
      %v1696 = vrsqrt.pop %v1680
      %v1697 = vrsqrt.pop %v1681
      %v1698 = vrsqrt.pop %v1682
      %v1699 = vrsqrt.pop %v1683
      %v1700 = vrsqrt.pop %v1684
      %v1701 = vrsqrt.pop %v1685
      %v1702 = vrsqrt.pop %v1686
      %v1703 = vrsqrt.pop %v1687
      %v1704 = vrsqrt.pop %v1688
      %v1705 = vrsqrt.pop %v1689
      %v1706 = vrsqrt.pop %v1690
      %v1707 = vrsqrt.pop %v1691
      %v1708 = vrsqrt.pop %v1692
      %v1709 = vmul.f32 %v1365, %v1693
      %v1710 = vmul.f32 %v1366, %v1694
      %v1711 = vmul.f32 %v1367, %v1695
      %v1712 = vmul.f32 %v1368, %v1696
      %v1713 = vmul.f32 %v1369, %v1697
      %v1714 = vmul.f32 %v1370, %v1698
      %v1715 = vmul.f32 %v1371, %v1699
      %v1716 = vmul.f32 %v1372, %v1700
      %v1717 = vmul.f32 %v1373, %v1701
      %v1718 = vmul.f32 %v1374, %v1702
      %v1719 = vmul.f32 %v1375, %v1703
      %v1720 = vmul.f32 %v1376, %v1704
      %v1721 = vmul.f32 %v1377, %v1705
      %v1722 = vmul.f32 %v1378, %v1706
      %v1723 = vmul.f32 %v1379, %v1707
      %v1724 = vmul.f32 %v1380, %v1708
      %v1725 = vmul.f32 %v1597, %v1597
      %v1726 = vmul.f32 %v1598, %v1598
      %v1727 = vmul.f32 %v1599, %v1599
      %v1728 = vmul.f32 %v1600, %v1600
      %v1729 = vmul.f32 %v1601, %v1601
      %v1730 = vmul.f32 %v1602, %v1602
      %v1731 = vmul.f32 %v1603, %v1603
      %v1732 = vmul.f32 %v1604, %v1604
      %v1733 = vmul.f32 %v1605, %v1605
      %v1734 = vmul.f32 %v1606, %v1606
      %v1735 = vmul.f32 %v1607, %v1607
      %v1736 = vmul.f32 %v1608, %v1608
      %v1737 = vmul.f32 %v1609, %v1609
      %v1738 = vmul.f32 %v1610, %v1610
      %v1739 = vmul.f32 %v1611, %v1611
      %v1740 = vmul.f32 %v1612, %v1612
      %1741 = vadd.xlane.f32.xlu0 %v1725
      %v1742 = vpop.xlane.xlu0 %1741
      %1743 = vadd.xlane.f32.xlu0 %v1726
      %v1744 = vpop.xlane.xlu0 %1743
      %1745 = vadd.xlane.f32.xlu0 %v1727
      %v1746 = vpop.xlane.xlu0 %1745
      %1747 = vadd.xlane.f32.xlu0 %v1728
      %v1748 = vpop.xlane.xlu0 %1747
      %1749 = vadd.xlane.f32.xlu0 %v1729
      %v1750 = vpop.xlane.xlu0 %1749
      %1751 = vadd.xlane.f32.xlu0 %v1730
      %v1752 = vpop.xlane.xlu0 %1751
      %1753 = vadd.xlane.f32.xlu0 %v1731
      %v1754 = vpop.xlane.xlu0 %1753
      %1755 = vadd.xlane.f32.xlu0 %v1732
      %v1756 = vpop.xlane.xlu0 %1755
      %1757 = vadd.xlane.f32.xlu0 %v1733
      %v1758 = vpop.xlane.xlu0 %1757
      %1759 = vadd.xlane.f32.xlu0 %v1734
      %v1760 = vpop.xlane.xlu0 %1759
      %1761 = vadd.xlane.f32.xlu0 %v1735
      %v1762 = vpop.xlane.xlu0 %1761
      %1763 = vadd.xlane.f32.xlu0 %v1736
      %v1764 = vpop.xlane.xlu0 %1763
      %1765 = vadd.xlane.f32.xlu0 %v1737
      %v1766 = vpop.xlane.xlu0 %1765
      %1767 = vadd.xlane.f32.xlu0 %v1738
      %v1768 = vpop.xlane.xlu0 %1767
      %1769 = vadd.xlane.f32.xlu0 %v1739
      %v1770 = vpop.xlane.xlu0 %1769
      %1771 = vadd.xlane.f32.xlu0 %v1740
      %v1772 = vpop.xlane.xlu0 %1771
      %v1773 = vadd.f32 %v1742, 1e-10
      %v1774 = vadd.f32 %v1744, 1e-10
      %v1775 = vadd.f32 %v1746, 1e-10
      %v1776 = vadd.f32 %v1748, 1e-10
      %v1777 = vadd.f32 %v1750, 1e-10
      %v1778 = vadd.f32 %v1752, 1e-10
      %v1779 = vadd.f32 %v1754, 1e-10
      %v1780 = vadd.f32 %v1756, 1e-10
      %v1781 = vadd.f32 %v1758, 1e-10
      %v1782 = vadd.f32 %v1760, 1e-10
      %v1783 = vadd.f32 %v1762, 1e-10
      %v1784 = vadd.f32 %v1764, 1e-10
      %v1785 = vadd.f32 %v1766, 1e-10
      %v1786 = vadd.f32 %v1768, 1e-10
      %v1787 = vadd.f32 %v1770, 1e-10
      %v1788 = vadd.f32 %v1772, 1e-10
      %v1789 = vrsqrt.pop %v1773
      %v1790 = vrsqrt.pop %v1774
      %v1791 = vrsqrt.pop %v1775
      %v1792 = vrsqrt.pop %v1776
      %v1793 = vrsqrt.pop %v1777
      %v1794 = vrsqrt.pop %v1778
      %v1795 = vrsqrt.pop %v1779
      %v1796 = vrsqrt.pop %v1780
      %v1797 = vrsqrt.pop %v1781
      %v1798 = vrsqrt.pop %v1782
      %v1799 = vrsqrt.pop %v1783
      %v1800 = vrsqrt.pop %v1784
      %v1801 = vrsqrt.pop %v1785
      %v1802 = vrsqrt.pop %v1786
      %v1803 = vrsqrt.pop %v1787
      %v1804 = vrsqrt.pop %v1788
      %v1805 = vmul.f32 %v1597, %v1789
      %v1806 = vmul.f32 %v1598, %v1790
      %v1807 = vmul.f32 %v1599, %v1791
      %v1808 = vmul.f32 %v1600, %v1792
      %v1809 = vmul.f32 %v1601, %v1793
      %v1810 = vmul.f32 %v1602, %v1794
      %v1811 = vmul.f32 %v1603, %v1795
      %v1812 = vmul.f32 %v1604, %v1796
      %v1813 = vmul.f32 %v1605, %v1797
      %v1814 = vmul.f32 %v1606, %v1798
      %v1815 = vmul.f32 %v1607, %v1799
      %v1816 = vmul.f32 %v1608, %v1800
      %v1817 = vmul.f32 %v1609, %v1801
      %v1818 = vmul.f32 %v1610, %v1802
      %v1819 = vmul.f32 %v1611, %v1803
      %v1820 = vmul.f32 %v1612, %v1804
      %v1821 = vsub.f32 %v1709, %v1805
      %v1822 = vsub.f32 %v1710, %v1806
      %v1823 = vsub.f32 %v1711, %v1807
      %v1824 = vsub.f32 %v1712, %v1808
      %v1825 = vsub.f32 %v1713, %v1809
      %v1826 = vsub.f32 %v1714, %v1810
      %v1827 = vsub.f32 %v1715, %v1811
      %v1828 = vsub.f32 %v1716, %v1812
      %v1829 = vsub.f32 %v1717, %v1813
      %v1830 = vsub.f32 %v1718, %v1814
      %v1831 = vsub.f32 %v1719, %v1815
      %v1832 = vsub.f32 %v1720, %v1816
      %v1833 = vsub.f32 %v1721, %v1817
      %v1834 = vsub.f32 %v1722, %v1818
      %v1835 = vsub.f32 %v1723, %v1819
      %v1836 = vsub.f32 %v1724, %v1820
      %v1837 = vmul.f32 %v1821, %v1821
      %v1838 = vmul.f32 %v1822, %v1822
      %v1839 = vmul.f32 %v1823, %v1823
      %v1840 = vmul.f32 %v1824, %v1824
      %v1841 = vmul.f32 %v1825, %v1825
      %v1842 = vmul.f32 %v1826, %v1826
      %v1843 = vmul.f32 %v1827, %v1827
      %v1844 = vmul.f32 %v1828, %v1828
      %v1845 = vmul.f32 %v1829, %v1829
      %v1846 = vmul.f32 %v1830, %v1830
      %v1847 = vmul.f32 %v1831, %v1831
      %v1848 = vmul.f32 %v1832, %v1832
      %v1849 = vmul.f32 %v1833, %v1833
      %v1850 = vmul.f32 %v1834, %v1834
      %v1851 = vmul.f32 %v1835, %v1835
      %v1852 = vmul.f32 %v1836, %v1836
      %v1853 = vpack.c.bf16 %v1838, %v1837
      %v1854 = vpack.c.bf16 %v1840, %v1839
      %v1855 = vpack.c.bf16 %v1842, %v1841
      %v1856 = vpack.c.bf16 %v1844, %v1843
      %v1857 = vpack.c.bf16 %v1846, %v1845
      %v1858 = vpack.c.bf16 %v1848, %v1847
      %v1859 = vpack.c.bf16 %v1850, %v1849
      %v1860 = vpack.c.bf16 %v1852, %v1851
      %1861 = vmatprep.subr.bf16.mxu0 0
      %1862 = vmatpush1.bf16.msra.mxu0 %v288
      %1863 = vmatprep.subr.bf16.mxu0 0
      %1864 = vmatpush1.bf16.msra.mxu0 %v289
      %1865 = vmatprep.subr.bf16.mxu0 0
      %1866 = vmatpush1.bf16.msra.mxu0 %v290
      %1867 = vmatprep.subr.bf16.mxu0 0
      %1868 = vmatpush1.bf16.msra.mxu0 %v291
      %1869 = vmatprep.subr.bf16.mxu0 0
      %1870 = vmatpush1.bf16.msra.mxu0 %v292
      %1871 = vmatprep.subr.bf16.mxu0 0
      %1872 = vmatpush1.bf16.msra.mxu0 %v293
      %1873 = vmatprep.subr.bf16.mxu0 0
      %1874 = vmatpush1.bf16.msra.mxu0 %v294
      %1875 = vmatprep.subr.bf16.mxu0 0
      %1876 = vmatpush1.bf16.msra.mxu0 %v295
      %1877 = vmatprep.subr.bf16.mxu0 0
      %1878 = vmatpush1.bf16.msra.mxu0 0
      %1879 = vmatprep.subr.bf16.mxu0 0
      %1880 = vmatpush1.bf16.msra.mxu0 0
      %1881 = vmatprep.subr.bf16.mxu0 0
      %1882 = vmatpush1.bf16.msra.mxu0 0
      %1883 = vmatprep.subr.bf16.mxu0 0
      %1884 = vmatpush1.bf16.msra.mxu0 0
      %1885 = vmatprep.subr.bf16.mxu0 0
      %1886 = vmatpush1.bf16.msra.mxu0 0
      %1887 = vmatprep.subr.bf16.mxu0 0
      %1888 = vmatpush1.bf16.msra.mxu0 0
      %1889 = vmatprep.subr.bf16.mxu0 0
      %1890 = vmatpush1.bf16.msra.mxu0 0
      %1891 = vmatprep.subr.bf16.mxu0 0
      %1892 = vmatpush1.bf16.msra.mxu0 0
      %1893 = vmatprep.mubr.bf16.mxu0 0
      %1894 = vmatmul.mubr.bf16.gmra.mrb[0].mxu0 %v1853
      %v1895 = vpop.f32.mrb[0].mxu0
      %v1896 = vadd.f32 0.0, %v1895
      %v1897 = vpop.f32.mrb[0].mxu0
      %v1898 = vpop.f32.mrb[0].mxu0
      %v1899 = vadd.f32 0.0, %v1898
      %v1900 = vpop.f32.mrb[0].mxu0
      %1901 = vmatprep.mubr.bf16.mxu0 0
      %1902 = vmatmul.mubr.bf16.gmra.mrb[0].mxu0 %v1854
      %v1903 = vpop.f32.mrb[0].mxu0
      %v1904 = vadd.f32 0.0, %v1903
      %v1905 = vpop.f32.mrb[0].mxu0
      %v1906 = vpop.f32.mrb[0].mxu0
      %v1907 = vadd.f32 0.0, %v1906
      %v1908 = vpop.f32.mrb[0].mxu0
      %1909 = vmatprep.mubr.bf16.mxu0 0
      %1910 = vmatmul.mubr.bf16.gmra.mrb[0].mxu0 %v1855
      %v1911 = vpop.f32.mrb[0].mxu0
      %v1912 = vadd.f32 0.0, %v1911
      %v1913 = vpop.f32.mrb[0].mxu0
      %v1914 = vpop.f32.mrb[0].mxu0
      %v1915 = vadd.f32 0.0, %v1914
      %v1916 = vpop.f32.mrb[0].mxu0
      %1917 = vmatprep.mubr.bf16.mxu0 0
      %1918 = vmatmul.mubr.bf16.gmra.mrb[0].mxu0 %v1856
      %v1919 = vpop.f32.mrb[0].mxu0
      %v1920 = vadd.f32 0.0, %v1919
      %v1921 = vpop.f32.mrb[0].mxu0
      %v1922 = vpop.f32.mrb[0].mxu0
      %v1923 = vadd.f32 0.0, %v1922
      %v1924 = vpop.f32.mrb[0].mxu0
      %1925 = vmatprep.mubr.bf16.mxu0 0
      %1926 = vmatmul.mubr.bf16.gmra.mrb[0].mxu0 %v1857
      %v1927 = vpop.f32.mrb[0].mxu0
      %v1928 = vadd.f32 0.0, %v1927
      %v1929 = vpop.f32.mrb[0].mxu0
      %v1930 = vpop.f32.mrb[0].mxu0
      %v1931 = vadd.f32 0.0, %v1930
      %v1932 = vpop.f32.mrb[0].mxu0
      %1933 = vmatprep.mubr.bf16.mxu0 0
      %1934 = vmatmul.mubr.bf16.gmra.mrb[0].mxu0 %v1858
      %v1935 = vpop.f32.mrb[0].mxu0
      %v1936 = vadd.f32 0.0, %v1935
      %v1937 = vpop.f32.mrb[0].mxu0
      %v1938 = vpop.f32.mrb[0].mxu0
      %v1939 = vadd.f32 0.0, %v1938
      %v1940 = vpop.f32.mrb[0].mxu0
      %1941 = vmatprep.mubr.bf16.mxu0 0
      %1942 = vmatmul.mubr.bf16.gmra.mrb[0].mxu0 %v1859
      %v1943 = vpop.f32.mrb[0].mxu0
      %v1944 = vadd.f32 0.0, %v1943
      %v1945 = vpop.f32.mrb[0].mxu0
      %v1946 = vpop.f32.mrb[0].mxu0
      %v1947 = vadd.f32 0.0, %v1946
      %v1948 = vpop.f32.mrb[0].mxu0
      %1949 = vmatprep.mubr.bf16.mxu0 0
      %1950 = vmatmul.mubr.bf16.gmra.mrb[0].mxu0 %v1860
      %v1951 = vpop.f32.mrb[0].mxu0
      %v1952 = vadd.f32 0.0, %v1951
      %v1953 = vpop.f32.mrb[0].mxu0
      %v1954 = vpop.f32.mrb[0].mxu0
      %v1955 = vadd.f32 0.0, %v1954
      %v1956 = vpop.f32.mrb[0].mxu0
      %1957 = vdwg.mxu0
      %v1958 = vld [vmem:[%s4 + $0x80] sm:$0xff]
      %v1959 = vld [vmem:[%s4 + $0x88] sm:$0xff]
      %v1960 = vld [vmem:[%s4 + $0x90] sm:$0xff]
      %v1961 = vld [vmem:[%s4 + $0x98] sm:$0xff]
      %v1962 = vld [vmem:[%s4 + $0xa0] sm:$0xff]
      %v1963 = vld [vmem:[%s4 + $0xa8] sm:$0xff]
      %v1964 = vld [vmem:[%s4 + $0xb0] sm:$0xff]
      %v1965 = vld [vmem:[%s4 + $0xb8] sm:$0xff]
      %v1966 = vld [vmem:[%s4 + $0xc0] sm:$0xff]
      %v1967 = vld [vmem:[%s4 + $0xc8] sm:$0xff]
      %v1968 = vld [vmem:[%s4 + $0xd0] sm:$0xff]
      %v1969 = vld [vmem:[%s4 + $0xd8] sm:$0xff]
      %v1970 = vld [vmem:[%s4 + $0xe0] sm:$0xff]
      %v1971 = vld [vmem:[%s4 + $0xe8] sm:$0xff]
      %v1972 = vld [vmem:[%s4 + $0xf0] sm:$0xff]
      %v1973 = vld [vmem:[%s4 + $0xf8] sm:$0xff]
      %v1974 = vmul.f32 %v1896, %v1958
      %v1975 = vmul.f32 %v1899, %v1959
      %v1976 = vmul.f32 %v1904, %v1960
      %v1977 = vmul.f32 %v1907, %v1961
      %v1978 = vmul.f32 %v1912, %v1962
      %v1979 = vmul.f32 %v1915, %v1963
      %v1980 = vmul.f32 %v1920, %v1964
      %v1981 = vmul.f32 %v1923, %v1965
      %v1982 = vmul.f32 %v1928, %v1966
      %v1983 = vmul.f32 %v1931, %v1967
      %v1984 = vmul.f32 %v1936, %v1968
      %v1985 = vmul.f32 %v1939, %v1969
      %v1986 = vmul.f32 %v1944, %v1970
      %v1987 = vmul.f32 %v1947, %v1971
      %v1988 = vmul.f32 %v1952, %v1972
      %v1989 = vmul.f32 %v1955, %v1973
      %v1990 = vsel %vm1123, %v1974, 0.0
      %v1991 = vsel %vm1123, %v1975, 0.0
      %v1992 = vadd.f32 %v1990, %v1991
      %v1993 = vsel %vm1123, %v1976, 0.0
      %v1994 = vadd.f32 %v1992, %v1993
      %v1995 = vsel %vm1123, %v1977, 0.0
      %v1996 = vadd.f32 %v1994, %v1995
      %v1997 = vsel %vm1123, %v1978, 0.0
      %v1998 = vadd.f32 %v1996, %v1997
      %v1999 = vsel %vm1123, %v1979, 0.0
      %v2000 = vadd.f32 %v1998, %v1999
      %v2001 = vsel %vm1123, %v1980, 0.0
      %v2002 = vadd.f32 %v2000, %v2001
      %v2003 = vsel %vm1123, %v1981, 0.0
      %v2004 = vadd.f32 %v2002, %v2003
      %v2005 = vsel %vm1123, %v1982, 0.0
      %v2006 = vadd.f32 %v2004, %v2005
      %v2007 = vsel %vm1123, %v1983, 0.0
      %v2008 = vadd.f32 %v2006, %v2007
      %v2009 = vsel %vm1123, %v1984, 0.0
      %v2010 = vadd.f32 %v2008, %v2009
      %v2011 = vsel %vm1123, %v1985, 0.0
      %v2012 = vadd.f32 %v2010, %v2011
      %v2013 = vsel %vm1123, %v1986, 0.0
      %v2014 = vadd.f32 %v2012, %v2013
      %v2015 = vsel %vm1123, %v1987, 0.0
      %v2016 = vadd.f32 %v2014, %v2015
      %v2017 = vsel %vm1123, %v1988, 0.0
      %v2018 = vadd.f32 %v2016, %v2017
      %v2019 = vsel %vm1123, %v1989, 0.0
      %v2020 = vadd.f32 %v2018, %v2019
      %2021 = vadd.xlane.f32.xlu0 %v2020
      %v2022 = vpop.xlane.xlu0 %2021
      %v2023 = vrot.slane %v2022, 4
      %v2024 = vadd.f32 %v2022, %v2023
      %v2025 = vrot.slane %v2024, 2
      %v2026 = vadd.f32 %v2024, %v2025
      %v2027 = vrot.slane %v2026, 1
      %v2028 = vadd.f32 %v2026, %v2027
      %s2029 = vtos %v2028
      %s2030 = sadd.f32 %s1164, %s2029
      %s2031 = smul.f32 %s2030, 0.00390625
      %v2032 = vstv %s2031
      %2033 = vst [vmem:[%s263] sm:$0xff] %v2032
      %v2034 = vld [vmem:[#allocation2] ss:$2 sm:$0xff]
      %s2035 = scalar_lea.vmem [#allocation2], 16
      %v2036 = vld [vmem:[%s2035] ss:$2 sm:$0xff]
      %s2037 = scalar_lea.vmem [#allocation2], 32
      %v2038 = vld [vmem:[%s2037] ss:$2 sm:$0xff]
      %s2039 = scalar_lea.vmem [#allocation2], 48
      %v2040 = vld [vmem:[%s2039] ss:$2 sm:$0xff]
      %s2041 = scalar_lea.vmem [#allocation2], 64
      %v2042 = vld [vmem:[%s2041] ss:$2 sm:$0xff]
      %s2043 = scalar_lea.vmem [#allocation2], 80
      %v2044 = vld [vmem:[%s2043] ss:$2 sm:$0xff]
      %s2045 = scalar_lea.vmem [#allocation2], 96
      %v2046 = vld [vmem:[%s2045] ss:$2 sm:$0xff]
      %s2047 = scalar_lea.vmem [#allocation2], 112
      %v2048 = vld [vmem:[%s2047] ss:$2 sm:$0xff]
      %s2049 = scalar_lea.vmem [#allocation2], 128
      %v2050 = vld [vmem:[%s2049] ss:$2 sm:$0xff]
      %s2051 = scalar_lea.vmem [#allocation2], 144
      %v2052 = vld [vmem:[%s2051] ss:$2 sm:$0xff]
      %s2053 = scalar_lea.vmem [#allocation2], 160
      %v2054 = vld [vmem:[%s2053] ss:$2 sm:$0xff]
      %s2055 = scalar_lea.vmem [#allocation2], 176
      %v2056 = vld [vmem:[%s2055] ss:$2 sm:$0xff]
      %s2057 = scalar_lea.vmem [#allocation2], 192
      %v2058 = vld [vmem:[%s2057] ss:$2 sm:$0xff]
      %s2059 = scalar_lea.vmem [#allocation2], 208
      %v2060 = vld [vmem:[%s2059] ss:$2 sm:$0xff]
      %s2061 = scalar_lea.vmem [#allocation2], 224
      %v2062 = vld [vmem:[%s2061] ss:$2 sm:$0xff]
      %s2063 = scalar_lea.vmem [#allocation2], 240
      %v2064 = vld [vmem:[%s2063] ss:$2 sm:$0xff]
      %s2065 = scalar_lea.vmem [#allocation2], 1
      %v2066 = vld [vmem:[%s2065] ss:$2 sm:$0xff]
      %s2067 = scalar_lea.vmem [#allocation2], 17
      %v2068 = vld [vmem:[%s2067] ss:$2 sm:$0xff]
      %s2069 = scalar_lea.vmem [#allocation2], 33
      %v2070 = vld [vmem:[%s2069] ss:$2 sm:$0xff]
      %s2071 = scalar_lea.vmem [#allocation2], 49
      %v2072 = vld [vmem:[%s2071] ss:$2 sm:$0xff]
      %s2073 = scalar_lea.vmem [#allocation2], 65
      %v2074 = vld [vmem:[%s2073] ss:$2 sm:$0xff]
      %s2075 = scalar_lea.vmem [#allocation2], 81
      %v2076 = vld [vmem:[%s2075] ss:$2 sm:$0xff]
      %s2077 = scalar_lea.vmem [#allocation2], 97
      %v2078 = vld [vmem:[%s2077] ss:$2 sm:$0xff]
      %s2079 = scalar_lea.vmem [#allocation2], 113
      %v2080 = vld [vmem:[%s2079] ss:$2 sm:$0xff]
      %s2081 = scalar_lea.vmem [#allocation2], 129
      %v2082 = vld [vmem:[%s2081] ss:$2 sm:$0xff]
      %s2083 = scalar_lea.vmem [#allocation2], 145
      %v2084 = vld [vmem:[%s2083] ss:$2 sm:$0xff]
      %s2085 = scalar_lea.vmem [#allocation2], 161
      %v2086 = vld [vmem:[%s2085] ss:$2 sm:$0xff]
      %s2087 = scalar_lea.vmem [#allocation2], 177
      %v2088 = vld [vmem:[%s2087] ss:$2 sm:$0xff]
      %s2089 = scalar_lea.vmem [#allocation2], 193
      %v2090 = vld [vmem:[%s2089] ss:$2 sm:$0xff]
      %s2091 = scalar_lea.vmem [#allocation2], 209
      %v2092 = vld [vmem:[%s2091] ss:$2 sm:$0xff]
      %s2093 = scalar_lea.vmem [#allocation2], 225
      %v2094 = vld [vmem:[%s2093] ss:$2 sm:$0xff]
      %s2095 = scalar_lea.vmem [#allocation2], 241
      %v2096 = vld [vmem:[%s2095] ss:$2 sm:$0xff]
      %v2097 = vmax.f32 %v2034, %v2066
      %v2098 = vmax.f32 %v2036, %v2068
      %v2099 = vmax.f32 %v2038, %v2070
      %v2100 = vmax.f32 %v2040, %v2072
      %v2101 = vmax.f32 %v2042, %v2074
      %v2102 = vmax.f32 %v2044, %v2076
      %v2103 = vmax.f32 %v2046, %v2078
      %v2104 = vmax.f32 %v2048, %v2080
      %v2105 = vmax.f32 %v2050, %v2082
      %v2106 = vmax.f32 %v2052, %v2084
      %v2107 = vmax.f32 %v2054, %v2086
      %v2108 = vmax.f32 %v2056, %v2088
      %v2109 = vmax.f32 %v2058, %v2090
      %v2110 = vmax.f32 %v2060, %v2092
      %v2111 = vmax.f32 %v2062, %v2094
      %v2112 = vmax.f32 %v2064, %v2096
      %v2113 = vmax.f32 %v2097, %v2098
      %v2114 = vmax.f32 %v2099, %v2100
      %v2115 = vmax.f32 %v2101, %v2102
      %v2116 = vmax.f32 %v2103, %v2104
      %v2117 = vmax.f32 %v2105, %v2106
      %v2118 = vmax.f32 %v2107, %v2108
      %v2119 = vmax.f32 %v2109, %v2110
      %v2120 = vmax.f32 %v2111, %v2112
      %v2121 = vpack.c.bf16 %v2113, %v2113
      %v2122 = vpack.c.bf16 %v2114, %v2114
      %v2123 = vpack.c.bf16 %v2115, %v2115
      %v2124 = vpack.c.bf16 %v2116, %v2116
      %v2125 = vpack.c.bf16 %v2117, %v2117
      %v2126 = vpack.c.bf16 %v2118, %v2118
      %v2127 = vpack.c.bf16 %v2119, %v2119
      %v2128 = vpack.c.bf16 %v2120, %v2120
      %2129 = vst [vmem:[%s269] sm:$0xf] %v2121
      %2130 = vst [vmem:[%s269 + $0x4] sm:$0xf] %v2122
      %2131 = vst [vmem:[%s269 + $0x8] sm:$0xf] %v2123
      %2132 = vst [vmem:[%s269 + $0xc] sm:$0xf] %v2124
      %2133 = vst [vmem:[%s269 + $0x10] sm:$0xf] %v2125
      %2134 = vst [vmem:[%s269 + $0x14] sm:$0xf] %v2126
      %2135 = vst [vmem:[%s269 + $0x18] sm:$0xf] %v2127
      %2136 = vst [vmem:[%s269 + $0x1c] sm:$0xf] %v2128
      %v2137 = vld [vmem:[#allocation3] ss:$2 sm:$0xff]
      %s2138 = scalar_lea.vmem [#allocation3], 16
      %v2139 = vld [vmem:[%s2138] ss:$2 sm:$0xff]
      %s2140 = scalar_lea.vmem [#allocation3], 32
      %v2141 = vld [vmem:[%s2140] ss:$2 sm:$0xff]
      %s2142 = scalar_lea.vmem [#allocation3], 48
      %v2143 = vld [vmem:[%s2142] ss:$2 sm:$0xff]
      %s2144 = scalar_lea.vmem [#allocation3], 64
      %v2145 = vld [vmem:[%s2144] ss:$2 sm:$0xff]
      %s2146 = scalar_lea.vmem [#allocation3], 80
      %v2147 = vld [vmem:[%s2146] ss:$2 sm:$0xff]
      %s2148 = scalar_lea.vmem [#allocation3], 96
      %v2149 = vld [vmem:[%s2148] ss:$2 sm:$0xff]
      %s2150 = scalar_lea.vmem [#allocation3], 112
      %v2151 = vld [vmem:[%s2150] ss:$2 sm:$0xff]
      %s2152 = scalar_lea.vmem [#allocation3], 128
      %v2153 = vld [vmem:[%s2152] ss:$2 sm:$0xff]
      %s2154 = scalar_lea.vmem [#allocation3], 144
      %v2155 = vld [vmem:[%s2154] ss:$2 sm:$0xff]
      %s2156 = scalar_lea.vmem [#allocation3], 160
      %v2157 = vld [vmem:[%s2156] ss:$2 sm:$0xff]
      %s2158 = scalar_lea.vmem [#allocation3], 176
      %v2159 = vld [vmem:[%s2158] ss:$2 sm:$0xff]
      %s2160 = scalar_lea.vmem [#allocation3], 192
      %v2161 = vld [vmem:[%s2160] ss:$2 sm:$0xff]
      %s2162 = scalar_lea.vmem [#allocation3], 208
      %v2163 = vld [vmem:[%s2162] ss:$2 sm:$0xff]
      %s2164 = scalar_lea.vmem [#allocation3], 224
      %v2165 = vld [vmem:[%s2164] ss:$2 sm:$0xff]
      %s2166 = scalar_lea.vmem [#allocation3], 240
      %v2167 = vld [vmem:[%s2166] ss:$2 sm:$0xff]
      %s2168 = scalar_lea.vmem [#allocation3], 1
      %v2169 = vld [vmem:[%s2168] ss:$2 sm:$0xff]
      %s2170 = scalar_lea.vmem [#allocation3], 17
      %v2171 = vld [vmem:[%s2170] ss:$2 sm:$0xff]
      %s2172 = scalar_lea.vmem [#allocation3], 33
      %v2173 = vld [vmem:[%s2172] ss:$2 sm:$0xff]
      %s2174 = scalar_lea.vmem [#allocation3], 49
      %v2175 = vld [vmem:[%s2174] ss:$2 sm:$0xff]
      %s2176 = scalar_lea.vmem [#allocation3], 65
      %v2177 = vld [vmem:[%s2176] ss:$2 sm:$0xff]
      %s2178 = scalar_lea.vmem [#allocation3], 81
      %v2179 = vld [vmem:[%s2178] ss:$2 sm:$0xff]
      %s2180 = scalar_lea.vmem [#allocation3], 97
      %v2181 = vld [vmem:[%s2180] ss:$2 sm:$0xff]
      %s2182 = scalar_lea.vmem [#allocation3], 113
      %v2183 = vld [vmem:[%s2182] ss:$2 sm:$0xff]
      %s2184 = scalar_lea.vmem [#allocation3], 129
      %v2185 = vld [vmem:[%s2184] ss:$2 sm:$0xff]
      %s2186 = scalar_lea.vmem [#allocation3], 145
      %v2187 = vld [vmem:[%s2186] ss:$2 sm:$0xff]
      %s2188 = scalar_lea.vmem [#allocation3], 161
      %v2189 = vld [vmem:[%s2188] ss:$2 sm:$0xff]
      %s2190 = scalar_lea.vmem [#allocation3], 177
      %v2191 = vld [vmem:[%s2190] ss:$2 sm:$0xff]
      %s2192 = scalar_lea.vmem [#allocation3], 193
      %v2193 = vld [vmem:[%s2192] ss:$2 sm:$0xff]
      %s2194 = scalar_lea.vmem [#allocation3], 209
      %v2195 = vld [vmem:[%s2194] ss:$2 sm:$0xff]
      %s2196 = scalar_lea.vmem [#allocation3], 225
      %v2197 = vld [vmem:[%s2196] ss:$2 sm:$0xff]
      %s2198 = scalar_lea.vmem [#allocation3], 241
      %v2199 = vld [vmem:[%s2198] ss:$2 sm:$0xff]
      %v2200 = vmax.f32 %v2137, %v2169
      %v2201 = vmax.f32 %v2139, %v2171
      %v2202 = vmax.f32 %v2141, %v2173
      %v2203 = vmax.f32 %v2143, %v2175
      %v2204 = vmax.f32 %v2145, %v2177
      %v2205 = vmax.f32 %v2147, %v2179
      %v2206 = vmax.f32 %v2149, %v2181
      %v2207 = vmax.f32 %v2151, %v2183
      %v2208 = vmax.f32 %v2153, %v2185
      %v2209 = vmax.f32 %v2155, %v2187
      %v2210 = vmax.f32 %v2157, %v2189
      %v2211 = vmax.f32 %v2159, %v2191
      %v2212 = vmax.f32 %v2161, %v2193
      %v2213 = vmax.f32 %v2163, %v2195
      %v2214 = vmax.f32 %v2165, %v2197
      %v2215 = vmax.f32 %v2167, %v2199
      %v2216 = vmax.f32 %v2200, %v2201
      %v2217 = vmax.f32 %v2202, %v2203
      %v2218 = vmax.f32 %v2204, %v2205
      %v2219 = vmax.f32 %v2206, %v2207
      %v2220 = vmax.f32 %v2208, %v2209
      %v2221 = vmax.f32 %v2210, %v2211
      %v2222 = vmax.f32 %v2212, %v2213
      %v2223 = vmax.f32 %v2214, %v2215
      %v2224 = vpack.c.bf16 %v2216, %v2216
      %v2225 = vpack.c.bf16 %v2217, %v2217
      %v2226 = vpack.c.bf16 %v2218, %v2218
      %v2227 = vpack.c.bf16 %v2219, %v2219
      %v2228 = vpack.c.bf16 %v2220, %v2220
      %v2229 = vpack.c.bf16 %v2221, %v2221
      %v2230 = vpack.c.bf16 %v2222, %v2222
      %v2231 = vpack.c.bf16 %v2223, %v2223
      %s2232 = scalar_lea.vmem %s269, 32
      %2233 = vst [vmem:[%s2232] sm:$0xf] %v2224
      %2234 = vst [vmem:[%s2232 + $0x4] sm:$0xf] %v2225
      %2235 = vst [vmem:[%s2232 + $0x8] sm:$0xf] %v2226
      %2236 = vst [vmem:[%s2232 + $0xc] sm:$0xf] %v2227
      %2237 = vst [vmem:[%s2232 + $0x10] sm:$0xf] %v2228
      %2238 = vst [vmem:[%s2232 + $0x14] sm:$0xf] %v2229
      %2239 = vst [vmem:[%s2232 + $0x18] sm:$0xf] %v2230
      %2240 = vst [vmem:[%s2232 + $0x1c] sm:$0xf] %v2231
      %p2241 = scmp.lt.s32.totalorder %s18, 1
      %s2242 = scalar_select %p2241, %s18, 1
      %s2243 = smul.addr %s2242, 8
      %s2244 = scalar_lea.vmem %s5, %s2243
      %s2245 = smul.u32 2, %s18
      %p2246 = scmp.lt.s32.totalorder %s2245, 3
      %s2247 = scalar_select %p2246, %s2245, 3
      %s2248 = smul.addr %s2247, 8
      %s2249 = smul.addr %s2248, 4
      %s2250 = scalar_lea.vmem %s6, %s2249
      // Predicated region
      $region41: #{perceptual_loss_forward.3} parent=39 // pred_check
        %p2251 = pneg %p146
      $region42: #{perceptual_loss_forward.3} parent=39 // pred_check_branch
        %2253 = sbr.rel (%p2251) target = $region44
      $region43: #{perceptual_loss_forward.3} parent=39 // pred_region
        _
      $region44: #{perceptual_loss_forward.3} parent=39 // pred_fallthru
        _
      // Predicated region
      $region45: #{perceptual_loss_forward.3} parent=39 // pred_check
        %p2254 = pneg %p172
      $region46: #{perceptual_loss_forward.3} parent=39 // pred_check_branch
        %2256 = sbr.rel (%p2254) target = $region48
      $region47: #{perceptual_loss_forward.3} parent=39 // pred_region
        %s2257 = smul.u32 2, %s18
      $region48: #{perceptual_loss_forward.3} parent=39 // pred_fallthru
        _
    $region40: #{perceptual_loss_forward.3} parent=5 // pred_fallthru
      _
    %p2258 = scmp.le.s32.totalorder 2, %s13
    // Predicated region
    $region49: #{perceptual_loss_forward.3} parent=5 // pred_check
      %p2259 = pneg %p2258
    $region50: #{perceptual_loss_forward.3} parent=5 // pred_check_branch
      %2261 = sbr.rel (%p2259) target = $region52
    $region51: #{perceptual_loss_forward.3} parent=5 // pred_region
      %s2262 = ssub.s32 %s13, 2
      // Predicated region
      $region53: #{perceptual_loss_forward.3} parent=51 // pred_check
        %p2263 = pneg %p152
      $region54: #{perceptual_loss_forward.3} parent=51 // pred_check_branch
        %2265 = sbr.rel (%p2263) target = $region56
      $region55: #{perceptual_loss_forward.3} parent=51 // pred_region
        %p2266 = scmp.lt.s32.totalorder %s19, 1
        %s2267 = scalar_select %p2266, %s19, 1
        %s2268 = smul.addr %s2267, 8
        %s2269 = scalar_lea.vmem %s5, %s2268
      $region56: #{perceptual_loss_forward.3} parent=51 // pred_fallthru
        _
      // Predicated region
      $region57: #{perceptual_loss_forward.3} parent=51 // pred_check
        %p2270 = pneg %p178
      $region58: #{perceptual_loss_forward.3} parent=51 // pred_check_branch
        %2272 = sbr.rel (%p2270) target = $region60
      $region59: #{perceptual_loss_forward.3} parent=51 // pred_region
        %s2273 = smul.u32 2, %s19
        %p2274 = scmp.lt.s32.totalorder %s2273, 3
        %s2275 = scalar_select %p2274, %s2273, 3
        %s2276 = smul.addr %s2275, 8
        %s2277 = smul.addr %s2276, 4
        %s2278 = scalar_lea.vmem %s6, %s2277
      $region60: #{perceptual_loss_forward.3} parent=51 // pred_fallthru
        _
    $region52: #{perceptual_loss_forward.3} parent=5 // pred_fallthru
      _
  $region6: #{perceptual_loss_forward.3} parent=0 // loop_footer
    %s17 = sadd.s32 1, %s13
  $region7: #{perceptual_loss_forward.3} parent=0 // loop_footer_branch
    %12 = sbr.rel target = $region3
  $region8: #{perceptual_loss_forward.3} parent=0 // loop_exit
    _

// kernel: perceptual_loss_forward.5
$region0: #{perceptual_loss_forward.5}
  #allocation0 [shape = 'u32[]', space=smem, size = 0x4, offset = 0x4, fixed_abs, tag = 'smem constant byte address 0x4 - core index']
  #allocation1 [shape = 'u32[144,128]{1,0:T(1,128)}', space=vmem, size = 0x12000, scoped, tag = 'internal scratch']
  %s0 = inlined_call_operand.vmem [shape: bf16[4,56,128], index: 0, kind: input, shape index: {}]
  %s1 = inlined_call_operand.vmem [shape: bf16[5,256,128], index: 1, kind: input, shape index: {}]
  %s2 = inlined_call_operand.vmem [shape: f32[1,128], index: 2, kind: input, shape index: {}]
  %s3 = inlined_call_operand.vmem [shape: f32[128,1], index: 3, kind: input, shape index: {}]
  %s4 = inlined_call_operand.vmem [shape: f32[32,1], index: 4, kind: input, shape index: {}]
  %s5 = inlined_call_operand.vmem [shape: f32[2,8,128], index: 5, kind: output, shape index: {}]
  %s6 = sld [smem:[#allocation0]]
  $region53: #{perceptual_loss_forward.5} parent=0
    _
  %s8 = ssub.s32 1, %s6
  %s9 = scalar_select 0, %s8, %s6
  loop: start=0, step=1, limit=4
  $region2: #{perceptual_loss_forward.5} parent=0 // loop_pre_header
    _
  $region3: #{perceptual_loss_forward.5} parent=0 // loop_header
    %s11 = sphi 0, %s15
    %p12 = scmp.ge.s32.totalorder %s11, 4
    %s21 = sphi 0, %s23
    %s24 = sphi 0, %s21
    %s25 = sphi 0, %s24
    %s41 = sphi 0, %s25
    %s45 = sphi 0, %s45
    %s47 = sphi 0, %s45
    %s48 = sphi 0, %s47
    %s62 = sphi 0, %s48
    %s66 = sphi 0, %s66
    %s68 = sphi 0, %s66
    %s69 = sphi 0, %s68
    %s83 = sphi 0, %s69
    %s87 = sphi 0, %s87
    %s89 = sphi 0, %s87
    %s90 = sphi 0, %s89
    %s104 = sphi 0, %s90
    %s108 = sphi 0, %s108
    %s110 = sphi 0, %s108
    %s111 = sphi 0, %s110
    %s125 = sphi 0, %s111
    %s131 = sphi 0, %s133
    %s134 = sphi 0, %s131
    %s135 = sphi 0, %s134
    %s151 = sphi 0, %s135
  $region4: #{perceptual_loss_forward.5} parent=0 // loop_header_branch
    %14 = sbr.rel (%p12) target = $region8
  $region5: #{perceptual_loss_forward.5} parent=0 // loop_body
    %s16 = ssub.s32 %s11, 1
    %s17 = ssub.s32 %s11, 2
    %s18 = sadd.s32 %s11, 1
    %s19 = ssub.s32 %s11, %s18
    %p20 = scmp.eq.s32.totalorder %s19, 0
    %s22 = sadd.s32 %s21, 1
    %s23 = scalar_select %p20, %s21, %s22
    %p26 = pneg %p20
    %p27 = scmp.eq.s32.totalorder %s11, 1
    %p28 = por %p26, %p27
    %p29 = scmp.ne.s32.totalorder %s21, %s24
    %p30 = scmp.eq.s32.totalorder %s11, 0
    %p31 = por %p29, %p30
    %p32 = scmp.ne.s32.totalorder %s21, %s24
    %p33 = scmp.eq.s32.totalorder %s16, 1
    %p34 = por %p32, %p33
    %p35 = scmp.ne.s32.totalorder %s24, %s25
    %p36 = scmp.eq.s32.totalorder %s16, 0
    %p37 = por %p35, %p36
    %p38 = scmp.ne.s32.totalorder %s24, %s25
    %p39 = scmp.eq.s32.totalorder %s17, 1
    %p40 = por %p38, %p39
    %p42 = scmp.ne.s32.totalorder %s25, %s41
    %p43 = scmp.eq.s32.totalorder %s17, 0
    %p44 = por %p42, %p43
    %s46 = sadd.s32 %s45, 1
    %p49 = scmp.eq.s32.totalorder %s11, 1
    %p50 = scmp.ne.s32.totalorder %s45, %s47
    %p51 = scmp.eq.s32.totalorder %s11, 0
    %p52 = por %p50, %p51
    %p53 = scmp.ne.s32.totalorder %s45, %s47
    %p54 = scmp.eq.s32.totalorder %s16, 1
    %p55 = por %p53, %p54
    %p56 = scmp.ne.s32.totalorder %s47, %s48
    %p57 = scmp.eq.s32.totalorder %s16, 0
    %p58 = por %p56, %p57
    %p59 = scmp.ne.s32.totalorder %s47, %s48
    %p60 = scmp.eq.s32.totalorder %s17, 1
    %p61 = por %p59, %p60
    %p63 = scmp.ne.s32.totalorder %s48, %s62
    %p64 = scmp.eq.s32.totalorder %s17, 0
    %p65 = por %p63, %p64
    %s67 = sadd.s32 %s66, 1
    %p70 = scmp.eq.s32.totalorder %s11, 1
    %p71 = scmp.ne.s32.totalorder %s66, %s68
    %p72 = scmp.eq.s32.totalorder %s11, 0
    %p73 = por %p71, %p72
    %p74 = scmp.ne.s32.totalorder %s66, %s68
    %p75 = scmp.eq.s32.totalorder %s16, 1
    %p76 = por %p74, %p75
    %p77 = scmp.ne.s32.totalorder %s68, %s69
    %p78 = scmp.eq.s32.totalorder %s16, 0
    %p79 = por %p77, %p78
    %p80 = scmp.ne.s32.totalorder %s68, %s69
    %p81 = scmp.eq.s32.totalorder %s17, 1
    %p82 = por %p80, %p81
    %p84 = scmp.ne.s32.totalorder %s69, %s83
    %p85 = scmp.eq.s32.totalorder %s17, 0
    %p86 = por %p84, %p85
    %s88 = sadd.s32 %s87, 1
    %p91 = scmp.eq.s32.totalorder %s11, 1
    %p92 = scmp.ne.s32.totalorder %s87, %s89
    %p93 = scmp.eq.s32.totalorder %s11, 0
    %p94 = por %p92, %p93
    %p95 = scmp.ne.s32.totalorder %s87, %s89
    %p96 = scmp.eq.s32.totalorder %s16, 1
    %p97 = por %p95, %p96
    %p98 = scmp.ne.s32.totalorder %s89, %s90
    %p99 = scmp.eq.s32.totalorder %s16, 0
    %p100 = por %p98, %p99
    %p101 = scmp.ne.s32.totalorder %s89, %s90
    %p102 = scmp.eq.s32.totalorder %s17, 1
    %p103 = por %p101, %p102
    %p105 = scmp.ne.s32.totalorder %s90, %s104
    %p106 = scmp.eq.s32.totalorder %s17, 0
    %p107 = por %p105, %p106
    %s109 = sadd.s32 %s108, 1
    %p112 = scmp.eq.s32.totalorder %s11, 1
    %p113 = scmp.ne.s32.totalorder %s108, %s110
    %p114 = scmp.eq.s32.totalorder %s11, 0
    %p115 = por %p113, %p114
    %p116 = scmp.ne.s32.totalorder %s108, %s110
    %p117 = scmp.eq.s32.totalorder %s16, 1
    %p118 = por %p116, %p117
    %p119 = scmp.ne.s32.totalorder %s110, %s111
    %p120 = scmp.eq.s32.totalorder %s16, 0
    %p121 = por %p119, %p120
    %p122 = scmp.ne.s32.totalorder %s110, %s111
    %p123 = scmp.eq.s32.totalorder %s17, 1
    %p124 = por %p122, %p123
    %p126 = scmp.ne.s32.totalorder %s111, %s125
    %p127 = scmp.eq.s32.totalorder %s17, 0
    %p128 = por %p126, %p127
    %s129 = ssub.s32 %s11, %s18
    %p130 = scmp.eq.s32.totalorder %s129, 0
    %s132 = sadd.s32 %s131, 1
    %s133 = scalar_select %p130, %s131, %s132
    %p136 = pneg %p130
    %p137 = scmp.eq.s32.totalorder %s11, 1
    %p138 = por %p136, %p137
    %p139 = scmp.ne.s32.totalorder %s131, %s134
    %p140 = scmp.eq.s32.totalorder %s11, 0
    %p141 = por %p139, %p140
    %p142 = scmp.ne.s32.totalorder %s131, %s134
    %p143 = scmp.eq.s32.totalorder %s16, 1
    %p144 = por %p142, %p143
    %p145 = scmp.ne.s32.totalorder %s134, %s135
    %p146 = scmp.eq.s32.totalorder %s16, 0
    %p147 = por %p145, %p146
    %p148 = scmp.ne.s32.totalorder %s134, %s135
    %p149 = scmp.eq.s32.totalorder %s17, 1
    %p150 = por %p148, %p149
    %p152 = scmp.ne.s32.totalorder %s135, %s151
    %p153 = scmp.eq.s32.totalorder %s17, 0
    %p154 = por %p152, %p153
    %p155 = scmp.le.s32.totalorder 1, %s11
    %p156 = scmp.lt.s32.totalorder %s11, 3
    %p157 = pnand %p155, %p156
    %p158 = pneg %p157
    // Predicated region
    $region9: #{perceptual_loss_forward.5} parent=5 // pred_check
      _
    $region10: #{perceptual_loss_forward.5} parent=5 // pred_check_branch
      %160 = sbr.rel (%p157) target = $region12
    $region11: #{perceptual_loss_forward.5} parent=5 // pred_region
      %s161 = ssub.s32 %s11, 1
      // Predicated region
      $region13: #{perceptual_loss_forward.5} parent=11 // pred_check
        %p162 = pneg %p58
      $region14: #{perceptual_loss_forward.5} parent=11 // pred_check_branch
        %164 = sbr.rel (%p162) target = $region16
      $region15: #{perceptual_loss_forward.5} parent=11 // pred_region
        _
      $region16: #{perceptual_loss_forward.5} parent=11 // pred_fallthru
        _
      // Predicated region
      $region17: #{perceptual_loss_forward.5} parent=11 // pred_check
        %p165 = pneg %p79
      $region18: #{perceptual_loss_forward.5} parent=11 // pred_check_branch
        %167 = sbr.rel (%p165) target = $region20
      $region19: #{perceptual_loss_forward.5} parent=11 // pred_region
        _
      $region20: #{perceptual_loss_forward.5} parent=11 // pred_fallthru
        _
      // Predicated region
      $region21: #{perceptual_loss_forward.5} parent=11 // pred_check
        %p168 = pneg %p100
      $region22: #{perceptual_loss_forward.5} parent=11 // pred_check_branch
        %170 = sbr.rel (%p168) target = $region24
      $region23: #{perceptual_loss_forward.5} parent=11 // pred_region
        _
      $region24: #{perceptual_loss_forward.5} parent=11 // pred_fallthru
        _
      // Predicated region
      $region25: #{perceptual_loss_forward.5} parent=11 // pred_check
        %p171 = pneg %p121
      $region26: #{perceptual_loss_forward.5} parent=11 // pred_check_branch
        %173 = sbr.rel (%p171) target = $region28
      $region27: #{perceptual_loss_forward.5} parent=11 // pred_region
        _
      $region28: #{perceptual_loss_forward.5} parent=11 // pred_fallthru
        _
    $region12: #{perceptual_loss_forward.5} parent=5 // pred_fallthru
      _
    %p174 = scmp.lt.s32.totalorder %s11, 2
    // Predicated region
    $region29: #{perceptual_loss_forward.5} parent=5 // pred_check
      %p175 = pneg %p174
    $region30: #{perceptual_loss_forward.5} parent=5 // pred_check_branch
      %177 = sbr.rel (%p175) target = $region32
    $region31: #{perceptual_loss_forward.5} parent=5 // pred_region
      // Predicated region
      $region33: #{perceptual_loss_forward.5} parent=31 // pred_check
        %p178 = pneg %p31
      $region34: #{perceptual_loss_forward.5} parent=31 // pred_check_branch
        %180 = sbr.rel (%p178) target = $region36
      $region35: #{perceptual_loss_forward.5} parent=31 // pred_region
        %s181 = smul.u32 2, %s11
        %p182 = scmp.lt.s32.totalorder %s181, 3
        %s183 = scalar_select %p182, %s181, 3
        %s184 = smul.addr %s183, 7
        %s185 = smul.addr %s184, 4
        %s186 = scalar_lea.vmem %s0, %s185
        %s187 = smul.u32 2, %s11
      $region36: #{perceptual_loss_forward.5} parent=31 // pred_fallthru
        _
    $region32: #{perceptual_loss_forward.5} parent=5 // pred_fallthru
      _
    %p188 = scmp.le.s32.totalorder 1, %s11
    %p189 = scmp.lt.s32.totalorder %s11, 3
    %p190 = pnand %p188, %p189
    %p191 = pneg %p190
    // Predicated region
    $region37: #{perceptual_loss_forward.5} parent=5 // pred_check
      _
    $region38: #{perceptual_loss_forward.5} parent=5 // pred_check_branch
      %193 = sbr.rel (%p190) target = $region40
    $region39: #{perceptual_loss_forward.5} parent=5 // pred_region
      %s194 = ssub.s32 %s11, 1
      %s195 = smul.u32 2, %s16
      %p196 = scmp.lt.s32.totalorder %s195, 3
      %s197 = scalar_select %p196, %s195, 3
      %s198 = smul.addr %s197, 7
      %s199 = smul.addr %s198, 4
      %s200 = scalar_lea.vmem %s0, %s199
      %p201 = pneg %p37
      %p202 = pneg %p34
      %p203 = pneg %p58
      %p204 = pneg %p55
      %p205 = pneg %p79
      %p206 = pneg %p76
      %p207 = pneg %p100
      %p208 = pneg %p97
      %p209 = pneg %p121
      %p210 = pneg %p118
      %p211 = pneg %p147
      %p212 = pneg %p144
      %p213 = scmp.lt.s32.totalorder %s16, 1
      %s214 = scalar_select %p213, %s16, 1
      %s215 = smul.addr %s214, 8
      %s216 = scalar_lea.vmem %s5, %s215
      %s217 = smul.u32 2, %s16
      %p218 = scmp.lt.s32.totalorder %s217, 3
      %s219 = scalar_select %p218, %s217, 3
      %s220 = smul.addr %s219, 7
      %s221 = smul.addr %s220, 4
      %s222 = scalar_lea.vmem %s0, %s221
      %s223 = smul.u32 2, %s16
      %p224 = scmp.lt.s32.totalorder %s16, 1
      %s225 = scalar_select %p224, %s16, 1
      %s226 = smul.addr %s225, 8
      %s227 = scalar_lea.vmem %s5, %s226
      %v229 = vld [vmem:[%s3] sm:$0xff]
      %v230 = vld [vmem:[%s3 + $0x8] sm:$0xff]
      %v231 = vld [vmem:[%s3 + $0x10] sm:$0xff]
      %v232 = vld [vmem:[%s3 + $0x18] sm:$0xff]
      %v233 = vld [vmem:[%s3 + $0x20] sm:$0xff]
      %v234 = vld [vmem:[%s3 + $0x28] sm:$0xff]
      %v235 = vld [vmem:[%s3 + $0x30] sm:$0xff]
      %v236 = vld [vmem:[%s3 + $0x38] sm:$0xff]
      %v237 = vld [vmem:[%s3 + $0x40] sm:$0xff]
      %v238 = vld [vmem:[%s3 + $0x48] sm:$0xff]
      %v239 = vld [vmem:[%s3 + $0x50] sm:$0xff]
      %v240 = vld [vmem:[%s3 + $0x58] sm:$0xff]
      %v241 = vld [vmem:[%s3 + $0x60] sm:$0xff]
      %v242 = vld [vmem:[%s3 + $0x68] sm:$0xff]
      %v243 = vld [vmem:[%s3 + $0x70] sm:$0xff]
      %v244 = vld [vmem:[%s3 + $0x78] sm:$0xff]
      %v245 = vpack.c.bf16 %v230, %v229
      %v246 = vpack.c.bf16 %v232, %v231
      %v247 = vpack.c.bf16 %v234, %v233
      %v248 = vpack.c.bf16 %v236, %v235
      %v249 = vpack.c.bf16 %v238, %v237
      %v250 = vpack.c.bf16 %v240, %v239
      %v251 = vpack.c.bf16 %v242, %v241
      %v252 = vpack.c.bf16 %v244, %v243
      %v253 = vld [vmem:[%s222] sm:$0xf]
      %v254 = vld [vmem:[%s222 + $0x4] sm:$0xf]
      %v255 = vld [vmem:[%s222 + $0x8] sm:$0xf]
      %v256 = vld [vmem:[%s222 + $0xc] sm:$0xf]
      %v257 = vld [vmem:[%s222 + $0x10] sm:$0x1]
      %v262 = vunpack.c.l.b16 %v253
      %v263 = vunpack.c.l.b16 %v254
      %v264 = vunpack.c.l.b16 %v255
      %v265 = vunpack.c.l.b16 %v256
      %v266 = vpack.c.b16 %v263, %v262
      %v267 = vpack.c.b16 %v265, %v264
      %v271 = vunpack.c.l.b16 %v257
      %v272 = vpack.c.b16 %v271, %v271
      %vm273 = vsmask.f32 7424
      %v275 = vshrl.u32 %v266, 16
      %v277 = vshll.u32 %v266, 16
      %v279 = vrot.slane %v277, 1
      %v280 = vor.u32 %v275, %v279
      %v282 = vshll.u32 %v267, 16
      %v284 = vrot.slane %v282, 1
      %v285 = vsel %vm273, %v280, %v284
      %v286 = vshrl.u32 %v267, 16
      %v288 = vor.u32 %v286, %v284
      %v290 = vshll.u32 %v272, 16
      %v292 = vrot.slane %v290, 1
      %v293 = vsel %vm273, %v288, %v292
      %v296 = vld [vmem:[%s1] sm:$0xf]
      %v297 = vld [vmem:[%s1 + $0x4] sm:$0xf]
      %v298 = vld [vmem:[%s1 + $0x8] sm:$0xf]
      %v299 = vld [vmem:[%s1 + $0xc] sm:$0xf]
      %v300 = vld [vmem:[%s1 + $0x10] sm:$0xf]
      %v301 = vld [vmem:[%s1 + $0x14] sm:$0xf]
      %v302 = vld [vmem:[%s1 + $0x18] sm:$0xf]
      %v303 = vld [vmem:[%s1 + $0x1c] sm:$0xf]
      %v304 = vld [vmem:[%s1 + $0x20] sm:$0xf]
      %v305 = vld [vmem:[%s1 + $0x24] sm:$0xf]
      %v306 = vld [vmem:[%s1 + $0x28] sm:$0xf]
      %v307 = vld [vmem:[%s1 + $0x2c] sm:$0xf]
      %v308 = vld [vmem:[%s1 + $0x30] sm:$0xf]
      %v309 = vld [vmem:[%s1 + $0x34] sm:$0xf]
      %v310 = vld [vmem:[%s1 + $0x38] sm:$0xf]
      %v311 = vld [vmem:[%s1 + $0x3c] sm:$0xf]
      %v312 = vld [vmem:[%s1 + $0x40] sm:$0xf]
      %v313 = vld [vmem:[%s1 + $0x44] sm:$0xf]
      %v314 = vld [vmem:[%s1 + $0x48] sm:$0xf]
      %v315 = vld [vmem:[%s1 + $0x4c] sm:$0xf]
      %v316 = vld [vmem:[%s1 + $0x50] sm:$0xf]
      %v317 = vld [vmem:[%s1 + $0x54] sm:$0xf]
      %v318 = vld [vmem:[%s1 + $0x58] sm:$0xf]
      %v319 = vld [vmem:[%s1 + $0x5c] sm:$0xf]
      %v320 = vld [vmem:[%s1 + $0x60] sm:$0xf]
      %v321 = vld [vmem:[%s1 + $0x64] sm:$0xf]
      %v322 = vld [vmem:[%s1 + $0x68] sm:$0xf]
      %v323 = vld [vmem:[%s1 + $0x6c] sm:$0xf]
      %v324 = vld [vmem:[%s1 + $0x70] sm:$0xf]
      %v325 = vld [vmem:[%s1 + $0x74] sm:$0xf]
      %v326 = vld [vmem:[%s1 + $0x78] sm:$0xf]
      %v327 = vld [vmem:[%s1 + $0x7c] sm:$0xf]
      %v328 = vld [vmem:[%s222] sm:$0xe]
      %v329 = vld [vmem:[%s222 + $0x10] sm:$0xf]
      %v331 = vunpack.c.l.b16 %v328
      %v332 = vpack.c.b16 %v263, %v331
      %v334 = vunpack.c.l.b16 %v329
      %v335 = vpack.c.b16 %v264, %v263
      %v336 = vpack.c.b16 %v334, %v265
      %vm337 = vcmask 1040384
      %v338 = vrot.slane %v335, 7
      %v339 = vrot.slane %v336, 7
      %v340 = vsel %vm337, %v338, %v339
      %s341 = scalar_lea.vmem %s1, 128
      %v342 = vld [vmem:[%s341] sm:$0xf]
      %v343 = vld [vmem:[%s341 + $0x4] sm:$0xf]
      %v344 = vld [vmem:[%s341 + $0x8] sm:$0xf]
      %v345 = vld [vmem:[%s341 + $0xc] sm:$0xf]
      %v346 = vld [vmem:[%s341 + $0x10] sm:$0xf]
      %v347 = vld [vmem:[%s341 + $0x14] sm:$0xf]
      %v348 = vld [vmem:[%s341 + $0x18] sm:$0xf]
      %v349 = vld [vmem:[%s341 + $0x1c] sm:$0xf]
      %v350 = vld [vmem:[%s341 + $0x20] sm:$0xf]
      %v351 = vld [vmem:[%s341 + $0x24] sm:$0xf]
      %v352 = vld [vmem:[%s341 + $0x28] sm:$0xf]
      %v353 = vld [vmem:[%s341 + $0x2c] sm:$0xf]
      %v354 = vld [vmem:[%s341 + $0x30] sm:$0xf]
      %v355 = vld [vmem:[%s341 + $0x34] sm:$0xf]
      %v356 = vld [vmem:[%s341 + $0x38] sm:$0xf]
      %v357 = vld [vmem:[%s341 + $0x3c] sm:$0xf]
      %v358 = vld [vmem:[%s341 + $0x40] sm:$0xf]
      %v359 = vld [vmem:[%s341 + $0x44] sm:$0xf]
      %v360 = vld [vmem:[%s341 + $0x48] sm:$0xf]
      %v361 = vld [vmem:[%s341 + $0x4c] sm:$0xf]
      %v362 = vld [vmem:[%s341 + $0x50] sm:$0xf]
      %v363 = vld [vmem:[%s341 + $0x54] sm:$0xf]
      %v364 = vld [vmem:[%s341 + $0x58] sm:$0xf]
      %v365 = vld [vmem:[%s341 + $0x5c] sm:$0xf]
      %v366 = vld [vmem:[%s341 + $0x60] sm:$0xf]
      %v367 = vld [vmem:[%s341 + $0x64] sm:$0xf]
      %v368 = vld [vmem:[%s341 + $0x68] sm:$0xf]
      %v369 = vld [vmem:[%s341 + $0x6c] sm:$0xf]
      %v370 = vld [vmem:[%s341 + $0x70] sm:$0xf]
      %v371 = vld [vmem:[%s341 + $0x74] sm:$0xf]
      %v372 = vld [vmem:[%s341 + $0x78] sm:$0xf]
      %v373 = vld [vmem:[%s341 + $0x7c] sm:$0xf]
      %vm374 = vcmask 1046528
      %v375 = vrot.slane %v332, 1
      %v376 = vrot.slane %v267, 1
      %v377 = vsel %vm374, %v375, %v376
      %v378 = vrot.slane %v338, 1
      %v379 = vrot.slane %v340, 1
      %v380 = vsel %vm374, %v378, %v379
      %v381 = vrot.slane %v272, 1
      %v382 = vsel %vm374, %v376, %v381
      %v383 = vrot.slane %v339, 1
      %v384 = vsel %vm374, %v379, %v383
      %v421 = vunpack.c.l.b16 %v342
      %v422 = vunpack.c.l.b16 %v343
      %v423 = vunpack.c.l.b16 %v344
      %v424 = vunpack.c.l.b16 %v345
      %v425 = vunpack.c.l.b16 %v346
      %v426 = vunpack.c.l.b16 %v347
      %v427 = vunpack.c.l.b16 %v348
      %v428 = vunpack.c.l.b16 %v349
      %v429 = vunpack.c.l.b16 %v350
      %v430 = vunpack.c.l.b16 %v351
      %v431 = vunpack.c.l.b16 %v352
      %v432 = vunpack.c.l.b16 %v353
      %v433 = vunpack.c.l.b16 %v354
      %v434 = vunpack.c.l.b16 %v355
      %v435 = vunpack.c.l.b16 %v356
      %v436 = vunpack.c.l.b16 %v357
      %v437 = vunpack.c.l.b16 %v358
      %v438 = vunpack.c.l.b16 %v359
      %v439 = vunpack.c.l.b16 %v360
      %v440 = vunpack.c.l.b16 %v361
      %v441 = vunpack.c.l.b16 %v362
      %v442 = vunpack.c.l.b16 %v363
      %v443 = vunpack.c.l.b16 %v364
      %v444 = vunpack.c.l.b16 %v365
      %v445 = vunpack.c.l.b16 %v366
      %v446 = vunpack.c.l.b16 %v367
      %v447 = vunpack.c.l.b16 %v368
      %v448 = vunpack.c.l.b16 %v369
      %v449 = vunpack.c.l.b16 %v370
      %v450 = vunpack.c.l.b16 %v371
      %v451 = vunpack.c.l.b16 %v372
      %v452 = vunpack.c.l.b16 %v373
      %v453 = vpack.c.b16 %v422, %v421
      %v454 = vpack.c.b16 %v424, %v423
      %v455 = vpack.c.b16 %v426, %v425
      %v456 = vpack.c.b16 %v428, %v427
      %v457 = vpack.c.b16 %v430, %v429
      %v458 = vpack.c.b16 %v432, %v431
      %v459 = vpack.c.b16 %v434, %v433
      %v460 = vpack.c.b16 %v436, %v435
      %v461 = vpack.c.b16 %v438, %v437
      %v462 = vpack.c.b16 %v440, %v439
      %v463 = vpack.c.b16 %v442, %v441
      %v464 = vpack.c.b16 %v444, %v443
      %v465 = vpack.c.b16 %v446, %v445
      %v466 = vpack.c.b16 %v448, %v447
      %v467 = vpack.c.b16 %v450, %v449
      %v468 = vpack.c.b16 %v452, %v451
      %485 = vmatprep.subr.bf16.mxu0 0
      %486 = vmatpush1.bf16.msra.mxu0 %v453
      %487 = vmatprep.subr.bf16.mxu0 0
      %488 = vmatpush1.bf16.msra.mxu0 %v454
      %489 = vmatprep.subr.bf16.mxu0 0
      %490 = vmatpush1.bf16.msra.mxu0 %v455
      %491 = vmatprep.subr.bf16.mxu0 0
      %492 = vmatpush1.bf16.msra.mxu0 %v456
      %493 = vmatprep.subr.bf16.mxu0 0
      %494 = vmatpush1.bf16.msra.mxu0 %v457
      %495 = vmatprep.subr.bf16.mxu0 0
      %496 = vmatpush1.bf16.msra.mxu0 %v458
      %497 = vmatprep.subr.bf16.mxu0 0
      %498 = vmatpush1.bf16.msra.mxu0 %v459
      %499 = vmatprep.subr.bf16.mxu0 0
      %500 = vmatpush1.bf16.msra.mxu0 %v460
      %501 = vmatprep.subr.bf16.mxu0 0
      %502 = vmatpush1.bf16.msra.mxu0 %v461
      %503 = vmatprep.subr.bf16.mxu0 0
      %504 = vmatpush1.bf16.msra.mxu0 %v462
      %505 = vmatprep.subr.bf16.mxu0 0
      %506 = vmatpush1.bf16.msra.mxu0 %v463
      %507 = vmatprep.subr.bf16.mxu0 0
      %508 = vmatpush1.bf16.msra.mxu0 %v464
      %509 = vmatprep.subr.bf16.mxu0 0
      %510 = vmatpush1.bf16.msra.mxu0 %v465
      %511 = vmatprep.subr.bf16.mxu0 0
      %512 = vmatpush1.bf16.msra.mxu0 %v466
      %513 = vmatprep.subr.bf16.mxu0 0
      %514 = vmatpush1.bf16.msra.mxu0 %v467
      %515 = vmatprep.subr.bf16.mxu0 0
      %516 = vmatpush1.bf16.msra.mxu0 %v468
      %517 = vmatprep.mubr.bf16.mxu0 %v380
      %518 = vmatmul.mubr.bf16.gmra.mrb[0].mxu0 %v377
      %v519 = vpop.f32.mrb[0].mxu0
      %v520 = vadd.f32 0.0, %v519
      %v521 = vpop.f32.mrb[0].mxu0
      %v522 = vpop.f32.mrb[0].mxu0
      %v523 = vadd.f32 0.0, %v522
      %v524 = vpop.f32.mrb[0].mxu0
      %525 = vmatprep.mubr.bf16.mxu0 %v384
      %526 = vmatmul.mubr.bf16.gmra.mrb[0].mxu0 %v382
      %v527 = vpop.f32.mrb[0].mxu0
      %v528 = vadd.f32 0.0, %v527
      %v529 = vpop.f32.mrb[0].mxu0
      %v530 = vpop.f32.mrb[0].mxu0
      %v531 = vadd.f32 0.0, %v530
      %v532 = vpop.f32.mrb[0].mxu0
      %533 = vdwg.mxu0
      %v566 = vunpack.c.l.b16 %v296
      %v567 = vunpack.c.l.b16 %v297
      %v568 = vunpack.c.l.b16 %v298
      %v569 = vunpack.c.l.b16 %v299
      %v570 = vunpack.c.l.b16 %v300
      %v571 = vunpack.c.l.b16 %v301
      %v572 = vunpack.c.l.b16 %v302
      %v573 = vunpack.c.l.b16 %v303
      %v574 = vunpack.c.l.b16 %v304
      %v575 = vunpack.c.l.b16 %v305
      %v576 = vunpack.c.l.b16 %v306
      %v577 = vunpack.c.l.b16 %v307
      %v578 = vunpack.c.l.b16 %v308
      %v579 = vunpack.c.l.b16 %v309
      %v580 = vunpack.c.l.b16 %v310
      %v581 = vunpack.c.l.b16 %v311
      %v582 = vunpack.c.l.b16 %v312
      %v583 = vunpack.c.l.b16 %v313
      %v584 = vunpack.c.l.b16 %v314
      %v585 = vunpack.c.l.b16 %v315
      %v586 = vunpack.c.l.b16 %v316
      %v587 = vunpack.c.l.b16 %v317
      %v588 = vunpack.c.l.b16 %v318
      %v589 = vunpack.c.l.b16 %v319
      %v590 = vunpack.c.l.b16 %v320
      %v591 = vunpack.c.l.b16 %v321
      %v592 = vunpack.c.l.b16 %v322
      %v593 = vunpack.c.l.b16 %v323
      %v594 = vunpack.c.l.b16 %v324
      %v595 = vunpack.c.l.b16 %v325
      %v596 = vunpack.c.l.b16 %v326
      %v597 = vunpack.c.l.b16 %v327
      %v598 = vpack.c.b16 %v567, %v566
      %v599 = vpack.c.b16 %v569, %v568
      %v600 = vpack.c.b16 %v571, %v570
      %v601 = vpack.c.b16 %v573, %v572
      %v602 = vpack.c.b16 %v575, %v574
      %v603 = vpack.c.b16 %v577, %v576
      %v604 = vpack.c.b16 %v579, %v578
      %v605 = vpack.c.b16 %v581, %v580
      %v606 = vpack.c.b16 %v583, %v582
      %v607 = vpack.c.b16 %v585, %v584
      %v608 = vpack.c.b16 %v587, %v586
      %v609 = vpack.c.b16 %v589, %v588
      %v610 = vpack.c.b16 %v591, %v590
      %v611 = vpack.c.b16 %v593, %v592
      %v612 = vpack.c.b16 %v595, %v594
      %v613 = vpack.c.b16 %v597, %v596
      %630 = vmatprep.subr.bf16.mxu0 0
      %631 = vmatpush1.bf16.msra.mxu0 %v598
      %632 = vmatprep.subr.bf16.mxu0 0
      %633 = vmatpush1.bf16.msra.mxu0 %v599
      %634 = vmatprep.subr.bf16.mxu0 0
      %635 = vmatpush1.bf16.msra.mxu0 %v600
      %636 = vmatprep.subr.bf16.mxu0 0
      %637 = vmatpush1.bf16.msra.mxu0 %v601
      %638 = vmatprep.subr.bf16.mxu0 0
      %639 = vmatpush1.bf16.msra.mxu0 %v602
      %640 = vmatprep.subr.bf16.mxu0 0
      %641 = vmatpush1.bf16.msra.mxu0 %v603
      %642 = vmatprep.subr.bf16.mxu0 0
      %643 = vmatpush1.bf16.msra.mxu0 %v604
      %644 = vmatprep.subr.bf16.mxu0 0
      %645 = vmatpush1.bf16.msra.mxu0 %v605
      %646 = vmatprep.subr.bf16.mxu0 0
      %647 = vmatpush1.bf16.msra.mxu0 %v606
      %648 = vmatprep.subr.bf16.mxu0 0
      %649 = vmatpush1.bf16.msra.mxu0 %v607
      %650 = vmatprep.subr.bf16.mxu0 0
      %651 = vmatpush1.bf16.msra.mxu0 %v608
      %652 = vmatprep.subr.bf16.mxu0 0
      %653 = vmatpush1.bf16.msra.mxu0 %v609
      %654 = vmatprep.subr.bf16.mxu0 0
      %655 = vmatpush1.bf16.msra.mxu0 %v610
      %656 = vmatprep.subr.bf16.mxu0 0
      %657 = vmatpush1.bf16.msra.mxu0 %v611
      %658 = vmatprep.subr.bf16.mxu0 0
      %659 = vmatpush1.bf16.msra.mxu0 %v612
      %660 = vmatprep.subr.bf16.mxu0 0
      %661 = vmatpush1.bf16.msra.mxu0 %v613
      %662 = vmatprep.mubr.bf16.mxu0 %v285
      %663 = vmatmul.mubr.bf16.gmra.mrb[0].mxu0 %v266
      %v664 = vpop.f32.mrb[0].mxu0
      %v665 = vadd.f32 %v520, %v664
      %v666 = vpop.f32.mrb[0].mxu0
      %v667 = vpop.f32.mrb[0].mxu0
      %v668 = vadd.f32 %v523, %v667
      %v669 = vpop.f32.mrb[0].mxu0
      %670 = vmatprep.mubr.bf16.mxu0 %v293
      %671 = vmatmul.mubr.bf16.gmra.mrb[0].mxu0 %v267
      %v672 = vpop.f32.mrb[0].mxu0
      %v673 = vadd.f32 %v528, %v672
      %v674 = vpop.f32.mrb[0].mxu0
      %v675 = vpop.f32.mrb[0].mxu0
      %v676 = vadd.f32 %v531, %v675
      %v677 = vpop.f32.mrb[0].mxu0
      %678 = vdwg.mxu0
      %v679 = vld [vmem:[%s222 + $0x4] sm:$0xf]
      %v680 = vld [vmem:[%s222 + $0x8] sm:$0xf]
      %v681 = vld [vmem:[%s222 + $0xc] sm:$0xf]
      %v682 = vld [vmem:[%s222 + $0x10] sm:$0xf]
      %v683 = vld [vmem:[%s222 + $0x14] sm:$0x1]
      %v684 = vld [vmem:[%s222 + $0x4] sm:$0xe]
      %v690 = vunpack.c.l.b16 %v679
      %v691 = vunpack.c.l.b16 %v680
      %v692 = vunpack.c.l.b16 %v681
      %v693 = vunpack.c.l.b16 %v682
      %v694 = vunpack.c.l.b16 %v683
      %v695 = vpack.c.b16 %v691, %v690
      %v696 = vpack.c.b16 %v693, %v692
      %v697 = vpack.c.b16 %v694, %v694
      %v699 = vunpack.c.l.b16 %v684
      %v700 = vpack.c.b16 %v691, %v699
      %v702 = vshrl.u32 %v700, 16
      %v704 = vshll.u32 %v700, 16
      %v706 = vrot.slane %v704, 1
      %v707 = vor.u32 %v702, %v706
      %v709 = vshll.u32 %v696, 16
      %v711 = vrot.slane %v709, 1
      %v712 = vsel %vm273, %v707, %v711
      %v713 = vshrl.u32 %v696, 16
      %v715 = vor.u32 %v713, %v711
      %v717 = vshll.u32 %v697, 16
      %v719 = vrot.slane %v717, 1
      %v720 = vsel %vm273, %v715, %v719
      %v721 = vshrl.u32 %v697, 16
      %s723 = scalar_lea.vmem %s1, 256
      %v724 = vld [vmem:[%s723] sm:$0xf]
      %v725 = vld [vmem:[%s723 + $0x4] sm:$0xf]
      %v726 = vld [vmem:[%s723 + $0x8] sm:$0xf]
      %v727 = vld [vmem:[%s723 + $0xc] sm:$0xf]
      %v728 = vld [vmem:[%s723 + $0x10] sm:$0xf]
      %v729 = vld [vmem:[%s723 + $0x14] sm:$0xf]
      %v730 = vld [vmem:[%s723 + $0x18] sm:$0xf]
      %v731 = vld [vmem:[%s723 + $0x1c] sm:$0xf]
      %v732 = vld [vmem:[%s723 + $0x20] sm:$0xf]
      %v733 = vld [vmem:[%s723 + $0x24] sm:$0xf]
      %v734 = vld [vmem:[%s723 + $0x28] sm:$0xf]
      %v735 = vld [vmem:[%s723 + $0x2c] sm:$0xf]
      %v736 = vld [vmem:[%s723 + $0x30] sm:$0xf]
      %v737 = vld [vmem:[%s723 + $0x34] sm:$0xf]
      %v738 = vld [vmem:[%s723 + $0x38] sm:$0xf]
      %v739 = vld [vmem:[%s723 + $0x3c] sm:$0xf]
      %v740 = vld [vmem:[%s723 + $0x40] sm:$0xf]
      %v741 = vld [vmem:[%s723 + $0x44] sm:$0xf]
      %v742 = vld [vmem:[%s723 + $0x48] sm:$0xf]
      %v743 = vld [vmem:[%s723 + $0x4c] sm:$0xf]
      %v744 = vld [vmem:[%s723 + $0x50] sm:$0xf]
      %v745 = vld [vmem:[%s723 + $0x54] sm:$0xf]
      %v746 = vld [vmem:[%s723 + $0x58] sm:$0xf]
      %v747 = vld [vmem:[%s723 + $0x5c] sm:$0xf]
      %v748 = vld [vmem:[%s723 + $0x60] sm:$0xf]
      %v749 = vld [vmem:[%s723 + $0x64] sm:$0xf]
      %v750 = vld [vmem:[%s723 + $0x68] sm:$0xf]
      %v751 = vld [vmem:[%s723 + $0x6c] sm:$0xf]
      %v752 = vld [vmem:[%s723 + $0x70] sm:$0xf]
      %v753 = vld [vmem:[%s723 + $0x74] sm:$0xf]
      %v754 = vld [vmem:[%s723 + $0x78] sm:$0xf]
      %v755 = vld [vmem:[%s723 + $0x7c] sm:$0xf]
      %v757 = vshrl.u32 %v695, 16
      %v759 = vshll.u32 %v695, 16
      %v761 = vrot.slane %v759, 1
      %v762 = vor.u32 %v757, %v761
      %v763 = vsel %vm273, %v762, %v711
      %v765 = vshrl.u32 %v712, 16
      %v767 = vshll.u32 %v712, 16
      %v769 = vrot.slane %v767, 1
      %v770 = vor.u32 %v765, %v769
      %v772 = vshll.u32 %v720, 16
      %v774 = vrot.slane %v772, 1
      %v775 = vsel %vm273, %v770, %v774
      %v776 = vshrl.u32 %v720, 16
      %v778 = vor.u32 %v776, %v774
      %v780 = vshll.u32 %v721, 16
      %v782 = vrot.slane %v780, 1
      %v783 = vsel %vm273, %v778, %v782
      %v820 = vunpack.c.l.b16 %v724
      %v821 = vunpack.c.l.b16 %v725
      %v822 = vunpack.c.l.b16 %v726
      %v823 = vunpack.c.l.b16 %v727
      %v824 = vunpack.c.l.b16 %v728
      %v825 = vunpack.c.l.b16 %v729
      %v826 = vunpack.c.l.b16 %v730
      %v827 = vunpack.c.l.b16 %v731
      %v828 = vunpack.c.l.b16 %v732
      %v829 = vunpack.c.l.b16 %v733
      %v830 = vunpack.c.l.b16 %v734
      %v831 = vunpack.c.l.b16 %v735
      %v832 = vunpack.c.l.b16 %v736
      %v833 = vunpack.c.l.b16 %v737
      %v834 = vunpack.c.l.b16 %v738
      %v835 = vunpack.c.l.b16 %v739
      %v836 = vunpack.c.l.b16 %v740
      %v837 = vunpack.c.l.b16 %v741
      %v838 = vunpack.c.l.b16 %v742
      %v839 = vunpack.c.l.b16 %v743
      %v840 = vunpack.c.l.b16 %v744
      %v841 = vunpack.c.l.b16 %v745
      %v842 = vunpack.c.l.b16 %v746
      %v843 = vunpack.c.l.b16 %v747
      %v844 = vunpack.c.l.b16 %v748
      %v845 = vunpack.c.l.b16 %v749
      %v846 = vunpack.c.l.b16 %v750
      %v847 = vunpack.c.l.b16 %v751
      %v848 = vunpack.c.l.b16 %v752
      %v849 = vunpack.c.l.b16 %v753
      %v850 = vunpack.c.l.b16 %v754
      %v851 = vunpack.c.l.b16 %v755
      %v852 = vpack.c.b16 %v821, %v820
      %v853 = vpack.c.b16 %v823, %v822
      %v854 = vpack.c.b16 %v825, %v824
      %v855 = vpack.c.b16 %v827, %v826
      %v856 = vpack.c.b16 %v829, %v828
      %v857 = vpack.c.b16 %v831, %v830
      %v858 = vpack.c.b16 %v833, %v832
      %v859 = vpack.c.b16 %v835, %v834
      %v860 = vpack.c.b16 %v837, %v836
      %v861 = vpack.c.b16 %v839, %v838
      %v862 = vpack.c.b16 %v841, %v840
      %v863 = vpack.c.b16 %v843, %v842
      %v864 = vpack.c.b16 %v845, %v844
      %v865 = vpack.c.b16 %v847, %v846
      %v866 = vpack.c.b16 %v849, %v848
      %v867 = vpack.c.b16 %v851, %v850
      %884 = vmatprep.subr.bf16.mxu0 0
      %885 = vmatpush1.bf16.msra.mxu0 %v852
      %886 = vmatprep.subr.bf16.mxu0 0
      %887 = vmatpush1.bf16.msra.mxu0 %v853
      %888 = vmatprep.subr.bf16.mxu0 0
      %889 = vmatpush1.bf16.msra.mxu0 %v854
      %890 = vmatprep.subr.bf16.mxu0 0
      %891 = vmatpush1.bf16.msra.mxu0 %v855
      %892 = vmatprep.subr.bf16.mxu0 0
      %893 = vmatpush1.bf16.msra.mxu0 %v856
      %894 = vmatprep.subr.bf16.mxu0 0
      %895 = vmatpush1.bf16.msra.mxu0 %v857
      %896 = vmatprep.subr.bf16.mxu0 0
      %897 = vmatpush1.bf16.msra.mxu0 %v858
      %898 = vmatprep.subr.bf16.mxu0 0
      %899 = vmatpush1.bf16.msra.mxu0 %v859
      %900 = vmatprep.subr.bf16.mxu0 0
      %901 = vmatpush1.bf16.msra.mxu0 %v860
      %902 = vmatprep.subr.bf16.mxu0 0
      %903 = vmatpush1.bf16.msra.mxu0 %v861
      %904 = vmatprep.subr.bf16.mxu0 0
      %905 = vmatpush1.bf16.msra.mxu0 %v862
      %906 = vmatprep.subr.bf16.mxu0 0
      %907 = vmatpush1.bf16.msra.mxu0 %v863
      %908 = vmatprep.subr.bf16.mxu0 0
      %909 = vmatpush1.bf16.msra.mxu0 %v864
      %910 = vmatprep.subr.bf16.mxu0 0
      %911 = vmatpush1.bf16.msra.mxu0 %v865
      %912 = vmatprep.subr.bf16.mxu0 0
      %913 = vmatpush1.bf16.msra.mxu0 %v866
      %914 = vmatprep.subr.bf16.mxu0 0
      %915 = vmatpush1.bf16.msra.mxu0 %v867
      %916 = vmatprep.mubr.bf16.mxu0 %v775
      %917 = vmatmul.mubr.bf16.gmra.mrb[0].mxu0 %v763
      %v918 = vpop.f32.mrb[0].mxu0
      %v919 = vadd.f32 0.0, %v918
      %v920 = vpop.f32.mrb[0].mxu0
      %v921 = vpop.f32.mrb[0].mxu0
      %v922 = vadd.f32 0.0, %v921
      %v923 = vpop.f32.mrb[0].mxu0
      %924 = vmatprep.mubr.bf16.mxu0 %v783
      %925 = vmatmul.mubr.bf16.gmra.mrb[0].mxu0 %v720
      %v926 = vpop.f32.mrb[0].mxu0
      %v927 = vadd.f32 0.0, %v926
      %v928 = vpop.f32.mrb[0].mxu0
      %v929 = vpop.f32.mrb[0].mxu0
      %v930 = vadd.f32 0.0, %v929
      %v931 = vpop.f32.mrb[0].mxu0
      %932 = vdwg.mxu0
      %v933 = vadd.f32 %v665, %v919
      %v934 = vadd.f32 %v668, %v922
      %v935 = vadd.f32 %v673, %v927
      %v936 = vadd.f32 %v676, %v930
      %v937 = vld [vmem:[%s222 + $0x14] sm:$0xf]
      %v938 = vld [vmem:[%s222 + $0x8] sm:$0xf]
      %v939 = vld [vmem:[%s222 + $0xc] sm:$0xf]
      %v940 = vld [vmem:[%s222 + $0x10] sm:$0xf]
      %v941 = vld [vmem:[%s222 + $0x18] sm:$0x1]
      %v943 = vunpack.c.l.b16 %v937
      %v944 = vpack.c.b16 %v692, %v691
      %v945 = vpack.c.b16 %v943, %v693
      %v952 = vunpack.c.l.b16 %v938
      %v953 = vunpack.c.l.b16 %v939
      %v954 = vunpack.c.l.b16 %v940
      %v955 = vunpack.c.l.b16 %v941
      %v956 = vpack.c.b16 %v953, %v952
      %v957 = vpack.c.b16 %v943, %v954
      %v958 = vpack.c.b16 %v955, %v955
      %v960 = vshrl.u32 %v956, 16
      %v962 = vshll.u32 %v956, 16
      %v964 = vrot.slane %v962, 1
      %v965 = vor.u32 %v960, %v964
      %v967 = vshll.u32 %v957, 16
      %v969 = vrot.slane %v967, 1
      %v970 = vsel %vm273, %v965, %v969
      %v971 = vshrl.u32 %v957, 16
      %v973 = vor.u32 %v971, %v969
      %v975 = vshll.u32 %v958, 16
      %v977 = vrot.slane %v975, 1
      %v978 = vsel %vm273, %v973, %v977
      %s981 = scalar_lea.vmem %s1, 384
      %v982 = vld [vmem:[%s981] sm:$0xf]
      %v983 = vld [vmem:[%s981 + $0x4] sm:$0xf]
      %v984 = vld [vmem:[%s981 + $0x8] sm:$0xf]
      %v985 = vld [vmem:[%s981 + $0xc] sm:$0xf]
      %v986 = vld [vmem:[%s981 + $0x10] sm:$0xf]
      %v987 = vld [vmem:[%s981 + $0x14] sm:$0xf]
      %v988 = vld [vmem:[%s981 + $0x18] sm:$0xf]
      %v989 = vld [vmem:[%s981 + $0x1c] sm:$0xf]
      %v990 = vld [vmem:[%s981 + $0x20] sm:$0xf]
      %v991 = vld [vmem:[%s981 + $0x24] sm:$0xf]
      %v992 = vld [vmem:[%s981 + $0x28] sm:$0xf]
      %v993 = vld [vmem:[%s981 + $0x2c] sm:$0xf]
      %v994 = vld [vmem:[%s981 + $0x30] sm:$0xf]
      %v995 = vld [vmem:[%s981 + $0x34] sm:$0xf]
      %v996 = vld [vmem:[%s981 + $0x38] sm:$0xf]
      %v997 = vld [vmem:[%s981 + $0x3c] sm:$0xf]
      %v998 = vld [vmem:[%s981 + $0x40] sm:$0xf]
      %v999 = vld [vmem:[%s981 + $0x44] sm:$0xf]
      %v1000 = vld [vmem:[%s981 + $0x48] sm:$0xf]
      %v1001 = vld [vmem:[%s981 + $0x4c] sm:$0xf]
      %v1002 = vld [vmem:[%s981 + $0x50] sm:$0xf]
      %v1003 = vld [vmem:[%s981 + $0x54] sm:$0xf]
      %v1004 = vld [vmem:[%s981 + $0x58] sm:$0xf]
      %v1005 = vld [vmem:[%s981 + $0x5c] sm:$0xf]
      %v1006 = vld [vmem:[%s981 + $0x60] sm:$0xf]
      %v1007 = vld [vmem:[%s981 + $0x64] sm:$0xf]
      %v1008 = vld [vmem:[%s981 + $0x68] sm:$0xf]
      %v1009 = vld [vmem:[%s981 + $0x6c] sm:$0xf]
      %v1010 = vld [vmem:[%s981 + $0x70] sm:$0xf]
      %v1011 = vld [vmem:[%s981 + $0x74] sm:$0xf]
      %v1012 = vld [vmem:[%s981 + $0x78] sm:$0xf]
      %v1013 = vld [vmem:[%s981 + $0x7c] sm:$0xf]
      %v1046 = vunpack.c.l.b16 %v982
      %v1047 = vunpack.c.l.b16 %v983
      %v1048 = vunpack.c.l.b16 %v984
      %v1049 = vunpack.c.l.b16 %v985
      %v1050 = vunpack.c.l.b16 %v986
      %v1051 = vunpack.c.l.b16 %v987
      %v1052 = vunpack.c.l.b16 %v988
      %v1053 = vunpack.c.l.b16 %v989
      %v1054 = vunpack.c.l.b16 %v990
      %v1055 = vunpack.c.l.b16 %v991
      %v1056 = vunpack.c.l.b16 %v992
      %v1057 = vunpack.c.l.b16 %v993
      %v1058 = vunpack.c.l.b16 %v994
      %v1059 = vunpack.c.l.b16 %v995
      %v1060 = vunpack.c.l.b16 %v996
      %v1061 = vunpack.c.l.b16 %v997
      %v1062 = vunpack.c.l.b16 %v998
      %v1063 = vunpack.c.l.b16 %v999
      %v1064 = vunpack.c.l.b16 %v1000
      %v1065 = vunpack.c.l.b16 %v1001
      %v1066 = vunpack.c.l.b16 %v1002
      %v1067 = vunpack.c.l.b16 %v1003
      %v1068 = vunpack.c.l.b16 %v1004
      %v1069 = vunpack.c.l.b16 %v1005
      %v1070 = vunpack.c.l.b16 %v1006
      %v1071 = vunpack.c.l.b16 %v1007
      %v1072 = vunpack.c.l.b16 %v1008
      %v1073 = vunpack.c.l.b16 %v1009
      %v1074 = vunpack.c.l.b16 %v1010
      %v1075 = vunpack.c.l.b16 %v1011
      %v1076 = vunpack.c.l.b16 %v1012
      %v1077 = vunpack.c.l.b16 %v1013
      %v1078 = vpack.c.b16 %v1047, %v1046
      %v1079 = vpack.c.b16 %v1049, %v1048
      %v1080 = vpack.c.b16 %v1051, %v1050
      %v1081 = vpack.c.b16 %v1053, %v1052
      %v1082 = vpack.c.b16 %v1055, %v1054
      %v1083 = vpack.c.b16 %v1057, %v1056
      %v1084 = vpack.c.b16 %v1059, %v1058
      %v1085 = vpack.c.b16 %v1061, %v1060
      %v1086 = vpack.c.b16 %v1063, %v1062
      %v1087 = vpack.c.b16 %v1065, %v1064
      %v1088 = vpack.c.b16 %v1067, %v1066
      %v1089 = vpack.c.b16 %v1069, %v1068
      %v1090 = vpack.c.b16 %v1071, %v1070
      %v1091 = vpack.c.b16 %v1073, %v1072
      %v1092 = vpack.c.b16 %v1075, %v1074
      %v1093 = vpack.c.b16 %v1077, %v1076
      %1110 = vmatprep.subr.bf16.mxu0 0
      %1111 = vmatpush1.bf16.msra.mxu0 %v1078
      %1112 = vmatprep.subr.bf16.mxu0 0
      %1113 = vmatpush1.bf16.msra.mxu0 %v1079
      %1114 = vmatprep.subr.bf16.mxu0 0
      %1115 = vmatpush1.bf16.msra.mxu0 %v1080
      %1116 = vmatprep.subr.bf16.mxu0 0
      %1117 = vmatpush1.bf16.msra.mxu0 %v1081
      %1118 = vmatprep.subr.bf16.mxu0 0
      %1119 = vmatpush1.bf16.msra.mxu0 %v1082
      %1120 = vmatprep.subr.bf16.mxu0 0
      %1121 = vmatpush1.bf16.msra.mxu0 %v1083
      %1122 = vmatprep.subr.bf16.mxu0 0
      %1123 = vmatpush1.bf16.msra.mxu0 %v1084
      %1124 = vmatprep.subr.bf16.mxu0 0
      %1125 = vmatpush1.bf16.msra.mxu0 %v1085
      %1126 = vmatprep.subr.bf16.mxu0 0
      %1127 = vmatpush1.bf16.msra.mxu0 %v1086
      %1128 = vmatprep.subr.bf16.mxu0 0
      %1129 = vmatpush1.bf16.msra.mxu0 %v1087
      %1130 = vmatprep.subr.bf16.mxu0 0
      %1131 = vmatpush1.bf16.msra.mxu0 %v1088
      %1132 = vmatprep.subr.bf16.mxu0 0
      %1133 = vmatpush1.bf16.msra.mxu0 %v1089
      %1134 = vmatprep.subr.bf16.mxu0 0
      %1135 = vmatpush1.bf16.msra.mxu0 %v1090
      %1136 = vmatprep.subr.bf16.mxu0 0
      %1137 = vmatpush1.bf16.msra.mxu0 %v1091
      %1138 = vmatprep.subr.bf16.mxu0 0
      %1139 = vmatpush1.bf16.msra.mxu0 %v1092
      %1140 = vmatprep.subr.bf16.mxu0 0
      %1141 = vmatpush1.bf16.msra.mxu0 %v1093
      %1142 = vmatprep.mubr.bf16.mxu0 %v970
      %1143 = vmatmul.mubr.bf16.gmra.mrb[0].mxu0 %v944
      %v1144 = vpop.f32.mrb[0].mxu0
      %v1145 = vadd.f32 0.0, %v1144
      %v1146 = vpop.f32.mrb[0].mxu0
      %v1147 = vpop.f32.mrb[0].mxu0
      %v1148 = vadd.f32 0.0, %v1147
      %v1149 = vpop.f32.mrb[0].mxu0
      %1150 = vmatprep.mubr.bf16.mxu0 %v978
      %1151 = vmatmul.mubr.bf16.gmra.mrb[0].mxu0 %v945
      %v1152 = vpop.f32.mrb[0].mxu0
      %v1153 = vadd.f32 0.0, %v1152
      %v1154 = vpop.f32.mrb[0].mxu0
      %v1155 = vpop.f32.mrb[0].mxu0
      %v1156 = vadd.f32 0.0, %v1155
      %v1157 = vpop.f32.mrb[0].mxu0
      %1158 = vdwg.mxu0
      %v1159 = vadd.f32 %v933, %v1145
      %v1160 = vadd.f32 %v934, %v1148
      %v1161 = vadd.f32 %v935, %v1153
      %v1162 = vadd.f32 %v936, %v1156
      %v1163 = vld [vmem:[%s222 + $0x8] sm:$0xe]
      %v1165 = vunpack.c.l.b16 %v1163
      %v1166 = vpack.c.b16 %v953, %v1165
      %v1167 = vrot.slane %v266, 7
      %v1168 = vrot.slane %v267, 7
      %v1169 = vsel %vm337, %v1167, %v1168
      %s1170 = scalar_lea.vmem %s1, 512
      %v1171 = vld [vmem:[%s1170] sm:$0xf]
      %v1172 = vld [vmem:[%s1170 + $0x4] sm:$0xf]
      %v1173 = vld [vmem:[%s1170 + $0x8] sm:$0xf]
      %v1174 = vld [vmem:[%s1170 + $0xc] sm:$0xf]
      %v1175 = vld [vmem:[%s1170 + $0x10] sm:$0xf]
      %v1176 = vld [vmem:[%s1170 + $0x14] sm:$0xf]
      %v1177 = vld [vmem:[%s1170 + $0x18] sm:$0xf]
      %v1178 = vld [vmem:[%s1170 + $0x1c] sm:$0xf]
      %v1179 = vld [vmem:[%s1170 + $0x20] sm:$0xf]
      %v1180 = vld [vmem:[%s1170 + $0x24] sm:$0xf]
      %v1181 = vld [vmem:[%s1170 + $0x28] sm:$0xf]
      %v1182 = vld [vmem:[%s1170 + $0x2c] sm:$0xf]
      %v1183 = vld [vmem:[%s1170 + $0x30] sm:$0xf]
      %v1184 = vld [vmem:[%s1170 + $0x34] sm:$0xf]
      %v1185 = vld [vmem:[%s1170 + $0x38] sm:$0xf]
      %v1186 = vld [vmem:[%s1170 + $0x3c] sm:$0xf]
      %v1187 = vld [vmem:[%s1170 + $0x40] sm:$0xf]
      %v1188 = vld [vmem:[%s1170 + $0x44] sm:$0xf]
      %v1189 = vld [vmem:[%s1170 + $0x48] sm:$0xf]
      %v1190 = vld [vmem:[%s1170 + $0x4c] sm:$0xf]
      %v1191 = vld [vmem:[%s1170 + $0x50] sm:$0xf]
      %v1192 = vld [vmem:[%s1170 + $0x54] sm:$0xf]
      %v1193 = vld [vmem:[%s1170 + $0x58] sm:$0xf]
      %v1194 = vld [vmem:[%s1170 + $0x5c] sm:$0xf]
      %v1195 = vld [vmem:[%s1170 + $0x60] sm:$0xf]
      %v1196 = vld [vmem:[%s1170 + $0x64] sm:$0xf]
      %v1197 = vld [vmem:[%s1170 + $0x68] sm:$0xf]
      %v1198 = vld [vmem:[%s1170 + $0x6c] sm:$0xf]
      %v1199 = vld [vmem:[%s1170 + $0x70] sm:$0xf]
      %v1200 = vld [vmem:[%s1170 + $0x74] sm:$0xf]
      %v1201 = vld [vmem:[%s1170 + $0x78] sm:$0xf]
      %v1202 = vld [vmem:[%s1170 + $0x7c] sm:$0xf]
      %v1203 = vrot.slane %v1166, 1
      %v1204 = vrot.slane %v957, 1
      %v1205 = vsel %vm374, %v1203, %v1204
      %v1206 = vrot.slane %v1167, 1
      %v1207 = vrot.slane %v1169, 1
      %v1208 = vsel %vm374, %v1206, %v1207
      %v1209 = vrot.slane %v958, 1
      %v1210 = vsel %vm374, %v1204, %v1209
      %v1211 = vrot.slane %v1168, 1
      %v1212 = vsel %vm374, %v1207, %v1211
      %v1249 = vunpack.c.l.b16 %v1171
      %v1250 = vunpack.c.l.b16 %v1172
      %v1251 = vunpack.c.l.b16 %v1173
      %v1252 = vunpack.c.l.b16 %v1174
      %v1253 = vunpack.c.l.b16 %v1175
      %v1254 = vunpack.c.l.b16 %v1176
      %v1255 = vunpack.c.l.b16 %v1177
      %v1256 = vunpack.c.l.b16 %v1178
      %v1257 = vunpack.c.l.b16 %v1179
      %v1258 = vunpack.c.l.b16 %v1180
      %v1259 = vunpack.c.l.b16 %v1181
      %v1260 = vunpack.c.l.b16 %v1182
      %v1261 = vunpack.c.l.b16 %v1183
      %v1262 = vunpack.c.l.b16 %v1184
      %v1263 = vunpack.c.l.b16 %v1185
      %v1264 = vunpack.c.l.b16 %v1186
      %v1265 = vunpack.c.l.b16 %v1187
      %v1266 = vunpack.c.l.b16 %v1188
      %v1267 = vunpack.c.l.b16 %v1189
      %v1268 = vunpack.c.l.b16 %v1190
      %v1269 = vunpack.c.l.b16 %v1191
      %v1270 = vunpack.c.l.b16 %v1192
      %v1271 = vunpack.c.l.b16 %v1193
      %v1272 = vunpack.c.l.b16 %v1194
      %v1273 = vunpack.c.l.b16 %v1195
      %v1274 = vunpack.c.l.b16 %v1196
      %v1275 = vunpack.c.l.b16 %v1197
      %v1276 = vunpack.c.l.b16 %v1198
      %v1277 = vunpack.c.l.b16 %v1199
      %v1278 = vunpack.c.l.b16 %v1200
      %v1279 = vunpack.c.l.b16 %v1201
      %v1280 = vunpack.c.l.b16 %v1202
      %v1281 = vpack.c.b16 %v1250, %v1249
      %v1282 = vpack.c.b16 %v1252, %v1251
      %v1283 = vpack.c.b16 %v1254, %v1253
      %v1284 = vpack.c.b16 %v1256, %v1255
      %v1285 = vpack.c.b16 %v1258, %v1257
      %v1286 = vpack.c.b16 %v1260, %v1259
      %v1287 = vpack.c.b16 %v1262, %v1261
      %v1288 = vpack.c.b16 %v1264, %v1263
      %v1289 = vpack.c.b16 %v1266, %v1265
      %v1290 = vpack.c.b16 %v1268, %v1267
      %v1291 = vpack.c.b16 %v1270, %v1269
      %v1292 = vpack.c.b16 %v1272, %v1271
      %v1293 = vpack.c.b16 %v1274, %v1273
      %v1294 = vpack.c.b16 %v1276, %v1275
      %v1295 = vpack.c.b16 %v1278, %v1277
      %v1296 = vpack.c.b16 %v1280, %v1279
      %1313 = vmatprep.subr.bf16.mxu0 0
      %1314 = vmatpush1.bf16.msra.mxu0 %v1281
      %1315 = vmatprep.subr.bf16.mxu0 0
      %1316 = vmatpush1.bf16.msra.mxu0 %v1282
      %1317 = vmatprep.subr.bf16.mxu0 0
      %1318 = vmatpush1.bf16.msra.mxu0 %v1283
      %1319 = vmatprep.subr.bf16.mxu0 0
      %1320 = vmatpush1.bf16.msra.mxu0 %v1284
      %1321 = vmatprep.subr.bf16.mxu0 0
      %1322 = vmatpush1.bf16.msra.mxu0 %v1285
      %1323 = vmatprep.subr.bf16.mxu0 0
      %1324 = vmatpush1.bf16.msra.mxu0 %v1286
      %1325 = vmatprep.subr.bf16.mxu0 0
      %1326 = vmatpush1.bf16.msra.mxu0 %v1287
      %1327 = vmatprep.subr.bf16.mxu0 0
      %1328 = vmatpush1.bf16.msra.mxu0 %v1288
      %1329 = vmatprep.subr.bf16.mxu0 0
      %1330 = vmatpush1.bf16.msra.mxu0 %v1289
      %1331 = vmatprep.subr.bf16.mxu0 0
      %1332 = vmatpush1.bf16.msra.mxu0 %v1290
      %1333 = vmatprep.subr.bf16.mxu0 0
      %1334 = vmatpush1.bf16.msra.mxu0 %v1291
      %1335 = vmatprep.subr.bf16.mxu0 0
      %1336 = vmatpush1.bf16.msra.mxu0 %v1292
      %1337 = vmatprep.subr.bf16.mxu0 0
      %1338 = vmatpush1.bf16.msra.mxu0 %v1293
      %1339 = vmatprep.subr.bf16.mxu0 0
      %1340 = vmatpush1.bf16.msra.mxu0 %v1294
      %1341 = vmatprep.subr.bf16.mxu0 0
      %1342 = vmatpush1.bf16.msra.mxu0 %v1295
      %1343 = vmatprep.subr.bf16.mxu0 0
      %1344 = vmatpush1.bf16.msra.mxu0 %v1296
      %1345 = vmatprep.mubr.bf16.mxu0 %v1208
      %1346 = vmatmul.mubr.bf16.gmra.mrb[0].mxu0 %v1205
      %v1347 = vpop.f32.mrb[0].mxu0
      %v1348 = vadd.f32 0.0, %v1347
      %v1349 = vpop.f32.mrb[0].mxu0
      %v1350 = vpop.f32.mrb[0].mxu0
      %v1351 = vadd.f32 0.0, %v1350
      %v1352 = vpop.f32.mrb[0].mxu0
      %1353 = vmatprep.mubr.bf16.mxu0 %v1212
      %1354 = vmatmul.mubr.bf16.gmra.mrb[0].mxu0 %v1210
      %v1355 = vpop.f32.mrb[0].mxu0
      %v1356 = vadd.f32 0.0, %v1355
      %v1357 = vpop.f32.mrb[0].mxu0
      %v1358 = vpop.f32.mrb[0].mxu0
      %v1359 = vadd.f32 0.0, %v1358
      %v1360 = vpop.f32.mrb[0].mxu0
      %1361 = vdwg.mxu0
      %v1362 = vadd.f32 %v1159, %v1348
      %v1363 = vadd.f32 %v1160, %v1351
      %v1364 = vadd.f32 %v1161, %v1356
      %v1365 = vadd.f32 %v1162, %v1359
      %v1366 = vld [vmem:[%s2] sm:$0x1]
      %v1368 = vlaneseq
      %v1369 = vshrl.u32 %v1368, 7
      %v1370 = vsub.s32 0, %v1369
      %v1371 = vrot.slane %v1366, %v1370
      %v1373 = vadd.f32 %v1362, %v1371
      %v1374 = vadd.f32 %v1363, %v1371
      %v1375 = vadd.f32 %v1364, %v1371
      %v1376 = vadd.f32 %v1365, %v1371
      %v1377 = vmax.f32 %v1373, 0.0
      %v1378 = vmax.f32 %v1374, 0.0
      %v1379 = vmax.f32 %v1375, 0.0
      %v1380 = vmax.f32 %v1376, 0.0
      %s1381 = scalar_lea.vmem %s222, 28
      %v1382 = vld [vmem:[%s1381] sm:$0xf]
      %v1383 = vld [vmem:[%s1381 + $0x4] sm:$0xf]
      %v1384 = vld [vmem:[%s1381 + $0x8] sm:$0xf]
      %v1385 = vld [vmem:[%s1381 + $0xc] sm:$0xf]
      %v1386 = vld [vmem:[%s1381 + $0x10] sm:$0x1]
      %v1391 = vunpack.c.l.b16 %v1382
      %v1392 = vunpack.c.l.b16 %v1383
      %v1393 = vunpack.c.l.b16 %v1384
      %v1394 = vunpack.c.l.b16 %v1385
      %v1395 = vpack.c.b16 %v1392, %v1391
      %v1396 = vpack.c.b16 %v1394, %v1393
      %v1400 = vunpack.c.l.b16 %v1386
      %v1401 = vpack.c.b16 %v1400, %v1400
      %v1403 = vshrl.u32 %v1395, 16
      %v1405 = vshll.u32 %v1395, 16
      %v1407 = vrot.slane %v1405, 1
      %v1408 = vor.u32 %v1403, %v1407
      %v1410 = vshll.u32 %v1396, 16
      %v1412 = vrot.slane %v1410, 1
      %v1413 = vsel %vm273, %v1408, %v1412
      %v1414 = vshrl.u32 %v1396, 16
      %v1416 = vor.u32 %v1414, %v1412
      %v1418 = vshll.u32 %v1401, 16
      %v1420 = vrot.slane %v1418, 1
      %v1421 = vsel %vm273, %v1416, %v1420
      %v1424 = vld [vmem:[%s1381] sm:$0xe]
      %v1425 = vld [vmem:[%s1381 + $0x10] sm:$0xf]
      %v1427 = vunpack.c.l.b16 %v1424
      %v1428 = vpack.c.b16 %v1392, %v1427
      %v1430 = vunpack.c.l.b16 %v1425
      %v1431 = vpack.c.b16 %v1393, %v1392
      %v1432 = vpack.c.b16 %v1430, %v1394
      %v1433 = vrot.slane %v1431, 7
      %v1434 = vrot.slane %v1432, 7
      %v1435 = vsel %vm337, %v1433, %v1434
      %v1436 = vrot.slane %v1428, 1
      %v1437 = vrot.slane %v1396, 1
      %v1438 = vsel %vm374, %v1436, %v1437
      %v1439 = vrot.slane %v1433, 1
      %v1440 = vrot.slane %v1435, 1
      %v1441 = vsel %vm374, %v1439, %v1440
      %v1442 = vrot.slane %v1401, 1
      %v1443 = vsel %vm374, %v1437, %v1442
      %v1444 = vrot.slane %v1434, 1
      %v1445 = vsel %vm374, %v1440, %v1444
      %1450 = vmatprep.subr.bf16.mxu0 0
      %1451 = vmatpush1.bf16.msra.mxu0 %v453
      %1452 = vmatprep.subr.bf16.mxu0 0
      %1453 = vmatpush1.bf16.msra.mxu0 %v454
      %1454 = vmatprep.subr.bf16.mxu0 0
      %1455 = vmatpush1.bf16.msra.mxu0 %v455
      %1456 = vmatprep.subr.bf16.mxu0 0
      %1457 = vmatpush1.bf16.msra.mxu0 %v456
      %1458 = vmatprep.subr.bf16.mxu0 0
      %1459 = vmatpush1.bf16.msra.mxu0 %v457
      %1460 = vmatprep.subr.bf16.mxu0 0
      %1461 = vmatpush1.bf16.msra.mxu0 %v458
      %1462 = vmatprep.subr.bf16.mxu0 0
      %1463 = vmatpush1.bf16.msra.mxu0 %v459
      %1464 = vmatprep.subr.bf16.mxu0 0
      %1465 = vmatpush1.bf16.msra.mxu0 %v460
      %1466 = vmatprep.subr.bf16.mxu0 0
      %1467 = vmatpush1.bf16.msra.mxu0 %v461
      %1468 = vmatprep.subr.bf16.mxu0 0
      %1469 = vmatpush1.bf16.msra.mxu0 %v462
      %1470 = vmatprep.subr.bf16.mxu0 0
      %1471 = vmatpush1.bf16.msra.mxu0 %v463
      %1472 = vmatprep.subr.bf16.mxu0 0
      %1473 = vmatpush1.bf16.msra.mxu0 %v464
      %1474 = vmatprep.subr.bf16.mxu0 0
      %1475 = vmatpush1.bf16.msra.mxu0 %v465
      %1476 = vmatprep.subr.bf16.mxu0 0
      %1477 = vmatpush1.bf16.msra.mxu0 %v466
      %1478 = vmatprep.subr.bf16.mxu0 0
      %1479 = vmatpush1.bf16.msra.mxu0 %v467
      %1480 = vmatprep.subr.bf16.mxu0 0
      %1481 = vmatpush1.bf16.msra.mxu0 %v468
      %1482 = vmatprep.mubr.bf16.mxu0 %v1441
      %1483 = vmatmul.mubr.bf16.gmra.mrb[0].mxu0 %v1438
      %v1484 = vpop.f32.mrb[0].mxu0
      %v1485 = vadd.f32 0.0, %v1484
      %v1486 = vpop.f32.mrb[0].mxu0
      %v1487 = vpop.f32.mrb[0].mxu0
      %v1488 = vadd.f32 0.0, %v1487
      %v1489 = vpop.f32.mrb[0].mxu0
      %1490 = vmatprep.mubr.bf16.mxu0 %v1445
      %1491 = vmatmul.mubr.bf16.gmra.mrb[0].mxu0 %v1443
      %v1492 = vpop.f32.mrb[0].mxu0
      %v1493 = vadd.f32 0.0, %v1492
      %v1494 = vpop.f32.mrb[0].mxu0
      %v1495 = vpop.f32.mrb[0].mxu0
      %v1496 = vadd.f32 0.0, %v1495
      %v1497 = vpop.f32.mrb[0].mxu0
      %1498 = vdwg.mxu0
      %1499 = vmatprep.subr.bf16.mxu0 0
      %1500 = vmatpush1.bf16.msra.mxu0 %v598
      %1501 = vmatprep.subr.bf16.mxu0 0
      %1502 = vmatpush1.bf16.msra.mxu0 %v599
      %1503 = vmatprep.subr.bf16.mxu0 0
      %1504 = vmatpush1.bf16.msra.mxu0 %v600
      %1505 = vmatprep.subr.bf16.mxu0 0
      %1506 = vmatpush1.bf16.msra.mxu0 %v601
      %1507 = vmatprep.subr.bf16.mxu0 0
      %1508 = vmatpush1.bf16.msra.mxu0 %v602
      %1509 = vmatprep.subr.bf16.mxu0 0
      %1510 = vmatpush1.bf16.msra.mxu0 %v603
      %1511 = vmatprep.subr.bf16.mxu0 0
      %1512 = vmatpush1.bf16.msra.mxu0 %v604
      %1513 = vmatprep.subr.bf16.mxu0 0
      %1514 = vmatpush1.bf16.msra.mxu0 %v605
      %1515 = vmatprep.subr.bf16.mxu0 0
      %1516 = vmatpush1.bf16.msra.mxu0 %v606
      %1517 = vmatprep.subr.bf16.mxu0 0
      %1518 = vmatpush1.bf16.msra.mxu0 %v607
      %1519 = vmatprep.subr.bf16.mxu0 0
      %1520 = vmatpush1.bf16.msra.mxu0 %v608
      %1521 = vmatprep.subr.bf16.mxu0 0
      %1522 = vmatpush1.bf16.msra.mxu0 %v609
      %1523 = vmatprep.subr.bf16.mxu0 0
      %1524 = vmatpush1.bf16.msra.mxu0 %v610
      %1525 = vmatprep.subr.bf16.mxu0 0
      %1526 = vmatpush1.bf16.msra.mxu0 %v611
      %1527 = vmatprep.subr.bf16.mxu0 0
      %1528 = vmatpush1.bf16.msra.mxu0 %v612
      %1529 = vmatprep.subr.bf16.mxu0 0
      %1530 = vmatpush1.bf16.msra.mxu0 %v613
      %1531 = vmatprep.mubr.bf16.mxu0 %v1413
      %1532 = vmatmul.mubr.bf16.gmra.mrb[0].mxu0 %v1395
      %v1533 = vpop.f32.mrb[0].mxu0
      %v1534 = vadd.f32 %v1485, %v1533
      %v1535 = vpop.f32.mrb[0].mxu0
      %v1536 = vpop.f32.mrb[0].mxu0
      %v1537 = vadd.f32 %v1488, %v1536
      %v1538 = vpop.f32.mrb[0].mxu0
      %1539 = vmatprep.mubr.bf16.mxu0 %v1421
      %1540 = vmatmul.mubr.bf16.gmra.mrb[0].mxu0 %v1396
      %v1541 = vpop.f32.mrb[0].mxu0
      %v1542 = vadd.f32 %v1493, %v1541
      %v1543 = vpop.f32.mrb[0].mxu0
      %v1544 = vpop.f32.mrb[0].mxu0
      %v1545 = vadd.f32 %v1496, %v1544
      %v1546 = vpop.f32.mrb[0].mxu0
      %1547 = vdwg.mxu0
      %v1548 = vld [vmem:[%s1381 + $0x4] sm:$0xf]
      %v1549 = vld [vmem:[%s1381 + $0x8] sm:$0xf]
      %v1550 = vld [vmem:[%s1381 + $0xc] sm:$0xf]
      %v1551 = vld [vmem:[%s1381 + $0x10] sm:$0xf]
      %v1552 = vld [vmem:[%s1381 + $0x14] sm:$0x1]
      %v1553 = vld [vmem:[%s1381 + $0x4] sm:$0xe]
      %v1559 = vunpack.c.l.b16 %v1548
      %v1560 = vunpack.c.l.b16 %v1549
      %v1561 = vunpack.c.l.b16 %v1550
      %v1562 = vunpack.c.l.b16 %v1551
      %v1563 = vunpack.c.l.b16 %v1552
      %v1564 = vpack.c.b16 %v1560, %v1559
      %v1565 = vpack.c.b16 %v1562, %v1561
      %v1566 = vpack.c.b16 %v1563, %v1563
      %v1568 = vunpack.c.l.b16 %v1553
      %v1569 = vpack.c.b16 %v1560, %v1568
      %v1571 = vshrl.u32 %v1569, 16
      %v1573 = vshll.u32 %v1569, 16
      %v1575 = vrot.slane %v1573, 1
      %v1576 = vor.u32 %v1571, %v1575
      %v1578 = vshll.u32 %v1565, 16
      %v1580 = vrot.slane %v1578, 1
      %v1581 = vsel %vm273, %v1576, %v1580
      %v1582 = vshrl.u32 %v1565, 16
      %v1584 = vor.u32 %v1582, %v1580
      %v1586 = vshll.u32 %v1566, 16
      %v1588 = vrot.slane %v1586, 1
      %v1589 = vsel %vm273, %v1584, %v1588
      %v1590 = vshrl.u32 %v1566, 16
      %v1593 = vshrl.u32 %v1564, 16
      %v1595 = vshll.u32 %v1564, 16
      %v1597 = vrot.slane %v1595, 1
      %v1598 = vor.u32 %v1593, %v1597
      %v1599 = vsel %vm273, %v1598, %v1580
      %v1601 = vshrl.u32 %v1581, 16
      %v1603 = vshll.u32 %v1581, 16
      %v1605 = vrot.slane %v1603, 1
      %v1606 = vor.u32 %v1601, %v1605
      %v1608 = vshll.u32 %v1589, 16
      %v1610 = vrot.slane %v1608, 1
      %v1611 = vsel %vm273, %v1606, %v1610
      %v1612 = vshrl.u32 %v1589, 16
      %v1614 = vor.u32 %v1612, %v1610
      %v1616 = vshll.u32 %v1590, 16
      %v1618 = vrot.slane %v1616, 1
      %v1619 = vsel %vm273, %v1614, %v1618
      %1624 = vmatprep.subr.bf16.mxu0 0
      %1625 = vmatpush1.bf16.msra.mxu0 %v852
      %1626 = vmatprep.subr.bf16.mxu0 0
      %1627 = vmatpush1.bf16.msra.mxu0 %v853
      %1628 = vmatprep.subr.bf16.mxu0 0
      %1629 = vmatpush1.bf16.msra.mxu0 %v854
      %1630 = vmatprep.subr.bf16.mxu0 0
      %1631 = vmatpush1.bf16.msra.mxu0 %v855
      %1632 = vmatprep.subr.bf16.mxu0 0
      %1633 = vmatpush1.bf16.msra.mxu0 %v856
      %1634 = vmatprep.subr.bf16.mxu0 0
      %1635 = vmatpush1.bf16.msra.mxu0 %v857
      %1636 = vmatprep.subr.bf16.mxu0 0
      %1637 = vmatpush1.bf16.msra.mxu0 %v858
      %1638 = vmatprep.subr.bf16.mxu0 0
      %1639 = vmatpush1.bf16.msra.mxu0 %v859
      %1640 = vmatprep.subr.bf16.mxu0 0
      %1641 = vmatpush1.bf16.msra.mxu0 %v860
      %1642 = vmatprep.subr.bf16.mxu0 0
      %1643 = vmatpush1.bf16.msra.mxu0 %v861
      %1644 = vmatprep.subr.bf16.mxu0 0
      %1645 = vmatpush1.bf16.msra.mxu0 %v862
      %1646 = vmatprep.subr.bf16.mxu0 0
      %1647 = vmatpush1.bf16.msra.mxu0 %v863
      %1648 = vmatprep.subr.bf16.mxu0 0
      %1649 = vmatpush1.bf16.msra.mxu0 %v864
      %1650 = vmatprep.subr.bf16.mxu0 0
      %1651 = vmatpush1.bf16.msra.mxu0 %v865
      %1652 = vmatprep.subr.bf16.mxu0 0
      %1653 = vmatpush1.bf16.msra.mxu0 %v866
      %1654 = vmatprep.subr.bf16.mxu0 0
      %1655 = vmatpush1.bf16.msra.mxu0 %v867
      %1656 = vmatprep.mubr.bf16.mxu0 %v1611
      %1657 = vmatmul.mubr.bf16.gmra.mrb[0].mxu0 %v1599
      %v1658 = vpop.f32.mrb[0].mxu0
      %v1659 = vadd.f32 0.0, %v1658
      %v1660 = vpop.f32.mrb[0].mxu0
      %v1661 = vpop.f32.mrb[0].mxu0
      %v1662 = vadd.f32 0.0, %v1661
      %v1663 = vpop.f32.mrb[0].mxu0
      %1664 = vmatprep.mubr.bf16.mxu0 %v1619
      %1665 = vmatmul.mubr.bf16.gmra.mrb[0].mxu0 %v1589
      %v1666 = vpop.f32.mrb[0].mxu0
      %v1667 = vadd.f32 0.0, %v1666
      %v1668 = vpop.f32.mrb[0].mxu0
      %v1669 = vpop.f32.mrb[0].mxu0
      %v1670 = vadd.f32 0.0, %v1669
      %v1671 = vpop.f32.mrb[0].mxu0
      %1672 = vdwg.mxu0
      %v1673 = vadd.f32 %v1534, %v1659
      %v1674 = vadd.f32 %v1537, %v1662
      %v1675 = vadd.f32 %v1542, %v1667
      %v1676 = vadd.f32 %v1545, %v1670
      %v1677 = vld [vmem:[%s1381 + $0x14] sm:$0xf]
      %v1678 = vld [vmem:[%s1381 + $0x8] sm:$0xf]
      %v1679 = vld [vmem:[%s1381 + $0xc] sm:$0xf]
      %v1680 = vld [vmem:[%s1381 + $0x10] sm:$0xf]
      %v1681 = vld [vmem:[%s1381 + $0x18] sm:$0x1]
      %v1683 = vunpack.c.l.b16 %v1677
      %v1684 = vpack.c.b16 %v1561, %v1560
      %v1685 = vpack.c.b16 %v1683, %v1562
      %v1692 = vunpack.c.l.b16 %v1678
      %v1693 = vunpack.c.l.b16 %v1679
      %v1694 = vunpack.c.l.b16 %v1680
      %v1695 = vunpack.c.l.b16 %v1681
      %v1696 = vpack.c.b16 %v1693, %v1692
      %v1697 = vpack.c.b16 %v1683, %v1694
      %v1698 = vpack.c.b16 %v1695, %v1695
      %v1700 = vshrl.u32 %v1696, 16
      %v1702 = vshll.u32 %v1696, 16
      %v1704 = vrot.slane %v1702, 1
      %v1705 = vor.u32 %v1700, %v1704
      %v1707 = vshll.u32 %v1697, 16
      %v1709 = vrot.slane %v1707, 1
      %v1710 = vsel %vm273, %v1705, %v1709
      %v1711 = vshrl.u32 %v1697, 16
      %v1713 = vor.u32 %v1711, %v1709
      %v1715 = vshll.u32 %v1698, 16
      %v1717 = vrot.slane %v1715, 1
      %v1718 = vsel %vm273, %v1713, %v1717
      %1721 = vmatprep.subr.bf16.mxu0 0
      %1722 = vmatpush1.bf16.msra.mxu0 %v1078
      %1723 = vmatprep.subr.bf16.mxu0 0
      %1724 = vmatpush1.bf16.msra.mxu0 %v1079
      %1725 = vmatprep.subr.bf16.mxu0 0
      %1726 = vmatpush1.bf16.msra.mxu0 %v1080
      %1727 = vmatprep.subr.bf16.mxu0 0
      %1728 = vmatpush1.bf16.msra.mxu0 %v1081
      %1729 = vmatprep.subr.bf16.mxu0 0
      %1730 = vmatpush1.bf16.msra.mxu0 %v1082
      %1731 = vmatprep.subr.bf16.mxu0 0
      %1732 = vmatpush1.bf16.msra.mxu0 %v1083
      %1733 = vmatprep.subr.bf16.mxu0 0
      %1734 = vmatpush1.bf16.msra.mxu0 %v1084
      %1735 = vmatprep.subr.bf16.mxu0 0
      %1736 = vmatpush1.bf16.msra.mxu0 %v1085
      %1737 = vmatprep.subr.bf16.mxu0 0
      %1738 = vmatpush1.bf16.msra.mxu0 %v1086
      %1739 = vmatprep.subr.bf16.mxu0 0
      %1740 = vmatpush1.bf16.msra.mxu0 %v1087
      %1741 = vmatprep.subr.bf16.mxu0 0
      %1742 = vmatpush1.bf16.msra.mxu0 %v1088
      %1743 = vmatprep.subr.bf16.mxu0 0
      %1744 = vmatpush1.bf16.msra.mxu0 %v1089
      %1745 = vmatprep.subr.bf16.mxu0 0
      %1746 = vmatpush1.bf16.msra.mxu0 %v1090
      %1747 = vmatprep.subr.bf16.mxu0 0
      %1748 = vmatpush1.bf16.msra.mxu0 %v1091
      %1749 = vmatprep.subr.bf16.mxu0 0
      %1750 = vmatpush1.bf16.msra.mxu0 %v1092
      %1751 = vmatprep.subr.bf16.mxu0 0
      %1752 = vmatpush1.bf16.msra.mxu0 %v1093
      %1753 = vmatprep.mubr.bf16.mxu0 %v1710
      %1754 = vmatmul.mubr.bf16.gmra.mrb[0].mxu0 %v1684
      %v1755 = vpop.f32.mrb[0].mxu0
      %v1756 = vadd.f32 0.0, %v1755
      %v1757 = vpop.f32.mrb[0].mxu0
      %v1758 = vpop.f32.mrb[0].mxu0
      %v1759 = vadd.f32 0.0, %v1758
      %v1760 = vpop.f32.mrb[0].mxu0
      %1761 = vmatprep.mubr.bf16.mxu0 %v1718
      %1762 = vmatmul.mubr.bf16.gmra.mrb[0].mxu0 %v1685
      %v1763 = vpop.f32.mrb[0].mxu0
      %v1764 = vadd.f32 0.0, %v1763
      %v1765 = vpop.f32.mrb[0].mxu0
      %v1766 = vpop.f32.mrb[0].mxu0
      %v1767 = vadd.f32 0.0, %v1766
      %v1768 = vpop.f32.mrb[0].mxu0
      %1769 = vdwg.mxu0
      %v1770 = vadd.f32 %v1673, %v1756
      %v1771 = vadd.f32 %v1674, %v1759
      %v1772 = vadd.f32 %v1675, %v1764
      %v1773 = vadd.f32 %v1676, %v1767
      %v1774 = vld [vmem:[%s1381 + $0x8] sm:$0xe]
      %v1776 = vunpack.c.l.b16 %v1774
      %v1777 = vpack.c.b16 %v1693, %v1776
      %v1778 = vrot.slane %v1395, 7
      %v1779 = vrot.slane %v1396, 7
      %v1780 = vsel %vm337, %v1778, %v1779
      %v1781 = vrot.slane %v1777, 1
      %v1782 = vrot.slane %v1697, 1
      %v1783 = vsel %vm374, %v1781, %v1782
      %v1784 = vrot.slane %v1778, 1
      %v1785 = vrot.slane %v1780, 1
      %v1786 = vsel %vm374, %v1784, %v1785
      %v1787 = vrot.slane %v1698, 1
      %v1788 = vsel %vm374, %v1782, %v1787
      %v1789 = vrot.slane %v1779, 1
      %v1790 = vsel %vm374, %v1785, %v1789
      %1795 = vmatprep.subr.bf16.mxu0 0
      %1796 = vmatpush1.bf16.msra.mxu0 %v1281
      %1797 = vmatprep.subr.bf16.mxu0 0
      %1798 = vmatpush1.bf16.msra.mxu0 %v1282
      %1799 = vmatprep.subr.bf16.mxu0 0
      %1800 = vmatpush1.bf16.msra.mxu0 %v1283
      %1801 = vmatprep.subr.bf16.mxu0 0
      %1802 = vmatpush1.bf16.msra.mxu0 %v1284
      %1803 = vmatprep.subr.bf16.mxu0 0
      %1804 = vmatpush1.bf16.msra.mxu0 %v1285
      %1805 = vmatprep.subr.bf16.mxu0 0
      %1806 = vmatpush1.bf16.msra.mxu0 %v1286
      %1807 = vmatprep.subr.bf16.mxu0 0
      %1808 = vmatpush1.bf16.msra.mxu0 %v1287
      %1809 = vmatprep.subr.bf16.mxu0 0
      %1810 = vmatpush1.bf16.msra.mxu0 %v1288
      %1811 = vmatprep.subr.bf16.mxu0 0
      %1812 = vmatpush1.bf16.msra.mxu0 %v1289
      %1813 = vmatprep.subr.bf16.mxu0 0
      %1814 = vmatpush1.bf16.msra.mxu0 %v1290
      %1815 = vmatprep.subr.bf16.mxu0 0
      %1816 = vmatpush1.bf16.msra.mxu0 %v1291
      %1817 = vmatprep.subr.bf16.mxu0 0
      %1818 = vmatpush1.bf16.msra.mxu0 %v1292
      %1819 = vmatprep.subr.bf16.mxu0 0
      %1820 = vmatpush1.bf16.msra.mxu0 %v1293
      %1821 = vmatprep.subr.bf16.mxu0 0
      %1822 = vmatpush1.bf16.msra.mxu0 %v1294
      %1823 = vmatprep.subr.bf16.mxu0 0
      %1824 = vmatpush1.bf16.msra.mxu0 %v1295
      %1825 = vmatprep.subr.bf16.mxu0 0
      %1826 = vmatpush1.bf16.msra.mxu0 %v1296
      %1827 = vmatprep.mubr.bf16.mxu0 %v1786
      %1828 = vmatmul.mubr.bf16.gmra.mrb[0].mxu0 %v1783
      %v1829 = vpop.f32.mrb[0].mxu0
      %v1830 = vadd.f32 0.0, %v1829
      %v1831 = vpop.f32.mrb[0].mxu0
      %v1832 = vpop.f32.mrb[0].mxu0
      %v1833 = vadd.f32 0.0, %v1832
      %v1834 = vpop.f32.mrb[0].mxu0
      %1835 = vmatprep.mubr.bf16.mxu0 %v1790
      %1836 = vmatmul.mubr.bf16.gmra.mrb[0].mxu0 %v1788
      %v1837 = vpop.f32.mrb[0].mxu0
      %v1838 = vadd.f32 0.0, %v1837
      %v1839 = vpop.f32.mrb[0].mxu0
      %v1840 = vpop.f32.mrb[0].mxu0
      %v1841 = vadd.f32 0.0, %v1840
      %v1842 = vpop.f32.mrb[0].mxu0
      %1843 = vdwg.mxu0
      %v1844 = vadd.f32 %v1770, %v1830
      %v1845 = vadd.f32 %v1771, %v1833
      %v1846 = vadd.f32 %v1772, %v1838
      %v1847 = vadd.f32 %v1773, %v1841
      %v1848 = vadd.f32 %v1844, %v1371
      %v1849 = vadd.f32 %v1845, %v1371
      %v1850 = vadd.f32 %v1846, %v1371
      %v1851 = vadd.f32 %v1847, %v1371
      %v1852 = vmax.f32 %v1848, 0.0
      %v1853 = vmax.f32 %v1849, 0.0
      %v1854 = vmax.f32 %v1850, 0.0
      %v1855 = vmax.f32 %v1851, 0.0
      %v1856 = vmul.f32 %v1377, %v1377
      %v1857 = vmul.f32 %v1378, %v1378
      %v1858 = vmul.f32 %v1379, %v1379
      %v1859 = vmul.f32 %v1380, %v1380
      %1860 = vadd.xlane.f32.xlu0 %v1856
      %v1861 = vpop.xlane.xlu0 %1860
      %1862 = vadd.xlane.f32.xlu0 %v1857
      %v1863 = vpop.xlane.xlu0 %1862
      %1864 = vadd.xlane.f32.xlu0 %v1858
      %v1865 = vpop.xlane.xlu0 %1864
      %1866 = vadd.xlane.f32.xlu0 %v1859
      %v1867 = vpop.xlane.xlu0 %1866
      %v1868 = vadd.f32 %v1861, 1e-10
      %v1869 = vadd.f32 %v1863, 1e-10
      %v1870 = vadd.f32 %v1865, 1e-10
      %v1871 = vadd.f32 %v1867, 1e-10
      %v1872 = vrsqrt.pop %v1868
      %v1873 = vrsqrt.pop %v1869
      %v1874 = vrsqrt.pop %v1870
      %v1875 = vrsqrt.pop %v1871
      %v1876 = vmul.f32 %v1377, %v1872
      %v1877 = vmul.f32 %v1378, %v1873
      %v1878 = vmul.f32 %v1379, %v1874
      %v1879 = vmul.f32 %v1380, %v1875
      %v1880 = vmul.f32 %v1852, %v1852
      %v1881 = vmul.f32 %v1853, %v1853
      %v1882 = vmul.f32 %v1854, %v1854
      %v1883 = vmul.f32 %v1855, %v1855
      %1884 = vadd.xlane.f32.xlu0 %v1880
      %v1885 = vpop.xlane.xlu0 %1884
      %1886 = vadd.xlane.f32.xlu0 %v1881
      %v1887 = vpop.xlane.xlu0 %1886
      %1888 = vadd.xlane.f32.xlu0 %v1882
      %v1889 = vpop.xlane.xlu0 %1888
      %1890 = vadd.xlane.f32.xlu0 %v1883
      %v1891 = vpop.xlane.xlu0 %1890
      %v1892 = vadd.f32 %v1885, 1e-10
      %v1893 = vadd.f32 %v1887, 1e-10
      %v1894 = vadd.f32 %v1889, 1e-10
      %v1895 = vadd.f32 %v1891, 1e-10
      %v1896 = vrsqrt.pop %v1892
      %v1897 = vrsqrt.pop %v1893
      %v1898 = vrsqrt.pop %v1894
      %v1899 = vrsqrt.pop %v1895
      %v1900 = vmul.f32 %v1852, %v1896
      %v1901 = vmul.f32 %v1853, %v1897
      %v1902 = vmul.f32 %v1854, %v1898
      %v1903 = vmul.f32 %v1855, %v1899
      %v1904 = vsub.f32 %v1876, %v1900
      %v1905 = vsub.f32 %v1877, %v1901
      %v1906 = vsub.f32 %v1878, %v1902
      %v1907 = vsub.f32 %v1879, %v1903
      %v1908 = vmul.f32 %v1904, %v1904
      %v1909 = vmul.f32 %v1905, %v1905
      %v1910 = vmul.f32 %v1906, %v1906
      %v1911 = vmul.f32 %v1907, %v1907
      %v1912 = vpack.c.bf16 %v1909, %v1908
      %v1913 = vpack.c.bf16 %v1911, %v1910
      %1914 = vmatprep.subr.bf16.mxu0 0
      %1915 = vmatpush1.bf16.msra.mxu0 %v245
      %1916 = vmatprep.subr.bf16.mxu0 0
      %1917 = vmatpush1.bf16.msra.mxu0 %v246
      %1918 = vmatprep.subr.bf16.mxu0 0
      %1919 = vmatpush1.bf16.msra.mxu0 %v247
      %1920 = vmatprep.subr.bf16.mxu0 0
      %1921 = vmatpush1.bf16.msra.mxu0 %v248
      %1922 = vmatprep.subr.bf16.mxu0 0
      %1923 = vmatpush1.bf16.msra.mxu0 %v249
      %1924 = vmatprep.subr.bf16.mxu0 0
      %1925 = vmatpush1.bf16.msra.mxu0 %v250
      %1926 = vmatprep.subr.bf16.mxu0 0
      %1927 = vmatpush1.bf16.msra.mxu0 %v251
      %1928 = vmatprep.subr.bf16.mxu0 0
      %1929 = vmatpush1.bf16.msra.mxu0 %v252
      %1930 = vmatprep.subr.bf16.mxu0 0
      %1931 = vmatpush1.bf16.msra.mxu0 0
      %1932 = vmatprep.subr.bf16.mxu0 0
      %1933 = vmatpush1.bf16.msra.mxu0 0
      %1934 = vmatprep.subr.bf16.mxu0 0
      %1935 = vmatpush1.bf16.msra.mxu0 0
      %1936 = vmatprep.subr.bf16.mxu0 0
      %1937 = vmatpush1.bf16.msra.mxu0 0
      %1938 = vmatprep.subr.bf16.mxu0 0
      %1939 = vmatpush1.bf16.msra.mxu0 0
      %1940 = vmatprep.subr.bf16.mxu0 0
      %1941 = vmatpush1.bf16.msra.mxu0 0
      %1942 = vmatprep.subr.bf16.mxu0 0
      %1943 = vmatpush1.bf16.msra.mxu0 0
      %1944 = vmatprep.subr.bf16.mxu0 0
      %1945 = vmatpush1.bf16.msra.mxu0 0
      %1946 = vmatprep.mubr.bf16.mxu0 0
      %1947 = vmatmul.mubr.bf16.gmra.mrb[0].mxu0 %v1912
      %v1948 = vpop.f32.mrb[0].mxu0
      %v1949 = vadd.f32 0.0, %v1948
      %v1950 = vpop.f32.mrb[0].mxu0
      %v1951 = vpop.f32.mrb[0].mxu0
      %v1952 = vadd.f32 0.0, %v1951
      %v1953 = vpop.f32.mrb[0].mxu0
      %1954 = vmatprep.mubr.bf16.mxu0 0
      %1955 = vmatmul.mubr.bf16.gmra.mrb[0].mxu0 %v1913
      %v1956 = vpop.f32.mrb[0].mxu0
      %v1957 = vadd.f32 0.0, %v1956
      %v1958 = vpop.f32.mrb[0].mxu0
      %v1959 = vpop.f32.mrb[0].mxu0
      %v1960 = vadd.f32 0.0, %v1959
      %v1961 = vpop.f32.mrb[0].mxu0
      %1962 = vdwg.mxu0
      %v1963 = vld [vmem:[%s4] sm:$0xff]
      %v1964 = vld [vmem:[%s4 + $0x8] sm:$0xff]
      %v1965 = vld [vmem:[%s4 + $0x10] sm:$0xff]
      %v1966 = vld [vmem:[%s4 + $0x18] sm:$0xff]
      %v1967 = vmul.f32 %v1949, %v1963
      %v1968 = vmul.f32 %v1952, %v1964
      %v1969 = vmul.f32 %v1957, %v1965
      %v1970 = vmul.f32 %v1960, %v1966
      %vm1971 = vcmask 7168
      %v1972 = vsel %vm1971, %v1967, 0.0
      %v1973 = vsel %vm1971, %v1968, 0.0
      %v1974 = vadd.f32 %v1972, %v1973
      %v1975 = vsel %vm1971, %v1969, 0.0
      %v1976 = vadd.f32 %v1974, %v1975
      %v1977 = vsel %vm1971, %v1970, 0.0
      %v1978 = vadd.f32 %v1976, %v1977
      %1979 = vadd.xlane.f32.xlu0 %v1978
      %v1980 = vpop.xlane.xlu0 %1979
      %v1981 = vrot.slane %v1980, 4
      %v1982 = vadd.f32 %v1980, %v1981
      %v1983 = vrot.slane %v1982, 2
      %v1984 = vadd.f32 %v1982, %v1983
      %v1985 = vrot.slane %v1984, 1
      %v1986 = vadd.f32 %v1984, %v1985
      %s1987 = vtos %v1986
      %s1988 = sadd.f32 %s1987, 0.0
      %s1989 = smul.f32 %s1988, 0.0625
      %v1990 = vstv %s1989
      %1991 = vst [vmem:[%s227] sm:$0xff] %v1990
      %p1992 = scmp.lt.s32.totalorder %s16, 1
      %s1993 = scalar_select %p1992, %s16, 1
      %s1994 = smul.addr %s1993, 8
      %s1995 = scalar_lea.vmem %s5, %s1994
      // Predicated region
      $region41: #{perceptual_loss_forward.5} parent=39 // pred_check
        %p1996 = pneg %p144
      $region42: #{perceptual_loss_forward.5} parent=39 // pred_check_branch
        %1998 = sbr.rel (%p1996) target = $region44
      $region43: #{perceptual_loss_forward.5} parent=39 // pred_region
        _
      $region44: #{perceptual_loss_forward.5} parent=39 // pred_fallthru
        _
    $region40: #{perceptual_loss_forward.5} parent=5 // pred_fallthru
      _
    %p1999 = scmp.le.s32.totalorder 2, %s11
    // Predicated region
    $region45: #{perceptual_loss_forward.5} parent=5 // pred_check
      %p2000 = pneg %p1999
    $region46: #{perceptual_loss_forward.5} parent=5 // pred_check_branch
      %2002 = sbr.rel (%p2000) target = $region48
    $region47: #{perceptual_loss_forward.5} parent=5 // pred_region
      %s2003 = ssub.s32 %s11, 2
      // Predicated region
      $region49: #{perceptual_loss_forward.5} parent=47 // pred_check
        %p2004 = pneg %p150
      $region50: #{perceptual_loss_forward.5} parent=47 // pred_check_branch
        %2006 = sbr.rel (%p2004) target = $region52
      $region51: #{perceptual_loss_forward.5} parent=47 // pred_region
        %p2007 = scmp.lt.s32.totalorder %s17, 1
        %s2008 = scalar_select %p2007, %s17, 1
        %s2009 = smul.addr %s2008, 8
        %s2010 = scalar_lea.vmem %s5, %s2009
      $region52: #{perceptual_loss_forward.5} parent=47 // pred_fallthru
        _
    $region48: #{perceptual_loss_forward.5} parent=5 // pred_fallthru
      _
  $region6: #{perceptual_loss_forward.5} parent=0 // loop_footer
    %s15 = sadd.s32 1, %s11
  $region7: #{perceptual_loss_forward.5} parent=0 // loop_footer_branch
    %10 = sbr.rel target = $region3
  $region8: #{perceptual_loss_forward.5} parent=0 // loop_exit
    _

// kernel: perceptual_loss_forward.4
$region0: #{perceptual_loss_forward.4}
  #allocation0 [shape = 'u32[]', space=smem, size = 0x4, offset = 0x4, fixed_abs, tag = 'smem constant byte address 0x4 - core index']
  #allocation1 [shape = 'u32[144,128]{1,0:T(1,128)}', space=vmem, size = 0x12000, scoped, tag = 'internal scratch']
  #allocation2 [shape = 'f32[128,128]{1,0:T(8,128)}', space=vmem, size = 0x10000, scoped, tag = 'scratch operand']
  #allocation3 [shape = 'f32[128,128]{1,0:T(8,128)}', space=vmem, size = 0x10000, scoped, tag = 'scratch operand']
  %s0 = inlined_call_operand.vmem [shape: bf16[4,168,128], index: 0, kind: input, shape index: {}]
  %s1 = inlined_call_operand.vmem [shape: bf16[5,256,128], index: 1, kind: input, shape index: {}]
  %s2 = inlined_call_operand.vmem [shape: f32[1,128], index: 2, kind: input, shape index: {}]
  %s3 = inlined_call_operand.vmem [shape: f32[128,1], index: 3, kind: input, shape index: {}]
  %s4 = inlined_call_operand.vmem [shape: f32[128,1], index: 4, kind: input, shape index: {}]
  %s5 = inlined_call_operand.vmem [shape: f32[2,8,128], index: 5, kind: output, shape index: {0}]
  %s6 = inlined_call_operand.vmem [shape: bf16[4,4,8,128], index: 6, kind: output, shape index: {1}]
  %7 = xla_tuple %s5, %s6
  %s8 = sld [smem:[#allocation0]]
  $region61: #{perceptual_loss_forward.4} parent=0
    _
  %s10 = ssub.s32 1, %s8
  %s11 = scalar_select 0, %s10, %s8
  loop: start=0, step=1, limit=4
  $region2: #{perceptual_loss_forward.4} parent=0 // loop_pre_header
    _
  $region3: #{perceptual_loss_forward.4} parent=0 // loop_header
    %s13 = sphi 0, %s17
    %p14 = scmp.ge.s32.totalorder %s13, 4
    %s23 = sphi 0, %s25
    %s26 = sphi 0, %s23
    %s27 = sphi 0, %s26
    %s43 = sphi 0, %s27
    %s47 = sphi 0, %s47
    %s49 = sphi 0, %s47
    %s50 = sphi 0, %s49
    %s64 = sphi 0, %s50
    %s68 = sphi 0, %s68
    %s70 = sphi 0, %s68
    %s71 = sphi 0, %s70
    %s85 = sphi 0, %s71
    %s89 = sphi 0, %s89
    %s91 = sphi 0, %s89
    %s92 = sphi 0, %s91
    %s106 = sphi 0, %s92
    %s110 = sphi 0, %s110
    %s112 = sphi 0, %s110
    %s113 = sphi 0, %s112
    %s127 = sphi 0, %s113
    %s133 = sphi 0, %s135
    %s136 = sphi 0, %s133
    %s137 = sphi 0, %s136
    %s153 = sphi 0, %s137
    %s159 = sphi 0, %s161
    %s162 = sphi 0, %s159
    %s163 = sphi 0, %s162
    %s179 = sphi 0, %s163
  $region4: #{perceptual_loss_forward.4} parent=0 // loop_header_branch
    %16 = sbr.rel (%p14) target = $region8
  $region5: #{perceptual_loss_forward.4} parent=0 // loop_body
    %s18 = ssub.s32 %s13, 1
    %s19 = ssub.s32 %s13, 2
    %s20 = sadd.s32 %s13, 1
    %s21 = ssub.s32 %s13, %s20
    %p22 = scmp.eq.s32.totalorder %s21, 0
    %s24 = sadd.s32 %s23, 1
    %s25 = scalar_select %p22, %s23, %s24
    %p28 = pneg %p22
    %p29 = scmp.eq.s32.totalorder %s13, 1
    %p30 = por %p28, %p29
    %p31 = scmp.ne.s32.totalorder %s23, %s26
    %p32 = scmp.eq.s32.totalorder %s13, 0
    %p33 = por %p31, %p32
    %p34 = scmp.ne.s32.totalorder %s23, %s26
    %p35 = scmp.eq.s32.totalorder %s18, 1
    %p36 = por %p34, %p35
    %p37 = scmp.ne.s32.totalorder %s26, %s27
    %p38 = scmp.eq.s32.totalorder %s18, 0
    %p39 = por %p37, %p38
    %p40 = scmp.ne.s32.totalorder %s26, %s27
    %p41 = scmp.eq.s32.totalorder %s19, 1
    %p42 = por %p40, %p41
    %p44 = scmp.ne.s32.totalorder %s27, %s43
    %p45 = scmp.eq.s32.totalorder %s19, 0
    %p46 = por %p44, %p45
    %s48 = sadd.s32 %s47, 1
    %p51 = scmp.eq.s32.totalorder %s13, 1
    %p52 = scmp.ne.s32.totalorder %s47, %s49
    %p53 = scmp.eq.s32.totalorder %s13, 0
    %p54 = por %p52, %p53
    %p55 = scmp.ne.s32.totalorder %s47, %s49
    %p56 = scmp.eq.s32.totalorder %s18, 1
    %p57 = por %p55, %p56
    %p58 = scmp.ne.s32.totalorder %s49, %s50
    %p59 = scmp.eq.s32.totalorder %s18, 0
    %p60 = por %p58, %p59
    %p61 = scmp.ne.s32.totalorder %s49, %s50
    %p62 = scmp.eq.s32.totalorder %s19, 1
    %p63 = por %p61, %p62
    %p65 = scmp.ne.s32.totalorder %s50, %s64
    %p66 = scmp.eq.s32.totalorder %s19, 0
    %p67 = por %p65, %p66
    %s69 = sadd.s32 %s68, 1
    %p72 = scmp.eq.s32.totalorder %s13, 1
    %p73 = scmp.ne.s32.totalorder %s68, %s70
    %p74 = scmp.eq.s32.totalorder %s13, 0
    %p75 = por %p73, %p74
    %p76 = scmp.ne.s32.totalorder %s68, %s70
    %p77 = scmp.eq.s32.totalorder %s18, 1
    %p78 = por %p76, %p77
    %p79 = scmp.ne.s32.totalorder %s70, %s71
    %p80 = scmp.eq.s32.totalorder %s18, 0
    %p81 = por %p79, %p80
    %p82 = scmp.ne.s32.totalorder %s70, %s71
    %p83 = scmp.eq.s32.totalorder %s19, 1
    %p84 = por %p82, %p83
    %p86 = scmp.ne.s32.totalorder %s71, %s85
    %p87 = scmp.eq.s32.totalorder %s19, 0
    %p88 = por %p86, %p87
    %s90 = sadd.s32 %s89, 1
    %p93 = scmp.eq.s32.totalorder %s13, 1
    %p94 = scmp.ne.s32.totalorder %s89, %s91
    %p95 = scmp.eq.s32.totalorder %s13, 0
    %p96 = por %p94, %p95
    %p97 = scmp.ne.s32.totalorder %s89, %s91
    %p98 = scmp.eq.s32.totalorder %s18, 1
    %p99 = por %p97, %p98
    %p100 = scmp.ne.s32.totalorder %s91, %s92
    %p101 = scmp.eq.s32.totalorder %s18, 0
    %p102 = por %p100, %p101
    %p103 = scmp.ne.s32.totalorder %s91, %s92
    %p104 = scmp.eq.s32.totalorder %s19, 1
    %p105 = por %p103, %p104
    %p107 = scmp.ne.s32.totalorder %s92, %s106
    %p108 = scmp.eq.s32.totalorder %s19, 0
    %p109 = por %p107, %p108
    %s111 = sadd.s32 %s110, 1
    %p114 = scmp.eq.s32.totalorder %s13, 1
    %p115 = scmp.ne.s32.totalorder %s110, %s112
    %p116 = scmp.eq.s32.totalorder %s13, 0
    %p117 = por %p115, %p116
    %p118 = scmp.ne.s32.totalorder %s110, %s112
    %p119 = scmp.eq.s32.totalorder %s18, 1
    %p120 = por %p118, %p119
    %p121 = scmp.ne.s32.totalorder %s112, %s113
    %p122 = scmp.eq.s32.totalorder %s18, 0
    %p123 = por %p121, %p122
    %p124 = scmp.ne.s32.totalorder %s112, %s113
    %p125 = scmp.eq.s32.totalorder %s19, 1
    %p126 = por %p124, %p125
    %p128 = scmp.ne.s32.totalorder %s113, %s127
    %p129 = scmp.eq.s32.totalorder %s19, 0
    %p130 = por %p128, %p129
    %s131 = ssub.s32 %s13, %s20
    %p132 = scmp.eq.s32.totalorder %s131, 0
    %s134 = sadd.s32 %s133, 1
    %s135 = scalar_select %p132, %s133, %s134
    %p138 = pneg %p132
    %p139 = scmp.eq.s32.totalorder %s13, 1
    %p140 = por %p138, %p139
    %p141 = scmp.ne.s32.totalorder %s133, %s136
    %p142 = scmp.eq.s32.totalorder %s13, 0
    %p143 = por %p141, %p142
    %p144 = scmp.ne.s32.totalorder %s133, %s136
    %p145 = scmp.eq.s32.totalorder %s18, 1
    %p146 = por %p144, %p145
    %p147 = scmp.ne.s32.totalorder %s136, %s137
    %p148 = scmp.eq.s32.totalorder %s18, 0
    %p149 = por %p147, %p148
    %p150 = scmp.ne.s32.totalorder %s136, %s137
    %p151 = scmp.eq.s32.totalorder %s19, 1
    %p152 = por %p150, %p151
    %p154 = scmp.ne.s32.totalorder %s137, %s153
    %p155 = scmp.eq.s32.totalorder %s19, 0
    %p156 = por %p154, %p155
    %s157 = ssub.s32 %s13, %s20
    %p158 = scmp.eq.s32.totalorder %s157, 0
    %s160 = sadd.s32 %s159, 1
    %s161 = scalar_select %p158, %s159, %s160
    %p164 = pneg %p158
    %p165 = scmp.eq.s32.totalorder %s13, 1
    %p166 = por %p164, %p165
    %p167 = scmp.ne.s32.totalorder %s159, %s162
    %p168 = scmp.eq.s32.totalorder %s13, 0
    %p169 = por %p167, %p168
    %p170 = scmp.ne.s32.totalorder %s159, %s162
    %p171 = scmp.eq.s32.totalorder %s18, 1
    %p172 = por %p170, %p171
    %p173 = scmp.ne.s32.totalorder %s162, %s163
    %p174 = scmp.eq.s32.totalorder %s18, 0
    %p175 = por %p173, %p174
    %p176 = scmp.ne.s32.totalorder %s162, %s163
    %p177 = scmp.eq.s32.totalorder %s19, 1
    %p178 = por %p176, %p177
    %p180 = scmp.ne.s32.totalorder %s163, %s179
    %p181 = scmp.eq.s32.totalorder %s19, 0
    %p182 = por %p180, %p181
    %p183 = scmp.le.s32.totalorder 1, %s13
    %p184 = scmp.lt.s32.totalorder %s13, 3
    %p185 = pnand %p183, %p184
    %p186 = pneg %p185
    // Predicated region
    $region9: #{perceptual_loss_forward.4} parent=5 // pred_check
      _
    $region10: #{perceptual_loss_forward.4} parent=5 // pred_check_branch
      %188 = sbr.rel (%p185) target = $region12
    $region11: #{perceptual_loss_forward.4} parent=5 // pred_region
      %s189 = ssub.s32 %s13, 1
      // Predicated region
      $region13: #{perceptual_loss_forward.4} parent=11 // pred_check
        %p190 = pneg %p60
      $region14: #{perceptual_loss_forward.4} parent=11 // pred_check_branch
        %192 = sbr.rel (%p190) target = $region16
      $region15: #{perceptual_loss_forward.4} parent=11 // pred_region
        _
      $region16: #{perceptual_loss_forward.4} parent=11 // pred_fallthru
        _
      // Predicated region
      $region17: #{perceptual_loss_forward.4} parent=11 // pred_check
        %p193 = pneg %p81
      $region18: #{perceptual_loss_forward.4} parent=11 // pred_check_branch
        %195 = sbr.rel (%p193) target = $region20
      $region19: #{perceptual_loss_forward.4} parent=11 // pred_region
        _
      $region20: #{perceptual_loss_forward.4} parent=11 // pred_fallthru
        _
      // Predicated region
      $region21: #{perceptual_loss_forward.4} parent=11 // pred_check
        %p196 = pneg %p102
      $region22: #{perceptual_loss_forward.4} parent=11 // pred_check_branch
        %198 = sbr.rel (%p196) target = $region24
      $region23: #{perceptual_loss_forward.4} parent=11 // pred_region
        _
      $region24: #{perceptual_loss_forward.4} parent=11 // pred_fallthru
        _
      // Predicated region
      $region25: #{perceptual_loss_forward.4} parent=11 // pred_check
        %p199 = pneg %p123
      $region26: #{perceptual_loss_forward.4} parent=11 // pred_check_branch
        %201 = sbr.rel (%p199) target = $region28
      $region27: #{perceptual_loss_forward.4} parent=11 // pred_region
        _
      $region28: #{perceptual_loss_forward.4} parent=11 // pred_fallthru
        _
    $region12: #{perceptual_loss_forward.4} parent=5 // pred_fallthru
      _
    %p202 = scmp.lt.s32.totalorder %s13, 2
    // Predicated region
    $region29: #{perceptual_loss_forward.4} parent=5 // pred_check
      %p203 = pneg %p202
    $region30: #{perceptual_loss_forward.4} parent=5 // pred_check_branch
      %205 = sbr.rel (%p203) target = $region32
    $region31: #{perceptual_loss_forward.4} parent=5 // pred_region
      // Predicated region
      $region33: #{perceptual_loss_forward.4} parent=31 // pred_check
        %p206 = pneg %p33
      $region34: #{perceptual_loss_forward.4} parent=31 // pred_check_branch
        %208 = sbr.rel (%p206) target = $region36
      $region35: #{perceptual_loss_forward.4} parent=31 // pred_region
        %s209 = smul.u32 2, %s13
        %p210 = scmp.lt.s32.totalorder %s209, 3
        %s211 = scalar_select %p210, %s209, 3
        %s212 = smul.addr %s211, 21
        %s213 = smul.addr %s212, 4
        %s214 = scalar_lea.vmem %s0, %s213
        %s215 = smul.u32 2, %s13
      $region36: #{perceptual_loss_forward.4} parent=31 // pred_fallthru
        _
    $region32: #{perceptual_loss_forward.4} parent=5 // pred_fallthru
      _
    %p216 = scmp.le.s32.totalorder 1, %s13
    %p217 = scmp.lt.s32.totalorder %s13, 3
    %p218 = pnand %p216, %p217
    %p219 = pneg %p218
    // Predicated region
    $region37: #{perceptual_loss_forward.4} parent=5 // pred_check
      _
    $region38: #{perceptual_loss_forward.4} parent=5 // pred_check_branch
      %221 = sbr.rel (%p218) target = $region40
    $region39: #{perceptual_loss_forward.4} parent=5 // pred_region
      %s222 = ssub.s32 %s13, 1
      %s223 = smul.u32 2, %s18
      %p224 = scmp.lt.s32.totalorder %s223, 3
      %s225 = scalar_select %p224, %s223, 3
      %s226 = smul.addr %s225, 21
      %s227 = smul.addr %s226, 4
      %s228 = scalar_lea.vmem %s0, %s227
      %p229 = pneg %p39
      %p230 = pneg %p36
      %p231 = pneg %p60
      %p232 = pneg %p57
      %p233 = pneg %p81
      %p234 = pneg %p78
      %p235 = pneg %p102
      %p236 = pneg %p99
      %p237 = pneg %p123
      %p238 = pneg %p120
      %p239 = pneg %p149
      %p240 = pneg %p146
      %p241 = scmp.lt.s32.totalorder %s18, 1
      %s242 = scalar_select %p241, %s18, 1
      %s243 = smul.addr %s242, 8
      %s244 = scalar_lea.vmem %s5, %s243
      %p245 = pneg %p175
      %p246 = pneg %p172
      %s247 = smul.u32 2, %s18
      %p248 = scmp.lt.s32.totalorder %s247, 3
      %s249 = scalar_select %p248, %s247, 3
      %s250 = smul.addr %s249, 4
      %s251 = smul.addr %s250, 4
      %s252 = scalar_lea.vmem %s6, %s251
      %s253 = smul.u32 2, %s18
      %p254 = scmp.lt.s32.totalorder %s253, 3
      %s255 = scalar_select %p254, %s253, 3
      %s256 = smul.addr %s255, 21
      %s257 = smul.addr %s256, 4
      %s258 = scalar_lea.vmem %s0, %s257
      %s259 = smul.u32 2, %s18
      %p260 = scmp.lt.s32.totalorder %s18, 1
      %s261 = scalar_select %p260, %s18, 1
      %s262 = smul.addr %s261, 8
      %s263 = scalar_lea.vmem %s5, %s262
      %s264 = smul.u32 2, %s18
      %p265 = scmp.lt.s32.totalorder %s264, 3
      %s266 = scalar_select %p265, %s264, 3
      %s267 = smul.addr %s266, 4
      %s268 = smul.addr %s267, 4
      %s269 = scalar_lea.vmem %s6, %s268
      %s270 = smul.u32 2, %s18
      %v272 = vld [vmem:[%s3] sm:$0xff]
      %v273 = vld [vmem:[%s3 + $0x8] sm:$0xff]
      %v274 = vld [vmem:[%s3 + $0x10] sm:$0xff]
      %v275 = vld [vmem:[%s3 + $0x18] sm:$0xff]
      %v276 = vld [vmem:[%s3 + $0x20] sm:$0xff]
      %v277 = vld [vmem:[%s3 + $0x28] sm:$0xff]
      %v278 = vld [vmem:[%s3 + $0x30] sm:$0xff]
      %v279 = vld [vmem:[%s3 + $0x38] sm:$0xff]
      %v280 = vld [vmem:[%s3 + $0x40] sm:$0xff]
      %v281 = vld [vmem:[%s3 + $0x48] sm:$0xff]
      %v282 = vld [vmem:[%s3 + $0x50] sm:$0xff]
      %v283 = vld [vmem:[%s3 + $0x58] sm:$0xff]
      %v284 = vld [vmem:[%s3 + $0x60] sm:$0xff]
      %v285 = vld [vmem:[%s3 + $0x68] sm:$0xff]
      %v286 = vld [vmem:[%s3 + $0x70] sm:$0xff]
      %v287 = vld [vmem:[%s3 + $0x78] sm:$0xff]
      %v288 = vpack.c.bf16 %v273, %v272
      %v289 = vpack.c.bf16 %v275, %v274
      %v290 = vpack.c.bf16 %v277, %v276
      %v291 = vpack.c.bf16 %v279, %v278
      %v292 = vpack.c.bf16 %v281, %v280
      %v293 = vpack.c.bf16 %v283, %v282
      %v294 = vpack.c.bf16 %v285, %v284
      %v295 = vpack.c.bf16 %v287, %v286
      %v296 = vld [vmem:[%s258] sm:$0xf]
      %v297 = vld [vmem:[%s258 + $0x4] sm:$0xf]
      %v298 = vld [vmem:[%s258 + $0x8] sm:$0xf]
      %v299 = vld [vmem:[%s258 + $0xc] sm:$0xf]
      %v300 = vld [vmem:[%s258 + $0x10] sm:$0xf]
      %v301 = vld [vmem:[%s258 + $0x14] sm:$0xf]
      %v302 = vld [vmem:[%s258 + $0x18] sm:$0xf]
      %v303 = vld [vmem:[%s258 + $0x1c] sm:$0xf]
      %v304 = vld [vmem:[%s258 + $0x20] sm:$0xf]
      %v305 = vld [vmem:[%s258 + $0x24] sm:$0xf]
      %v306 = vld [vmem:[%s258 + $0x28] sm:$0xf]
      %v307 = vld [vmem:[%s258 + $0x2c] sm:$0xf]
      %v308 = vld [vmem:[%s258 + $0x30] sm:$0xf]
      %v309 = vld [vmem:[%s258 + $0x34] sm:$0xf]
      %v310 = vld [vmem:[%s258 + $0x38] sm:$0xf]
      %v311 = vld [vmem:[%s258 + $0x3c] sm:$0xf]
      %v312 = vld [vmem:[%s258 + $0x40] sm:$0x1]
      %v329 = vunpack.c.l.b16 %v296
      %v330 = vunpack.c.l.b16 %v297
      %v331 = vunpack.c.l.b16 %v298
      %v332 = vunpack.c.l.b16 %v299
      %v333 = vunpack.c.l.b16 %v300
      %v334 = vunpack.c.l.b16 %v301
      %v335 = vunpack.c.l.b16 %v302
      %v336 = vunpack.c.l.b16 %v303
      %v337 = vunpack.c.l.b16 %v304
      %v338 = vunpack.c.l.b16 %v305
      %v339 = vunpack.c.l.b16 %v306
      %v340 = vunpack.c.l.b16 %v307
      %v341 = vunpack.c.l.b16 %v308
      %v342 = vunpack.c.l.b16 %v309
      %v343 = vunpack.c.l.b16 %v310
      %v344 = vunpack.c.l.b16 %v311
      %v345 = vpack.c.b16 %v330, %v329
      %v346 = vpack.c.b16 %v332, %v331
      %v347 = vpack.c.b16 %v334, %v333
      %v348 = vpack.c.b16 %v336, %v335
      %v349 = vpack.c.b16 %v338, %v337
      %v350 = vpack.c.b16 %v340, %v339
      %v351 = vpack.c.b16 %v342, %v341
      %v352 = vpack.c.b16 %v344, %v343
      %v362 = vunpack.c.l.b16 %v312
      %v363 = vpack.c.b16 %v362, %v362
      %vm364 = vsmask.f32 7424
      %v366 = vshrl.u32 %v345, 16
      %v368 = vshll.u32 %v345, 16
      %v370 = vrot.slane %v368, 1
      %v371 = vor.u32 %v366, %v370
      %v373 = vshll.u32 %v346, 16
      %v375 = vrot.slane %v373, 1
      %v376 = vsel %vm364, %v371, %v375
      %v377 = vshrl.u32 %v346, 16
      %v379 = vor.u32 %v377, %v375
      %v381 = vshll.u32 %v347, 16
      %v383 = vrot.slane %v381, 1
      %v384 = vsel %vm364, %v379, %v383
      %v385 = vshrl.u32 %v347, 16
      %v387 = vor.u32 %v385, %v383
      %v389 = vshll.u32 %v348, 16
      %v391 = vrot.slane %v389, 1
      %v392 = vsel %vm364, %v387, %v391
      %v393 = vshrl.u32 %v348, 16
      %v395 = vor.u32 %v393, %v391
      %v397 = vshll.u32 %v349, 16
      %v399 = vrot.slane %v397, 1
      %v400 = vsel %vm364, %v395, %v399
      %v401 = vshrl.u32 %v349, 16
      %v403 = vor.u32 %v401, %v399
      %v405 = vshll.u32 %v350, 16
      %v407 = vrot.slane %v405, 1
      %v408 = vsel %vm364, %v403, %v407
      %v409 = vshrl.u32 %v350, 16
      %v411 = vor.u32 %v409, %v407
      %v413 = vshll.u32 %v351, 16
      %v415 = vrot.slane %v413, 1
      %v416 = vsel %vm364, %v411, %v415
      %v417 = vshrl.u32 %v351, 16
      %v419 = vor.u32 %v417, %v415
      %v421 = vshll.u32 %v352, 16
      %v423 = vrot.slane %v421, 1
      %v424 = vsel %vm364, %v419, %v423
      %v425 = vshrl.u32 %v352, 16
      %v427 = vor.u32 %v425, %v423
      %v429 = vshll.u32 %v363, 16
      %v431 = vrot.slane %v429, 1
      %v432 = vsel %vm364, %v427, %v431
      %v441 = vld [vmem:[%s1] sm:$0xf]
      %v442 = vld [vmem:[%s1 + $0x4] sm:$0xf]
      %v443 = vld [vmem:[%s1 + $0x8] sm:$0xf]
      %v444 = vld [vmem:[%s1 + $0xc] sm:$0xf]
      %v445 = vld [vmem:[%s1 + $0x10] sm:$0xf]
      %v446 = vld [vmem:[%s1 + $0x14] sm:$0xf]
      %v447 = vld [vmem:[%s1 + $0x18] sm:$0xf]
      %v448 = vld [vmem:[%s1 + $0x1c] sm:$0xf]
      %v449 = vld [vmem:[%s1 + $0x20] sm:$0xf]
      %v450 = vld [vmem:[%s1 + $0x24] sm:$0xf]
      %v451 = vld [vmem:[%s1 + $0x28] sm:$0xf]
      %v452 = vld [vmem:[%s1 + $0x2c] sm:$0xf]
      %v453 = vld [vmem:[%s1 + $0x30] sm:$0xf]
      %v454 = vld [vmem:[%s1 + $0x34] sm:$0xf]
      %v455 = vld [vmem:[%s1 + $0x38] sm:$0xf]
      %v456 = vld [vmem:[%s1 + $0x3c] sm:$0xf]
      %v457 = vld [vmem:[%s1 + $0x40] sm:$0xf]
      %v458 = vld [vmem:[%s1 + $0x44] sm:$0xf]
      %v459 = vld [vmem:[%s1 + $0x48] sm:$0xf]
      %v460 = vld [vmem:[%s1 + $0x4c] sm:$0xf]
      %v461 = vld [vmem:[%s1 + $0x50] sm:$0xf]
      %v462 = vld [vmem:[%s1 + $0x54] sm:$0xf]
      %v463 = vld [vmem:[%s1 + $0x58] sm:$0xf]
      %v464 = vld [vmem:[%s1 + $0x5c] sm:$0xf]
      %v465 = vld [vmem:[%s1 + $0x60] sm:$0xf]
      %v466 = vld [vmem:[%s1 + $0x64] sm:$0xf]
      %v467 = vld [vmem:[%s1 + $0x68] sm:$0xf]
      %v468 = vld [vmem:[%s1 + $0x6c] sm:$0xf]
      %v469 = vld [vmem:[%s1 + $0x70] sm:$0xf]
      %v470 = vld [vmem:[%s1 + $0x74] sm:$0xf]
      %v471 = vld [vmem:[%s1 + $0x78] sm:$0xf]
      %v472 = vld [vmem:[%s1 + $0x7c] sm:$0xf]
      %v473 = vld [vmem:[%s258] sm:$0xe]
      %v474 = vld [vmem:[%s258 + $0x40] sm:$0xf]
      %v475 = vld [vmem:[%s258 + $0x44] sm:$0xf]
      %v477 = vunpack.c.l.b16 %v473
      %v478 = vpack.c.b16 %v330, %v477
      %v481 = vunpack.c.l.b16 %v474
      %v482 = vunpack.c.l.b16 %v475
      %v483 = vpack.c.b16 %v482, %v481
      %vm484 = vcmask 1040384
      %v485 = vrot.slane %v346, 7
      %v486 = vrot.slane %v347, 7
      %v487 = vsel %vm484, %v485, %v486
      %v488 = vrot.slane %v348, 7
      %v489 = vsel %vm484, %v486, %v488
      %v490 = vrot.slane %v349, 7
      %v491 = vsel %vm484, %v488, %v490
      %v492 = vrot.slane %v350, 7
      %v493 = vsel %vm484, %v490, %v492
      %v494 = vrot.slane %v351, 7
      %v495 = vsel %vm484, %v492, %v494
      %v496 = vrot.slane %v352, 7
      %v497 = vsel %vm484, %v494, %v496
      %v498 = vrot.slane %v483, 7
      %v499 = vsel %vm484, %v496, %v498
      %s500 = scalar_lea.vmem %s1, 128
      %v501 = vld [vmem:[%s500] sm:$0xf]
      %v502 = vld [vmem:[%s500 + $0x4] sm:$0xf]
      %v503 = vld [vmem:[%s500 + $0x8] sm:$0xf]
      %v504 = vld [vmem:[%s500 + $0xc] sm:$0xf]
      %v505 = vld [vmem:[%s500 + $0x10] sm:$0xf]
      %v506 = vld [vmem:[%s500 + $0x14] sm:$0xf]
      %v507 = vld [vmem:[%s500 + $0x18] sm:$0xf]
      %v508 = vld [vmem:[%s500 + $0x1c] sm:$0xf]
      %v509 = vld [vmem:[%s500 + $0x20] sm:$0xf]
      %v510 = vld [vmem:[%s500 + $0x24] sm:$0xf]
      %v511 = vld [vmem:[%s500 + $0x28] sm:$0xf]
      %v512 = vld [vmem:[%s500 + $0x2c] sm:$0xf]
      %v513 = vld [vmem:[%s500 + $0x30] sm:$0xf]
      %v514 = vld [vmem:[%s500 + $0x34] sm:$0xf]
      %v515 = vld [vmem:[%s500 + $0x38] sm:$0xf]
      %v516 = vld [vmem:[%s500 + $0x3c] sm:$0xf]
      %v517 = vld [vmem:[%s500 + $0x40] sm:$0xf]
      %v518 = vld [vmem:[%s500 + $0x44] sm:$0xf]
      %v519 = vld [vmem:[%s500 + $0x48] sm:$0xf]
      %v520 = vld [vmem:[%s500 + $0x4c] sm:$0xf]
      %v521 = vld [vmem:[%s500 + $0x50] sm:$0xf]
      %v522 = vld [vmem:[%s500 + $0x54] sm:$0xf]
      %v523 = vld [vmem:[%s500 + $0x58] sm:$0xf]
      %v524 = vld [vmem:[%s500 + $0x5c] sm:$0xf]
      %v525 = vld [vmem:[%s500 + $0x60] sm:$0xf]
      %v526 = vld [vmem:[%s500 + $0x64] sm:$0xf]
      %v527 = vld [vmem:[%s500 + $0x68] sm:$0xf]
      %v528 = vld [vmem:[%s500 + $0x6c] sm:$0xf]
      %v529 = vld [vmem:[%s500 + $0x70] sm:$0xf]
      %v530 = vld [vmem:[%s500 + $0x74] sm:$0xf]
      %v531 = vld [vmem:[%s500 + $0x78] sm:$0xf]
      %v532 = vld [vmem:[%s500 + $0x7c] sm:$0xf]
      %vm533 = vcmask 1046528
      %v534 = vrot.slane %v478, 1
      %v535 = vrot.slane %v346, 1
      %v536 = vsel %vm533, %v534, %v535
      %v537 = vrot.slane %v485, 1
      %v538 = vrot.slane %v487, 1
      %v539 = vsel %vm533, %v537, %v538
      %v540 = vrot.slane %v347, 1
      %v541 = vsel %vm533, %v535, %v540
      %v542 = vrot.slane %v489, 1
      %v543 = vsel %vm533, %v538, %v542
      %v544 = vrot.slane %v348, 1
      %v545 = vsel %vm533, %v540, %v544
      %v546 = vrot.slane %v491, 1
      %v547 = vsel %vm533, %v542, %v546
      %v548 = vrot.slane %v349, 1
      %v549 = vsel %vm533, %v544, %v548
      %v550 = vrot.slane %v493, 1
      %v551 = vsel %vm533, %v546, %v550
      %v552 = vrot.slane %v350, 1
      %v553 = vsel %vm533, %v548, %v552
      %v554 = vrot.slane %v495, 1
      %v555 = vsel %vm533, %v550, %v554
      %v556 = vrot.slane %v351, 1
      %v557 = vsel %vm533, %v552, %v556
      %v558 = vrot.slane %v497, 1
      %v559 = vsel %vm533, %v554, %v558
      %v560 = vrot.slane %v352, 1
      %v561 = vsel %vm533, %v556, %v560
      %v562 = vrot.slane %v499, 1
      %v563 = vsel %vm533, %v558, %v562
      %v564 = vrot.slane %v363, 1
      %v565 = vsel %vm533, %v560, %v564
      %v566 = vrot.slane %v498, 1
      %v567 = vsel %vm533, %v562, %v566
      %v616 = vunpack.c.l.b16 %v501
      %v617 = vunpack.c.l.b16 %v502
      %v618 = vunpack.c.l.b16 %v503
      %v619 = vunpack.c.l.b16 %v504
      %v620 = vunpack.c.l.b16 %v505
      %v621 = vunpack.c.l.b16 %v506
      %v622 = vunpack.c.l.b16 %v507
      %v623 = vunpack.c.l.b16 %v508
      %v624 = vunpack.c.l.b16 %v509
      %v625 = vunpack.c.l.b16 %v510
      %v626 = vunpack.c.l.b16 %v511
      %v627 = vunpack.c.l.b16 %v512
      %v628 = vunpack.c.l.b16 %v513
      %v629 = vunpack.c.l.b16 %v514
      %v630 = vunpack.c.l.b16 %v515
      %v631 = vunpack.c.l.b16 %v516
      %v632 = vunpack.c.l.b16 %v517
      %v633 = vunpack.c.l.b16 %v518
      %v634 = vunpack.c.l.b16 %v519
      %v635 = vunpack.c.l.b16 %v520
      %v636 = vunpack.c.l.b16 %v521
      %v637 = vunpack.c.l.b16 %v522
      %v638 = vunpack.c.l.b16 %v523
      %v639 = vunpack.c.l.b16 %v524
      %v640 = vunpack.c.l.b16 %v525
      %v641 = vunpack.c.l.b16 %v526
      %v642 = vunpack.c.l.b16 %v527
      %v643 = vunpack.c.l.b16 %v528
      %v644 = vunpack.c.l.b16 %v529
      %v645 = vunpack.c.l.b16 %v530
      %v646 = vunpack.c.l.b16 %v531
      %v647 = vunpack.c.l.b16 %v532
      %v648 = vpack.c.b16 %v617, %v616
      %v649 = vpack.c.b16 %v619, %v618
      %v650 = vpack.c.b16 %v621, %v620
      %v651 = vpack.c.b16 %v623, %v622
      %v652 = vpack.c.b16 %v625, %v624
      %v653 = vpack.c.b16 %v627, %v626
      %v654 = vpack.c.b16 %v629, %v628
      %v655 = vpack.c.b16 %v631, %v630
      %v656 = vpack.c.b16 %v633, %v632
      %v657 = vpack.c.b16 %v635, %v634
      %v658 = vpack.c.b16 %v637, %v636
      %v659 = vpack.c.b16 %v639, %v638
      %v660 = vpack.c.b16 %v641, %v640
      %v661 = vpack.c.b16 %v643, %v642
      %v662 = vpack.c.b16 %v645, %v644
      %v663 = vpack.c.b16 %v647, %v646
      %680 = vmatprep.subr.bf16.mxu0 0
      %681 = vmatpush1.bf16.msra.mxu0 %v648
      %682 = vmatprep.subr.bf16.mxu0 0
      %683 = vmatpush1.bf16.msra.mxu0 %v649
      %684 = vmatprep.subr.bf16.mxu0 0
      %685 = vmatpush1.bf16.msra.mxu0 %v650
      %686 = vmatprep.subr.bf16.mxu0 0
      %687 = vmatpush1.bf16.msra.mxu0 %v651
      %688 = vmatprep.subr.bf16.mxu0 0
      %689 = vmatpush1.bf16.msra.mxu0 %v652
      %690 = vmatprep.subr.bf16.mxu0 0
      %691 = vmatpush1.bf16.msra.mxu0 %v653
      %692 = vmatprep.subr.bf16.mxu0 0
      %693 = vmatpush1.bf16.msra.mxu0 %v654
      %694 = vmatprep.subr.bf16.mxu0 0
      %695 = vmatpush1.bf16.msra.mxu0 %v655
      %696 = vmatprep.subr.bf16.mxu0 0
      %697 = vmatpush1.bf16.msra.mxu0 %v656
      %698 = vmatprep.subr.bf16.mxu0 0
      %699 = vmatpush1.bf16.msra.mxu0 %v657
      %700 = vmatprep.subr.bf16.mxu0 0
      %701 = vmatpush1.bf16.msra.mxu0 %v658
      %702 = vmatprep.subr.bf16.mxu0 0
      %703 = vmatpush1.bf16.msra.mxu0 %v659
      %704 = vmatprep.subr.bf16.mxu0 0
      %705 = vmatpush1.bf16.msra.mxu0 %v660
      %706 = vmatprep.subr.bf16.mxu0 0
      %707 = vmatpush1.bf16.msra.mxu0 %v661
      %708 = vmatprep.subr.bf16.mxu0 0
      %709 = vmatpush1.bf16.msra.mxu0 %v662
      %710 = vmatprep.subr.bf16.mxu0 0
      %711 = vmatpush1.bf16.msra.mxu0 %v663
      %712 = vmatprep.mubr.bf16.mxu0 %v539
      %713 = vmatmul.mubr.bf16.gmra.mrb[0].mxu0 %v536
      %v714 = vpop.f32.mrb[0].mxu0
      %v715 = vadd.f32 0.0, %v714
      %v716 = vpop.f32.mrb[0].mxu0
      %v717 = vpop.f32.mrb[0].mxu0
      %v718 = vadd.f32 0.0, %v717
      %v719 = vpop.f32.mrb[0].mxu0
      %720 = vmatprep.mubr.bf16.mxu0 %v543
      %721 = vmatmul.mubr.bf16.gmra.mrb[0].mxu0 %v541
      %v722 = vpop.f32.mrb[0].mxu0
      %v723 = vadd.f32 0.0, %v722
      %v724 = vpop.f32.mrb[0].mxu0
      %v725 = vpop.f32.mrb[0].mxu0
      %v726 = vadd.f32 0.0, %v725
      %v727 = vpop.f32.mrb[0].mxu0
      %728 = vmatprep.mubr.bf16.mxu0 %v547
      %729 = vmatmul.mubr.bf16.gmra.mrb[0].mxu0 %v545
      %v730 = vpop.f32.mrb[0].mxu0
      %v731 = vadd.f32 0.0, %v730
      %v732 = vpop.f32.mrb[0].mxu0
      %v733 = vpop.f32.mrb[0].mxu0
      %v734 = vadd.f32 0.0, %v733
      %v735 = vpop.f32.mrb[0].mxu0
      %736 = vmatprep.mubr.bf16.mxu0 %v551
      %737 = vmatmul.mubr.bf16.gmra.mrb[0].mxu0 %v549
      %v738 = vpop.f32.mrb[0].mxu0
      %v739 = vadd.f32 0.0, %v738
      %v740 = vpop.f32.mrb[0].mxu0
      %v741 = vpop.f32.mrb[0].mxu0
      %v742 = vadd.f32 0.0, %v741
      %v743 = vpop.f32.mrb[0].mxu0
      %744 = vmatprep.mubr.bf16.mxu0 %v555
      %745 = vmatmul.mubr.bf16.gmra.mrb[0].mxu0 %v553
      %v746 = vpop.f32.mrb[0].mxu0
      %v747 = vadd.f32 0.0, %v746
      %v748 = vpop.f32.mrb[0].mxu0
      %v749 = vpop.f32.mrb[0].mxu0
      %v750 = vadd.f32 0.0, %v749
      %v751 = vpop.f32.mrb[0].mxu0
      %752 = vmatprep.mubr.bf16.mxu0 %v559
      %753 = vmatmul.mubr.bf16.gmra.mrb[0].mxu0 %v557
      %v754 = vpop.f32.mrb[0].mxu0
      %v755 = vadd.f32 0.0, %v754
      %v756 = vpop.f32.mrb[0].mxu0
      %v757 = vpop.f32.mrb[0].mxu0
      %v758 = vadd.f32 0.0, %v757
      %v759 = vpop.f32.mrb[0].mxu0
      %760 = vmatprep.mubr.bf16.mxu0 %v563
      %761 = vmatmul.mubr.bf16.gmra.mrb[0].mxu0 %v561
      %v762 = vpop.f32.mrb[0].mxu0
      %v763 = vadd.f32 0.0, %v762
      %v764 = vpop.f32.mrb[0].mxu0
      %v765 = vpop.f32.mrb[0].mxu0
      %v766 = vadd.f32 0.0, %v765
      %v767 = vpop.f32.mrb[0].mxu0
      %768 = vmatprep.mubr.bf16.mxu0 %v567
      %769 = vmatmul.mubr.bf16.gmra.mrb[0].mxu0 %v565
      %v770 = vpop.f32.mrb[0].mxu0
      %v771 = vadd.f32 0.0, %v770
      %v772 = vpop.f32.mrb[0].mxu0
      %v773 = vpop.f32.mrb[0].mxu0
      %v774 = vadd.f32 0.0, %v773
      %v775 = vpop.f32.mrb[0].mxu0
      %776 = vdwg.mxu0
      %v809 = vunpack.c.l.b16 %v441
      %v810 = vunpack.c.l.b16 %v442
      %v811 = vunpack.c.l.b16 %v443
      %v812 = vunpack.c.l.b16 %v444
      %v813 = vunpack.c.l.b16 %v445
      %v814 = vunpack.c.l.b16 %v446
      %v815 = vunpack.c.l.b16 %v447
      %v816 = vunpack.c.l.b16 %v448
      %v817 = vunpack.c.l.b16 %v449
      %v818 = vunpack.c.l.b16 %v450
      %v819 = vunpack.c.l.b16 %v451
      %v820 = vunpack.c.l.b16 %v452
      %v821 = vunpack.c.l.b16 %v453
      %v822 = vunpack.c.l.b16 %v454
      %v823 = vunpack.c.l.b16 %v455
      %v824 = vunpack.c.l.b16 %v456
      %v825 = vunpack.c.l.b16 %v457
      %v826 = vunpack.c.l.b16 %v458
      %v827 = vunpack.c.l.b16 %v459
      %v828 = vunpack.c.l.b16 %v460
      %v829 = vunpack.c.l.b16 %v461
      %v830 = vunpack.c.l.b16 %v462
      %v831 = vunpack.c.l.b16 %v463
      %v832 = vunpack.c.l.b16 %v464
      %v833 = vunpack.c.l.b16 %v465
      %v834 = vunpack.c.l.b16 %v466
      %v835 = vunpack.c.l.b16 %v467
      %v836 = vunpack.c.l.b16 %v468
      %v837 = vunpack.c.l.b16 %v469
      %v838 = vunpack.c.l.b16 %v470
      %v839 = vunpack.c.l.b16 %v471
      %v840 = vunpack.c.l.b16 %v472
      %v841 = vpack.c.b16 %v810, %v809
      %v842 = vpack.c.b16 %v812, %v811
      %v843 = vpack.c.b16 %v814, %v813
      %v844 = vpack.c.b16 %v816, %v815
      %v845 = vpack.c.b16 %v818, %v817
      %v846 = vpack.c.b16 %v820, %v819
      %v847 = vpack.c.b16 %v822, %v821
      %v848 = vpack.c.b16 %v824, %v823
      %v849 = vpack.c.b16 %v826, %v825
      %v850 = vpack.c.b16 %v828, %v827
      %v851 = vpack.c.b16 %v830, %v829
      %v852 = vpack.c.b16 %v832, %v831
      %v853 = vpack.c.b16 %v834, %v833
      %v854 = vpack.c.b16 %v836, %v835
      %v855 = vpack.c.b16 %v838, %v837
      %v856 = vpack.c.b16 %v840, %v839
      %873 = vmatprep.subr.bf16.mxu0 0
      %874 = vmatpush1.bf16.msra.mxu0 %v841
      %875 = vmatprep.subr.bf16.mxu0 0
      %876 = vmatpush1.bf16.msra.mxu0 %v842
      %877 = vmatprep.subr.bf16.mxu0 0
      %878 = vmatpush1.bf16.msra.mxu0 %v843
      %879 = vmatprep.subr.bf16.mxu0 0
      %880 = vmatpush1.bf16.msra.mxu0 %v844
      %881 = vmatprep.subr.bf16.mxu0 0
      %882 = vmatpush1.bf16.msra.mxu0 %v845
      %883 = vmatprep.subr.bf16.mxu0 0
      %884 = vmatpush1.bf16.msra.mxu0 %v846
      %885 = vmatprep.subr.bf16.mxu0 0
      %886 = vmatpush1.bf16.msra.mxu0 %v847
      %887 = vmatprep.subr.bf16.mxu0 0
      %888 = vmatpush1.bf16.msra.mxu0 %v848
      %889 = vmatprep.subr.bf16.mxu0 0
      %890 = vmatpush1.bf16.msra.mxu0 %v849
      %891 = vmatprep.subr.bf16.mxu0 0
      %892 = vmatpush1.bf16.msra.mxu0 %v850
      %893 = vmatprep.subr.bf16.mxu0 0
      %894 = vmatpush1.bf16.msra.mxu0 %v851
      %895 = vmatprep.subr.bf16.mxu0 0
      %896 = vmatpush1.bf16.msra.mxu0 %v852
      %897 = vmatprep.subr.bf16.mxu0 0
      %898 = vmatpush1.bf16.msra.mxu0 %v853
      %899 = vmatprep.subr.bf16.mxu0 0
      %900 = vmatpush1.bf16.msra.mxu0 %v854
      %901 = vmatprep.subr.bf16.mxu0 0
      %902 = vmatpush1.bf16.msra.mxu0 %v855
      %903 = vmatprep.subr.bf16.mxu0 0
      %904 = vmatpush1.bf16.msra.mxu0 %v856
      %905 = vmatprep.mubr.bf16.mxu0 %v376
      %906 = vmatmul.mubr.bf16.gmra.mrb[0].mxu0 %v345
      %v907 = vpop.f32.mrb[0].mxu0
      %v908 = vadd.f32 %v715, %v907
      %v909 = vpop.f32.mrb[0].mxu0
      %v910 = vpop.f32.mrb[0].mxu0
      %v911 = vadd.f32 %v718, %v910
      %v912 = vpop.f32.mrb[0].mxu0
      %913 = vmatprep.mubr.bf16.mxu0 %v384
      %914 = vmatmul.mubr.bf16.gmra.mrb[0].mxu0 %v346
      %v915 = vpop.f32.mrb[0].mxu0
      %v916 = vadd.f32 %v723, %v915
      %v917 = vpop.f32.mrb[0].mxu0
      %v918 = vpop.f32.mrb[0].mxu0
      %v919 = vadd.f32 %v726, %v918
      %v920 = vpop.f32.mrb[0].mxu0
      %921 = vmatprep.mubr.bf16.mxu0 %v392
      %922 = vmatmul.mubr.bf16.gmra.mrb[0].mxu0 %v347
      %v923 = vpop.f32.mrb[0].mxu0
      %v924 = vadd.f32 %v731, %v923
      %v925 = vpop.f32.mrb[0].mxu0
      %v926 = vpop.f32.mrb[0].mxu0
      %v927 = vadd.f32 %v734, %v926
      %v928 = vpop.f32.mrb[0].mxu0
      %929 = vmatprep.mubr.bf16.mxu0 %v400
      %930 = vmatmul.mubr.bf16.gmra.mrb[0].mxu0 %v348
      %v931 = vpop.f32.mrb[0].mxu0
      %v932 = vadd.f32 %v739, %v931
      %v933 = vpop.f32.mrb[0].mxu0
      %v934 = vpop.f32.mrb[0].mxu0
      %v935 = vadd.f32 %v742, %v934
      %v936 = vpop.f32.mrb[0].mxu0
      %937 = vmatprep.mubr.bf16.mxu0 %v408
      %938 = vmatmul.mubr.bf16.gmra.mrb[0].mxu0 %v349
      %v939 = vpop.f32.mrb[0].mxu0
      %v940 = vadd.f32 %v747, %v939
      %v941 = vpop.f32.mrb[0].mxu0
      %v942 = vpop.f32.mrb[0].mxu0
      %v943 = vadd.f32 %v750, %v942
      %v944 = vpop.f32.mrb[0].mxu0
      %945 = vmatprep.mubr.bf16.mxu0 %v416
      %946 = vmatmul.mubr.bf16.gmra.mrb[0].mxu0 %v350
      %v947 = vpop.f32.mrb[0].mxu0
      %v948 = vadd.f32 %v755, %v947
      %v949 = vpop.f32.mrb[0].mxu0
      %v950 = vpop.f32.mrb[0].mxu0
      %v951 = vadd.f32 %v758, %v950
      %v952 = vpop.f32.mrb[0].mxu0
      %953 = vmatprep.mubr.bf16.mxu0 %v424
      %954 = vmatmul.mubr.bf16.gmra.mrb[0].mxu0 %v351
      %v955 = vpop.f32.mrb[0].mxu0
      %v956 = vadd.f32 %v763, %v955
      %v957 = vpop.f32.mrb[0].mxu0
      %v958 = vpop.f32.mrb[0].mxu0
      %v959 = vadd.f32 %v766, %v958
      %v960 = vpop.f32.mrb[0].mxu0
      %961 = vmatprep.mubr.bf16.mxu0 %v432
      %962 = vmatmul.mubr.bf16.gmra.mrb[0].mxu0 %v352
      %v963 = vpop.f32.mrb[0].mxu0
      %v964 = vadd.f32 %v771, %v963
      %v965 = vpop.f32.mrb[0].mxu0
      %v966 = vpop.f32.mrb[0].mxu0
      %v967 = vadd.f32 %v774, %v966
      %v968 = vpop.f32.mrb[0].mxu0
      %969 = vdwg.mxu0
      %v970 = vld [vmem:[%s258 + $0x8] sm:$0xf]
      %v971 = vld [vmem:[%s258 + $0xc] sm:$0xf]
      %v972 = vld [vmem:[%s258 + $0x10] sm:$0xf]
      %v973 = vld [vmem:[%s258 + $0x14] sm:$0xf]
      %v974 = vld [vmem:[%s258 + $0x18] sm:$0xf]
      %v975 = vld [vmem:[%s258 + $0x1c] sm:$0xf]
      %v976 = vld [vmem:[%s258 + $0x20] sm:$0xf]
      %v977 = vld [vmem:[%s258 + $0x24] sm:$0xf]
      %v978 = vld [vmem:[%s258 + $0x28] sm:$0xf]
      %v979 = vld [vmem:[%s258 + $0x2c] sm:$0xf]
      %v980 = vld [vmem:[%s258 + $0x30] sm:$0xf]
      %v981 = vld [vmem:[%s258 + $0x34] sm:$0xf]
      %v982 = vld [vmem:[%s258 + $0x38] sm:$0xf]
      %v983 = vld [vmem:[%s258 + $0x3c] sm:$0xf]
      %v984 = vld [vmem:[%s258 + $0x40] sm:$0xf]
      %v985 = vld [vmem:[%s258 + $0x44] sm:$0xf]
      %v986 = vld [vmem:[%s258 + $0x48] sm:$0x1]
      %v987 = vld [vmem:[%s258 + $0x8] sm:$0xe]
      %v1005 = vunpack.c.l.b16 %v970
      %v1006 = vunpack.c.l.b16 %v971
      %v1007 = vunpack.c.l.b16 %v972
      %v1008 = vunpack.c.l.b16 %v973
      %v1009 = vunpack.c.l.b16 %v974
      %v1010 = vunpack.c.l.b16 %v975
      %v1011 = vunpack.c.l.b16 %v976
      %v1012 = vunpack.c.l.b16 %v977
      %v1013 = vunpack.c.l.b16 %v978
      %v1014 = vunpack.c.l.b16 %v979
      %v1015 = vunpack.c.l.b16 %v980
      %v1016 = vunpack.c.l.b16 %v981
      %v1017 = vunpack.c.l.b16 %v982
      %v1018 = vunpack.c.l.b16 %v983
      %v1019 = vunpack.c.l.b16 %v984
      %v1020 = vunpack.c.l.b16 %v985
      %v1021 = vunpack.c.l.b16 %v986
      %v1022 = vpack.c.b16 %v1006, %v1005
      %v1023 = vpack.c.b16 %v1008, %v1007
      %v1024 = vpack.c.b16 %v1010, %v1009
      %v1025 = vpack.c.b16 %v1012, %v1011
      %v1026 = vpack.c.b16 %v1014, %v1013
      %v1027 = vpack.c.b16 %v1016, %v1015
      %v1028 = vpack.c.b16 %v1018, %v1017
      %v1029 = vpack.c.b16 %v1020, %v1019
      %v1030 = vpack.c.b16 %v1021, %v1021
      %v1032 = vunpack.c.l.b16 %v987
      %v1033 = vpack.c.b16 %v1006, %v1032
      %v1035 = vshrl.u32 %v1033, 16
      %v1037 = vshll.u32 %v1033, 16
      %v1039 = vrot.slane %v1037, 1
      %v1040 = vor.u32 %v1035, %v1039
      %v1042 = vshll.u32 %v1023, 16
      %v1044 = vrot.slane %v1042, 1
      %v1045 = vsel %vm364, %v1040, %v1044
      %v1046 = vshrl.u32 %v1023, 16
      %v1048 = vor.u32 %v1046, %v1044
      %v1050 = vshll.u32 %v1024, 16
      %v1052 = vrot.slane %v1050, 1
      %v1053 = vsel %vm364, %v1048, %v1052
      %v1054 = vshrl.u32 %v1024, 16
      %v1056 = vor.u32 %v1054, %v1052
      %v1058 = vshll.u32 %v1025, 16
      %v1060 = vrot.slane %v1058, 1
      %v1061 = vsel %vm364, %v1056, %v1060
      %v1062 = vshrl.u32 %v1025, 16
      %v1064 = vor.u32 %v1062, %v1060
      %v1066 = vshll.u32 %v1026, 16
      %v1068 = vrot.slane %v1066, 1
      %v1069 = vsel %vm364, %v1064, %v1068
      %v1070 = vshrl.u32 %v1026, 16
      %v1072 = vor.u32 %v1070, %v1068
      %v1074 = vshll.u32 %v1027, 16
      %v1076 = vrot.slane %v1074, 1
      %v1077 = vsel %vm364, %v1072, %v1076
      %v1078 = vshrl.u32 %v1027, 16
      %v1080 = vor.u32 %v1078, %v1076
      %v1082 = vshll.u32 %v1028, 16
      %v1084 = vrot.slane %v1082, 1
      %v1085 = vsel %vm364, %v1080, %v1084
      %v1086 = vshrl.u32 %v1028, 16
      %v1088 = vor.u32 %v1086, %v1084
      %v1090 = vshll.u32 %v1029, 16
      %v1092 = vrot.slane %v1090, 1
      %v1093 = vsel %vm364, %v1088, %v1092
      %v1094 = vshrl.u32 %v1029, 16
      %v1096 = vor.u32 %v1094, %v1092
      %v1098 = vshll.u32 %v1030, 16
      %v1100 = vrot.slane %v1098, 1
      %v1101 = vsel %vm364, %v1096, %v1100
      %v1102 = vshrl.u32 %v1030, 16
      %s1104 = scalar_lea.vmem %s1, 256
      %v1105 = vld [vmem:[%s1104] sm:$0xf]
      %v1106 = vld [vmem:[%s1104 + $0x4] sm:$0xf]
      %v1107 = vld [vmem:[%s1104 + $0x8] sm:$0xf]
      %v1108 = vld [vmem:[%s1104 + $0xc] sm:$0xf]
      %v1109 = vld [vmem:[%s1104 + $0x10] sm:$0xf]
      %v1110 = vld [vmem:[%s1104 + $0x14] sm:$0xf]
      %v1111 = vld [vmem:[%s1104 + $0x18] sm:$0xf]
      %v1112 = vld [vmem:[%s1104 + $0x1c] sm:$0xf]
      %v1113 = vld [vmem:[%s1104 + $0x20] sm:$0xf]
      %v1114 = vld [vmem:[%s1104 + $0x24] sm:$0xf]
      %v1115 = vld [vmem:[%s1104 + $0x28] sm:$0xf]
      %v1116 = vld [vmem:[%s1104 + $0x2c] sm:$0xf]
      %v1117 = vld [vmem:[%s1104 + $0x30] sm:$0xf]
      %v1118 = vld [vmem:[%s1104 + $0x34] sm:$0xf]
      %v1119 = vld [vmem:[%s1104 + $0x38] sm:$0xf]
      %v1120 = vld [vmem:[%s1104 + $0x3c] sm:$0xf]
      %v1121 = vld [vmem:[%s1104 + $0x40] sm:$0xf]
      %v1122 = vld [vmem:[%s1104 + $0x44] sm:$0xf]
      %v1123 = vld [vmem:[%s1104 + $0x48] sm:$0xf]
      %v1124 = vld [vmem:[%s1104 + $0x4c] sm:$0xf]
      %v1125 = vld [vmem:[%s1104 + $0x50] sm:$0xf]
      %v1126 = vld [vmem:[%s1104 + $0x54] sm:$0xf]
      %v1127 = vld [vmem:[%s1104 + $0x58] sm:$0xf]
      %v1128 = vld [vmem:[%s1104 + $0x5c] sm:$0xf]
      %v1129 = vld [vmem:[%s1104 + $0x60] sm:$0xf]
      %v1130 = vld [vmem:[%s1104 + $0x64] sm:$0xf]
      %v1131 = vld [vmem:[%s1104 + $0x68] sm:$0xf]
      %v1132 = vld [vmem:[%s1104 + $0x6c] sm:$0xf]
      %v1133 = vld [vmem:[%s1104 + $0x70] sm:$0xf]
      %v1134 = vld [vmem:[%s1104 + $0x74] sm:$0xf]
      %v1135 = vld [vmem:[%s1104 + $0x78] sm:$0xf]
      %v1136 = vld [vmem:[%s1104 + $0x7c] sm:$0xf]
      %v1138 = vshrl.u32 %v1022, 16
      %v1140 = vshll.u32 %v1022, 16
      %v1142 = vrot.slane %v1140, 1
      %v1143 = vor.u32 %v1138, %v1142
      %v1144 = vsel %vm364, %v1143, %v1044
      %v1146 = vshrl.u32 %v1045, 16
      %v1148 = vshll.u32 %v1045, 16
      %v1150 = vrot.slane %v1148, 1
      %v1151 = vor.u32 %v1146, %v1150
      %v1153 = vshll.u32 %v1053, 16
      %v1155 = vrot.slane %v1153, 1
      %v1156 = vsel %vm364, %v1151, %v1155
      %v1157 = vshrl.u32 %v1053, 16
      %v1159 = vor.u32 %v1157, %v1155
      %v1161 = vshll.u32 %v1061, 16
      %v1163 = vrot.slane %v1161, 1
      %v1164 = vsel %vm364, %v1159, %v1163
      %v1165 = vshrl.u32 %v1061, 16
      %v1167 = vor.u32 %v1165, %v1163
      %v1169 = vshll.u32 %v1069, 16
      %v1171 = vrot.slane %v1169, 1
      %v1172 = vsel %vm364, %v1167, %v1171
      %v1173 = vshrl.u32 %v1069, 16
      %v1175 = vor.u32 %v1173, %v1171
      %v1177 = vshll.u32 %v1077, 16
      %v1179 = vrot.slane %v1177, 1
      %v1180 = vsel %vm364, %v1175, %v1179
      %v1181 = vshrl.u32 %v1077, 16
      %v1183 = vor.u32 %v1181, %v1179
      %v1185 = vshll.u32 %v1085, 16
      %v1187 = vrot.slane %v1185, 1
      %v1188 = vsel %vm364, %v1183, %v1187
      %v1189 = vshrl.u32 %v1085, 16
      %v1191 = vor.u32 %v1189, %v1187
      %v1193 = vshll.u32 %v1093, 16
      %v1195 = vrot.slane %v1193, 1
      %v1196 = vsel %vm364, %v1191, %v1195
      %v1197 = vshrl.u32 %v1093, 16
      %v1199 = vor.u32 %v1197, %v1195
      %v1201 = vshll.u32 %v1101, 16
      %v1203 = vrot.slane %v1201, 1
      %v1204 = vsel %vm364, %v1199, %v1203
      %v1205 = vshrl.u32 %v1101, 16
      %v1207 = vor.u32 %v1205, %v1203
      %v1209 = vshll.u32 %v1102, 16
      %v1211 = vrot.slane %v1209, 1
      %v1212 = vsel %vm364, %v1207, %v1211
      %v1261 = vunpack.c.l.b16 %v1105
      %v1262 = vunpack.c.l.b16 %v1106
      %v1263 = vunpack.c.l.b16 %v1107
      %v1264 = vunpack.c.l.b16 %v1108
      %v1265 = vunpack.c.l.b16 %v1109
      %v1266 = vunpack.c.l.b16 %v1110
      %v1267 = vunpack.c.l.b16 %v1111
      %v1268 = vunpack.c.l.b16 %v1112
      %v1269 = vunpack.c.l.b16 %v1113
      %v1270 = vunpack.c.l.b16 %v1114
      %v1271 = vunpack.c.l.b16 %v1115
      %v1272 = vunpack.c.l.b16 %v1116
      %v1273 = vunpack.c.l.b16 %v1117
      %v1274 = vunpack.c.l.b16 %v1118
      %v1275 = vunpack.c.l.b16 %v1119
      %v1276 = vunpack.c.l.b16 %v1120
      %v1277 = vunpack.c.l.b16 %v1121
      %v1278 = vunpack.c.l.b16 %v1122
      %v1279 = vunpack.c.l.b16 %v1123
      %v1280 = vunpack.c.l.b16 %v1124
      %v1281 = vunpack.c.l.b16 %v1125
      %v1282 = vunpack.c.l.b16 %v1126
      %v1283 = vunpack.c.l.b16 %v1127
      %v1284 = vunpack.c.l.b16 %v1128
      %v1285 = vunpack.c.l.b16 %v1129
      %v1286 = vunpack.c.l.b16 %v1130
      %v1287 = vunpack.c.l.b16 %v1131
      %v1288 = vunpack.c.l.b16 %v1132
      %v1289 = vunpack.c.l.b16 %v1133
      %v1290 = vunpack.c.l.b16 %v1134
      %v1291 = vunpack.c.l.b16 %v1135
      %v1292 = vunpack.c.l.b16 %v1136
      %v1293 = vpack.c.b16 %v1262, %v1261
      %v1294 = vpack.c.b16 %v1264, %v1263
      %v1295 = vpack.c.b16 %v1266, %v1265
      %v1296 = vpack.c.b16 %v1268, %v1267
      %v1297 = vpack.c.b16 %v1270, %v1269
      %v1298 = vpack.c.b16 %v1272, %v1271
      %v1299 = vpack.c.b16 %v1274, %v1273
      %v1300 = vpack.c.b16 %v1276, %v1275
      %v1301 = vpack.c.b16 %v1278, %v1277
      %v1302 = vpack.c.b16 %v1280, %v1279
      %v1303 = vpack.c.b16 %v1282, %v1281
      %v1304 = vpack.c.b16 %v1284, %v1283
      %v1305 = vpack.c.b16 %v1286, %v1285
      %v1306 = vpack.c.b16 %v1288, %v1287
      %v1307 = vpack.c.b16 %v1290, %v1289
      %v1308 = vpack.c.b16 %v1292, %v1291
      %1325 = vmatprep.subr.bf16.mxu0 0
      %1326 = vmatpush1.bf16.msra.mxu0 %v1293
      %1327 = vmatprep.subr.bf16.mxu0 0
      %1328 = vmatpush1.bf16.msra.mxu0 %v1294
      %1329 = vmatprep.subr.bf16.mxu0 0
      %1330 = vmatpush1.bf16.msra.mxu0 %v1295
      %1331 = vmatprep.subr.bf16.mxu0 0
      %1332 = vmatpush1.bf16.msra.mxu0 %v1296
      %1333 = vmatprep.subr.bf16.mxu0 0
      %1334 = vmatpush1.bf16.msra.mxu0 %v1297
      %1335 = vmatprep.subr.bf16.mxu0 0
      %1336 = vmatpush1.bf16.msra.mxu0 %v1298
      %1337 = vmatprep.subr.bf16.mxu0 0
      %1338 = vmatpush1.bf16.msra.mxu0 %v1299
      %1339 = vmatprep.subr.bf16.mxu0 0
      %1340 = vmatpush1.bf16.msra.mxu0 %v1300
      %1341 = vmatprep.subr.bf16.mxu0 0
      %1342 = vmatpush1.bf16.msra.mxu0 %v1301
      %1343 = vmatprep.subr.bf16.mxu0 0
      %1344 = vmatpush1.bf16.msra.mxu0 %v1302
      %1345 = vmatprep.subr.bf16.mxu0 0
      %1346 = vmatpush1.bf16.msra.mxu0 %v1303
      %1347 = vmatprep.subr.bf16.mxu0 0
      %1348 = vmatpush1.bf16.msra.mxu0 %v1304
      %1349 = vmatprep.subr.bf16.mxu0 0
      %1350 = vmatpush1.bf16.msra.mxu0 %v1305
      %1351 = vmatprep.subr.bf16.mxu0 0
      %1352 = vmatpush1.bf16.msra.mxu0 %v1306
      %1353 = vmatprep.subr.bf16.mxu0 0
      %1354 = vmatpush1.bf16.msra.mxu0 %v1307
      %1355 = vmatprep.subr.bf16.mxu0 0
      %1356 = vmatpush1.bf16.msra.mxu0 %v1308
      %1357 = vmatprep.mubr.bf16.mxu0 %v1156
      %1358 = vmatmul.mubr.bf16.gmra.mrb[0].mxu0 %v1144
      %v1359 = vpop.f32.mrb[0].mxu0
      %v1360 = vadd.f32 0.0, %v1359
      %v1361 = vpop.f32.mrb[0].mxu0
      %v1362 = vpop.f32.mrb[0].mxu0
      %v1363 = vadd.f32 0.0, %v1362
      %v1364 = vpop.f32.mrb[0].mxu0
      %1365 = vmatprep.mubr.bf16.mxu0 %v1164
      %1366 = vmatmul.mubr.bf16.gmra.mrb[0].mxu0 %v1053
      %v1367 = vpop.f32.mrb[0].mxu0
      %v1368 = vadd.f32 0.0, %v1367
      %v1369 = vpop.f32.mrb[0].mxu0
      %v1370 = vpop.f32.mrb[0].mxu0
      %v1371 = vadd.f32 0.0, %v1370
      %v1372 = vpop.f32.mrb[0].mxu0
      %1373 = vmatprep.mubr.bf16.mxu0 %v1172
      %1374 = vmatmul.mubr.bf16.gmra.mrb[0].mxu0 %v1061
      %v1375 = vpop.f32.mrb[0].mxu0
      %v1376 = vadd.f32 0.0, %v1375
      %v1377 = vpop.f32.mrb[0].mxu0
      %v1378 = vpop.f32.mrb[0].mxu0
      %v1379 = vadd.f32 0.0, %v1378
      %v1380 = vpop.f32.mrb[0].mxu0
      %1381 = vmatprep.mubr.bf16.mxu0 %v1180
      %1382 = vmatmul.mubr.bf16.gmra.mrb[0].mxu0 %v1069
      %v1383 = vpop.f32.mrb[0].mxu0
      %v1384 = vadd.f32 0.0, %v1383
      %v1385 = vpop.f32.mrb[0].mxu0
      %v1386 = vpop.f32.mrb[0].mxu0
      %v1387 = vadd.f32 0.0, %v1386
      %v1388 = vpop.f32.mrb[0].mxu0
      %1389 = vmatprep.mubr.bf16.mxu0 %v1188
      %1390 = vmatmul.mubr.bf16.gmra.mrb[0].mxu0 %v1077
      %v1391 = vpop.f32.mrb[0].mxu0
      %v1392 = vadd.f32 0.0, %v1391
      %v1393 = vpop.f32.mrb[0].mxu0
      %v1394 = vpop.f32.mrb[0].mxu0
      %v1395 = vadd.f32 0.0, %v1394
      %v1396 = vpop.f32.mrb[0].mxu0
      %1397 = vmatprep.mubr.bf16.mxu0 %v1196
      %1398 = vmatmul.mubr.bf16.gmra.mrb[0].mxu0 %v1085
      %v1399 = vpop.f32.mrb[0].mxu0
      %v1400 = vadd.f32 0.0, %v1399
      %v1401 = vpop.f32.mrb[0].mxu0
      %v1402 = vpop.f32.mrb[0].mxu0
      %v1403 = vadd.f32 0.0, %v1402
      %v1404 = vpop.f32.mrb[0].mxu0
      %1405 = vmatprep.mubr.bf16.mxu0 %v1204
      %1406 = vmatmul.mubr.bf16.gmra.mrb[0].mxu0 %v1093
      %v1407 = vpop.f32.mrb[0].mxu0
      %v1408 = vadd.f32 0.0, %v1407
      %v1409 = vpop.f32.mrb[0].mxu0
      %v1410 = vpop.f32.mrb[0].mxu0
      %v1411 = vadd.f32 0.0, %v1410
      %v1412 = vpop.f32.mrb[0].mxu0
      %1413 = vmatprep.mubr.bf16.mxu0 %v1212
      %1414 = vmatmul.mubr.bf16.gmra.mrb[0].mxu0 %v1101
      %v1415 = vpop.f32.mrb[0].mxu0
      %v1416 = vadd.f32 0.0, %v1415
      %v1417 = vpop.f32.mrb[0].mxu0
      %v1418 = vpop.f32.mrb[0].mxu0
      %v1419 = vadd.f32 0.0, %v1418
      %v1420 = vpop.f32.mrb[0].mxu0
      %1421 = vdwg.mxu0
      %v1422 = vadd.f32 %v908, %v1360
      %v1423 = vadd.f32 %v911, %v1363
      %v1424 = vadd.f32 %v916, %v1368
      %v1425 = vadd.f32 %v919, %v1371
      %v1426 = vadd.f32 %v924, %v1376
      %v1427 = vadd.f32 %v927, %v1379
      %v1428 = vadd.f32 %v932, %v1384
      %v1429 = vadd.f32 %v935, %v1387
      %v1430 = vadd.f32 %v940, %v1392
      %v1431 = vadd.f32 %v943, %v1395
      %v1432 = vadd.f32 %v948, %v1400
      %v1433 = vadd.f32 %v951, %v1403
      %v1434 = vadd.f32 %v956, %v1408
      %v1435 = vadd.f32 %v959, %v1411
      %v1436 = vadd.f32 %v964, %v1416
      %v1437 = vadd.f32 %v967, %v1419
      %v1438 = vld [vmem:[%s258 + $0x10] sm:$0xf]
      %v1439 = vld [vmem:[%s258 + $0x14] sm:$0xf]
      %v1440 = vld [vmem:[%s258 + $0x18] sm:$0xf]
      %v1441 = vld [vmem:[%s258 + $0x1c] sm:$0xf]
      %v1442 = vld [vmem:[%s258 + $0x20] sm:$0xf]
      %v1443 = vld [vmem:[%s258 + $0x24] sm:$0xf]
      %v1444 = vld [vmem:[%s258 + $0x28] sm:$0xf]
      %v1445 = vld [vmem:[%s258 + $0x2c] sm:$0xf]
      %v1446 = vld [vmem:[%s258 + $0x30] sm:$0xf]
      %v1447 = vld [vmem:[%s258 + $0x34] sm:$0xf]
      %v1448 = vld [vmem:[%s258 + $0x38] sm:$0xf]
      %v1449 = vld [vmem:[%s258 + $0x3c] sm:$0xf]
      %v1450 = vld [vmem:[%s258 + $0x40] sm:$0xf]
      %v1451 = vld [vmem:[%s258 + $0x44] sm:$0xf]
      %v1452 = vld [vmem:[%s258 + $0x48] sm:$0xf]
      %v1453 = vld [vmem:[%s258 + $0x4c] sm:$0xf]
      %v1454 = vld [vmem:[%s258 + $0x50] sm:$0x1]
      %v1471 = vunpack.c.l.b16 %v1438
      %v1472 = vunpack.c.l.b16 %v1439
      %v1473 = vunpack.c.l.b16 %v1440
      %v1474 = vunpack.c.l.b16 %v1441
      %v1475 = vunpack.c.l.b16 %v1442
      %v1476 = vunpack.c.l.b16 %v1443
      %v1477 = vunpack.c.l.b16 %v1444
      %v1478 = vunpack.c.l.b16 %v1445
      %v1479 = vunpack.c.l.b16 %v1446
      %v1480 = vunpack.c.l.b16 %v1447
      %v1481 = vunpack.c.l.b16 %v1448
      %v1482 = vunpack.c.l.b16 %v1449
      %v1483 = vunpack.c.l.b16 %v1450
      %v1484 = vunpack.c.l.b16 %v1451
      %v1485 = vunpack.c.l.b16 %v1452
      %v1486 = vunpack.c.l.b16 %v1453
      %v1487 = vpack.c.b16 %v1472, %v1471
      %v1488 = vpack.c.b16 %v1474, %v1473
      %v1489 = vpack.c.b16 %v1476, %v1475
      %v1490 = vpack.c.b16 %v1478, %v1477
      %v1491 = vpack.c.b16 %v1480, %v1479
      %v1492 = vpack.c.b16 %v1482, %v1481
      %v1493 = vpack.c.b16 %v1484, %v1483
      %v1494 = vpack.c.b16 %v1486, %v1485
      %v1504 = vunpack.c.l.b16 %v1454
      %v1505 = vpack.c.b16 %v1504, %v1504
      %v1507 = vshrl.u32 %v1487, 16
      %v1509 = vshll.u32 %v1487, 16
      %v1511 = vrot.slane %v1509, 1
      %v1512 = vor.u32 %v1507, %v1511
      %v1514 = vshll.u32 %v1488, 16
      %v1516 = vrot.slane %v1514, 1
      %v1517 = vsel %vm364, %v1512, %v1516
      %v1518 = vshrl.u32 %v1488, 16
      %v1520 = vor.u32 %v1518, %v1516
      %v1522 = vshll.u32 %v1489, 16
      %v1524 = vrot.slane %v1522, 1
      %v1525 = vsel %vm364, %v1520, %v1524
      %v1526 = vshrl.u32 %v1489, 16
      %v1528 = vor.u32 %v1526, %v1524
      %v1530 = vshll.u32 %v1490, 16
      %v1532 = vrot.slane %v1530, 1
      %v1533 = vsel %vm364, %v1528, %v1532
      %v1534 = vshrl.u32 %v1490, 16
      %v1536 = vor.u32 %v1534, %v1532
      %v1538 = vshll.u32 %v1491, 16
      %v1540 = vrot.slane %v1538, 1
      %v1541 = vsel %vm364, %v1536, %v1540
      %v1542 = vshrl.u32 %v1491, 16
      %v1544 = vor.u32 %v1542, %v1540
      %v1546 = vshll.u32 %v1492, 16
      %v1548 = vrot.slane %v1546, 1
      %v1549 = vsel %vm364, %v1544, %v1548
      %v1550 = vshrl.u32 %v1492, 16
      %v1552 = vor.u32 %v1550, %v1548
      %v1554 = vshll.u32 %v1493, 16
      %v1556 = vrot.slane %v1554, 1
      %v1557 = vsel %vm364, %v1552, %v1556
      %v1558 = vshrl.u32 %v1493, 16
      %v1560 = vor.u32 %v1558, %v1556
      %v1562 = vshll.u32 %v1494, 16
      %v1564 = vrot.slane %v1562, 1
      %v1565 = vsel %vm364, %v1560, %v1564
      %v1566 = vshrl.u32 %v1494, 16
      %v1568 = vor.u32 %v1566, %v1564
      %v1570 = vshll.u32 %v1505, 16
      %v1572 = vrot.slane %v1570, 1
      %v1573 = vsel %vm364, %v1568, %v1572
      %s1582 = scalar_lea.vmem %s1, 384
      %v1583 = vld [vmem:[%s1582] sm:$0xf]
      %v1584 = vld [vmem:[%s1582 + $0x4] sm:$0xf]
      %v1585 = vld [vmem:[%s1582 + $0x8] sm:$0xf]
      %v1586 = vld [vmem:[%s1582 + $0xc] sm:$0xf]
      %v1587 = vld [vmem:[%s1582 + $0x10] sm:$0xf]
      %v1588 = vld [vmem:[%s1582 + $0x14] sm:$0xf]
      %v1589 = vld [vmem:[%s1582 + $0x18] sm:$0xf]
      %v1590 = vld [vmem:[%s1582 + $0x1c] sm:$0xf]
      %v1591 = vld [vmem:[%s1582 + $0x20] sm:$0xf]
      %v1592 = vld [vmem:[%s1582 + $0x24] sm:$0xf]
      %v1593 = vld [vmem:[%s1582 + $0x28] sm:$0xf]
      %v1594 = vld [vmem:[%s1582 + $0x2c] sm:$0xf]
      %v1595 = vld [vmem:[%s1582 + $0x30] sm:$0xf]
      %v1596 = vld [vmem:[%s1582 + $0x34] sm:$0xf]
      %v1597 = vld [vmem:[%s1582 + $0x38] sm:$0xf]
      %v1598 = vld [vmem:[%s1582 + $0x3c] sm:$0xf]
      %v1599 = vld [vmem:[%s1582 + $0x40] sm:$0xf]
      %v1600 = vld [vmem:[%s1582 + $0x44] sm:$0xf]
      %v1601 = vld [vmem:[%s1582 + $0x48] sm:$0xf]
      %v1602 = vld [vmem:[%s1582 + $0x4c] sm:$0xf]
      %v1603 = vld [vmem:[%s1582 + $0x50] sm:$0xf]
      %v1604 = vld [vmem:[%s1582 + $0x54] sm:$0xf]
      %v1605 = vld [vmem:[%s1582 + $0x58] sm:$0xf]
      %v1606 = vld [vmem:[%s1582 + $0x5c] sm:$0xf]
      %v1607 = vld [vmem:[%s1582 + $0x60] sm:$0xf]
      %v1608 = vld [vmem:[%s1582 + $0x64] sm:$0xf]
      %v1609 = vld [vmem:[%s1582 + $0x68] sm:$0xf]
      %v1610 = vld [vmem:[%s1582 + $0x6c] sm:$0xf]
      %v1611 = vld [vmem:[%s1582 + $0x70] sm:$0xf]
      %v1612 = vld [vmem:[%s1582 + $0x74] sm:$0xf]
      %v1613 = vld [vmem:[%s1582 + $0x78] sm:$0xf]
      %v1614 = vld [vmem:[%s1582 + $0x7c] sm:$0xf]
      %v1647 = vunpack.c.l.b16 %v1583
      %v1648 = vunpack.c.l.b16 %v1584
      %v1649 = vunpack.c.l.b16 %v1585
      %v1650 = vunpack.c.l.b16 %v1586
      %v1651 = vunpack.c.l.b16 %v1587
      %v1652 = vunpack.c.l.b16 %v1588
      %v1653 = vunpack.c.l.b16 %v1589
      %v1654 = vunpack.c.l.b16 %v1590
      %v1655 = vunpack.c.l.b16 %v1591
      %v1656 = vunpack.c.l.b16 %v1592
      %v1657 = vunpack.c.l.b16 %v1593
      %v1658 = vunpack.c.l.b16 %v1594
      %v1659 = vunpack.c.l.b16 %v1595
      %v1660 = vunpack.c.l.b16 %v1596
      %v1661 = vunpack.c.l.b16 %v1597
      %v1662 = vunpack.c.l.b16 %v1598
      %v1663 = vunpack.c.l.b16 %v1599
      %v1664 = vunpack.c.l.b16 %v1600
      %v1665 = vunpack.c.l.b16 %v1601
      %v1666 = vunpack.c.l.b16 %v1602
      %v1667 = vunpack.c.l.b16 %v1603
      %v1668 = vunpack.c.l.b16 %v1604
      %v1669 = vunpack.c.l.b16 %v1605
      %v1670 = vunpack.c.l.b16 %v1606
      %v1671 = vunpack.c.l.b16 %v1607
      %v1672 = vunpack.c.l.b16 %v1608
      %v1673 = vunpack.c.l.b16 %v1609
      %v1674 = vunpack.c.l.b16 %v1610
      %v1675 = vunpack.c.l.b16 %v1611
      %v1676 = vunpack.c.l.b16 %v1612
      %v1677 = vunpack.c.l.b16 %v1613
      %v1678 = vunpack.c.l.b16 %v1614
      %v1679 = vpack.c.b16 %v1648, %v1647
      %v1680 = vpack.c.b16 %v1650, %v1649
      %v1681 = vpack.c.b16 %v1652, %v1651
      %v1682 = vpack.c.b16 %v1654, %v1653
      %v1683 = vpack.c.b16 %v1656, %v1655
      %v1684 = vpack.c.b16 %v1658, %v1657
      %v1685 = vpack.c.b16 %v1660, %v1659
      %v1686 = vpack.c.b16 %v1662, %v1661
      %v1687 = vpack.c.b16 %v1664, %v1663
      %v1688 = vpack.c.b16 %v1666, %v1665
      %v1689 = vpack.c.b16 %v1668, %v1667
      %v1690 = vpack.c.b16 %v1670, %v1669
      %v1691 = vpack.c.b16 %v1672, %v1671
      %v1692 = vpack.c.b16 %v1674, %v1673
      %v1693 = vpack.c.b16 %v1676, %v1675
      %v1694 = vpack.c.b16 %v1678, %v1677
      %1711 = vmatprep.subr.bf16.mxu0 0
      %1712 = vmatpush1.bf16.msra.mxu0 %v1679
      %1713 = vmatprep.subr.bf16.mxu0 0
      %1714 = vmatpush1.bf16.msra.mxu0 %v1680
      %1715 = vmatprep.subr.bf16.mxu0 0
      %1716 = vmatpush1.bf16.msra.mxu0 %v1681
      %1717 = vmatprep.subr.bf16.mxu0 0
      %1718 = vmatpush1.bf16.msra.mxu0 %v1682
      %1719 = vmatprep.subr.bf16.mxu0 0
      %1720 = vmatpush1.bf16.msra.mxu0 %v1683
      %1721 = vmatprep.subr.bf16.mxu0 0
      %1722 = vmatpush1.bf16.msra.mxu0 %v1684
      %1723 = vmatprep.subr.bf16.mxu0 0
      %1724 = vmatpush1.bf16.msra.mxu0 %v1685
      %1725 = vmatprep.subr.bf16.mxu0 0
      %1726 = vmatpush1.bf16.msra.mxu0 %v1686
      %1727 = vmatprep.subr.bf16.mxu0 0
      %1728 = vmatpush1.bf16.msra.mxu0 %v1687
      %1729 = vmatprep.subr.bf16.mxu0 0
      %1730 = vmatpush1.bf16.msra.mxu0 %v1688
      %1731 = vmatprep.subr.bf16.mxu0 0
      %1732 = vmatpush1.bf16.msra.mxu0 %v1689
      %1733 = vmatprep.subr.bf16.mxu0 0
      %1734 = vmatpush1.bf16.msra.mxu0 %v1690
      %1735 = vmatprep.subr.bf16.mxu0 0
      %1736 = vmatpush1.bf16.msra.mxu0 %v1691
      %1737 = vmatprep.subr.bf16.mxu0 0
      %1738 = vmatpush1.bf16.msra.mxu0 %v1692
      %1739 = vmatprep.subr.bf16.mxu0 0
      %1740 = vmatpush1.bf16.msra.mxu0 %v1693
      %1741 = vmatprep.subr.bf16.mxu0 0
      %1742 = vmatpush1.bf16.msra.mxu0 %v1694
      %1743 = vmatprep.mubr.bf16.mxu0 %v1517
      %1744 = vmatmul.mubr.bf16.gmra.mrb[0].mxu0 %v1487
      %v1745 = vpop.f32.mrb[0].mxu0
      %v1746 = vadd.f32 0.0, %v1745
      %v1747 = vpop.f32.mrb[0].mxu0
      %v1748 = vpop.f32.mrb[0].mxu0
      %v1749 = vadd.f32 0.0, %v1748
      %v1750 = vpop.f32.mrb[0].mxu0
      %1751 = vmatprep.mubr.bf16.mxu0 %v1525
      %1752 = vmatmul.mubr.bf16.gmra.mrb[0].mxu0 %v1488
      %v1753 = vpop.f32.mrb[0].mxu0
      %v1754 = vadd.f32 0.0, %v1753
      %v1755 = vpop.f32.mrb[0].mxu0
      %v1756 = vpop.f32.mrb[0].mxu0
      %v1757 = vadd.f32 0.0, %v1756
      %v1758 = vpop.f32.mrb[0].mxu0
      %1759 = vmatprep.mubr.bf16.mxu0 %v1533
      %1760 = vmatmul.mubr.bf16.gmra.mrb[0].mxu0 %v1489
      %v1761 = vpop.f32.mrb[0].mxu0
      %v1762 = vadd.f32 0.0, %v1761
      %v1763 = vpop.f32.mrb[0].mxu0
      %v1764 = vpop.f32.mrb[0].mxu0
      %v1765 = vadd.f32 0.0, %v1764
      %v1766 = vpop.f32.mrb[0].mxu0
      %1767 = vmatprep.mubr.bf16.mxu0 %v1541
      %1768 = vmatmul.mubr.bf16.gmra.mrb[0].mxu0 %v1490
      %v1769 = vpop.f32.mrb[0].mxu0
      %v1770 = vadd.f32 0.0, %v1769
      %v1771 = vpop.f32.mrb[0].mxu0
      %v1772 = vpop.f32.mrb[0].mxu0
      %v1773 = vadd.f32 0.0, %v1772
      %v1774 = vpop.f32.mrb[0].mxu0
      %1775 = vmatprep.mubr.bf16.mxu0 %v1549
      %1776 = vmatmul.mubr.bf16.gmra.mrb[0].mxu0 %v1491
      %v1777 = vpop.f32.mrb[0].mxu0
      %v1778 = vadd.f32 0.0, %v1777
      %v1779 = vpop.f32.mrb[0].mxu0
      %v1780 = vpop.f32.mrb[0].mxu0
      %v1781 = vadd.f32 0.0, %v1780
      %v1782 = vpop.f32.mrb[0].mxu0
      %1783 = vmatprep.mubr.bf16.mxu0 %v1557
      %1784 = vmatmul.mubr.bf16.gmra.mrb[0].mxu0 %v1492
      %v1785 = vpop.f32.mrb[0].mxu0
      %v1786 = vadd.f32 0.0, %v1785
      %v1787 = vpop.f32.mrb[0].mxu0
      %v1788 = vpop.f32.mrb[0].mxu0
      %v1789 = vadd.f32 0.0, %v1788
      %v1790 = vpop.f32.mrb[0].mxu0
      %1791 = vmatprep.mubr.bf16.mxu0 %v1565
      %1792 = vmatmul.mubr.bf16.gmra.mrb[0].mxu0 %v1493
      %v1793 = vpop.f32.mrb[0].mxu0
      %v1794 = vadd.f32 0.0, %v1793
      %v1795 = vpop.f32.mrb[0].mxu0
      %v1796 = vpop.f32.mrb[0].mxu0
      %v1797 = vadd.f32 0.0, %v1796
      %v1798 = vpop.f32.mrb[0].mxu0
      %1799 = vmatprep.mubr.bf16.mxu0 %v1573
      %1800 = vmatmul.mubr.bf16.gmra.mrb[0].mxu0 %v1494
      %v1801 = vpop.f32.mrb[0].mxu0
      %v1802 = vadd.f32 0.0, %v1801
      %v1803 = vpop.f32.mrb[0].mxu0
      %v1804 = vpop.f32.mrb[0].mxu0
      %v1805 = vadd.f32 0.0, %v1804
      %v1806 = vpop.f32.mrb[0].mxu0
      %1807 = vdwg.mxu0
      %v1808 = vadd.f32 %v1422, %v1746
      %v1809 = vadd.f32 %v1423, %v1749
      %v1810 = vadd.f32 %v1424, %v1754
      %v1811 = vadd.f32 %v1425, %v1757
      %v1812 = vadd.f32 %v1426, %v1762
      %v1813 = vadd.f32 %v1427, %v1765
      %v1814 = vadd.f32 %v1428, %v1770
      %v1815 = vadd.f32 %v1429, %v1773
      %v1816 = vadd.f32 %v1430, %v1778
      %v1817 = vadd.f32 %v1431, %v1781
      %v1818 = vadd.f32 %v1432, %v1786
      %v1819 = vadd.f32 %v1433, %v1789
      %v1820 = vadd.f32 %v1434, %v1794
      %v1821 = vadd.f32 %v1435, %v1797
      %v1822 = vadd.f32 %v1436, %v1802
      %v1823 = vadd.f32 %v1437, %v1805
      %v1824 = vld [vmem:[%s258 + $0x10] sm:$0xe]
      %v1826 = vunpack.c.l.b16 %v1824
      %v1827 = vpack.c.b16 %v1472, %v1826
      %v1828 = vrot.slane %v345, 7
      %v1829 = vsel %vm484, %v1828, %v485
      %s1830 = scalar_lea.vmem %s1, 512
      %v1831 = vld [vmem:[%s1830] sm:$0xf]
      %v1832 = vld [vmem:[%s1830 + $0x4] sm:$0xf]
      %v1833 = vld [vmem:[%s1830 + $0x8] sm:$0xf]
      %v1834 = vld [vmem:[%s1830 + $0xc] sm:$0xf]
      %v1835 = vld [vmem:[%s1830 + $0x10] sm:$0xf]
      %v1836 = vld [vmem:[%s1830 + $0x14] sm:$0xf]
      %v1837 = vld [vmem:[%s1830 + $0x18] sm:$0xf]
      %v1838 = vld [vmem:[%s1830 + $0x1c] sm:$0xf]
      %v1839 = vld [vmem:[%s1830 + $0x20] sm:$0xf]
      %v1840 = vld [vmem:[%s1830 + $0x24] sm:$0xf]
      %v1841 = vld [vmem:[%s1830 + $0x28] sm:$0xf]
      %v1842 = vld [vmem:[%s1830 + $0x2c] sm:$0xf]
      %v1843 = vld [vmem:[%s1830 + $0x30] sm:$0xf]
      %v1844 = vld [vmem:[%s1830 + $0x34] sm:$0xf]
      %v1845 = vld [vmem:[%s1830 + $0x38] sm:$0xf]
      %v1846 = vld [vmem:[%s1830 + $0x3c] sm:$0xf]
      %v1847 = vld [vmem:[%s1830 + $0x40] sm:$0xf]
      %v1848 = vld [vmem:[%s1830 + $0x44] sm:$0xf]
      %v1849 = vld [vmem:[%s1830 + $0x48] sm:$0xf]
      %v1850 = vld [vmem:[%s1830 + $0x4c] sm:$0xf]
      %v1851 = vld [vmem:[%s1830 + $0x50] sm:$0xf]
      %v1852 = vld [vmem:[%s1830 + $0x54] sm:$0xf]
      %v1853 = vld [vmem:[%s1830 + $0x58] sm:$0xf]
      %v1854 = vld [vmem:[%s1830 + $0x5c] sm:$0xf]
      %v1855 = vld [vmem:[%s1830 + $0x60] sm:$0xf]
      %v1856 = vld [vmem:[%s1830 + $0x64] sm:$0xf]
      %v1857 = vld [vmem:[%s1830 + $0x68] sm:$0xf]
      %v1858 = vld [vmem:[%s1830 + $0x6c] sm:$0xf]
      %v1859 = vld [vmem:[%s1830 + $0x70] sm:$0xf]
      %v1860 = vld [vmem:[%s1830 + $0x74] sm:$0xf]
      %v1861 = vld [vmem:[%s1830 + $0x78] sm:$0xf]
      %v1862 = vld [vmem:[%s1830 + $0x7c] sm:$0xf]
      %v1863 = vrot.slane %v1827, 1
      %v1864 = vrot.slane %v1488, 1
      %v1865 = vsel %vm533, %v1863, %v1864
      %v1866 = vrot.slane %v1828, 1
      %v1867 = vrot.slane %v1829, 1
      %v1868 = vsel %vm533, %v1866, %v1867
      %v1869 = vrot.slane %v1489, 1
      %v1870 = vsel %vm533, %v1864, %v1869
      %v1871 = vsel %vm533, %v1867, %v538
      %v1872 = vrot.slane %v1490, 1
      %v1873 = vsel %vm533, %v1869, %v1872
      %v1874 = vrot.slane %v1491, 1
      %v1875 = vsel %vm533, %v1872, %v1874
      %v1876 = vrot.slane %v1492, 1
      %v1877 = vsel %vm533, %v1874, %v1876
      %v1878 = vrot.slane %v1493, 1
      %v1879 = vsel %vm533, %v1876, %v1878
      %v1880 = vrot.slane %v1494, 1
      %v1881 = vsel %vm533, %v1878, %v1880
      %v1882 = vrot.slane %v1505, 1
      %v1883 = vsel %vm533, %v1880, %v1882
      %v1884 = vrot.slane %v496, 1
      %v1885 = vsel %vm533, %v558, %v1884
      %v1929 = vunpack.c.l.b16 %v1831
      %v1930 = vunpack.c.l.b16 %v1832
      %v1931 = vunpack.c.l.b16 %v1833
      %v1932 = vunpack.c.l.b16 %v1834
      %v1933 = vunpack.c.l.b16 %v1835
      %v1934 = vunpack.c.l.b16 %v1836
      %v1935 = vunpack.c.l.b16 %v1837
      %v1936 = vunpack.c.l.b16 %v1838
      %v1937 = vunpack.c.l.b16 %v1839
      %v1938 = vunpack.c.l.b16 %v1840
      %v1939 = vunpack.c.l.b16 %v1841
      %v1940 = vunpack.c.l.b16 %v1842
      %v1941 = vunpack.c.l.b16 %v1843
      %v1942 = vunpack.c.l.b16 %v1844
      %v1943 = vunpack.c.l.b16 %v1845
      %v1944 = vunpack.c.l.b16 %v1846
      %v1945 = vunpack.c.l.b16 %v1847
      %v1946 = vunpack.c.l.b16 %v1848
      %v1947 = vunpack.c.l.b16 %v1849
      %v1948 = vunpack.c.l.b16 %v1850
      %v1949 = vunpack.c.l.b16 %v1851
      %v1950 = vunpack.c.l.b16 %v1852
      %v1951 = vunpack.c.l.b16 %v1853
      %v1952 = vunpack.c.l.b16 %v1854
      %v1953 = vunpack.c.l.b16 %v1855
      %v1954 = vunpack.c.l.b16 %v1856
      %v1955 = vunpack.c.l.b16 %v1857
      %v1956 = vunpack.c.l.b16 %v1858
      %v1957 = vunpack.c.l.b16 %v1859
      %v1958 = vunpack.c.l.b16 %v1860
      %v1959 = vunpack.c.l.b16 %v1861
      %v1960 = vunpack.c.l.b16 %v1862
      %v1961 = vpack.c.b16 %v1930, %v1929
      %v1962 = vpack.c.b16 %v1932, %v1931
      %v1963 = vpack.c.b16 %v1934, %v1933
      %v1964 = vpack.c.b16 %v1936, %v1935
      %v1965 = vpack.c.b16 %v1938, %v1937
      %v1966 = vpack.c.b16 %v1940, %v1939
      %v1967 = vpack.c.b16 %v1942, %v1941
      %v1968 = vpack.c.b16 %v1944, %v1943
      %v1969 = vpack.c.b16 %v1946, %v1945
      %v1970 = vpack.c.b16 %v1948, %v1947
      %v1971 = vpack.c.b16 %v1950, %v1949
      %v1972 = vpack.c.b16 %v1952, %v1951
      %v1973 = vpack.c.b16 %v1954, %v1953
      %v1974 = vpack.c.b16 %v1956, %v1955
      %v1975 = vpack.c.b16 %v1958, %v1957
      %v1976 = vpack.c.b16 %v1960, %v1959
      %1993 = vmatprep.subr.bf16.mxu0 0
      %1994 = vmatpush1.bf16.msra.mxu0 %v1961
      %1995 = vmatprep.subr.bf16.mxu0 0
      %1996 = vmatpush1.bf16.msra.mxu0 %v1962
      %1997 = vmatprep.subr.bf16.mxu0 0
      %1998 = vmatpush1.bf16.msra.mxu0 %v1963
      %1999 = vmatprep.subr.bf16.mxu0 0
      %2000 = vmatpush1.bf16.msra.mxu0 %v1964
      %2001 = vmatprep.subr.bf16.mxu0 0
      %2002 = vmatpush1.bf16.msra.mxu0 %v1965
      %2003 = vmatprep.subr.bf16.mxu0 0
      %2004 = vmatpush1.bf16.msra.mxu0 %v1966
      %2005 = vmatprep.subr.bf16.mxu0 0
      %2006 = vmatpush1.bf16.msra.mxu0 %v1967
      %2007 = vmatprep.subr.bf16.mxu0 0
      %2008 = vmatpush1.bf16.msra.mxu0 %v1968
      %2009 = vmatprep.subr.bf16.mxu0 0
      %2010 = vmatpush1.bf16.msra.mxu0 %v1969
      %2011 = vmatprep.subr.bf16.mxu0 0
      %2012 = vmatpush1.bf16.msra.mxu0 %v1970
      %2013 = vmatprep.subr.bf16.mxu0 0
      %2014 = vmatpush1.bf16.msra.mxu0 %v1971
      %2015 = vmatprep.subr.bf16.mxu0 0
      %2016 = vmatpush1.bf16.msra.mxu0 %v1972
      %2017 = vmatprep.subr.bf16.mxu0 0
      %2018 = vmatpush1.bf16.msra.mxu0 %v1973
      %2019 = vmatprep.subr.bf16.mxu0 0
      %2020 = vmatpush1.bf16.msra.mxu0 %v1974
      %2021 = vmatprep.subr.bf16.mxu0 0
      %2022 = vmatpush1.bf16.msra.mxu0 %v1975
      %2023 = vmatprep.subr.bf16.mxu0 0
      %2024 = vmatpush1.bf16.msra.mxu0 %v1976
      %2025 = vmatprep.mubr.bf16.mxu0 %v1868
      %2026 = vmatmul.mubr.bf16.gmra.mrb[0].mxu0 %v1865
      %v2027 = vpop.f32.mrb[0].mxu0
      %v2028 = vadd.f32 0.0, %v2027
      %v2029 = vpop.f32.mrb[0].mxu0
      %v2030 = vpop.f32.mrb[0].mxu0
      %v2031 = vadd.f32 0.0, %v2030
      %v2032 = vpop.f32.mrb[0].mxu0
      %2033 = vmatprep.mubr.bf16.mxu0 %v1871
      %2034 = vmatmul.mubr.bf16.gmra.mrb[0].mxu0 %v1870
      %v2035 = vpop.f32.mrb[0].mxu0
      %v2036 = vadd.f32 0.0, %v2035
      %v2037 = vpop.f32.mrb[0].mxu0
      %v2038 = vpop.f32.mrb[0].mxu0
      %v2039 = vadd.f32 0.0, %v2038
      %v2040 = vpop.f32.mrb[0].mxu0
      %2041 = vmatprep.mubr.bf16.mxu0 %v543
      %2042 = vmatmul.mubr.bf16.gmra.mrb[0].mxu0 %v1873
      %v2043 = vpop.f32.mrb[0].mxu0
      %v2044 = vadd.f32 0.0, %v2043
      %v2045 = vpop.f32.mrb[0].mxu0
      %v2046 = vpop.f32.mrb[0].mxu0
      %v2047 = vadd.f32 0.0, %v2046
      %v2048 = vpop.f32.mrb[0].mxu0
      %2049 = vmatprep.mubr.bf16.mxu0 %v547
      %2050 = vmatmul.mubr.bf16.gmra.mrb[0].mxu0 %v1875
      %v2051 = vpop.f32.mrb[0].mxu0
      %v2052 = vadd.f32 0.0, %v2051
      %v2053 = vpop.f32.mrb[0].mxu0
      %v2054 = vpop.f32.mrb[0].mxu0
      %v2055 = vadd.f32 0.0, %v2054
      %v2056 = vpop.f32.mrb[0].mxu0
      %2057 = vmatprep.mubr.bf16.mxu0 %v551
      %2058 = vmatmul.mubr.bf16.gmra.mrb[0].mxu0 %v1877
      %v2059 = vpop.f32.mrb[0].mxu0
      %v2060 = vadd.f32 0.0, %v2059
      %v2061 = vpop.f32.mrb[0].mxu0
      %v2062 = vpop.f32.mrb[0].mxu0
      %v2063 = vadd.f32 0.0, %v2062
      %v2064 = vpop.f32.mrb[0].mxu0
      %2065 = vmatprep.mubr.bf16.mxu0 %v555
      %2066 = vmatmul.mubr.bf16.gmra.mrb[0].mxu0 %v1879
      %v2067 = vpop.f32.mrb[0].mxu0
      %v2068 = vadd.f32 0.0, %v2067
      %v2069 = vpop.f32.mrb[0].mxu0
      %v2070 = vpop.f32.mrb[0].mxu0
      %v2071 = vadd.f32 0.0, %v2070
      %v2072 = vpop.f32.mrb[0].mxu0
      %2073 = vmatprep.mubr.bf16.mxu0 %v559
      %2074 = vmatmul.mubr.bf16.gmra.mrb[0].mxu0 %v1881
      %v2075 = vpop.f32.mrb[0].mxu0
      %v2076 = vadd.f32 0.0, %v2075
      %v2077 = vpop.f32.mrb[0].mxu0
      %v2078 = vpop.f32.mrb[0].mxu0
      %v2079 = vadd.f32 0.0, %v2078
      %v2080 = vpop.f32.mrb[0].mxu0
      %2081 = vmatprep.mubr.bf16.mxu0 %v1885
      %2082 = vmatmul.mubr.bf16.gmra.mrb[0].mxu0 %v1883
      %v2083 = vpop.f32.mrb[0].mxu0
      %v2084 = vadd.f32 0.0, %v2083
      %v2085 = vpop.f32.mrb[0].mxu0
      %v2086 = vpop.f32.mrb[0].mxu0
      %v2087 = vadd.f32 0.0, %v2086
      %v2088 = vpop.f32.mrb[0].mxu0
      %2089 = vdwg.mxu0
      %v2090 = vadd.f32 %v1808, %v2028
      %v2091 = vadd.f32 %v1809, %v2031
      %v2092 = vadd.f32 %v1810, %v2036
      %v2093 = vadd.f32 %v1811, %v2039
      %v2094 = vadd.f32 %v1812, %v2044
      %v2095 = vadd.f32 %v1813, %v2047
      %v2096 = vadd.f32 %v1814, %v2052
      %v2097 = vadd.f32 %v1815, %v2055
      %v2098 = vadd.f32 %v1816, %v2060
      %v2099 = vadd.f32 %v1817, %v2063
      %v2100 = vadd.f32 %v1818, %v2068
      %v2101 = vadd.f32 %v1819, %v2071
      %v2102 = vadd.f32 %v1820, %v2076
      %v2103 = vadd.f32 %v1821, %v2079
      %v2104 = vadd.f32 %v1822, %v2084
      %v2105 = vadd.f32 %v1823, %v2087
      %v2106 = vld [vmem:[%s2] sm:$0x1]
      %v2108 = vlaneseq
      %v2109 = vshrl.u32 %v2108, 7
      %v2110 = vsub.s32 0, %v2109
      %v2111 = vrot.slane %v2106, %v2110
      %v2113 = vadd.f32 %v2090, %v2111
      %v2114 = vadd.f32 %v2091, %v2111
      %v2115 = vadd.f32 %v2092, %v2111
      %v2116 = vadd.f32 %v2093, %v2111
      %v2117 = vadd.f32 %v2094, %v2111
      %v2118 = vadd.f32 %v2095, %v2111
      %v2119 = vadd.f32 %v2096, %v2111
      %v2120 = vadd.f32 %v2097, %v2111
      %v2121 = vadd.f32 %v2098, %v2111
      %v2122 = vadd.f32 %v2099, %v2111
      %v2123 = vadd.f32 %v2100, %v2111
      %v2124 = vadd.f32 %v2101, %v2111
      %v2125 = vadd.f32 %v2102, %v2111
      %v2126 = vadd.f32 %v2103, %v2111
      %v2127 = vadd.f32 %v2104, %v2111
      %v2128 = vadd.f32 %v2105, %v2111
      %v2129 = vmax.f32 %v2113, 0.0
      %v2130 = vmax.f32 %v2114, 0.0
      %v2131 = vmax.f32 %v2115, 0.0
      %v2132 = vmax.f32 %v2116, 0.0
      %v2133 = vmax.f32 %v2117, 0.0
      %v2134 = vmax.f32 %v2118, 0.0
      %v2135 = vmax.f32 %v2119, 0.0
      %v2136 = vmax.f32 %v2120, 0.0
      %v2137 = vmax.f32 %v2121, 0.0
      %v2138 = vmax.f32 %v2122, 0.0
      %v2139 = vmax.f32 %v2123, 0.0
      %v2140 = vmax.f32 %v2124, 0.0
      %v2141 = vmax.f32 %v2125, 0.0
      %v2142 = vmax.f32 %v2126, 0.0
      %v2143 = vmax.f32 %v2127, 0.0
      %v2144 = vmax.f32 %v2128, 0.0
      %2145 = vst [vmem:[#allocation2] sm:$0xff] %v2129
      %2146 = vst [vmem:[#allocation2 + $0x8] sm:$0xff] %v2130
      %2147 = vst [vmem:[#allocation2 + $0x10] sm:$0xff] %v2131
      %2148 = vst [vmem:[#allocation2 + $0x18] sm:$0xff] %v2132
      %2149 = vst [vmem:[#allocation2 + $0x20] sm:$0xff] %v2133
      %2150 = vst [vmem:[#allocation2 + $0x28] sm:$0xff] %v2134
      %2151 = vst [vmem:[#allocation2 + $0x30] sm:$0xff] %v2135
      %2152 = vst [vmem:[#allocation2 + $0x38] sm:$0xff] %v2136
      %2153 = vst [vmem:[#allocation2 + $0x40] sm:$0xff] %v2137
      %2154 = vst [vmem:[#allocation2 + $0x48] sm:$0xff] %v2138
      %2155 = vst [vmem:[#allocation2 + $0x50] sm:$0xff] %v2139
      %2156 = vst [vmem:[#allocation2 + $0x58] sm:$0xff] %v2140
      %2157 = vst [vmem:[#allocation2 + $0x60] sm:$0xff] %v2141
      %2158 = vst [vmem:[#allocation2 + $0x68] sm:$0xff] %v2142
      %2159 = vst [vmem:[#allocation2 + $0x70] sm:$0xff] %v2143
      %2160 = vst [vmem:[#allocation2 + $0x78] sm:$0xff] %v2144
      %s2161 = scalar_lea.vmem %s258, 84
      %v2162 = vld [vmem:[%s2161] sm:$0xf]
      %v2163 = vld [vmem:[%s2161 + $0x4] sm:$0xf]
      %v2164 = vld [vmem:[%s2161 + $0x8] sm:$0xf]
      %v2165 = vld [vmem:[%s2161 + $0xc] sm:$0xf]
      %v2166 = vld [vmem:[%s2161 + $0x10] sm:$0xf]
      %v2167 = vld [vmem:[%s2161 + $0x14] sm:$0xf]
      %v2168 = vld [vmem:[%s2161 + $0x18] sm:$0xf]
      %v2169 = vld [vmem:[%s2161 + $0x1c] sm:$0xf]
      %v2170 = vld [vmem:[%s2161 + $0x20] sm:$0xf]
      %v2171 = vld [vmem:[%s2161 + $0x24] sm:$0xf]
      %v2172 = vld [vmem:[%s2161 + $0x28] sm:$0xf]
      %v2173 = vld [vmem:[%s2161 + $0x2c] sm:$0xf]
      %v2174 = vld [vmem:[%s2161 + $0x30] sm:$0xf]
      %v2175 = vld [vmem:[%s2161 + $0x34] sm:$0xf]
      %v2176 = vld [vmem:[%s2161 + $0x38] sm:$0xf]
      %v2177 = vld [vmem:[%s2161 + $0x3c] sm:$0xf]
      %v2178 = vld [vmem:[%s2161 + $0x40] sm:$0x1]
      %v2195 = vunpack.c.l.b16 %v2162
      %v2196 = vunpack.c.l.b16 %v2163
      %v2197 = vunpack.c.l.b16 %v2164
      %v2198 = vunpack.c.l.b16 %v2165
      %v2199 = vunpack.c.l.b16 %v2166
      %v2200 = vunpack.c.l.b16 %v2167
      %v2201 = vunpack.c.l.b16 %v2168
      %v2202 = vunpack.c.l.b16 %v2169
      %v2203 = vunpack.c.l.b16 %v2170
      %v2204 = vunpack.c.l.b16 %v2171
      %v2205 = vunpack.c.l.b16 %v2172
      %v2206 = vunpack.c.l.b16 %v2173
      %v2207 = vunpack.c.l.b16 %v2174
      %v2208 = vunpack.c.l.b16 %v2175
      %v2209 = vunpack.c.l.b16 %v2176
      %v2210 = vunpack.c.l.b16 %v2177
      %v2211 = vpack.c.b16 %v2196, %v2195
      %v2212 = vpack.c.b16 %v2198, %v2197
      %v2213 = vpack.c.b16 %v2200, %v2199
      %v2214 = vpack.c.b16 %v2202, %v2201
      %v2215 = vpack.c.b16 %v2204, %v2203
      %v2216 = vpack.c.b16 %v2206, %v2205
      %v2217 = vpack.c.b16 %v2208, %v2207
      %v2218 = vpack.c.b16 %v2210, %v2209
      %v2228 = vunpack.c.l.b16 %v2178
      %v2229 = vpack.c.b16 %v2228, %v2228
      %v2231 = vshrl.u32 %v2211, 16
      %v2233 = vshll.u32 %v2211, 16
      %v2235 = vrot.slane %v2233, 1
      %v2236 = vor.u32 %v2231, %v2235
      %v2238 = vshll.u32 %v2212, 16
      %v2240 = vrot.slane %v2238, 1
      %v2241 = vsel %vm364, %v2236, %v2240
      %v2242 = vshrl.u32 %v2212, 16
      %v2244 = vor.u32 %v2242, %v2240
      %v2246 = vshll.u32 %v2213, 16
      %v2248 = vrot.slane %v2246, 1
      %v2249 = vsel %vm364, %v2244, %v2248
      %v2250 = vshrl.u32 %v2213, 16
      %v2252 = vor.u32 %v2250, %v2248
      %v2254 = vshll.u32 %v2214, 16
      %v2256 = vrot.slane %v2254, 1
      %v2257 = vsel %vm364, %v2252, %v2256
      %v2258 = vshrl.u32 %v2214, 16
      %v2260 = vor.u32 %v2258, %v2256
      %v2262 = vshll.u32 %v2215, 16
      %v2264 = vrot.slane %v2262, 1
      %v2265 = vsel %vm364, %v2260, %v2264
      %v2266 = vshrl.u32 %v2215, 16
      %v2268 = vor.u32 %v2266, %v2264
      %v2270 = vshll.u32 %v2216, 16
      %v2272 = vrot.slane %v2270, 1
      %v2273 = vsel %vm364, %v2268, %v2272
      %v2274 = vshrl.u32 %v2216, 16
      %v2276 = vor.u32 %v2274, %v2272
      %v2278 = vshll.u32 %v2217, 16
      %v2280 = vrot.slane %v2278, 1
      %v2281 = vsel %vm364, %v2276, %v2280
      %v2282 = vshrl.u32 %v2217, 16
      %v2284 = vor.u32 %v2282, %v2280
      %v2286 = vshll.u32 %v2218, 16
      %v2288 = vrot.slane %v2286, 1
      %v2289 = vsel %vm364, %v2284, %v2288
      %v2290 = vshrl.u32 %v2218, 16
      %v2292 = vor.u32 %v2290, %v2288
      %v2294 = vshll.u32 %v2229, 16
      %v2296 = vrot.slane %v2294, 1
      %v2297 = vsel %vm364, %v2292, %v2296
      %v2306 = vld [vmem:[%s1] sm:$0xf]
      %v2307 = vld [vmem:[%s1 + $0x4] sm:$0xf]
      %v2308 = vld [vmem:[%s1 + $0x8] sm:$0xf]
      %v2309 = vld [vmem:[%s1 + $0xc] sm:$0xf]
      %v2310 = vld [vmem:[%s1 + $0x10] sm:$0xf]
      %v2311 = vld [vmem:[%s1 + $0x14] sm:$0xf]
      %v2312 = vld [vmem:[%s1 + $0x18] sm:$0xf]
      %v2313 = vld [vmem:[%s1 + $0x1c] sm:$0xf]
      %v2314 = vld [vmem:[%s1 + $0x20] sm:$0xf]
      %v2315 = vld [vmem:[%s1 + $0x24] sm:$0xf]
      %v2316 = vld [vmem:[%s1 + $0x28] sm:$0xf]
      %v2317 = vld [vmem:[%s1 + $0x2c] sm:$0xf]
      %v2318 = vld [vmem:[%s1 + $0x30] sm:$0xf]
      %v2319 = vld [vmem:[%s1 + $0x34] sm:$0xf]
      %v2320 = vld [vmem:[%s1 + $0x38] sm:$0xf]
      %v2321 = vld [vmem:[%s1 + $0x3c] sm:$0xf]
      %v2322 = vld [vmem:[%s1 + $0x40] sm:$0xf]
      %v2323 = vld [vmem:[%s1 + $0x44] sm:$0xf]
      %v2324 = vld [vmem:[%s1 + $0x48] sm:$0xf]
      %v2325 = vld [vmem:[%s1 + $0x4c] sm:$0xf]
      %v2326 = vld [vmem:[%s1 + $0x50] sm:$0xf]
      %v2327 = vld [vmem:[%s1 + $0x54] sm:$0xf]
      %v2328 = vld [vmem:[%s1 + $0x58] sm:$0xf]
      %v2329 = vld [vmem:[%s1 + $0x5c] sm:$0xf]
      %v2330 = vld [vmem:[%s1 + $0x60] sm:$0xf]
      %v2331 = vld [vmem:[%s1 + $0x64] sm:$0xf]
      %v2332 = vld [vmem:[%s1 + $0x68] sm:$0xf]
      %v2333 = vld [vmem:[%s1 + $0x6c] sm:$0xf]
      %v2334 = vld [vmem:[%s1 + $0x70] sm:$0xf]
      %v2335 = vld [vmem:[%s1 + $0x74] sm:$0xf]
      %v2336 = vld [vmem:[%s1 + $0x78] sm:$0xf]
      %v2337 = vld [vmem:[%s1 + $0x7c] sm:$0xf]
      %v2338 = vld [vmem:[%s2161] sm:$0xe]
      %v2339 = vld [vmem:[%s2161 + $0x40] sm:$0xf]
      %v2340 = vld [vmem:[%s2161 + $0x44] sm:$0xf]
      %v2342 = vunpack.c.l.b16 %v2338
      %v2343 = vpack.c.b16 %v2196, %v2342
      %v2346 = vunpack.c.l.b16 %v2339
      %v2347 = vunpack.c.l.b16 %v2340
      %v2348 = vpack.c.b16 %v2347, %v2346
      %v2349 = vrot.slane %v2212, 7
      %v2350 = vrot.slane %v2213, 7
      %v2351 = vsel %vm484, %v2349, %v2350
      %v2352 = vrot.slane %v2214, 7
      %v2353 = vsel %vm484, %v2350, %v2352
      %v2354 = vrot.slane %v2215, 7
      %v2355 = vsel %vm484, %v2352, %v2354
      %v2356 = vrot.slane %v2216, 7
      %v2357 = vsel %vm484, %v2354, %v2356
      %v2358 = vrot.slane %v2217, 7
      %v2359 = vsel %vm484, %v2356, %v2358
      %v2360 = vrot.slane %v2218, 7
      %v2361 = vsel %vm484, %v2358, %v2360
      %v2362 = vrot.slane %v2348, 7
      %v2363 = vsel %vm484, %v2360, %v2362
      %v2364 = vld [vmem:[%s500] sm:$0xf]
      %v2365 = vld [vmem:[%s500 + $0x4] sm:$0xf]
      %v2366 = vld [vmem:[%s500 + $0x8] sm:$0xf]
      %v2367 = vld [vmem:[%s500 + $0xc] sm:$0xf]
      %v2368 = vld [vmem:[%s500 + $0x10] sm:$0xf]
      %v2369 = vld [vmem:[%s500 + $0x14] sm:$0xf]
      %v2370 = vld [vmem:[%s500 + $0x18] sm:$0xf]
      %v2371 = vld [vmem:[%s500 + $0x1c] sm:$0xf]
      %v2372 = vld [vmem:[%s500 + $0x20] sm:$0xf]
      %v2373 = vld [vmem:[%s500 + $0x24] sm:$0xf]
      %v2374 = vld [vmem:[%s500 + $0x28] sm:$0xf]
      %v2375 = vld [vmem:[%s500 + $0x2c] sm:$0xf]
      %v2376 = vld [vmem:[%s500 + $0x30] sm:$0xf]
      %v2377 = vld [vmem:[%s500 + $0x34] sm:$0xf]
      %v2378 = vld [vmem:[%s500 + $0x38] sm:$0xf]
      %v2379 = vld [vmem:[%s500 + $0x3c] sm:$0xf]
      %v2380 = vld [vmem:[%s500 + $0x40] sm:$0xf]
      %v2381 = vld [vmem:[%s500 + $0x44] sm:$0xf]
      %v2382 = vld [vmem:[%s500 + $0x48] sm:$0xf]
      %v2383 = vld [vmem:[%s500 + $0x4c] sm:$0xf]
      %v2384 = vld [vmem:[%s500 + $0x50] sm:$0xf]
      %v2385 = vld [vmem:[%s500 + $0x54] sm:$0xf]
      %v2386 = vld [vmem:[%s500 + $0x58] sm:$0xf]
      %v2387 = vld [vmem:[%s500 + $0x5c] sm:$0xf]
      %v2388 = vld [vmem:[%s500 + $0x60] sm:$0xf]
      %v2389 = vld [vmem:[%s500 + $0x64] sm:$0xf]
      %v2390 = vld [vmem:[%s500 + $0x68] sm:$0xf]
      %v2391 = vld [vmem:[%s500 + $0x6c] sm:$0xf]
      %v2392 = vld [vmem:[%s500 + $0x70] sm:$0xf]
      %v2393 = vld [vmem:[%s500 + $0x74] sm:$0xf]
      %v2394 = vld [vmem:[%s500 + $0x78] sm:$0xf]
      %v2395 = vld [vmem:[%s500 + $0x7c] sm:$0xf]
      %v2396 = vrot.slane %v2343, 1
      %v2397 = vrot.slane %v2212, 1
      %v2398 = vsel %vm533, %v2396, %v2397
      %v2399 = vrot.slane %v2349, 1
      %v2400 = vrot.slane %v2351, 1
      %v2401 = vsel %vm533, %v2399, %v2400
      %v2402 = vrot.slane %v2213, 1
      %v2403 = vsel %vm533, %v2397, %v2402
      %v2404 = vrot.slane %v2353, 1
      %v2405 = vsel %vm533, %v2400, %v2404
      %v2406 = vrot.slane %v2214, 1
      %v2407 = vsel %vm533, %v2402, %v2406
      %v2408 = vrot.slane %v2355, 1
      %v2409 = vsel %vm533, %v2404, %v2408
      %v2410 = vrot.slane %v2215, 1
      %v2411 = vsel %vm533, %v2406, %v2410
      %v2412 = vrot.slane %v2357, 1
      %v2413 = vsel %vm533, %v2408, %v2412
      %v2414 = vrot.slane %v2216, 1
      %v2415 = vsel %vm533, %v2410, %v2414
      %v2416 = vrot.slane %v2359, 1
      %v2417 = vsel %vm533, %v2412, %v2416
      %v2418 = vrot.slane %v2217, 1
      %v2419 = vsel %vm533, %v2414, %v2418
      %v2420 = vrot.slane %v2361, 1
      %v2421 = vsel %vm533, %v2416, %v2420
      %v2422 = vrot.slane %v2218, 1
      %v2423 = vsel %vm533, %v2418, %v2422
      %v2424 = vrot.slane %v2363, 1
      %v2425 = vsel %vm533, %v2420, %v2424
      %v2426 = vrot.slane %v2229, 1
      %v2427 = vsel %vm533, %v2422, %v2426
      %v2428 = vrot.slane %v2362, 1
      %v2429 = vsel %vm533, %v2424, %v2428
      %v2478 = vunpack.c.l.b16 %v2364
      %v2479 = vunpack.c.l.b16 %v2365
      %v2480 = vunpack.c.l.b16 %v2366
      %v2481 = vunpack.c.l.b16 %v2367
      %v2482 = vunpack.c.l.b16 %v2368
      %v2483 = vunpack.c.l.b16 %v2369
      %v2484 = vunpack.c.l.b16 %v2370
      %v2485 = vunpack.c.l.b16 %v2371
      %v2486 = vunpack.c.l.b16 %v2372
      %v2487 = vunpack.c.l.b16 %v2373
      %v2488 = vunpack.c.l.b16 %v2374
      %v2489 = vunpack.c.l.b16 %v2375
      %v2490 = vunpack.c.l.b16 %v2376
      %v2491 = vunpack.c.l.b16 %v2377
      %v2492 = vunpack.c.l.b16 %v2378
      %v2493 = vunpack.c.l.b16 %v2379
      %v2494 = vunpack.c.l.b16 %v2380
      %v2495 = vunpack.c.l.b16 %v2381
      %v2496 = vunpack.c.l.b16 %v2382
      %v2497 = vunpack.c.l.b16 %v2383
      %v2498 = vunpack.c.l.b16 %v2384
      %v2499 = vunpack.c.l.b16 %v2385
      %v2500 = vunpack.c.l.b16 %v2386
      %v2501 = vunpack.c.l.b16 %v2387
      %v2502 = vunpack.c.l.b16 %v2388
      %v2503 = vunpack.c.l.b16 %v2389
      %v2504 = vunpack.c.l.b16 %v2390
      %v2505 = vunpack.c.l.b16 %v2391
      %v2506 = vunpack.c.l.b16 %v2392
      %v2507 = vunpack.c.l.b16 %v2393
      %v2508 = vunpack.c.l.b16 %v2394
      %v2509 = vunpack.c.l.b16 %v2395
      %v2510 = vpack.c.b16 %v2479, %v2478
      %v2511 = vpack.c.b16 %v2481, %v2480
      %v2512 = vpack.c.b16 %v2483, %v2482
      %v2513 = vpack.c.b16 %v2485, %v2484
      %v2514 = vpack.c.b16 %v2487, %v2486
      %v2515 = vpack.c.b16 %v2489, %v2488
      %v2516 = vpack.c.b16 %v2491, %v2490
      %v2517 = vpack.c.b16 %v2493, %v2492
      %v2518 = vpack.c.b16 %v2495, %v2494
      %v2519 = vpack.c.b16 %v2497, %v2496
      %v2520 = vpack.c.b16 %v2499, %v2498
      %v2521 = vpack.c.b16 %v2501, %v2500
      %v2522 = vpack.c.b16 %v2503, %v2502
      %v2523 = vpack.c.b16 %v2505, %v2504
      %v2524 = vpack.c.b16 %v2507, %v2506
      %v2525 = vpack.c.b16 %v2509, %v2508
      %2542 = vmatprep.subr.bf16.mxu0 0
      %2543 = vmatpush1.bf16.msra.mxu0 %v2510
      %2544 = vmatprep.subr.bf16.mxu0 0
      %2545 = vmatpush1.bf16.msra.mxu0 %v2511
      %2546 = vmatprep.subr.bf16.mxu0 0
      %2547 = vmatpush1.bf16.msra.mxu0 %v2512
      %2548 = vmatprep.subr.bf16.mxu0 0
      %2549 = vmatpush1.bf16.msra.mxu0 %v2513
      %2550 = vmatprep.subr.bf16.mxu0 0
      %2551 = vmatpush1.bf16.msra.mxu0 %v2514
      %2552 = vmatprep.subr.bf16.mxu0 0
      %2553 = vmatpush1.bf16.msra.mxu0 %v2515
      %2554 = vmatprep.subr.bf16.mxu0 0
      %2555 = vmatpush1.bf16.msra.mxu0 %v2516
      %2556 = vmatprep.subr.bf16.mxu0 0
      %2557 = vmatpush1.bf16.msra.mxu0 %v2517
      %2558 = vmatprep.subr.bf16.mxu0 0
      %2559 = vmatpush1.bf16.msra.mxu0 %v2518
      %2560 = vmatprep.subr.bf16.mxu0 0
      %2561 = vmatpush1.bf16.msra.mxu0 %v2519
      %2562 = vmatprep.subr.bf16.mxu0 0
      %2563 = vmatpush1.bf16.msra.mxu0 %v2520
      %2564 = vmatprep.subr.bf16.mxu0 0
      %2565 = vmatpush1.bf16.msra.mxu0 %v2521
      %2566 = vmatprep.subr.bf16.mxu0 0
      %2567 = vmatpush1.bf16.msra.mxu0 %v2522
      %2568 = vmatprep.subr.bf16.mxu0 0
      %2569 = vmatpush1.bf16.msra.mxu0 %v2523
      %2570 = vmatprep.subr.bf16.mxu0 0
      %2571 = vmatpush1.bf16.msra.mxu0 %v2524
      %2572 = vmatprep.subr.bf16.mxu0 0
      %2573 = vmatpush1.bf16.msra.mxu0 %v2525
      %2574 = vmatprep.mubr.bf16.mxu0 %v2401
      %2575 = vmatmul.mubr.bf16.gmra.mrb[0].mxu0 %v2398
      %v2576 = vpop.f32.mrb[0].mxu0
      %v2577 = vadd.f32 0.0, %v2576
      %v2578 = vpop.f32.mrb[0].mxu0
      %v2579 = vpop.f32.mrb[0].mxu0
      %v2580 = vadd.f32 0.0, %v2579
      %v2581 = vpop.f32.mrb[0].mxu0
      %2582 = vmatprep.mubr.bf16.mxu0 %v2405
      %2583 = vmatmul.mubr.bf16.gmra.mrb[0].mxu0 %v2403
      %v2584 = vpop.f32.mrb[0].mxu0
      %v2585 = vadd.f32 0.0, %v2584
      %v2586 = vpop.f32.mrb[0].mxu0
      %v2587 = vpop.f32.mrb[0].mxu0
      %v2588 = vadd.f32 0.0, %v2587
      %v2589 = vpop.f32.mrb[0].mxu0
      %2590 = vmatprep.mubr.bf16.mxu0 %v2409
      %2591 = vmatmul.mubr.bf16.gmra.mrb[0].mxu0 %v2407
      %v2592 = vpop.f32.mrb[0].mxu0
      %v2593 = vadd.f32 0.0, %v2592
      %v2594 = vpop.f32.mrb[0].mxu0
      %v2595 = vpop.f32.mrb[0].mxu0
      %v2596 = vadd.f32 0.0, %v2595
      %v2597 = vpop.f32.mrb[0].mxu0
      %2598 = vmatprep.mubr.bf16.mxu0 %v2413
      %2599 = vmatmul.mubr.bf16.gmra.mrb[0].mxu0 %v2411
      %v2600 = vpop.f32.mrb[0].mxu0
      %v2601 = vadd.f32 0.0, %v2600
      %v2602 = vpop.f32.mrb[0].mxu0
      %v2603 = vpop.f32.mrb[0].mxu0
      %v2604 = vadd.f32 0.0, %v2603
      %v2605 = vpop.f32.mrb[0].mxu0
      %2606 = vmatprep.mubr.bf16.mxu0 %v2417
      %2607 = vmatmul.mubr.bf16.gmra.mrb[0].mxu0 %v2415
      %v2608 = vpop.f32.mrb[0].mxu0
      %v2609 = vadd.f32 0.0, %v2608
      %v2610 = vpop.f32.mrb[0].mxu0
      %v2611 = vpop.f32.mrb[0].mxu0
      %v2612 = vadd.f32 0.0, %v2611
      %v2613 = vpop.f32.mrb[0].mxu0
      %2614 = vmatprep.mubr.bf16.mxu0 %v2421
      %2615 = vmatmul.mubr.bf16.gmra.mrb[0].mxu0 %v2419
      %v2616 = vpop.f32.mrb[0].mxu0
      %v2617 = vadd.f32 0.0, %v2616
      %v2618 = vpop.f32.mrb[0].mxu0
      %v2619 = vpop.f32.mrb[0].mxu0
      %v2620 = vadd.f32 0.0, %v2619
      %v2621 = vpop.f32.mrb[0].mxu0
      %2622 = vmatprep.mubr.bf16.mxu0 %v2425
      %2623 = vmatmul.mubr.bf16.gmra.mrb[0].mxu0 %v2423
      %v2624 = vpop.f32.mrb[0].mxu0
      %v2625 = vadd.f32 0.0, %v2624
      %v2626 = vpop.f32.mrb[0].mxu0
      %v2627 = vpop.f32.mrb[0].mxu0
      %v2628 = vadd.f32 0.0, %v2627
      %v2629 = vpop.f32.mrb[0].mxu0
      %2630 = vmatprep.mubr.bf16.mxu0 %v2429
      %2631 = vmatmul.mubr.bf16.gmra.mrb[0].mxu0 %v2427
      %v2632 = vpop.f32.mrb[0].mxu0
      %v2633 = vadd.f32 0.0, %v2632
      %v2634 = vpop.f32.mrb[0].mxu0
      %v2635 = vpop.f32.mrb[0].mxu0
      %v2636 = vadd.f32 0.0, %v2635
      %v2637 = vpop.f32.mrb[0].mxu0
      %2638 = vdwg.mxu0
      %v2671 = vunpack.c.l.b16 %v2306
      %v2672 = vunpack.c.l.b16 %v2307
      %v2673 = vunpack.c.l.b16 %v2308
      %v2674 = vunpack.c.l.b16 %v2309
      %v2675 = vunpack.c.l.b16 %v2310
      %v2676 = vunpack.c.l.b16 %v2311
      %v2677 = vunpack.c.l.b16 %v2312
      %v2678 = vunpack.c.l.b16 %v2313
      %v2679 = vunpack.c.l.b16 %v2314
      %v2680 = vunpack.c.l.b16 %v2315
      %v2681 = vunpack.c.l.b16 %v2316
      %v2682 = vunpack.c.l.b16 %v2317
      %v2683 = vunpack.c.l.b16 %v2318
      %v2684 = vunpack.c.l.b16 %v2319
      %v2685 = vunpack.c.l.b16 %v2320
      %v2686 = vunpack.c.l.b16 %v2321
      %v2687 = vunpack.c.l.b16 %v2322
      %v2688 = vunpack.c.l.b16 %v2323
      %v2689 = vunpack.c.l.b16 %v2324
      %v2690 = vunpack.c.l.b16 %v2325
      %v2691 = vunpack.c.l.b16 %v2326
      %v2692 = vunpack.c.l.b16 %v2327
      %v2693 = vunpack.c.l.b16 %v2328
      %v2694 = vunpack.c.l.b16 %v2329
      %v2695 = vunpack.c.l.b16 %v2330
      %v2696 = vunpack.c.l.b16 %v2331
      %v2697 = vunpack.c.l.b16 %v2332
      %v2698 = vunpack.c.l.b16 %v2333
      %v2699 = vunpack.c.l.b16 %v2334
      %v2700 = vunpack.c.l.b16 %v2335
      %v2701 = vunpack.c.l.b16 %v2336
      %v2702 = vunpack.c.l.b16 %v2337
      %v2703 = vpack.c.b16 %v2672, %v2671
      %v2704 = vpack.c.b16 %v2674, %v2673
      %v2705 = vpack.c.b16 %v2676, %v2675
      %v2706 = vpack.c.b16 %v2678, %v2677
      %v2707 = vpack.c.b16 %v2680, %v2679
      %v2708 = vpack.c.b16 %v2682, %v2681
      %v2709 = vpack.c.b16 %v2684, %v2683
      %v2710 = vpack.c.b16 %v2686, %v2685
      %v2711 = vpack.c.b16 %v2688, %v2687
      %v2712 = vpack.c.b16 %v2690, %v2689
      %v2713 = vpack.c.b16 %v2692, %v2691
      %v2714 = vpack.c.b16 %v2694, %v2693
      %v2715 = vpack.c.b16 %v2696, %v2695
      %v2716 = vpack.c.b16 %v2698, %v2697
      %v2717 = vpack.c.b16 %v2700, %v2699
      %v2718 = vpack.c.b16 %v2702, %v2701
      %2735 = vmatprep.subr.bf16.mxu0 0
      %2736 = vmatpush1.bf16.msra.mxu0 %v2703
      %2737 = vmatprep.subr.bf16.mxu0 0
      %2738 = vmatpush1.bf16.msra.mxu0 %v2704
      %2739 = vmatprep.subr.bf16.mxu0 0
      %2740 = vmatpush1.bf16.msra.mxu0 %v2705
      %2741 = vmatprep.subr.bf16.mxu0 0
      %2742 = vmatpush1.bf16.msra.mxu0 %v2706
      %2743 = vmatprep.subr.bf16.mxu0 0
      %2744 = vmatpush1.bf16.msra.mxu0 %v2707
      %2745 = vmatprep.subr.bf16.mxu0 0
      %2746 = vmatpush1.bf16.msra.mxu0 %v2708
      %2747 = vmatprep.subr.bf16.mxu0 0
      %2748 = vmatpush1.bf16.msra.mxu0 %v2709
      %2749 = vmatprep.subr.bf16.mxu0 0
      %2750 = vmatpush1.bf16.msra.mxu0 %v2710
      %2751 = vmatprep.subr.bf16.mxu0 0
      %2752 = vmatpush1.bf16.msra.mxu0 %v2711
      %2753 = vmatprep.subr.bf16.mxu0 0
      %2754 = vmatpush1.bf16.msra.mxu0 %v2712
      %2755 = vmatprep.subr.bf16.mxu0 0
      %2756 = vmatpush1.bf16.msra.mxu0 %v2713
      %2757 = vmatprep.subr.bf16.mxu0 0
      %2758 = vmatpush1.bf16.msra.mxu0 %v2714
      %2759 = vmatprep.subr.bf16.mxu0 0
      %2760 = vmatpush1.bf16.msra.mxu0 %v2715
      %2761 = vmatprep.subr.bf16.mxu0 0
      %2762 = vmatpush1.bf16.msra.mxu0 %v2716
      %2763 = vmatprep.subr.bf16.mxu0 0
      %2764 = vmatpush1.bf16.msra.mxu0 %v2717
      %2765 = vmatprep.subr.bf16.mxu0 0
      %2766 = vmatpush1.bf16.msra.mxu0 %v2718
      %2767 = vmatprep.mubr.bf16.mxu0 %v2241
      %2768 = vmatmul.mubr.bf16.gmra.mrb[0].mxu0 %v2211
      %v2769 = vpop.f32.mrb[0].mxu0
      %v2770 = vadd.f32 %v2577, %v2769
      %v2771 = vpop.f32.mrb[0].mxu0
      %v2772 = vpop.f32.mrb[0].mxu0
      %v2773 = vadd.f32 %v2580, %v2772
      %v2774 = vpop.f32.mrb[0].mxu0
      %2775 = vmatprep.mubr.bf16.mxu0 %v2249
      %2776 = vmatmul.mubr.bf16.gmra.mrb[0].mxu0 %v2212
      %v2777 = vpop.f32.mrb[0].mxu0
      %v2778 = vadd.f32 %v2585, %v2777
      %v2779 = vpop.f32.mrb[0].mxu0
      %v2780 = vpop.f32.mrb[0].mxu0
      %v2781 = vadd.f32 %v2588, %v2780
      %v2782 = vpop.f32.mrb[0].mxu0
      %2783 = vmatprep.mubr.bf16.mxu0 %v2257
      %2784 = vmatmul.mubr.bf16.gmra.mrb[0].mxu0 %v2213
      %v2785 = vpop.f32.mrb[0].mxu0
      %v2786 = vadd.f32 %v2593, %v2785
      %v2787 = vpop.f32.mrb[0].mxu0
      %v2788 = vpop.f32.mrb[0].mxu0
      %v2789 = vadd.f32 %v2596, %v2788
      %v2790 = vpop.f32.mrb[0].mxu0
      %2791 = vmatprep.mubr.bf16.mxu0 %v2265
      %2792 = vmatmul.mubr.bf16.gmra.mrb[0].mxu0 %v2214
      %v2793 = vpop.f32.mrb[0].mxu0
      %v2794 = vadd.f32 %v2601, %v2793
      %v2795 = vpop.f32.mrb[0].mxu0
      %v2796 = vpop.f32.mrb[0].mxu0
      %v2797 = vadd.f32 %v2604, %v2796
      %v2798 = vpop.f32.mrb[0].mxu0
      %2799 = vmatprep.mubr.bf16.mxu0 %v2273
      %2800 = vmatmul.mubr.bf16.gmra.mrb[0].mxu0 %v2215
      %v2801 = vpop.f32.mrb[0].mxu0
      %v2802 = vadd.f32 %v2609, %v2801
      %v2803 = vpop.f32.mrb[0].mxu0
      %v2804 = vpop.f32.mrb[0].mxu0
      %v2805 = vadd.f32 %v2612, %v2804
      %v2806 = vpop.f32.mrb[0].mxu0
      %2807 = vmatprep.mubr.bf16.mxu0 %v2281
      %2808 = vmatmul.mubr.bf16.gmra.mrb[0].mxu0 %v2216
      %v2809 = vpop.f32.mrb[0].mxu0
      %v2810 = vadd.f32 %v2617, %v2809
      %v2811 = vpop.f32.mrb[0].mxu0
      %v2812 = vpop.f32.mrb[0].mxu0
      %v2813 = vadd.f32 %v2620, %v2812
      %v2814 = vpop.f32.mrb[0].mxu0
      %2815 = vmatprep.mubr.bf16.mxu0 %v2289
      %2816 = vmatmul.mubr.bf16.gmra.mrb[0].mxu0 %v2217
      %v2817 = vpop.f32.mrb[0].mxu0
      %v2818 = vadd.f32 %v2625, %v2817
      %v2819 = vpop.f32.mrb[0].mxu0
      %v2820 = vpop.f32.mrb[0].mxu0
      %v2821 = vadd.f32 %v2628, %v2820
      %v2822 = vpop.f32.mrb[0].mxu0
      %2823 = vmatprep.mubr.bf16.mxu0 %v2297
      %2824 = vmatmul.mubr.bf16.gmra.mrb[0].mxu0 %v2218
      %v2825 = vpop.f32.mrb[0].mxu0
      %v2826 = vadd.f32 %v2633, %v2825
      %v2827 = vpop.f32.mrb[0].mxu0
      %v2828 = vpop.f32.mrb[0].mxu0
      %v2829 = vadd.f32 %v2636, %v2828
      %v2830 = vpop.f32.mrb[0].mxu0
      %2831 = vdwg.mxu0
      %v2832 = vld [vmem:[%s2161 + $0x8] sm:$0xf]
      %v2833 = vld [vmem:[%s2161 + $0xc] sm:$0xf]
      %v2834 = vld [vmem:[%s2161 + $0x10] sm:$0xf]
      %v2835 = vld [vmem:[%s2161 + $0x14] sm:$0xf]
      %v2836 = vld [vmem:[%s2161 + $0x18] sm:$0xf]
      %v2837 = vld [vmem:[%s2161 + $0x1c] sm:$0xf]
      %v2838 = vld [vmem:[%s2161 + $0x20] sm:$0xf]
      %v2839 = vld [vmem:[%s2161 + $0x24] sm:$0xf]
      %v2840 = vld [vmem:[%s2161 + $0x28] sm:$0xf]
      %v2841 = vld [vmem:[%s2161 + $0x2c] sm:$0xf]
      %v2842 = vld [vmem:[%s2161 + $0x30] sm:$0xf]
      %v2843 = vld [vmem:[%s2161 + $0x34] sm:$0xf]
      %v2844 = vld [vmem:[%s2161 + $0x38] sm:$0xf]
      %v2845 = vld [vmem:[%s2161 + $0x3c] sm:$0xf]
      %v2846 = vld [vmem:[%s2161 + $0x40] sm:$0xf]
      %v2847 = vld [vmem:[%s2161 + $0x44] sm:$0xf]
      %v2848 = vld [vmem:[%s2161 + $0x48] sm:$0x1]
      %v2849 = vld [vmem:[%s2161 + $0x8] sm:$0xe]
      %v2867 = vunpack.c.l.b16 %v2832
      %v2868 = vunpack.c.l.b16 %v2833
      %v2869 = vunpack.c.l.b16 %v2834
      %v2870 = vunpack.c.l.b16 %v2835
      %v2871 = vunpack.c.l.b16 %v2836
      %v2872 = vunpack.c.l.b16 %v2837
      %v2873 = vunpack.c.l.b16 %v2838
      %v2874 = vunpack.c.l.b16 %v2839
      %v2875 = vunpack.c.l.b16 %v2840
      %v2876 = vunpack.c.l.b16 %v2841
      %v2877 = vunpack.c.l.b16 %v2842
      %v2878 = vunpack.c.l.b16 %v2843
      %v2879 = vunpack.c.l.b16 %v2844
      %v2880 = vunpack.c.l.b16 %v2845
      %v2881 = vunpack.c.l.b16 %v2846
      %v2882 = vunpack.c.l.b16 %v2847
      %v2883 = vunpack.c.l.b16 %v2848
      %v2884 = vpack.c.b16 %v2868, %v2867
      %v2885 = vpack.c.b16 %v2870, %v2869
      %v2886 = vpack.c.b16 %v2872, %v2871
      %v2887 = vpack.c.b16 %v2874, %v2873
      %v2888 = vpack.c.b16 %v2876, %v2875
      %v2889 = vpack.c.b16 %v2878, %v2877
      %v2890 = vpack.c.b16 %v2880, %v2879
      %v2891 = vpack.c.b16 %v2882, %v2881
      %v2892 = vpack.c.b16 %v2883, %v2883
      %v2894 = vunpack.c.l.b16 %v2849
      %v2895 = vpack.c.b16 %v2868, %v2894
      %v2897 = vshrl.u32 %v2895, 16
      %v2899 = vshll.u32 %v2895, 16
      %v2901 = vrot.slane %v2899, 1
      %v2902 = vor.u32 %v2897, %v2901
      %v2904 = vshll.u32 %v2885, 16
      %v2906 = vrot.slane %v2904, 1
      %v2907 = vsel %vm364, %v2902, %v2906
      %v2908 = vshrl.u32 %v2885, 16
      %v2910 = vor.u32 %v2908, %v2906
      %v2912 = vshll.u32 %v2886, 16
      %v2914 = vrot.slane %v2912, 1
      %v2915 = vsel %vm364, %v2910, %v2914
      %v2916 = vshrl.u32 %v2886, 16
      %v2918 = vor.u32 %v2916, %v2914
      %v2920 = vshll.u32 %v2887, 16
      %v2922 = vrot.slane %v2920, 1
      %v2923 = vsel %vm364, %v2918, %v2922
      %v2924 = vshrl.u32 %v2887, 16
      %v2926 = vor.u32 %v2924, %v2922
      %v2928 = vshll.u32 %v2888, 16
      %v2930 = vrot.slane %v2928, 1
      %v2931 = vsel %vm364, %v2926, %v2930
      %v2932 = vshrl.u32 %v2888, 16
      %v2934 = vor.u32 %v2932, %v2930
      %v2936 = vshll.u32 %v2889, 16
      %v2938 = vrot.slane %v2936, 1
      %v2939 = vsel %vm364, %v2934, %v2938
      %v2940 = vshrl.u32 %v2889, 16
      %v2942 = vor.u32 %v2940, %v2938
      %v2944 = vshll.u32 %v2890, 16
      %v2946 = vrot.slane %v2944, 1
      %v2947 = vsel %vm364, %v2942, %v2946
      %v2948 = vshrl.u32 %v2890, 16
      %v2950 = vor.u32 %v2948, %v2946
      %v2952 = vshll.u32 %v2891, 16
      %v2954 = vrot.slane %v2952, 1
      %v2955 = vsel %vm364, %v2950, %v2954
      %v2956 = vshrl.u32 %v2891, 16
      %v2958 = vor.u32 %v2956, %v2954
      %v2960 = vshll.u32 %v2892, 16
      %v2962 = vrot.slane %v2960, 1
      %v2963 = vsel %vm364, %v2958, %v2962
      %v2964 = vshrl.u32 %v2892, 16
      %v2966 = vld [vmem:[%s1104] sm:$0xf]
      %v2967 = vld [vmem:[%s1104 + $0x4] sm:$0xf]
      %v2968 = vld [vmem:[%s1104 + $0x8] sm:$0xf]
      %v2969 = vld [vmem:[%s1104 + $0xc] sm:$0xf]
      %v2970 = vld [vmem:[%s1104 + $0x10] sm:$0xf]
      %v2971 = vld [vmem:[%s1104 + $0x14] sm:$0xf]
      %v2972 = vld [vmem:[%s1104 + $0x18] sm:$0xf]
      %v2973 = vld [vmem:[%s1104 + $0x1c] sm:$0xf]
      %v2974 = vld [vmem:[%s1104 + $0x20] sm:$0xf]
      %v2975 = vld [vmem:[%s1104 + $0x24] sm:$0xf]
      %v2976 = vld [vmem:[%s1104 + $0x28] sm:$0xf]
      %v2977 = vld [vmem:[%s1104 + $0x2c] sm:$0xf]
      %v2978 = vld [vmem:[%s1104 + $0x30] sm:$0xf]
      %v2979 = vld [vmem:[%s1104 + $0x34] sm:$0xf]
      %v2980 = vld [vmem:[%s1104 + $0x38] sm:$0xf]
      %v2981 = vld [vmem:[%s1104 + $0x3c] sm:$0xf]
      %v2982 = vld [vmem:[%s1104 + $0x40] sm:$0xf]
      %v2983 = vld [vmem:[%s1104 + $0x44] sm:$0xf]
      %v2984 = vld [vmem:[%s1104 + $0x48] sm:$0xf]
      %v2985 = vld [vmem:[%s1104 + $0x4c] sm:$0xf]
      %v2986 = vld [vmem:[%s1104 + $0x50] sm:$0xf]
      %v2987 = vld [vmem:[%s1104 + $0x54] sm:$0xf]
      %v2988 = vld [vmem:[%s1104 + $0x58] sm:$0xf]
      %v2989 = vld [vmem:[%s1104 + $0x5c] sm:$0xf]
      %v2990 = vld [vmem:[%s1104 + $0x60] sm:$0xf]
      %v2991 = vld [vmem:[%s1104 + $0x64] sm:$0xf]
      %v2992 = vld [vmem:[%s1104 + $0x68] sm:$0xf]
      %v2993 = vld [vmem:[%s1104 + $0x6c] sm:$0xf]
      %v2994 = vld [vmem:[%s1104 + $0x70] sm:$0xf]
      %v2995 = vld [vmem:[%s1104 + $0x74] sm:$0xf]
      %v2996 = vld [vmem:[%s1104 + $0x78] sm:$0xf]
      %v2997 = vld [vmem:[%s1104 + $0x7c] sm:$0xf]
      %v2999 = vshrl.u32 %v2884, 16
      %v3001 = vshll.u32 %v2884, 16
      %v3003 = vrot.slane %v3001, 1
      %v3004 = vor.u32 %v2999, %v3003
      %v3005 = vsel %vm364, %v3004, %v2906
      %v3007 = vshrl.u32 %v2907, 16
      %v3009 = vshll.u32 %v2907, 16
      %v3011 = vrot.slane %v3009, 1
      %v3012 = vor.u32 %v3007, %v3011
      %v3014 = vshll.u32 %v2915, 16
      %v3016 = vrot.slane %v3014, 1
      %v3017 = vsel %vm364, %v3012, %v3016
      %v3018 = vshrl.u32 %v2915, 16
      %v3020 = vor.u32 %v3018, %v3016
      %v3022 = vshll.u32 %v2923, 16
      %v3024 = vrot.slane %v3022, 1
      %v3025 = vsel %vm364, %v3020, %v3024
      %v3026 = vshrl.u32 %v2923, 16
      %v3028 = vor.u32 %v3026, %v3024
      %v3030 = vshll.u32 %v2931, 16
      %v3032 = vrot.slane %v3030, 1
      %v3033 = vsel %vm364, %v3028, %v3032
      %v3034 = vshrl.u32 %v2931, 16
      %v3036 = vor.u32 %v3034, %v3032
      %v3038 = vshll.u32 %v2939, 16
      %v3040 = vrot.slane %v3038, 1
      %v3041 = vsel %vm364, %v3036, %v3040
      %v3042 = vshrl.u32 %v2939, 16
      %v3044 = vor.u32 %v3042, %v3040
      %v3046 = vshll.u32 %v2947, 16
      %v3048 = vrot.slane %v3046, 1
      %v3049 = vsel %vm364, %v3044, %v3048
      %v3050 = vshrl.u32 %v2947, 16
      %v3052 = vor.u32 %v3050, %v3048
      %v3054 = vshll.u32 %v2955, 16
      %v3056 = vrot.slane %v3054, 1
      %v3057 = vsel %vm364, %v3052, %v3056
      %v3058 = vshrl.u32 %v2955, 16
      %v3060 = vor.u32 %v3058, %v3056
      %v3062 = vshll.u32 %v2963, 16
      %v3064 = vrot.slane %v3062, 1
      %v3065 = vsel %vm364, %v3060, %v3064
      %v3066 = vshrl.u32 %v2963, 16
      %v3068 = vor.u32 %v3066, %v3064
      %v3070 = vshll.u32 %v2964, 16
      %v3072 = vrot.slane %v3070, 1
      %v3073 = vsel %vm364, %v3068, %v3072
      %v3122 = vunpack.c.l.b16 %v2966
      %v3123 = vunpack.c.l.b16 %v2967
      %v3124 = vunpack.c.l.b16 %v2968
      %v3125 = vunpack.c.l.b16 %v2969
      %v3126 = vunpack.c.l.b16 %v2970
      %v3127 = vunpack.c.l.b16 %v2971
      %v3128 = vunpack.c.l.b16 %v2972
      %v3129 = vunpack.c.l.b16 %v2973
      %v3130 = vunpack.c.l.b16 %v2974
      %v3131 = vunpack.c.l.b16 %v2975
      %v3132 = vunpack.c.l.b16 %v2976
      %v3133 = vunpack.c.l.b16 %v2977
      %v3134 = vunpack.c.l.b16 %v2978
      %v3135 = vunpack.c.l.b16 %v2979
      %v3136 = vunpack.c.l.b16 %v2980
      %v3137 = vunpack.c.l.b16 %v2981
      %v3138 = vunpack.c.l.b16 %v2982
      %v3139 = vunpack.c.l.b16 %v2983
      %v3140 = vunpack.c.l.b16 %v2984
      %v3141 = vunpack.c.l.b16 %v2985
      %v3142 = vunpack.c.l.b16 %v2986
      %v3143 = vunpack.c.l.b16 %v2987
      %v3144 = vunpack.c.l.b16 %v2988
      %v3145 = vunpack.c.l.b16 %v2989
      %v3146 = vunpack.c.l.b16 %v2990
      %v3147 = vunpack.c.l.b16 %v2991
      %v3148 = vunpack.c.l.b16 %v2992
      %v3149 = vunpack.c.l.b16 %v2993
      %v3150 = vunpack.c.l.b16 %v2994
      %v3151 = vunpack.c.l.b16 %v2995
      %v3152 = vunpack.c.l.b16 %v2996
      %v3153 = vunpack.c.l.b16 %v2997
      %v3154 = vpack.c.b16 %v3123, %v3122
      %v3155 = vpack.c.b16 %v3125, %v3124
      %v3156 = vpack.c.b16 %v3127, %v3126
      %v3157 = vpack.c.b16 %v3129, %v3128
      %v3158 = vpack.c.b16 %v3131, %v3130
      %v3159 = vpack.c.b16 %v3133, %v3132
      %v3160 = vpack.c.b16 %v3135, %v3134
      %v3161 = vpack.c.b16 %v3137, %v3136
      %v3162 = vpack.c.b16 %v3139, %v3138
      %v3163 = vpack.c.b16 %v3141, %v3140
      %v3164 = vpack.c.b16 %v3143, %v3142
      %v3165 = vpack.c.b16 %v3145, %v3144
      %v3166 = vpack.c.b16 %v3147, %v3146
      %v3167 = vpack.c.b16 %v3149, %v3148
      %v3168 = vpack.c.b16 %v3151, %v3150
      %v3169 = vpack.c.b16 %v3153, %v3152
      %3186 = vmatprep.subr.bf16.mxu0 0
      %3187 = vmatpush1.bf16.msra.mxu0 %v3154
      %3188 = vmatprep.subr.bf16.mxu0 0
      %3189 = vmatpush1.bf16.msra.mxu0 %v3155
      %3190 = vmatprep.subr.bf16.mxu0 0
      %3191 = vmatpush1.bf16.msra.mxu0 %v3156
      %3192 = vmatprep.subr.bf16.mxu0 0
      %3193 = vmatpush1.bf16.msra.mxu0 %v3157
      %3194 = vmatprep.subr.bf16.mxu0 0
      %3195 = vmatpush1.bf16.msra.mxu0 %v3158
      %3196 = vmatprep.subr.bf16.mxu0 0
      %3197 = vmatpush1.bf16.msra.mxu0 %v3159
      %3198 = vmatprep.subr.bf16.mxu0 0
      %3199 = vmatpush1.bf16.msra.mxu0 %v3160
      %3200 = vmatprep.subr.bf16.mxu0 0
      %3201 = vmatpush1.bf16.msra.mxu0 %v3161
      %3202 = vmatprep.subr.bf16.mxu0 0
      %3203 = vmatpush1.bf16.msra.mxu0 %v3162
      %3204 = vmatprep.subr.bf16.mxu0 0
      %3205 = vmatpush1.bf16.msra.mxu0 %v3163
      %3206 = vmatprep.subr.bf16.mxu0 0
      %3207 = vmatpush1.bf16.msra.mxu0 %v3164
      %3208 = vmatprep.subr.bf16.mxu0 0
      %3209 = vmatpush1.bf16.msra.mxu0 %v3165
      %3210 = vmatprep.subr.bf16.mxu0 0
      %3211 = vmatpush1.bf16.msra.mxu0 %v3166
      %3212 = vmatprep.subr.bf16.mxu0 0
      %3213 = vmatpush1.bf16.msra.mxu0 %v3167
      %3214 = vmatprep.subr.bf16.mxu0 0
      %3215 = vmatpush1.bf16.msra.mxu0 %v3168
      %3216 = vmatprep.subr.bf16.mxu0 0
      %3217 = vmatpush1.bf16.msra.mxu0 %v3169
      %3218 = vmatprep.mubr.bf16.mxu0 %v3017
      %3219 = vmatmul.mubr.bf16.gmra.mrb[0].mxu0 %v3005
      %v3220 = vpop.f32.mrb[0].mxu0
      %v3221 = vadd.f32 0.0, %v3220
      %v3222 = vpop.f32.mrb[0].mxu0
      %v3223 = vpop.f32.mrb[0].mxu0
      %v3224 = vadd.f32 0.0, %v3223
      %v3225 = vpop.f32.mrb[0].mxu0
      %3226 = vmatprep.mubr.bf16.mxu0 %v3025
      %3227 = vmatmul.mubr.bf16.gmra.mrb[0].mxu0 %v2915
      %v3228 = vpop.f32.mrb[0].mxu0
      %v3229 = vadd.f32 0.0, %v3228
      %v3230 = vpop.f32.mrb[0].mxu0
      %v3231 = vpop.f32.mrb[0].mxu0
      %v3232 = vadd.f32 0.0, %v3231
      %v3233 = vpop.f32.mrb[0].mxu0
      %3234 = vmatprep.mubr.bf16.mxu0 %v3033
      %3235 = vmatmul.mubr.bf16.gmra.mrb[0].mxu0 %v2923
      %v3236 = vpop.f32.mrb[0].mxu0
      %v3237 = vadd.f32 0.0, %v3236
      %v3238 = vpop.f32.mrb[0].mxu0
      %v3239 = vpop.f32.mrb[0].mxu0
      %v3240 = vadd.f32 0.0, %v3239
      %v3241 = vpop.f32.mrb[0].mxu0
      %3242 = vmatprep.mubr.bf16.mxu0 %v3041
      %3243 = vmatmul.mubr.bf16.gmra.mrb[0].mxu0 %v2931
      %v3244 = vpop.f32.mrb[0].mxu0
      %v3245 = vadd.f32 0.0, %v3244
      %v3246 = vpop.f32.mrb[0].mxu0
      %v3247 = vpop.f32.mrb[0].mxu0
      %v3248 = vadd.f32 0.0, %v3247
      %v3249 = vpop.f32.mrb[0].mxu0
      %3250 = vmatprep.mubr.bf16.mxu0 %v3049
      %3251 = vmatmul.mubr.bf16.gmra.mrb[0].mxu0 %v2939
      %v3252 = vpop.f32.mrb[0].mxu0
      %v3253 = vadd.f32 0.0, %v3252
      %v3254 = vpop.f32.mrb[0].mxu0
      %v3255 = vpop.f32.mrb[0].mxu0
      %v3256 = vadd.f32 0.0, %v3255
      %v3257 = vpop.f32.mrb[0].mxu0
      %3258 = vmatprep.mubr.bf16.mxu0 %v3057
      %3259 = vmatmul.mubr.bf16.gmra.mrb[0].mxu0 %v2947
      %v3260 = vpop.f32.mrb[0].mxu0
      %v3261 = vadd.f32 0.0, %v3260
      %v3262 = vpop.f32.mrb[0].mxu0
      %v3263 = vpop.f32.mrb[0].mxu0
      %v3264 = vadd.f32 0.0, %v3263
      %v3265 = vpop.f32.mrb[0].mxu0
      %3266 = vmatprep.mubr.bf16.mxu0 %v3065
      %3267 = vmatmul.mubr.bf16.gmra.mrb[0].mxu0 %v2955
      %v3268 = vpop.f32.mrb[0].mxu0
      %v3269 = vadd.f32 0.0, %v3268
      %v3270 = vpop.f32.mrb[0].mxu0
      %v3271 = vpop.f32.mrb[0].mxu0
      %v3272 = vadd.f32 0.0, %v3271
      %v3273 = vpop.f32.mrb[0].mxu0
      %3274 = vmatprep.mubr.bf16.mxu0 %v3073
      %3275 = vmatmul.mubr.bf16.gmra.mrb[0].mxu0 %v2963
      %v3276 = vpop.f32.mrb[0].mxu0
      %v3277 = vadd.f32 0.0, %v3276
      %v3278 = vpop.f32.mrb[0].mxu0
      %v3279 = vpop.f32.mrb[0].mxu0
      %v3280 = vadd.f32 0.0, %v3279
      %v3281 = vpop.f32.mrb[0].mxu0
      %3282 = vdwg.mxu0
      %v3283 = vadd.f32 %v2770, %v3221
      %v3284 = vadd.f32 %v2773, %v3224
      %v3285 = vadd.f32 %v2778, %v3229
      %v3286 = vadd.f32 %v2781, %v3232
      %v3287 = vadd.f32 %v2786, %v3237
      %v3288 = vadd.f32 %v2789, %v3240
      %v3289 = vadd.f32 %v2794, %v3245
      %v3290 = vadd.f32 %v2797, %v3248
      %v3291 = vadd.f32 %v2802, %v3253
      %v3292 = vadd.f32 %v2805, %v3256
      %v3293 = vadd.f32 %v2810, %v3261
      %v3294 = vadd.f32 %v2813, %v3264
      %v3295 = vadd.f32 %v2818, %v3269
      %v3296 = vadd.f32 %v2821, %v3272
      %v3297 = vadd.f32 %v2826, %v3277
      %v3298 = vadd.f32 %v2829, %v3280
      %v3299 = vld [vmem:[%s2161 + $0x10] sm:$0xf]
      %v3300 = vld [vmem:[%s2161 + $0x14] sm:$0xf]
      %v3301 = vld [vmem:[%s2161 + $0x18] sm:$0xf]
      %v3302 = vld [vmem:[%s2161 + $0x1c] sm:$0xf]
      %v3303 = vld [vmem:[%s2161 + $0x20] sm:$0xf]
      %v3304 = vld [vmem:[%s2161 + $0x24] sm:$0xf]
      %v3305 = vld [vmem:[%s2161 + $0x28] sm:$0xf]
      %v3306 = vld [vmem:[%s2161 + $0x2c] sm:$0xf]
      %v3307 = vld [vmem:[%s2161 + $0x30] sm:$0xf]
      %v3308 = vld [vmem:[%s2161 + $0x34] sm:$0xf]
      %v3309 = vld [vmem:[%s2161 + $0x38] sm:$0xf]
      %v3310 = vld [vmem:[%s2161 + $0x3c] sm:$0xf]
      %v3311 = vld [vmem:[%s2161 + $0x40] sm:$0xf]
      %v3312 = vld [vmem:[%s2161 + $0x44] sm:$0xf]
      %v3313 = vld [vmem:[%s2161 + $0x48] sm:$0xf]
      %v3314 = vld [vmem:[%s2161 + $0x4c] sm:$0xf]
      %v3315 = vld [vmem:[%s2161 + $0x50] sm:$0x1]
      %v3332 = vunpack.c.l.b16 %v3299
      %v3333 = vunpack.c.l.b16 %v3300
      %v3334 = vunpack.c.l.b16 %v3301
      %v3335 = vunpack.c.l.b16 %v3302
      %v3336 = vunpack.c.l.b16 %v3303
      %v3337 = vunpack.c.l.b16 %v3304
      %v3338 = vunpack.c.l.b16 %v3305
      %v3339 = vunpack.c.l.b16 %v3306
      %v3340 = vunpack.c.l.b16 %v3307
      %v3341 = vunpack.c.l.b16 %v3308
      %v3342 = vunpack.c.l.b16 %v3309
      %v3343 = vunpack.c.l.b16 %v3310
      %v3344 = vunpack.c.l.b16 %v3311
      %v3345 = vunpack.c.l.b16 %v3312
      %v3346 = vunpack.c.l.b16 %v3313
      %v3347 = vunpack.c.l.b16 %v3314
      %v3348 = vpack.c.b16 %v3333, %v3332
      %v3349 = vpack.c.b16 %v3335, %v3334
      %v3350 = vpack.c.b16 %v3337, %v3336
      %v3351 = vpack.c.b16 %v3339, %v3338
      %v3352 = vpack.c.b16 %v3341, %v3340
      %v3353 = vpack.c.b16 %v3343, %v3342
      %v3354 = vpack.c.b16 %v3345, %v3344
      %v3355 = vpack.c.b16 %v3347, %v3346
      %v3365 = vunpack.c.l.b16 %v3315
      %v3366 = vpack.c.b16 %v3365, %v3365
      %v3368 = vshrl.u32 %v3348, 16
      %v3370 = vshll.u32 %v3348, 16
      %v3372 = vrot.slane %v3370, 1
      %v3373 = vor.u32 %v3368, %v3372
      %v3375 = vshll.u32 %v3349, 16
      %v3377 = vrot.slane %v3375, 1
      %v3378 = vsel %vm364, %v3373, %v3377
      %v3379 = vshrl.u32 %v3349, 16
      %v3381 = vor.u32 %v3379, %v3377
      %v3383 = vshll.u32 %v3350, 16
      %v3385 = vrot.slane %v3383, 1
      %v3386 = vsel %vm364, %v3381, %v3385
      %v3387 = vshrl.u32 %v3350, 16
      %v3389 = vor.u32 %v3387, %v3385
      %v3391 = vshll.u32 %v3351, 16
      %v3393 = vrot.slane %v3391, 1
      %v3394 = vsel %vm364, %v3389, %v3393
      %v3395 = vshrl.u32 %v3351, 16
      %v3397 = vor.u32 %v3395, %v3393
      %v3399 = vshll.u32 %v3352, 16
      %v3401 = vrot.slane %v3399, 1
      %v3402 = vsel %vm364, %v3397, %v3401
      %v3403 = vshrl.u32 %v3352, 16
      %v3405 = vor.u32 %v3403, %v3401
      %v3407 = vshll.u32 %v3353, 16
      %v3409 = vrot.slane %v3407, 1
      %v3410 = vsel %vm364, %v3405, %v3409
      %v3411 = vshrl.u32 %v3353, 16
      %v3413 = vor.u32 %v3411, %v3409
      %v3415 = vshll.u32 %v3354, 16
      %v3417 = vrot.slane %v3415, 1
      %v3418 = vsel %vm364, %v3413, %v3417
      %v3419 = vshrl.u32 %v3354, 16
      %v3421 = vor.u32 %v3419, %v3417
      %v3423 = vshll.u32 %v3355, 16
      %v3425 = vrot.slane %v3423, 1
      %v3426 = vsel %vm364, %v3421, %v3425
      %v3427 = vshrl.u32 %v3355, 16
      %v3429 = vor.u32 %v3427, %v3425
      %v3431 = vshll.u32 %v3366, 16
      %v3433 = vrot.slane %v3431, 1
      %v3434 = vsel %vm364, %v3429, %v3433
      %v3443 = vld [vmem:[%s1582] sm:$0xf]
      %v3444 = vld [vmem:[%s1582 + $0x4] sm:$0xf]
      %v3445 = vld [vmem:[%s1582 + $0x8] sm:$0xf]
      %v3446 = vld [vmem:[%s1582 + $0xc] sm:$0xf]
      %v3447 = vld [vmem:[%s1582 + $0x10] sm:$0xf]
      %v3448 = vld [vmem:[%s1582 + $0x14] sm:$0xf]
      %v3449 = vld [vmem:[%s1582 + $0x18] sm:$0xf]
      %v3450 = vld [vmem:[%s1582 + $0x1c] sm:$0xf]
      %v3451 = vld [vmem:[%s1582 + $0x20] sm:$0xf]
      %v3452 = vld [vmem:[%s1582 + $0x24] sm:$0xf]
      %v3453 = vld [vmem:[%s1582 + $0x28] sm:$0xf]
      %v3454 = vld [vmem:[%s1582 + $0x2c] sm:$0xf]
      %v3455 = vld [vmem:[%s1582 + $0x30] sm:$0xf]
      %v3456 = vld [vmem:[%s1582 + $0x34] sm:$0xf]
      %v3457 = vld [vmem:[%s1582 + $0x38] sm:$0xf]
      %v3458 = vld [vmem:[%s1582 + $0x3c] sm:$0xf]
      %v3459 = vld [vmem:[%s1582 + $0x40] sm:$0xf]
      %v3460 = vld [vmem:[%s1582 + $0x44] sm:$0xf]
      %v3461 = vld [vmem:[%s1582 + $0x48] sm:$0xf]
      %v3462 = vld [vmem:[%s1582 + $0x4c] sm:$0xf]
      %v3463 = vld [vmem:[%s1582 + $0x50] sm:$0xf]
      %v3464 = vld [vmem:[%s1582 + $0x54] sm:$0xf]
      %v3465 = vld [vmem:[%s1582 + $0x58] sm:$0xf]
      %v3466 = vld [vmem:[%s1582 + $0x5c] sm:$0xf]
      %v3467 = vld [vmem:[%s1582 + $0x60] sm:$0xf]
      %v3468 = vld [vmem:[%s1582 + $0x64] sm:$0xf]
      %v3469 = vld [vmem:[%s1582 + $0x68] sm:$0xf]
      %v3470 = vld [vmem:[%s1582 + $0x6c] sm:$0xf]
      %v3471 = vld [vmem:[%s1582 + $0x70] sm:$0xf]
      %v3472 = vld [vmem:[%s1582 + $0x74] sm:$0xf]
      %v3473 = vld [vmem:[%s1582 + $0x78] sm:$0xf]
      %v3474 = vld [vmem:[%s1582 + $0x7c] sm:$0xf]
      %v3507 = vunpack.c.l.b16 %v3443
      %v3508 = vunpack.c.l.b16 %v3444
      %v3509 = vunpack.c.l.b16 %v3445
      %v3510 = vunpack.c.l.b16 %v3446
      %v3511 = vunpack.c.l.b16 %v3447
      %v3512 = vunpack.c.l.b16 %v3448
      %v3513 = vunpack.c.l.b16 %v3449
      %v3514 = vunpack.c.l.b16 %v3450
      %v3515 = vunpack.c.l.b16 %v3451
      %v3516 = vunpack.c.l.b16 %v3452
      %v3517 = vunpack.c.l.b16 %v3453
      %v3518 = vunpack.c.l.b16 %v3454
      %v3519 = vunpack.c.l.b16 %v3455
      %v3520 = vunpack.c.l.b16 %v3456
      %v3521 = vunpack.c.l.b16 %v3457
      %v3522 = vunpack.c.l.b16 %v3458
      %v3523 = vunpack.c.l.b16 %v3459
      %v3524 = vunpack.c.l.b16 %v3460
      %v3525 = vunpack.c.l.b16 %v3461
      %v3526 = vunpack.c.l.b16 %v3462
      %v3527 = vunpack.c.l.b16 %v3463
      %v3528 = vunpack.c.l.b16 %v3464
      %v3529 = vunpack.c.l.b16 %v3465
      %v3530 = vunpack.c.l.b16 %v3466
      %v3531 = vunpack.c.l.b16 %v3467
      %v3532 = vunpack.c.l.b16 %v3468
      %v3533 = vunpack.c.l.b16 %v3469
      %v3534 = vunpack.c.l.b16 %v3470
      %v3535 = vunpack.c.l.b16 %v3471
      %v3536 = vunpack.c.l.b16 %v3472
      %v3537 = vunpack.c.l.b16 %v3473
      %v3538 = vunpack.c.l.b16 %v3474
      %v3539 = vpack.c.b16 %v3508, %v3507
      %v3540 = vpack.c.b16 %v3510, %v3509
      %v3541 = vpack.c.b16 %v3512, %v3511
      %v3542 = vpack.c.b16 %v3514, %v3513
      %v3543 = vpack.c.b16 %v3516, %v3515
      %v3544 = vpack.c.b16 %v3518, %v3517
      %v3545 = vpack.c.b16 %v3520, %v3519
      %v3546 = vpack.c.b16 %v3522, %v3521
      %v3547 = vpack.c.b16 %v3524, %v3523
      %v3548 = vpack.c.b16 %v3526, %v3525
      %v3549 = vpack.c.b16 %v3528, %v3527
      %v3550 = vpack.c.b16 %v3530, %v3529
      %v3551 = vpack.c.b16 %v3532, %v3531
      %v3552 = vpack.c.b16 %v3534, %v3533
      %v3553 = vpack.c.b16 %v3536, %v3535
      %v3554 = vpack.c.b16 %v3538, %v3537
      %3571 = vmatprep.subr.bf16.mxu0 0
      %3572 = vmatpush1.bf16.msra.mxu0 %v3539
      %3573 = vmatprep.subr.bf16.mxu0 0
      %3574 = vmatpush1.bf16.msra.mxu0 %v3540
      %3575 = vmatprep.subr.bf16.mxu0 0
      %3576 = vmatpush1.bf16.msra.mxu0 %v3541
      %3577 = vmatprep.subr.bf16.mxu0 0
      %3578 = vmatpush1.bf16.msra.mxu0 %v3542
      %3579 = vmatprep.subr.bf16.mxu0 0
      %3580 = vmatpush1.bf16.msra.mxu0 %v3543
      %3581 = vmatprep.subr.bf16.mxu0 0
      %3582 = vmatpush1.bf16.msra.mxu0 %v3544
      %3583 = vmatprep.subr.bf16.mxu0 0
      %3584 = vmatpush1.bf16.msra.mxu0 %v3545
      %3585 = vmatprep.subr.bf16.mxu0 0
      %3586 = vmatpush1.bf16.msra.mxu0 %v3546
      %3587 = vmatprep.subr.bf16.mxu0 0
      %3588 = vmatpush1.bf16.msra.mxu0 %v3547
      %3589 = vmatprep.subr.bf16.mxu0 0
      %3590 = vmatpush1.bf16.msra.mxu0 %v3548
      %3591 = vmatprep.subr.bf16.mxu0 0
      %3592 = vmatpush1.bf16.msra.mxu0 %v3549
      %3593 = vmatprep.subr.bf16.mxu0 0
      %3594 = vmatpush1.bf16.msra.mxu0 %v3550
      %3595 = vmatprep.subr.bf16.mxu0 0
      %3596 = vmatpush1.bf16.msra.mxu0 %v3551
      %3597 = vmatprep.subr.bf16.mxu0 0
      %3598 = vmatpush1.bf16.msra.mxu0 %v3552
      %3599 = vmatprep.subr.bf16.mxu0 0
      %3600 = vmatpush1.bf16.msra.mxu0 %v3553
      %3601 = vmatprep.subr.bf16.mxu0 0
      %3602 = vmatpush1.bf16.msra.mxu0 %v3554
      %3603 = vmatprep.mubr.bf16.mxu0 %v3378
      %3604 = vmatmul.mubr.bf16.gmra.mrb[0].mxu0 %v3348
      %v3605 = vpop.f32.mrb[0].mxu0
      %v3606 = vadd.f32 0.0, %v3605
      %v3607 = vpop.f32.mrb[0].mxu0
      %v3608 = vpop.f32.mrb[0].mxu0
      %v3609 = vadd.f32 0.0, %v3608
      %v3610 = vpop.f32.mrb[0].mxu0
      %3611 = vmatprep.mubr.bf16.mxu0 %v3386
      %3612 = vmatmul.mubr.bf16.gmra.mrb[0].mxu0 %v3349
      %v3613 = vpop.f32.mrb[0].mxu0
      %v3614 = vadd.f32 0.0, %v3613
      %v3615 = vpop.f32.mrb[0].mxu0
      %v3616 = vpop.f32.mrb[0].mxu0
      %v3617 = vadd.f32 0.0, %v3616
      %v3618 = vpop.f32.mrb[0].mxu0
      %3619 = vmatprep.mubr.bf16.mxu0 %v3394
      %3620 = vmatmul.mubr.bf16.gmra.mrb[0].mxu0 %v3350
      %v3621 = vpop.f32.mrb[0].mxu0
      %v3622 = vadd.f32 0.0, %v3621
      %v3623 = vpop.f32.mrb[0].mxu0
      %v3624 = vpop.f32.mrb[0].mxu0
      %v3625 = vadd.f32 0.0, %v3624
      %v3626 = vpop.f32.mrb[0].mxu0
      %3627 = vmatprep.mubr.bf16.mxu0 %v3402
      %3628 = vmatmul.mubr.bf16.gmra.mrb[0].mxu0 %v3351
      %v3629 = vpop.f32.mrb[0].mxu0
      %v3630 = vadd.f32 0.0, %v3629
      %v3631 = vpop.f32.mrb[0].mxu0
      %v3632 = vpop.f32.mrb[0].mxu0
      %v3633 = vadd.f32 0.0, %v3632
      %v3634 = vpop.f32.mrb[0].mxu0
      %3635 = vmatprep.mubr.bf16.mxu0 %v3410
      %3636 = vmatmul.mubr.bf16.gmra.mrb[0].mxu0 %v3352
      %v3637 = vpop.f32.mrb[0].mxu0
      %v3638 = vadd.f32 0.0, %v3637
      %v3639 = vpop.f32.mrb[0].mxu0
      %v3640 = vpop.f32.mrb[0].mxu0
      %v3641 = vadd.f32 0.0, %v3640
      %v3642 = vpop.f32.mrb[0].mxu0
      %3643 = vmatprep.mubr.bf16.mxu0 %v3418
      %3644 = vmatmul.mubr.bf16.gmra.mrb[0].mxu0 %v3353
      %v3645 = vpop.f32.mrb[0].mxu0
      %v3646 = vadd.f32 0.0, %v3645
      %v3647 = vpop.f32.mrb[0].mxu0
      %v3648 = vpop.f32.mrb[0].mxu0
      %v3649 = vadd.f32 0.0, %v3648
      %v3650 = vpop.f32.mrb[0].mxu0
      %3651 = vmatprep.mubr.bf16.mxu0 %v3426
      %3652 = vmatmul.mubr.bf16.gmra.mrb[0].mxu0 %v3354
      %v3653 = vpop.f32.mrb[0].mxu0
      %v3654 = vadd.f32 0.0, %v3653
      %v3655 = vpop.f32.mrb[0].mxu0
      %v3656 = vpop.f32.mrb[0].mxu0
      %v3657 = vadd.f32 0.0, %v3656
      %v3658 = vpop.f32.mrb[0].mxu0
      %3659 = vmatprep.mubr.bf16.mxu0 %v3434
      %3660 = vmatmul.mubr.bf16.gmra.mrb[0].mxu0 %v3355
      %v3661 = vpop.f32.mrb[0].mxu0
      %v3662 = vadd.f32 0.0, %v3661
      %v3663 = vpop.f32.mrb[0].mxu0
      %v3664 = vpop.f32.mrb[0].mxu0
      %v3665 = vadd.f32 0.0, %v3664
      %v3666 = vpop.f32.mrb[0].mxu0
      %3667 = vdwg.mxu0
      %v3668 = vadd.f32 %v3283, %v3606
      %v3669 = vadd.f32 %v3284, %v3609
      %v3670 = vadd.f32 %v3285, %v3614
      %v3671 = vadd.f32 %v3286, %v3617
      %v3672 = vadd.f32 %v3287, %v3622
      %v3673 = vadd.f32 %v3288, %v3625
      %v3674 = vadd.f32 %v3289, %v3630
      %v3675 = vadd.f32 %v3290, %v3633
      %v3676 = vadd.f32 %v3291, %v3638
      %v3677 = vadd.f32 %v3292, %v3641
      %v3678 = vadd.f32 %v3293, %v3646
      %v3679 = vadd.f32 %v3294, %v3649
      %v3680 = vadd.f32 %v3295, %v3654
      %v3681 = vadd.f32 %v3296, %v3657
      %v3682 = vadd.f32 %v3297, %v3662
      %v3683 = vadd.f32 %v3298, %v3665
      %v3684 = vld [vmem:[%s2161 + $0x10] sm:$0xe]
      %v3686 = vunpack.c.l.b16 %v3684
      %v3687 = vpack.c.b16 %v3333, %v3686
      %v3688 = vrot.slane %v2211, 7
      %v3689 = vsel %vm484, %v3688, %v2349
      %v3690 = vld [vmem:[%s1830] sm:$0xf]
      %v3691 = vld [vmem:[%s1830 + $0x4] sm:$0xf]
      %v3692 = vld [vmem:[%s1830 + $0x8] sm:$0xf]
      %v3693 = vld [vmem:[%s1830 + $0xc] sm:$0xf]
      %v3694 = vld [vmem:[%s1830 + $0x10] sm:$0xf]
      %v3695 = vld [vmem:[%s1830 + $0x14] sm:$0xf]
      %v3696 = vld [vmem:[%s1830 + $0x18] sm:$0xf]
      %v3697 = vld [vmem:[%s1830 + $0x1c] sm:$0xf]
      %v3698 = vld [vmem:[%s1830 + $0x20] sm:$0xf]
      %v3699 = vld [vmem:[%s1830 + $0x24] sm:$0xf]
      %v3700 = vld [vmem:[%s1830 + $0x28] sm:$0xf]
      %v3701 = vld [vmem:[%s1830 + $0x2c] sm:$0xf]
      %v3702 = vld [vmem:[%s1830 + $0x30] sm:$0xf]
      %v3703 = vld [vmem:[%s1830 + $0x34] sm:$0xf]
      %v3704 = vld [vmem:[%s1830 + $0x38] sm:$0xf]
      %v3705 = vld [vmem:[%s1830 + $0x3c] sm:$0xf]
      %v3706 = vld [vmem:[%s1830 + $0x40] sm:$0xf]
      %v3707 = vld [vmem:[%s1830 + $0x44] sm:$0xf]
      %v3708 = vld [vmem:[%s1830 + $0x48] sm:$0xf]
      %v3709 = vld [vmem:[%s1830 + $0x4c] sm:$0xf]
      %v3710 = vld [vmem:[%s1830 + $0x50] sm:$0xf]
      %v3711 = vld [vmem:[%s1830 + $0x54] sm:$0xf]
      %v3712 = vld [vmem:[%s1830 + $0x58] sm:$0xf]
      %v3713 = vld [vmem:[%s1830 + $0x5c] sm:$0xf]
      %v3714 = vld [vmem:[%s1830 + $0x60] sm:$0xf]
      %v3715 = vld [vmem:[%s1830 + $0x64] sm:$0xf]
      %v3716 = vld [vmem:[%s1830 + $0x68] sm:$0xf]
      %v3717 = vld [vmem:[%s1830 + $0x6c] sm:$0xf]
      %v3718 = vld [vmem:[%s1830 + $0x70] sm:$0xf]
      %v3719 = vld [vmem:[%s1830 + $0x74] sm:$0xf]
      %v3720 = vld [vmem:[%s1830 + $0x78] sm:$0xf]
      %v3721 = vld [vmem:[%s1830 + $0x7c] sm:$0xf]
      %v3722 = vrot.slane %v3687, 1
      %v3723 = vrot.slane %v3349, 1
      %v3724 = vsel %vm533, %v3722, %v3723
      %v3725 = vrot.slane %v3688, 1
      %v3726 = vrot.slane %v3689, 1
      %v3727 = vsel %vm533, %v3725, %v3726
      %v3728 = vrot.slane %v3350, 1
      %v3729 = vsel %vm533, %v3723, %v3728
      %v3730 = vsel %vm533, %v3726, %v2400
      %v3731 = vrot.slane %v3351, 1
      %v3732 = vsel %vm533, %v3728, %v3731
      %v3733 = vrot.slane %v3352, 1
      %v3734 = vsel %vm533, %v3731, %v3733
      %v3735 = vrot.slane %v3353, 1
      %v3736 = vsel %vm533, %v3733, %v3735
      %v3737 = vrot.slane %v3354, 1
      %v3738 = vsel %vm533, %v3735, %v3737
      %v3739 = vrot.slane %v3355, 1
      %v3740 = vsel %vm533, %v3737, %v3739
      %v3741 = vrot.slane %v3366, 1
      %v3742 = vsel %vm533, %v3739, %v3741
      %v3743 = vrot.slane %v2360, 1
      %v3744 = vsel %vm533, %v2420, %v3743
      %v3788 = vunpack.c.l.b16 %v3690
      %v3789 = vunpack.c.l.b16 %v3691
      %v3790 = vunpack.c.l.b16 %v3692
      %v3791 = vunpack.c.l.b16 %v3693
      %v3792 = vunpack.c.l.b16 %v3694
      %v3793 = vunpack.c.l.b16 %v3695
      %v3794 = vunpack.c.l.b16 %v3696
      %v3795 = vunpack.c.l.b16 %v3697
      %v3796 = vunpack.c.l.b16 %v3698
      %v3797 = vunpack.c.l.b16 %v3699
      %v3798 = vunpack.c.l.b16 %v3700
      %v3799 = vunpack.c.l.b16 %v3701
      %v3800 = vunpack.c.l.b16 %v3702
      %v3801 = vunpack.c.l.b16 %v3703
      %v3802 = vunpack.c.l.b16 %v3704
      %v3803 = vunpack.c.l.b16 %v3705
      %v3804 = vunpack.c.l.b16 %v3706
      %v3805 = vunpack.c.l.b16 %v3707
      %v3806 = vunpack.c.l.b16 %v3708
      %v3807 = vunpack.c.l.b16 %v3709
      %v3808 = vunpack.c.l.b16 %v3710
      %v3809 = vunpack.c.l.b16 %v3711
      %v3810 = vunpack.c.l.b16 %v3712
      %v3811 = vunpack.c.l.b16 %v3713
      %v3812 = vunpack.c.l.b16 %v3714
      %v3813 = vunpack.c.l.b16 %v3715
      %v3814 = vunpack.c.l.b16 %v3716
      %v3815 = vunpack.c.l.b16 %v3717
      %v3816 = vunpack.c.l.b16 %v3718
      %v3817 = vunpack.c.l.b16 %v3719
      %v3818 = vunpack.c.l.b16 %v3720
      %v3819 = vunpack.c.l.b16 %v3721
      %v3820 = vpack.c.b16 %v3789, %v3788
      %v3821 = vpack.c.b16 %v3791, %v3790
      %v3822 = vpack.c.b16 %v3793, %v3792
      %v3823 = vpack.c.b16 %v3795, %v3794
      %v3824 = vpack.c.b16 %v3797, %v3796
      %v3825 = vpack.c.b16 %v3799, %v3798
      %v3826 = vpack.c.b16 %v3801, %v3800
      %v3827 = vpack.c.b16 %v3803, %v3802
      %v3828 = vpack.c.b16 %v3805, %v3804
      %v3829 = vpack.c.b16 %v3807, %v3806
      %v3830 = vpack.c.b16 %v3809, %v3808
      %v3831 = vpack.c.b16 %v3811, %v3810
      %v3832 = vpack.c.b16 %v3813, %v3812
      %v3833 = vpack.c.b16 %v3815, %v3814
      %v3834 = vpack.c.b16 %v3817, %v3816
      %v3835 = vpack.c.b16 %v3819, %v3818
      %3852 = vmatprep.subr.bf16.mxu0 0
      %3853 = vmatpush1.bf16.msra.mxu0 %v3820
      %3854 = vmatprep.subr.bf16.mxu0 0
      %3855 = vmatpush1.bf16.msra.mxu0 %v3821
      %3856 = vmatprep.subr.bf16.mxu0 0
      %3857 = vmatpush1.bf16.msra.mxu0 %v3822
      %3858 = vmatprep.subr.bf16.mxu0 0
      %3859 = vmatpush1.bf16.msra.mxu0 %v3823
      %3860 = vmatprep.subr.bf16.mxu0 0
      %3861 = vmatpush1.bf16.msra.mxu0 %v3824
      %3862 = vmatprep.subr.bf16.mxu0 0
      %3863 = vmatpush1.bf16.msra.mxu0 %v3825
      %3864 = vmatprep.subr.bf16.mxu0 0
      %3865 = vmatpush1.bf16.msra.mxu0 %v3826
      %3866 = vmatprep.subr.bf16.mxu0 0
      %3867 = vmatpush1.bf16.msra.mxu0 %v3827
      %3868 = vmatprep.subr.bf16.mxu0 0
      %3869 = vmatpush1.bf16.msra.mxu0 %v3828
      %3870 = vmatprep.subr.bf16.mxu0 0
      %3871 = vmatpush1.bf16.msra.mxu0 %v3829
      %3872 = vmatprep.subr.bf16.mxu0 0
      %3873 = vmatpush1.bf16.msra.mxu0 %v3830
      %3874 = vmatprep.subr.bf16.mxu0 0
      %3875 = vmatpush1.bf16.msra.mxu0 %v3831
      %3876 = vmatprep.subr.bf16.mxu0 0
      %3877 = vmatpush1.bf16.msra.mxu0 %v3832
      %3878 = vmatprep.subr.bf16.mxu0 0
      %3879 = vmatpush1.bf16.msra.mxu0 %v3833
      %3880 = vmatprep.subr.bf16.mxu0 0
      %3881 = vmatpush1.bf16.msra.mxu0 %v3834
      %3882 = vmatprep.subr.bf16.mxu0 0
      %3883 = vmatpush1.bf16.msra.mxu0 %v3835
      %3884 = vmatprep.mubr.bf16.mxu0 %v3727
      %3885 = vmatmul.mubr.bf16.gmra.mrb[0].mxu0 %v3724
      %v3886 = vpop.f32.mrb[0].mxu0
      %v3887 = vadd.f32 0.0, %v3886
      %v3888 = vpop.f32.mrb[0].mxu0
      %v3889 = vpop.f32.mrb[0].mxu0
      %v3890 = vadd.f32 0.0, %v3889
      %v3891 = vpop.f32.mrb[0].mxu0
      %3892 = vmatprep.mubr.bf16.mxu0 %v3730
      %3893 = vmatmul.mubr.bf16.gmra.mrb[0].mxu0 %v3729
      %v3894 = vpop.f32.mrb[0].mxu0
      %v3895 = vadd.f32 0.0, %v3894
      %v3896 = vpop.f32.mrb[0].mxu0
      %v3897 = vpop.f32.mrb[0].mxu0
      %v3898 = vadd.f32 0.0, %v3897
      %v3899 = vpop.f32.mrb[0].mxu0
      %3900 = vmatprep.mubr.bf16.mxu0 %v2405
      %3901 = vmatmul.mubr.bf16.gmra.mrb[0].mxu0 %v3732
      %v3902 = vpop.f32.mrb[0].mxu0
      %v3903 = vadd.f32 0.0, %v3902
      %v3904 = vpop.f32.mrb[0].mxu0
      %v3905 = vpop.f32.mrb[0].mxu0
      %v3906 = vadd.f32 0.0, %v3905
      %v3907 = vpop.f32.mrb[0].mxu0
      %3908 = vmatprep.mubr.bf16.mxu0 %v2409
      %3909 = vmatmul.mubr.bf16.gmra.mrb[0].mxu0 %v3734
      %v3910 = vpop.f32.mrb[0].mxu0
      %v3911 = vadd.f32 0.0, %v3910
      %v3912 = vpop.f32.mrb[0].mxu0
      %v3913 = vpop.f32.mrb[0].mxu0
      %v3914 = vadd.f32 0.0, %v3913
      %v3915 = vpop.f32.mrb[0].mxu0
      %3916 = vmatprep.mubr.bf16.mxu0 %v2413
      %3917 = vmatmul.mubr.bf16.gmra.mrb[0].mxu0 %v3736
      %v3918 = vpop.f32.mrb[0].mxu0
      %v3919 = vadd.f32 0.0, %v3918
      %v3920 = vpop.f32.mrb[0].mxu0
      %v3921 = vpop.f32.mrb[0].mxu0
      %v3922 = vadd.f32 0.0, %v3921
      %v3923 = vpop.f32.mrb[0].mxu0
      %3924 = vmatprep.mubr.bf16.mxu0 %v2417
      %3925 = vmatmul.mubr.bf16.gmra.mrb[0].mxu0 %v3738
      %v3926 = vpop.f32.mrb[0].mxu0
      %v3927 = vadd.f32 0.0, %v3926
      %v3928 = vpop.f32.mrb[0].mxu0
      %v3929 = vpop.f32.mrb[0].mxu0
      %v3930 = vadd.f32 0.0, %v3929
      %v3931 = vpop.f32.mrb[0].mxu0
      %3932 = vmatprep.mubr.bf16.mxu0 %v2421
      %3933 = vmatmul.mubr.bf16.gmra.mrb[0].mxu0 %v3740
      %v3934 = vpop.f32.mrb[0].mxu0
      %v3935 = vadd.f32 0.0, %v3934
      %v3936 = vpop.f32.mrb[0].mxu0
      %v3937 = vpop.f32.mrb[0].mxu0
      %v3938 = vadd.f32 0.0, %v3937
      %v3939 = vpop.f32.mrb[0].mxu0
      %3940 = vmatprep.mubr.bf16.mxu0 %v3744
      %3941 = vmatmul.mubr.bf16.gmra.mrb[0].mxu0 %v3742
      %v3942 = vpop.f32.mrb[0].mxu0
      %v3943 = vadd.f32 0.0, %v3942
      %v3944 = vpop.f32.mrb[0].mxu0
      %v3945 = vpop.f32.mrb[0].mxu0
      %v3946 = vadd.f32 0.0, %v3945
      %v3947 = vpop.f32.mrb[0].mxu0
      %3948 = vdwg.mxu0
      %v3949 = vadd.f32 %v3668, %v3887
      %v3950 = vadd.f32 %v3669, %v3890
      %v3951 = vadd.f32 %v3670, %v3895
      %v3952 = vadd.f32 %v3671, %v3898
      %v3953 = vadd.f32 %v3672, %v3903
      %v3954 = vadd.f32 %v3673, %v3906
      %v3955 = vadd.f32 %v3674, %v3911
      %v3956 = vadd.f32 %v3675, %v3914
      %v3957 = vadd.f32 %v3676, %v3919
      %v3958 = vadd.f32 %v3677, %v3922
      %v3959 = vadd.f32 %v3678, %v3927
      %v3960 = vadd.f32 %v3679, %v3930
      %v3961 = vadd.f32 %v3680, %v3935
      %v3962 = vadd.f32 %v3681, %v3938
      %v3963 = vadd.f32 %v3682, %v3943
      %v3964 = vadd.f32 %v3683, %v3946
      %v3965 = vld [vmem:[%s2] sm:$0x1]
      %v3967 = vlaneseq
      %v3968 = vshrl.u32 %v3967, 7
      %v3969 = vsub.s32 0, %v3968
      %v3970 = vrot.slane %v3965, %v3969
      %v3972 = vadd.f32 %v3949, %v3970
      %v3973 = vadd.f32 %v3950, %v3970
      %v3974 = vadd.f32 %v3951, %v3970
      %v3975 = vadd.f32 %v3952, %v3970
      %v3976 = vadd.f32 %v3953, %v3970
      %v3977 = vadd.f32 %v3954, %v3970
      %v3978 = vadd.f32 %v3955, %v3970
      %v3979 = vadd.f32 %v3956, %v3970
      %v3980 = vadd.f32 %v3957, %v3970
      %v3981 = vadd.f32 %v3958, %v3970
      %v3982 = vadd.f32 %v3959, %v3970
      %v3983 = vadd.f32 %v3960, %v3970
      %v3984 = vadd.f32 %v3961, %v3970
      %v3985 = vadd.f32 %v3962, %v3970
      %v3986 = vadd.f32 %v3963, %v3970
      %v3987 = vadd.f32 %v3964, %v3970
      %v3988 = vmax.f32 %v3972, 0.0
      %v3989 = vmax.f32 %v3973, 0.0
      %v3990 = vmax.f32 %v3974, 0.0
      %v3991 = vmax.f32 %v3975, 0.0
      %v3992 = vmax.f32 %v3976, 0.0
      %v3993 = vmax.f32 %v3977, 0.0
      %v3994 = vmax.f32 %v3978, 0.0
      %v3995 = vmax.f32 %v3979, 0.0
      %v3996 = vmax.f32 %v3980, 0.0
      %v3997 = vmax.f32 %v3981, 0.0
      %v3998 = vmax.f32 %v3982, 0.0
      %v3999 = vmax.f32 %v3983, 0.0
      %v4000 = vmax.f32 %v3984, 0.0
      %v4001 = vmax.f32 %v3985, 0.0
      %v4002 = vmax.f32 %v3986, 0.0
      %v4003 = vmax.f32 %v3987, 0.0
      %4004 = vst [vmem:[#allocation3] sm:$0xff] %v3988
      %4005 = vst [vmem:[#allocation3 + $0x8] sm:$0xff] %v3989
      %4006 = vst [vmem:[#allocation3 + $0x10] sm:$0xff] %v3990
      %4007 = vst [vmem:[#allocation3 + $0x18] sm:$0xff] %v3991
      %4008 = vst [vmem:[#allocation3 + $0x20] sm:$0xff] %v3992
      %4009 = vst [vmem:[#allocation3 + $0x28] sm:$0xff] %v3993
      %4010 = vst [vmem:[#allocation3 + $0x30] sm:$0xff] %v3994
      %4011 = vst [vmem:[#allocation3 + $0x38] sm:$0xff] %v3995
      %4012 = vst [vmem:[#allocation3 + $0x40] sm:$0xff] %v3996
      %4013 = vst [vmem:[#allocation3 + $0x48] sm:$0xff] %v3997
      %4014 = vst [vmem:[#allocation3 + $0x50] sm:$0xff] %v3998
      %4015 = vst [vmem:[#allocation3 + $0x58] sm:$0xff] %v3999
      %4016 = vst [vmem:[#allocation3 + $0x60] sm:$0xff] %v4000
      %4017 = vst [vmem:[#allocation3 + $0x68] sm:$0xff] %v4001
      %4018 = vst [vmem:[#allocation3 + $0x70] sm:$0xff] %v4002
      %4019 = vst [vmem:[#allocation3 + $0x78] sm:$0xff] %v4003
      %v4020 = vmul.f32 %v2129, %v2129
      %v4021 = vmul.f32 %v2130, %v2130
      %v4022 = vmul.f32 %v2131, %v2131
      %v4023 = vmul.f32 %v2132, %v2132
      %v4024 = vmul.f32 %v2133, %v2133
      %v4025 = vmul.f32 %v2134, %v2134
      %v4026 = vmul.f32 %v2135, %v2135
      %v4027 = vmul.f32 %v2136, %v2136
      %v4028 = vmul.f32 %v2137, %v2137
      %v4029 = vmul.f32 %v2138, %v2138
      %v4030 = vmul.f32 %v2139, %v2139
      %v4031 = vmul.f32 %v2140, %v2140
      %v4032 = vmul.f32 %v2141, %v2141
      %v4033 = vmul.f32 %v2142, %v2142
      %v4034 = vmul.f32 %v2143, %v2143
      %v4035 = vmul.f32 %v2144, %v2144
      %4036 = vadd.xlane.f32.xlu0 %v4020
      %v4037 = vpop.xlane.xlu0 %4036
      %4038 = vadd.xlane.f32.xlu0 %v4021
      %v4039 = vpop.xlane.xlu0 %4038
      %4040 = vadd.xlane.f32.xlu0 %v4022
      %v4041 = vpop.xlane.xlu0 %4040
      %4042 = vadd.xlane.f32.xlu0 %v4023
      %v4043 = vpop.xlane.xlu0 %4042
      %4044 = vadd.xlane.f32.xlu0 %v4024
      %v4045 = vpop.xlane.xlu0 %4044
      %4046 = vadd.xlane.f32.xlu0 %v4025
      %v4047 = vpop.xlane.xlu0 %4046
      %4048 = vadd.xlane.f32.xlu0 %v4026
      %v4049 = vpop.xlane.xlu0 %4048
      %4050 = vadd.xlane.f32.xlu0 %v4027
      %v4051 = vpop.xlane.xlu0 %4050
      %4052 = vadd.xlane.f32.xlu0 %v4028
      %v4053 = vpop.xlane.xlu0 %4052
      %4054 = vadd.xlane.f32.xlu0 %v4029
      %v4055 = vpop.xlane.xlu0 %4054
      %4056 = vadd.xlane.f32.xlu0 %v4030
      %v4057 = vpop.xlane.xlu0 %4056
      %4058 = vadd.xlane.f32.xlu0 %v4031
      %v4059 = vpop.xlane.xlu0 %4058
      %4060 = vadd.xlane.f32.xlu0 %v4032
      %v4061 = vpop.xlane.xlu0 %4060
      %4062 = vadd.xlane.f32.xlu0 %v4033
      %v4063 = vpop.xlane.xlu0 %4062
      %4064 = vadd.xlane.f32.xlu0 %v4034
      %v4065 = vpop.xlane.xlu0 %4064
      %4066 = vadd.xlane.f32.xlu0 %v4035
      %v4067 = vpop.xlane.xlu0 %4066
      %v4068 = vadd.f32 %v4037, 1e-10
      %v4069 = vadd.f32 %v4039, 1e-10
      %v4070 = vadd.f32 %v4041, 1e-10
      %v4071 = vadd.f32 %v4043, 1e-10
      %v4072 = vadd.f32 %v4045, 1e-10
      %v4073 = vadd.f32 %v4047, 1e-10
      %v4074 = vadd.f32 %v4049, 1e-10
      %v4075 = vadd.f32 %v4051, 1e-10
      %v4076 = vadd.f32 %v4053, 1e-10
      %v4077 = vadd.f32 %v4055, 1e-10
      %v4078 = vadd.f32 %v4057, 1e-10
      %v4079 = vadd.f32 %v4059, 1e-10
      %v4080 = vadd.f32 %v4061, 1e-10
      %v4081 = vadd.f32 %v4063, 1e-10
      %v4082 = vadd.f32 %v4065, 1e-10
      %v4083 = vadd.f32 %v4067, 1e-10
      %v4084 = vrsqrt.pop %v4068
      %v4085 = vrsqrt.pop %v4069
      %v4086 = vrsqrt.pop %v4070
      %v4087 = vrsqrt.pop %v4071
      %v4088 = vrsqrt.pop %v4072
      %v4089 = vrsqrt.pop %v4073
      %v4090 = vrsqrt.pop %v4074
      %v4091 = vrsqrt.pop %v4075
      %v4092 = vrsqrt.pop %v4076
      %v4093 = vrsqrt.pop %v4077
      %v4094 = vrsqrt.pop %v4078
      %v4095 = vrsqrt.pop %v4079
      %v4096 = vrsqrt.pop %v4080
      %v4097 = vrsqrt.pop %v4081
      %v4098 = vrsqrt.pop %v4082
      %v4099 = vrsqrt.pop %v4083
      %v4100 = vmul.f32 %v2129, %v4084
      %v4101 = vmul.f32 %v2130, %v4085
      %v4102 = vmul.f32 %v2131, %v4086
      %v4103 = vmul.f32 %v2132, %v4087
      %v4104 = vmul.f32 %v2133, %v4088
      %v4105 = vmul.f32 %v2134, %v4089
      %v4106 = vmul.f32 %v2135, %v4090
      %v4107 = vmul.f32 %v2136, %v4091
      %v4108 = vmul.f32 %v2137, %v4092
      %v4109 = vmul.f32 %v2138, %v4093
      %v4110 = vmul.f32 %v2139, %v4094
      %v4111 = vmul.f32 %v2140, %v4095
      %v4112 = vmul.f32 %v2141, %v4096
      %v4113 = vmul.f32 %v2142, %v4097
      %v4114 = vmul.f32 %v2143, %v4098
      %v4115 = vmul.f32 %v2144, %v4099
      %v4116 = vmul.f32 %v3988, %v3988
      %v4117 = vmul.f32 %v3989, %v3989
      %v4118 = vmul.f32 %v3990, %v3990
      %v4119 = vmul.f32 %v3991, %v3991
      %v4120 = vmul.f32 %v3992, %v3992
      %v4121 = vmul.f32 %v3993, %v3993
      %v4122 = vmul.f32 %v3994, %v3994
      %v4123 = vmul.f32 %v3995, %v3995
      %v4124 = vmul.f32 %v3996, %v3996
      %v4125 = vmul.f32 %v3997, %v3997
      %v4126 = vmul.f32 %v3998, %v3998
      %v4127 = vmul.f32 %v3999, %v3999
      %v4128 = vmul.f32 %v4000, %v4000
      %v4129 = vmul.f32 %v4001, %v4001
      %v4130 = vmul.f32 %v4002, %v4002
      %v4131 = vmul.f32 %v4003, %v4003
      %4132 = vadd.xlane.f32.xlu0 %v4116
      %v4133 = vpop.xlane.xlu0 %4132
      %4134 = vadd.xlane.f32.xlu0 %v4117
      %v4135 = vpop.xlane.xlu0 %4134
      %4136 = vadd.xlane.f32.xlu0 %v4118
      %v4137 = vpop.xlane.xlu0 %4136
      %4138 = vadd.xlane.f32.xlu0 %v4119
      %v4139 = vpop.xlane.xlu0 %4138
      %4140 = vadd.xlane.f32.xlu0 %v4120
      %v4141 = vpop.xlane.xlu0 %4140
      %4142 = vadd.xlane.f32.xlu0 %v4121
      %v4143 = vpop.xlane.xlu0 %4142
      %4144 = vadd.xlane.f32.xlu0 %v4122
      %v4145 = vpop.xlane.xlu0 %4144
      %4146 = vadd.xlane.f32.xlu0 %v4123
      %v4147 = vpop.xlane.xlu0 %4146
      %4148 = vadd.xlane.f32.xlu0 %v4124
      %v4149 = vpop.xlane.xlu0 %4148
      %4150 = vadd.xlane.f32.xlu0 %v4125
      %v4151 = vpop.xlane.xlu0 %4150
      %4152 = vadd.xlane.f32.xlu0 %v4126
      %v4153 = vpop.xlane.xlu0 %4152
      %4154 = vadd.xlane.f32.xlu0 %v4127
      %v4155 = vpop.xlane.xlu0 %4154
      %4156 = vadd.xlane.f32.xlu0 %v4128
      %v4157 = vpop.xlane.xlu0 %4156
      %4158 = vadd.xlane.f32.xlu0 %v4129
      %v4159 = vpop.xlane.xlu0 %4158
      %4160 = vadd.xlane.f32.xlu0 %v4130
      %v4161 = vpop.xlane.xlu0 %4160
      %4162 = vadd.xlane.f32.xlu0 %v4131
      %v4163 = vpop.xlane.xlu0 %4162
      %v4164 = vadd.f32 %v4133, 1e-10
      %v4165 = vadd.f32 %v4135, 1e-10
      %v4166 = vadd.f32 %v4137, 1e-10
      %v4167 = vadd.f32 %v4139, 1e-10
      %v4168 = vadd.f32 %v4141, 1e-10
      %v4169 = vadd.f32 %v4143, 1e-10
      %v4170 = vadd.f32 %v4145, 1e-10
      %v4171 = vadd.f32 %v4147, 1e-10
      %v4172 = vadd.f32 %v4149, 1e-10
      %v4173 = vadd.f32 %v4151, 1e-10
      %v4174 = vadd.f32 %v4153, 1e-10
      %v4175 = vadd.f32 %v4155, 1e-10
      %v4176 = vadd.f32 %v4157, 1e-10
      %v4177 = vadd.f32 %v4159, 1e-10
      %v4178 = vadd.f32 %v4161, 1e-10
      %v4179 = vadd.f32 %v4163, 1e-10
      %v4180 = vrsqrt.pop %v4164
      %v4181 = vrsqrt.pop %v4165
      %v4182 = vrsqrt.pop %v4166
      %v4183 = vrsqrt.pop %v4167
      %v4184 = vrsqrt.pop %v4168
      %v4185 = vrsqrt.pop %v4169
      %v4186 = vrsqrt.pop %v4170
      %v4187 = vrsqrt.pop %v4171
      %v4188 = vrsqrt.pop %v4172
      %v4189 = vrsqrt.pop %v4173
      %v4190 = vrsqrt.pop %v4174
      %v4191 = vrsqrt.pop %v4175
      %v4192 = vrsqrt.pop %v4176
      %v4193 = vrsqrt.pop %v4177
      %v4194 = vrsqrt.pop %v4178
      %v4195 = vrsqrt.pop %v4179
      %v4196 = vmul.f32 %v3988, %v4180
      %v4197 = vmul.f32 %v3989, %v4181
      %v4198 = vmul.f32 %v3990, %v4182
      %v4199 = vmul.f32 %v3991, %v4183
      %v4200 = vmul.f32 %v3992, %v4184
      %v4201 = vmul.f32 %v3993, %v4185
      %v4202 = vmul.f32 %v3994, %v4186
      %v4203 = vmul.f32 %v3995, %v4187
      %v4204 = vmul.f32 %v3996, %v4188
      %v4205 = vmul.f32 %v3997, %v4189
      %v4206 = vmul.f32 %v3998, %v4190
      %v4207 = vmul.f32 %v3999, %v4191
      %v4208 = vmul.f32 %v4000, %v4192
      %v4209 = vmul.f32 %v4001, %v4193
      %v4210 = vmul.f32 %v4002, %v4194
      %v4211 = vmul.f32 %v4003, %v4195
      %v4212 = vsub.f32 %v4100, %v4196
      %v4213 = vsub.f32 %v4101, %v4197
      %v4214 = vsub.f32 %v4102, %v4198
      %v4215 = vsub.f32 %v4103, %v4199
      %v4216 = vsub.f32 %v4104, %v4200
      %v4217 = vsub.f32 %v4105, %v4201
      %v4218 = vsub.f32 %v4106, %v4202
      %v4219 = vsub.f32 %v4107, %v4203
      %v4220 = vsub.f32 %v4108, %v4204
      %v4221 = vsub.f32 %v4109, %v4205
      %v4222 = vsub.f32 %v4110, %v4206
      %v4223 = vsub.f32 %v4111, %v4207
      %v4224 = vsub.f32 %v4112, %v4208
      %v4225 = vsub.f32 %v4113, %v4209
      %v4226 = vsub.f32 %v4114, %v4210
      %v4227 = vsub.f32 %v4115, %v4211
      %v4228 = vmul.f32 %v4212, %v4212
      %v4229 = vmul.f32 %v4213, %v4213
      %v4230 = vmul.f32 %v4214, %v4214
      %v4231 = vmul.f32 %v4215, %v4215
      %v4232 = vmul.f32 %v4216, %v4216
      %v4233 = vmul.f32 %v4217, %v4217
      %v4234 = vmul.f32 %v4218, %v4218
      %v4235 = vmul.f32 %v4219, %v4219
      %v4236 = vmul.f32 %v4220, %v4220
      %v4237 = vmul.f32 %v4221, %v4221
      %v4238 = vmul.f32 %v4222, %v4222
      %v4239 = vmul.f32 %v4223, %v4223
      %v4240 = vmul.f32 %v4224, %v4224
      %v4241 = vmul.f32 %v4225, %v4225
      %v4242 = vmul.f32 %v4226, %v4226
      %v4243 = vmul.f32 %v4227, %v4227
      %v4244 = vpack.c.bf16 %v4229, %v4228
      %v4245 = vpack.c.bf16 %v4231, %v4230
      %v4246 = vpack.c.bf16 %v4233, %v4232
      %v4247 = vpack.c.bf16 %v4235, %v4234
      %v4248 = vpack.c.bf16 %v4237, %v4236
      %v4249 = vpack.c.bf16 %v4239, %v4238
      %v4250 = vpack.c.bf16 %v4241, %v4240
      %v4251 = vpack.c.bf16 %v4243, %v4242
      %4252 = vmatprep.subr.bf16.mxu0 0
      %4253 = vmatpush1.bf16.msra.mxu0 %v288
      %4254 = vmatprep.subr.bf16.mxu0 0
      %4255 = vmatpush1.bf16.msra.mxu0 %v289
      %4256 = vmatprep.subr.bf16.mxu0 0
      %4257 = vmatpush1.bf16.msra.mxu0 %v290
      %4258 = vmatprep.subr.bf16.mxu0 0
      %4259 = vmatpush1.bf16.msra.mxu0 %v291
      %4260 = vmatprep.subr.bf16.mxu0 0
      %4261 = vmatpush1.bf16.msra.mxu0 %v292
      %4262 = vmatprep.subr.bf16.mxu0 0
      %4263 = vmatpush1.bf16.msra.mxu0 %v293
      %4264 = vmatprep.subr.bf16.mxu0 0
      %4265 = vmatpush1.bf16.msra.mxu0 %v294
      %4266 = vmatprep.subr.bf16.mxu0 0
      %4267 = vmatpush1.bf16.msra.mxu0 %v295
      %4268 = vmatprep.subr.bf16.mxu0 0
      %4269 = vmatpush1.bf16.msra.mxu0 0
      %4270 = vmatprep.subr.bf16.mxu0 0
      %4271 = vmatpush1.bf16.msra.mxu0 0
      %4272 = vmatprep.subr.bf16.mxu0 0
      %4273 = vmatpush1.bf16.msra.mxu0 0
      %4274 = vmatprep.subr.bf16.mxu0 0
      %4275 = vmatpush1.bf16.msra.mxu0 0
      %4276 = vmatprep.subr.bf16.mxu0 0
      %4277 = vmatpush1.bf16.msra.mxu0 0
      %4278 = vmatprep.subr.bf16.mxu0 0
      %4279 = vmatpush1.bf16.msra.mxu0 0
      %4280 = vmatprep.subr.bf16.mxu0 0
      %4281 = vmatpush1.bf16.msra.mxu0 0
      %4282 = vmatprep.subr.bf16.mxu0 0
      %4283 = vmatpush1.bf16.msra.mxu0 0
      %4284 = vmatprep.mubr.bf16.mxu0 0
      %4285 = vmatmul.mubr.bf16.gmra.mrb[0].mxu0 %v4244
      %v4286 = vpop.f32.mrb[0].mxu0
      %v4287 = vadd.f32 0.0, %v4286
      %v4288 = vpop.f32.mrb[0].mxu0
      %v4289 = vpop.f32.mrb[0].mxu0
      %v4290 = vadd.f32 0.0, %v4289
      %v4291 = vpop.f32.mrb[0].mxu0
      %4292 = vmatprep.mubr.bf16.mxu0 0
      %4293 = vmatmul.mubr.bf16.gmra.mrb[0].mxu0 %v4245
      %v4294 = vpop.f32.mrb[0].mxu0
      %v4295 = vadd.f32 0.0, %v4294
      %v4296 = vpop.f32.mrb[0].mxu0
      %v4297 = vpop.f32.mrb[0].mxu0
      %v4298 = vadd.f32 0.0, %v4297
      %v4299 = vpop.f32.mrb[0].mxu0
      %4300 = vmatprep.mubr.bf16.mxu0 0
      %4301 = vmatmul.mubr.bf16.gmra.mrb[0].mxu0 %v4246
      %v4302 = vpop.f32.mrb[0].mxu0
      %v4303 = vadd.f32 0.0, %v4302
      %v4304 = vpop.f32.mrb[0].mxu0
      %v4305 = vpop.f32.mrb[0].mxu0
      %v4306 = vadd.f32 0.0, %v4305
      %v4307 = vpop.f32.mrb[0].mxu0
      %4308 = vmatprep.mubr.bf16.mxu0 0
      %4309 = vmatmul.mubr.bf16.gmra.mrb[0].mxu0 %v4247
      %v4310 = vpop.f32.mrb[0].mxu0
      %v4311 = vadd.f32 0.0, %v4310
      %v4312 = vpop.f32.mrb[0].mxu0
      %v4313 = vpop.f32.mrb[0].mxu0
      %v4314 = vadd.f32 0.0, %v4313
      %v4315 = vpop.f32.mrb[0].mxu0
      %4316 = vmatprep.mubr.bf16.mxu0 0
      %4317 = vmatmul.mubr.bf16.gmra.mrb[0].mxu0 %v4248
      %v4318 = vpop.f32.mrb[0].mxu0
      %v4319 = vadd.f32 0.0, %v4318
      %v4320 = vpop.f32.mrb[0].mxu0
      %v4321 = vpop.f32.mrb[0].mxu0
      %v4322 = vadd.f32 0.0, %v4321
      %v4323 = vpop.f32.mrb[0].mxu0
      %4324 = vmatprep.mubr.bf16.mxu0 0
      %4325 = vmatmul.mubr.bf16.gmra.mrb[0].mxu0 %v4249
      %v4326 = vpop.f32.mrb[0].mxu0
      %v4327 = vadd.f32 0.0, %v4326
      %v4328 = vpop.f32.mrb[0].mxu0
      %v4329 = vpop.f32.mrb[0].mxu0
      %v4330 = vadd.f32 0.0, %v4329
      %v4331 = vpop.f32.mrb[0].mxu0
      %4332 = vmatprep.mubr.bf16.mxu0 0
      %4333 = vmatmul.mubr.bf16.gmra.mrb[0].mxu0 %v4250
      %v4334 = vpop.f32.mrb[0].mxu0
      %v4335 = vadd.f32 0.0, %v4334
      %v4336 = vpop.f32.mrb[0].mxu0
      %v4337 = vpop.f32.mrb[0].mxu0
      %v4338 = vadd.f32 0.0, %v4337
      %v4339 = vpop.f32.mrb[0].mxu0
      %4340 = vmatprep.mubr.bf16.mxu0 0
      %4341 = vmatmul.mubr.bf16.gmra.mrb[0].mxu0 %v4251
      %v4342 = vpop.f32.mrb[0].mxu0
      %v4343 = vadd.f32 0.0, %v4342
      %v4344 = vpop.f32.mrb[0].mxu0
      %v4345 = vpop.f32.mrb[0].mxu0
      %v4346 = vadd.f32 0.0, %v4345
      %v4347 = vpop.f32.mrb[0].mxu0
      %4348 = vdwg.mxu0
      %v4349 = vld [vmem:[%s4] sm:$0xff]
      %v4350 = vld [vmem:[%s4 + $0x8] sm:$0xff]
      %v4351 = vld [vmem:[%s4 + $0x10] sm:$0xff]
      %v4352 = vld [vmem:[%s4 + $0x18] sm:$0xff]
      %v4353 = vld [vmem:[%s4 + $0x20] sm:$0xff]
      %v4354 = vld [vmem:[%s4 + $0x28] sm:$0xff]
      %v4355 = vld [vmem:[%s4 + $0x30] sm:$0xff]
      %v4356 = vld [vmem:[%s4 + $0x38] sm:$0xff]
      %v4357 = vld [vmem:[%s4 + $0x40] sm:$0xff]
      %v4358 = vld [vmem:[%s4 + $0x48] sm:$0xff]
      %v4359 = vld [vmem:[%s4 + $0x50] sm:$0xff]
      %v4360 = vld [vmem:[%s4 + $0x58] sm:$0xff]
      %v4361 = vld [vmem:[%s4 + $0x60] sm:$0xff]
      %v4362 = vld [vmem:[%s4 + $0x68] sm:$0xff]
      %v4363 = vld [vmem:[%s4 + $0x70] sm:$0xff]
      %v4364 = vld [vmem:[%s4 + $0x78] sm:$0xff]
      %v4365 = vmul.f32 %v4287, %v4349
      %v4366 = vmul.f32 %v4290, %v4350
      %v4367 = vmul.f32 %v4295, %v4351
      %v4368 = vmul.f32 %v4298, %v4352
      %v4369 = vmul.f32 %v4303, %v4353
      %v4370 = vmul.f32 %v4306, %v4354
      %v4371 = vmul.f32 %v4311, %v4355
      %v4372 = vmul.f32 %v4314, %v4356
      %v4373 = vmul.f32 %v4319, %v4357
      %v4374 = vmul.f32 %v4322, %v4358
      %v4375 = vmul.f32 %v4327, %v4359
      %v4376 = vmul.f32 %v4330, %v4360
      %v4377 = vmul.f32 %v4335, %v4361
      %v4378 = vmul.f32 %v4338, %v4362
      %v4379 = vmul.f32 %v4343, %v4363
      %v4380 = vmul.f32 %v4346, %v4364
      %vm4381 = vcmask 7168
      %v4382 = vsel %vm4381, %v4365, 0.0
      %v4383 = vsel %vm4381, %v4366, 0.0
      %v4384 = vadd.f32 %v4382, %v4383
      %v4385 = vsel %vm4381, %v4367, 0.0
      %v4386 = vadd.f32 %v4384, %v4385
      %v4387 = vsel %vm4381, %v4368, 0.0
      %v4388 = vadd.f32 %v4386, %v4387
      %v4389 = vsel %vm4381, %v4369, 0.0
      %v4390 = vadd.f32 %v4388, %v4389
      %v4391 = vsel %vm4381, %v4370, 0.0
      %v4392 = vadd.f32 %v4390, %v4391
      %v4393 = vsel %vm4381, %v4371, 0.0
      %v4394 = vadd.f32 %v4392, %v4393
      %v4395 = vsel %vm4381, %v4372, 0.0
      %v4396 = vadd.f32 %v4394, %v4395
      %v4397 = vsel %vm4381, %v4373, 0.0
      %v4398 = vadd.f32 %v4396, %v4397
      %v4399 = vsel %vm4381, %v4374, 0.0
      %v4400 = vadd.f32 %v4398, %v4399
      %v4401 = vsel %vm4381, %v4375, 0.0
      %v4402 = vadd.f32 %v4400, %v4401
      %v4403 = vsel %vm4381, %v4376, 0.0
      %v4404 = vadd.f32 %v4402, %v4403
      %v4405 = vsel %vm4381, %v4377, 0.0
      %v4406 = vadd.f32 %v4404, %v4405
      %v4407 = vsel %vm4381, %v4378, 0.0
      %v4408 = vadd.f32 %v4406, %v4407
      %v4409 = vsel %vm4381, %v4379, 0.0
      %v4410 = vadd.f32 %v4408, %v4409
      %v4411 = vsel %vm4381, %v4380, 0.0
      %v4412 = vadd.f32 %v4410, %v4411
      %4413 = vadd.xlane.f32.xlu0 %v4412
      %v4414 = vpop.xlane.xlu0 %4413
      %v4415 = vrot.slane %v4414, 4
      %v4416 = vadd.f32 %v4414, %v4415
      %v4417 = vrot.slane %v4416, 2
      %v4418 = vadd.f32 %v4416, %v4417
      %v4419 = vrot.slane %v4418, 1
      %v4420 = vadd.f32 %v4418, %v4419
      %s4421 = vtos %v4420
      %s4422 = sadd.f32 %s4421, 0.0
      %s4423 = smul.f32 %s4422, 0.015625
      %v4424 = vstv %s4423
      %4425 = vst [vmem:[%s263] sm:$0xff] %v4424
      %v4426 = vld [vmem:[#allocation2] ss:$2 sm:$0xff]
      %s4427 = scalar_lea.vmem [#allocation2], 16
      %v4428 = vld [vmem:[%s4427] ss:$2 sm:$0xff]
      %s4429 = scalar_lea.vmem [#allocation2], 32
      %v4430 = vld [vmem:[%s4429] ss:$2 sm:$0xff]
      %s4431 = scalar_lea.vmem [#allocation2], 48
      %v4432 = vld [vmem:[%s4431] ss:$2 sm:$0xff]
      %s4433 = scalar_lea.vmem [#allocation2], 64
      %v4434 = vld [vmem:[%s4433] ss:$2 sm:$0xff]
      %s4435 = scalar_lea.vmem [#allocation2], 80
      %v4436 = vld [vmem:[%s4435] ss:$2 sm:$0xff]
      %s4437 = scalar_lea.vmem [#allocation2], 96
      %v4438 = vld [vmem:[%s4437] ss:$2 sm:$0xff]
      %s4439 = scalar_lea.vmem [#allocation2], 112
      %v4440 = vld [vmem:[%s4439] ss:$2 sm:$0xff]
      %s4441 = scalar_lea.vmem [#allocation2], 1
      %v4442 = vld [vmem:[%s4441] ss:$2 sm:$0xff]
      %s4443 = scalar_lea.vmem [#allocation2], 17
      %v4444 = vld [vmem:[%s4443] ss:$2 sm:$0xff]
      %s4445 = scalar_lea.vmem [#allocation2], 33
      %v4446 = vld [vmem:[%s4445] ss:$2 sm:$0xff]
      %s4447 = scalar_lea.vmem [#allocation2], 49
      %v4448 = vld [vmem:[%s4447] ss:$2 sm:$0xff]
      %s4449 = scalar_lea.vmem [#allocation2], 65
      %v4450 = vld [vmem:[%s4449] ss:$2 sm:$0xff]
      %s4451 = scalar_lea.vmem [#allocation2], 81
      %v4452 = vld [vmem:[%s4451] ss:$2 sm:$0xff]
      %s4453 = scalar_lea.vmem [#allocation2], 97
      %v4454 = vld [vmem:[%s4453] ss:$2 sm:$0xff]
      %s4455 = scalar_lea.vmem [#allocation2], 113
      %v4456 = vld [vmem:[%s4455] ss:$2 sm:$0xff]
      %v4457 = vmax.f32 %v4426, %v4442
      %v4458 = vmax.f32 %v4428, %v4444
      %v4459 = vmax.f32 %v4430, %v4446
      %v4460 = vmax.f32 %v4432, %v4448
      %v4461 = vmax.f32 %v4434, %v4450
      %v4462 = vmax.f32 %v4436, %v4452
      %v4463 = vmax.f32 %v4438, %v4454
      %v4464 = vmax.f32 %v4440, %v4456
      %v4465 = vmax.f32 %v4457, %v4458
      %v4466 = vmax.f32 %v4459, %v4460
      %v4467 = vmax.f32 %v4461, %v4462
      %v4468 = vmax.f32 %v4463, %v4464
      %v4469 = vpack.c.bf16 %v4465, %v4465
      %v4470 = vpack.c.bf16 %v4466, %v4466
      %v4471 = vpack.c.bf16 %v4467, %v4467
      %v4472 = vpack.c.bf16 %v4468, %v4468
      %4473 = vst [vmem:[%s269] sm:$0xf] %v4469
      %4474 = vst [vmem:[%s269 + $0x4] sm:$0xf] %v4470
      %4475 = vst [vmem:[%s269 + $0x8] sm:$0xf] %v4471
      %4476 = vst [vmem:[%s269 + $0xc] sm:$0xf] %v4472
      %v4477 = vld [vmem:[#allocation3] ss:$2 sm:$0xff]
      %s4478 = scalar_lea.vmem [#allocation3], 16
      %v4479 = vld [vmem:[%s4478] ss:$2 sm:$0xff]
      %s4480 = scalar_lea.vmem [#allocation3], 32
      %v4481 = vld [vmem:[%s4480] ss:$2 sm:$0xff]
      %s4482 = scalar_lea.vmem [#allocation3], 48
      %v4483 = vld [vmem:[%s4482] ss:$2 sm:$0xff]
      %s4484 = scalar_lea.vmem [#allocation3], 64
      %v4485 = vld [vmem:[%s4484] ss:$2 sm:$0xff]
      %s4486 = scalar_lea.vmem [#allocation3], 80
      %v4487 = vld [vmem:[%s4486] ss:$2 sm:$0xff]
      %s4488 = scalar_lea.vmem [#allocation3], 96
      %v4489 = vld [vmem:[%s4488] ss:$2 sm:$0xff]
      %s4490 = scalar_lea.vmem [#allocation3], 112
      %v4491 = vld [vmem:[%s4490] ss:$2 sm:$0xff]
      %s4492 = scalar_lea.vmem [#allocation3], 1
      %v4493 = vld [vmem:[%s4492] ss:$2 sm:$0xff]
      %s4494 = scalar_lea.vmem [#allocation3], 17
      %v4495 = vld [vmem:[%s4494] ss:$2 sm:$0xff]
      %s4496 = scalar_lea.vmem [#allocation3], 33
      %v4497 = vld [vmem:[%s4496] ss:$2 sm:$0xff]
      %s4498 = scalar_lea.vmem [#allocation3], 49
      %v4499 = vld [vmem:[%s4498] ss:$2 sm:$0xff]
      %s4500 = scalar_lea.vmem [#allocation3], 65
      %v4501 = vld [vmem:[%s4500] ss:$2 sm:$0xff]
      %s4502 = scalar_lea.vmem [#allocation3], 81
      %v4503 = vld [vmem:[%s4502] ss:$2 sm:$0xff]
      %s4504 = scalar_lea.vmem [#allocation3], 97
      %v4505 = vld [vmem:[%s4504] ss:$2 sm:$0xff]
      %s4506 = scalar_lea.vmem [#allocation3], 113
      %v4507 = vld [vmem:[%s4506] ss:$2 sm:$0xff]
      %v4508 = vmax.f32 %v4477, %v4493
      %v4509 = vmax.f32 %v4479, %v4495
      %v4510 = vmax.f32 %v4481, %v4497
      %v4511 = vmax.f32 %v4483, %v4499
      %v4512 = vmax.f32 %v4485, %v4501
      %v4513 = vmax.f32 %v4487, %v4503
      %v4514 = vmax.f32 %v4489, %v4505
      %v4515 = vmax.f32 %v4491, %v4507
      %v4516 = vmax.f32 %v4508, %v4509
      %v4517 = vmax.f32 %v4510, %v4511
      %v4518 = vmax.f32 %v4512, %v4513
      %v4519 = vmax.f32 %v4514, %v4515
      %v4520 = vpack.c.bf16 %v4516, %v4516
      %v4521 = vpack.c.bf16 %v4517, %v4517
      %v4522 = vpack.c.bf16 %v4518, %v4518
      %v4523 = vpack.c.bf16 %v4519, %v4519
      %s4524 = scalar_lea.vmem %s269, 16
      %4525 = vst [vmem:[%s4524] sm:$0xf] %v4520
      %4526 = vst [vmem:[%s4524 + $0x4] sm:$0xf] %v4521
      %4527 = vst [vmem:[%s4524 + $0x8] sm:$0xf] %v4522
      %4528 = vst [vmem:[%s4524 + $0xc] sm:$0xf] %v4523
      %p4529 = scmp.lt.s32.totalorder %s18, 1
      %s4530 = scalar_select %p4529, %s18, 1
      %s4531 = smul.addr %s4530, 8
      %s4532 = scalar_lea.vmem %s5, %s4531
      %s4533 = smul.u32 2, %s18
      %p4534 = scmp.lt.s32.totalorder %s4533, 3
      %s4535 = scalar_select %p4534, %s4533, 3
      %s4536 = smul.addr %s4535, 4
      %s4537 = smul.addr %s4536, 4
      %s4538 = scalar_lea.vmem %s6, %s4537
      // Predicated region
      $region41: #{perceptual_loss_forward.4} parent=39 // pred_check
        %p4539 = pneg %p146
      $region42: #{perceptual_loss_forward.4} parent=39 // pred_check_branch
        %4541 = sbr.rel (%p4539) target = $region44
      $region43: #{perceptual_loss_forward.4} parent=39 // pred_region
        _
      $region44: #{perceptual_loss_forward.4} parent=39 // pred_fallthru
        _
      // Predicated region
      $region45: #{perceptual_loss_forward.4} parent=39 // pred_check
        %p4542 = pneg %p172
      $region46: #{perceptual_loss_forward.4} parent=39 // pred_check_branch
        %4544 = sbr.rel (%p4542) target = $region48
      $region47: #{perceptual_loss_forward.4} parent=39 // pred_region
        %s4545 = smul.u32 2, %s18
      $region48: #{perceptual_loss_forward.4} parent=39 // pred_fallthru
        _
    $region40: #{perceptual_loss_forward.4} parent=5 // pred_fallthru
      _
    %p4546 = scmp.le.s32.totalorder 2, %s13
    // Predicated region
    $region49: #{perceptual_loss_forward.4} parent=5 // pred_check
      %p4547 = pneg %p4546
    $region50: #{perceptual_loss_forward.4} parent=5 // pred_check_branch
      %4549 = sbr.rel (%p4547) target = $region52
    $region51: #{perceptual_loss_forward.4} parent=5 // pred_region
      %s4550 = ssub.s32 %s13, 2
      // Predicated region
      $region53: #{perceptual_loss_forward.4} parent=51 // pred_check
        %p4551 = pneg %p152
      $region54: #{perceptual_loss_forward.4} parent=51 // pred_check_branch
        %4553 = sbr.rel (%p4551) target = $region56
      $region55: #{perceptual_loss_forward.4} parent=51 // pred_region
        %p4554 = scmp.lt.s32.totalorder %s19, 1
        %s4555 = scalar_select %p4554, %s19, 1
        %s4556 = smul.addr %s4555, 8
        %s4557 = scalar_lea.vmem %s5, %s4556
      $region56: #{perceptual_loss_forward.4} parent=51 // pred_fallthru
        _
      // Predicated region
      $region57: #{perceptual_loss_forward.4} parent=51 // pred_check
        %p4558 = pneg %p178
      $region58: #{perceptual_loss_forward.4} parent=51 // pred_check_branch
        %4560 = sbr.rel (%p4558) target = $region60
      $region59: #{perceptual_loss_forward.4} parent=51 // pred_region
        %s4561 = smul.u32 2, %s19
        %p4562 = scmp.lt.s32.totalorder %s4561, 3
        %s4563 = scalar_select %p4562, %s4561, 3
        %s4564 = smul.addr %s4563, 4
        %s4565 = smul.addr %s4564, 4
        %s4566 = scalar_lea.vmem %s6, %s4565
      $region60: #{perceptual_loss_forward.4} parent=51 // pred_fallthru
        _
    $region52: #{perceptual_loss_forward.4} parent=5 // pred_fallthru
      _
  $region6: #{perceptual_loss_forward.4} parent=0 // loop_footer
    %s17 = sadd.s32 1, %s13
  $region7: #{perceptual_loss_forward.4} parent=0 // loop_footer_branch
    %12 = sbr.rel target = $region3
  $region8: #{perceptual_loss_forward.4} parent=0 // loop_exit
    _

</llo_original>
